<compile_context>
chip_gen: v7x
topology: tpu7x:2x2x1
jax: 0.10.0
libtpu: 0.0.40
codegen_flags: <defaults>
</compile_context>

<pallas_src>
import functools

import jax
import jax.numpy as jnp
from jax.experimental import pallas as pl
from jax.experimental.pallas import tpu as pltpu

HIDDEN = 256          # LSTM hidden size (fixed by the module)
C1, C2 = 64, 128      # conv channel counts (fixed by the module)
FC1 = 128             # fc1 width
NUM_CLASSES = 2
PREDICT_DAYS = 1


def _cnn_lstm_kernel(x_ref,                       # (1, (L+2)*B_TILE, Cin) time-major flat, padded
                     w1_ref, b1_ref,              # (3, Cin, 64), (1, 64)
                     w2_ref, b2_ref,              # (3, 64, 128), (1, 128)
                     wih0_ref, whh0_ref, bl0_ref, # (128,1024), (256,1024), (1,1024)
                     wih1_ref, whh1_ref, bl1_ref, # (256,1024), (256,1024), (1,1024)
                     wih2_ref, whh2_ref, bl2_ref, # (256,1024), (256,1024), (1,1024)
                     wa_ref, ba_ref,              # (1,256), (1,1)
                     wf1_ref, bf1_ref,            # (256,128), (1,128)
                     wf2_ref, bf2_ref,            # (128,2), (1,2)
                     out_ref,                     # (1, B_TILE, 2)
                     h1p_ref,                     # scratch ((L+2)*B_TILE, 64)
                     gx_ref,                      # scratch (L*B_TILE, 1024)
                     seq_ref,                     # scratch (L*B_TILE, 256)
                     *, L, B_TILE):
    LB = L * B_TILE
    x = x_ref[0]                                  # ((L+2)*B_TILE, Cin), row = t*B_TILE + b

    # ---- conv1 (k=3, pad=1) + ReLU: 3 shifted matmuls; a time shift = B_TILE rows ----
    acc = jnp.zeros((LB, C1), jnp.float32)
    for k in range(3):
        acc = acc + jnp.dot(x[k * B_TILE:k * B_TILE + LB, :], w1_ref[k],
                            preferred_element_type=jnp.float32)
    h1 = jnp.maximum(acc + b1_ref[...], 0.0)      # (LB, 64)

    # ---- zero-pad one frame each side in time (via scratch), conv2 (k=3, pad=1) + ReLU ----
    zero_frame = jnp.zeros((B_TILE, C1), jnp.float32)
    h1p_ref[pl.ds(0, B_TILE), :] = zero_frame
    h1p_ref[pl.ds(B_TILE, LB), :] = h1
    h1p_ref[pl.ds((L + 1) * B_TILE, B_TILE), :] = zero_frame
    acc2 = jnp.zeros((LB, C2), jnp.float32)
    for k in range(3):
        acc2 = acc2 + jnp.dot(h1p_ref[pl.ds(k * B_TILE, LB), :], w2_ref[k],
                              preferred_element_type=jnp.float32)
    layer_in = jnp.maximum(acc2 + b2_ref[...], 0.0)   # (LB, 128)

    # ---- 3-layer LSTM (PyTorch gate order: i, f, g, o) ----
    def lstm_layer(xin, wih, whh, bias):
        # Hoisted input projection for all timesteps & batch rows at once (one big matmul).
        gx_ref[...] = jnp.dot(xin, wih, preferred_element_type=jnp.float32) + bias

        def step(t, carry):
            h, c = carry
            base = pl.multiple_of(t * B_TILE, B_TILE)
            g = gx_ref[pl.ds(base, B_TILE), :] + jnp.dot(
                h, whh, preferred_element_type=jnp.float32)       # (B_TILE, 4H)
            i = jax.nn.sigmoid(g[:, 0:HIDDEN])
            f = jax.nn.sigmoid(g[:, HIDDEN:2 * HIDDEN])
            gg = jnp.tanh(g[:, 2 * HIDDEN:3 * HIDDEN])
            o = jax.nn.sigmoid(g[:, 3 * HIDDEN:4 * HIDDEN])
            c = f * c + i * gg
            h = o * jnp.tanh(c)
            seq_ref[pl.ds(base, B_TILE), :] = h
            return h, c

        z = jnp.zeros((B_TILE, HIDDEN), jnp.float32)
        jax.lax.fori_loop(0, L, step, (z, z))
        return seq_ref[...]                                       # (LB, 256)

    layer_in = lstm_layer(layer_in, wih0_ref[...], whh0_ref[...], bl0_ref[...])
    layer_in = lstm_layer(layer_in, wih1_ref[...], whh1_ref[...], bl1_ref[...])
    seq = lstm_layer(layer_in, wih2_ref[...], whh2_ref[...], bl2_ref[...])   # (LB, 256)

    # ---- attention: softmax over time per batch row, weighted sum of outputs ----
    # VPU lane reduction for the scores (avoids an N=1 MXU matmul).
    scores = jnp.sum(seq * wa_ref[...], axis=-1, keepdims=True) + ba_ref[...]   # (LB, 1)
    m = jnp.max(scores, axis=0, keepdims=True)        # shared shift; softmax is shift-invariant
    e = jnp.exp(scores - m)                           # (LB, 1)
    # Selection matrix: flat row r = t*B_TILE + b belongs to batch b = r & (B_TILE-1).
    r_ids = jax.lax.broadcasted_iota(jnp.int32, (B_TILE, LB), 1)
    b_ids = jax.lax.broadcasted_iota(jnp.int32, (B_TILE, LB), 0)
    sel = ((r_ids & (B_TILE - 1)) == b_ids).astype(jnp.float32)    # (B_TILE, LB)
    num = jnp.dot(sel, e * seq, preferred_element_type=jnp.float32)  # (B_TILE, 256)
    den = jnp.dot(sel, e, preferred_element_type=jnp.float32)        # (B_TILE, 1)
    ctx = num / den                                                   # (B_TILE, 256)

    # ---- fc1 + ReLU, fc2 (dropouts are identity at inference) ----
    hfc = jnp.maximum(
        jnp.dot(ctx, wf1_ref[...], preferred_element_type=jnp.float32) + bf1_ref[...], 0.0)
    logits = jnp.dot(hfc, wf2_ref[...], preferred_element_type=jnp.float32) + bf2_ref[...]
    out_ref[0] = logits                                               # (B_TILE, 2)


def cnn_lstm_forward(params, x, *, b_tile=8):
    """x: (B, L, Cin) float32 -> (B, PREDICT_DAYS, NUM_CLASSES)."""
    B, L, cin = x.shape
    assert b_tile & (b_tile - 1) == 0, "b_tile must be a power of two"
    nt = pl.cdiv(B, b_tile)
    b_pad = nt * b_tile

    # Host-side layout plumbing: pad batch to a multiple of b_tile, pad time by one frame on
    # each side (conv padding), then lay each batch tile out time-major and flatten
    # (L+2, b_tile) -> rows so a time shift is a contiguous row shift inside the kernel.
    xp = jnp.pad(x, ((0, b_pad - B), (1, 1), (0, 0)))                  # (b_pad, L+2, cin)
    xp = xp.reshape(nt, b_tile, L + 2, cin).transpose(0, 2, 1, 3)      # (nt, L+2, b_tile, cin)
    xp = xp.reshape(nt, (L + 2) * b_tile, cin)

    full = lambda shape: pl.BlockSpec(shape, lambda i: (0,) * len(shape))
    kernel = functools.partial(_cnn_lstm_kernel, L=L, B_TILE=b_tile)

    lb = L * b_tile
    flops = nt * (
        2 * lb * 3 * cin * C1 + 2 * lb * 3 * C1 * C2
        + 2 * lb * (C2 + 2 * HIDDEN) * 4 * HIDDEN            # hoisted input projections
        + 3 * 2 * lb * HIDDEN * 4 * HIDDEN                   # recurrent matmuls
        + 2 * b_tile * lb * (HIDDEN + 1)                     # attention selection matmuls
        + 2 * b_tile * (HIDDEN * FC1 + FC1 * NUM_CLASSES))
    transcendentals = nt * (3 * lb * 5 * HIDDEN + lb)
    weight_bytes = 4 * sum(int(v.size) for v in params.values())
    bytes_accessed = nt * weight_bytes + 4 * int(xp.size) + 4 * b_pad * NUM_CLASSES

    out = pl.pallas_call(
        kernel,
        out_shape=jax.ShapeDtypeStruct((nt, b_tile, NUM_CLASSES), jnp.float32),
        grid=(nt,),
        in_specs=[
            pl.BlockSpec((1, (L + 2) * b_tile, cin), lambda i: (i, 0, 0)),
            full((3, cin, C1)), full((1, C1)),
            full((3, C1, C2)), full((1, C2)),
            full((C2, 4 * HIDDEN)), full((HIDDEN, 4 * HIDDEN)), full((1, 4 * HIDDEN)),
            full((HIDDEN, 4 * HIDDEN)), full((HIDDEN, 4 * HIDDEN)), full((1, 4 * HIDDEN)),
            full((HIDDEN, 4 * HIDDEN)), full((HIDDEN, 4 * HIDDEN)), full((1, 4 * HIDDEN)),
            full((1, HIDDEN)), full((1, 1)),
            full((HIDDEN, FC1)), full((1, FC1)),
            full((FC1, NUM_CLASSES)), full((1, NUM_CLASSES)),
        ],
        out_specs=pl.BlockSpec((1, b_tile, NUM_CLASSES), lambda i: (i, 0, 0)),
        scratch_shapes=[
            pltpu.VMEM(((L + 2) * b_tile, C1), jnp.float32),   # zero-padded conv1 output
            pltpu.VMEM((lb, 4 * HIDDEN), jnp.float32),         # hoisted gate pre-activations
            pltpu.VMEM((lb, HIDDEN), jnp.float32),             # per-layer LSTM outputs
        ],
        compiler_params=pltpu.CompilerParams(
            dimension_semantics=("parallel",),
            vmem_limit_bytes=32 * 1024 * 1024,                 # fits v7x's 64 MiB/TC VMEM
        ),
        cost_estimate=pl.CostEstimate(flops=flops, transcendentals=transcendentals,
                                      bytes_accessed=bytes_accessed),
    )(xp,
      params["w1"], params["b1"], params["w2"], params["b2"],
      params["wih0"], params["whh0"], params["bl0"],
      params["wih1"], params["whh1"], params["bl1"],
      params["wih2"], params["whh2"], params["bl2"],
      params["wa"], params["ba"],
      params["wf1"], params["bf1"],
      params["wf2"], params["bf2"])

    out = out.reshape(b_pad, NUM_CLASSES)[:B]
    return out.reshape(B, PREDICT_DAYS, NUM_CLASSES)


# ----------------- deterministic parameter initialization -----------------
def init_params(key, input_dim):
    ks = list(jax.random.split(key, 24))
    k = iter(ks)

    def u(shape, fan_in):
        bound = 1.0 / jnp.sqrt(jnp.float32(fan_in))
        return jax.random.uniform(next(k), shape, jnp.float32, -bound, bound)

    p = {}
    # Conv1d weights stored torch-style (Cout, Cin, K); kernel wants per-tap (K, Cin, Cout).
    conv1_w = u((C1, input_dim, 3), input_dim * 3)
    conv2_w = u((C2, C1, 3), C1 * 3)
    p["w1"] = jnp.transpose(conv1_w, (2, 1, 0))            # (3, Cin, 64)
    p["b1"] = u((1, C1), input_dim * 3)
    p["w2"] = jnp.transpose(conv2_w, (2, 1, 0))            # (3, 64, 128)
    p["b2"] = u((1, C2), C1 * 3)

    # LSTM: torch stores (4H, in) / (4H, H); kernel uses transposed, biases combined.
    def lstm_layer_params(in_dim):
        wih = u((4 * HIDDEN, in_dim), HIDDEN)
        whh = u((4 * HIDDEN, HIDDEN), HIDDEN)
        bih = u((4 * HIDDEN,), HIDDEN)
        bhh = u((4 * HIDDEN,), HIDDEN)
        return wih.T, whh.T, (bih + bhh)[None, :]

    p["wih0"], p["whh0"], p["bl0"] = lstm_layer_params(C2)
    p["wih1"], p["whh1"], p["bl1"] = lstm_layer_params(HIDDEN)
    p["wih2"], p["whh2"], p["bl2"] = lstm_layer_params(HIDDEN)

    # Attention linear (256 -> 1): keep torch layout (1, 256) — kernel uses it as a lane row.
    p["wa"] = u((1, HIDDEN), HIDDEN)                       # (1, 256)
    p["ba"] = u((1, 1), HIDDEN)
    # fc1 (256 -> 128), fc2 (128 -> 2)
    p["wf1"] = u((FC1, HIDDEN), HIDDEN).T                  # (256, 128)
    p["bf1"] = u((1, FC1), HIDDEN)
    p["wf2"] = u((NUM_CLASSES, FC1), FC1).T                # (128, 2)
    p["bf2"] = u((1, NUM_CLASSES), FC1)
    return p


# ----------------- pure-JAX reference (same math, no Pallas) -----------------
def forward_ref(params, x):
    B, L, _ = x.shape

    def conv(xp, w, b):  # xp: (B, L+2, Cin), w: (3, Cin, Cout)
        acc = sum(jnp.einsum("btc,co->bto", xp[:, kk:kk + L], w[kk]) for kk in range(3))
        return jax.nn.relu(acc + b)

    h = conv(jnp.pad(x, ((0, 0), (1, 1), (0, 0))), params["w1"], params["b1"])
    seq = conv(jnp.pad(h, ((0, 0), (1, 1), (0, 0))), params["w2"], params["b2"])

    def lstm_layer(seq, wih_t, whh_t, bias):
        h = jnp.zeros((B, HIDDEN)); c = jnp.zeros((B, HIDDEN))
        outs = []
        for t in range(L):
            gates = seq[:, t] @ wih_t + h @ whh_t + bias
            i = jax.nn.sigmoid(gates[:, :HIDDEN])
            f = jax.nn.sigmoid(gates[:, HIDDEN:2 * HIDDEN])
            g = jnp.tanh(gates[:, 2 * HIDDEN:3 * HIDDEN])
            o = jax.nn.sigmoid(gates[:, 3 * HIDDEN:])
            c = f * c + i * g
            h = o * jnp.tanh(c)
            outs.append(h)
        return jnp.stack(outs, axis=1)

    seq = lstm_layer(seq, params["wih0"], params["whh0"], params["bl0"])
    seq = lstm_layer(seq, params["wih1"], params["whh1"], params["bl1"])
    seq = lstm_layer(seq, params["wih2"], params["whh2"], params["bl2"])

    scores = jnp.einsum("bth,oh->bto", seq, params["wa"]) + params["ba"]
    w = jax.nn.softmax(scores, axis=1)
    ctx = jnp.sum(w * seq, axis=1)                         # (B, 256)

    hfc = jax.nn.relu(ctx @ params["wf1"] + params["bf1"])
    logits = hfc @ params["wf2"] + params["bf2"]
    return logits.reshape(B, PREDICT_DAYS, -1)


if __name__ == "__main__":
    B, L, INPUT_DIM = 2, 8, 4

    key = jax.random.PRNGKey(0)
    k_param, k_x = jax.random.split(key)
    params = init_params(k_param, INPUT_DIM)
    x = jax.random.normal(k_x, (B, L, INPUT_DIM), jnp.float32)

    out = jax.jit(functools.partial(cnn_lstm_forward, params))(x)
    out = jax.block_until_ready(out)

    ref = forward_ref(params, x)
    assert out.shape == (B, PREDICT_DAYS, NUM_CLASSES), out.shape
    assert jnp.allclose(out, ref, atol=1e-3, rtol=1e-3), (out, ref)

    print("KERNEL_OK")
</pallas_src>

<mosaic_0001>
module attributes {stable_mosaic.version = 11 : i64} {
  func.func @_cnn_lstm_kernel(%arg0: i32, %arg1: memref<1x80x4xf32, #tpu.memory_space<vmem>>, %arg2: memref<3x4x64xf32, #tpu.memory_space<vmem>>, %arg3: memref<1x64xf32, #tpu.memory_space<vmem>>, %arg4: memref<3x64x128xf32, #tpu.memory_space<vmem>>, %arg5: memref<1x128xf32, #tpu.memory_space<vmem>>, %arg6: memref<128x1024xf32, #tpu.memory_space<vmem>>, %arg7: memref<256x1024xf32, #tpu.memory_space<vmem>>, %arg8: memref<1x1024xf32, #tpu.memory_space<vmem>>, %arg9: memref<256x1024xf32, #tpu.memory_space<vmem>>, %arg10: memref<256x1024xf32, #tpu.memory_space<vmem>>, %arg11: memref<1x1024xf32, #tpu.memory_space<vmem>>, %arg12: memref<256x1024xf32, #tpu.memory_space<vmem>>, %arg13: memref<256x1024xf32, #tpu.memory_space<vmem>>, %arg14: memref<1x1024xf32, #tpu.memory_space<vmem>>, %arg15: memref<1x256xf32, #tpu.memory_space<vmem>>, %arg16: memref<1x1xf32, #tpu.memory_space<vmem>>, %arg17: memref<256x128xf32, #tpu.memory_space<vmem>>, %arg18: memref<1x128xf32, #tpu.memory_space<vmem>>, %arg19: memref<128x2xf32, #tpu.memory_space<vmem>>, %arg20: memref<1x2xf32, #tpu.memory_space<vmem>>, %arg21: memref<1x8x2xf32, #tpu.memory_space<vmem>>, %arg22: memref<80x64xf32, #tpu.memory_space<vmem>>, %arg23: memref<64x1024xf32, #tpu.memory_space<vmem>>, %arg24: memref<64x256xf32, #tpu.memory_space<vmem>>) attributes {dimension_semantics = [#tpu.dimension_semantics<parallel>], iteration_bounds = array<i64: 1>, scalar_prefetch = 0 : i64, scratch_operands = 3 : i64, tpu.core_type = #tpu.core_type<tc>, window_params = [{transform_indices = @transform_0, window_bounds = array<i64: 1, 80, 4>}, {pipeline_mode = #tpu.pipeline_mode<synchronous>, transform_indices = @transform_1, window_bounds = array<i64: 3, 4, 64>}, {pipeline_mode = #tpu.pipeline_mode<synchronous>, transform_indices = @transform_2, window_bounds = array<i64: 1, 64>}, {pipeline_mode = #tpu.pipeline_mode<synchronous>, transform_indices = @transform_3, window_bounds = array<i64: 3, 64, 128>}, {pipeline_mode = #tpu.pipeline_mode<synchronous>, transform_indices = @transform_4, window_bounds = array<i64: 1, 128>}, {pipeline_mode = #tpu.pipeline_mode<synchronous>, transform_indices = @transform_5, window_bounds = array<i64: 128, 1024>}, {pipeline_mode = #tpu.pipeline_mode<synchronous>, transform_indices = @transform_6, window_bounds = array<i64: 256, 1024>}, {pipeline_mode = #tpu.pipeline_mode<synchronous>, transform_indices = @transform_7, window_bounds = array<i64: 1, 1024>}, {pipeline_mode = #tpu.pipeline_mode<synchronous>, transform_indices = @transform_8, window_bounds = array<i64: 256, 1024>}, {pipeline_mode = #tpu.pipeline_mode<synchronous>, transform_indices = @transform_9, window_bounds = array<i64: 256, 1024>}, {pipeline_mode = #tpu.pipeline_mode<synchronous>, transform_indices = @transform_10, window_bounds = array<i64: 1, 1024>}, {pipeline_mode = #tpu.pipeline_mode<synchronous>, transform_indices = @transform_11, window_bounds = array<i64: 256, 1024>}, {pipeline_mode = #tpu.pipeline_mode<synchronous>, transform_indices = @transform_12, window_bounds = array<i64: 256, 1024>}, {pipeline_mode = #tpu.pipeline_mode<synchronous>, transform_indices = @transform_13, window_bounds = array<i64: 1, 1024>}, {pipeline_mode = #tpu.pipeline_mode<synchronous>, transform_indices = @transform_14, window_bounds = array<i64: 1, 256>}, {pipeline_mode = #tpu.pipeline_mode<synchronous>, transform_indices = @transform_15, window_bounds = array<i64: 1, 1>}, {pipeline_mode = #tpu.pipeline_mode<synchronous>, transform_indices = @transform_16, window_bounds = array<i64: 256, 128>}, {pipeline_mode = #tpu.pipeline_mode<synchronous>, transform_indices = @transform_17, window_bounds = array<i64: 1, 128>}, {pipeline_mode = #tpu.pipeline_mode<synchronous>, transform_indices = @transform_18, window_bounds = array<i64: 128, 2>}, {pipeline_mode = #tpu.pipeline_mode<synchronous>, transform_indices = @transform_19, window_bounds = array<i64: 1, 2>}, {transform_indices = @transform_20, window_bounds = array<i64: 1, 8, 2>}]} {
    %c0 = arith.constant 0 : index
    %c0_0 = arith.constant 0 : index
    %c0_1 = arith.constant 0 : index
    %0 = vector.load %arg1[%c0, %c0_0, %c0_1] : memref<1x80x4xf32, #tpu.memory_space<vmem>>, vector<1x80x4xf32>
    %1 = vector.shape_cast %0 : vector<1x80x4xf32> to vector<80x4xf32>
    %cst = arith.constant 0.000000e+00 : f32
    %2 = vector.broadcast %cst : f32 to vector<64x64xf32>
    %3 = vector.extract_strided_slice %1 {offsets = [0, 0], sizes = [64, 4], strides = [1, 1]} : vector<80x4xf32> to vector<64x4xf32>
    %c0_2 = arith.constant 0 : index
    %c0_3 = arith.constant 0 : index
    %c0_4 = arith.constant 0 : index
    %4 = vector.load %arg2[%c0_2, %c0_3, %c0_4] : memref<3x4x64xf32, #tpu.memory_space<vmem>>, vector<1x4x64xf32>
    %5 = vector.shape_cast %4 : vector<1x4x64xf32> to vector<4x64xf32>
    %cst_5 = arith.constant dense<0.000000e+00> : vector<64x64xf32>
    %6 = tpu.matmul %3, %5, %cst_5 {dimension_numbers = #tpu.dot_dimension_numbers<[1], [0], [0], [1], [0, 0, 1, 1], [], []>} : vector<64x4xf32>, vector<4x64xf32>, vector<64x64xf32> -> vector<64x64xf32>
    %7 = arith.addf %2, %6 : vector<64x64xf32>
    %8 = vector.extract_strided_slice %1 {offsets = [8, 0], sizes = [64, 4], strides = [1, 1]} : vector<80x4xf32> to vector<64x4xf32>
    %c1 = arith.constant 1 : index
    %c0_6 = arith.constant 0 : index
    %c0_7 = arith.constant 0 : index
    %9 = vector.load %arg2[%c1, %c0_6, %c0_7] : memref<3x4x64xf32, #tpu.memory_space<vmem>>, vector<1x4x64xf32>
    %10 = vector.shape_cast %9 : vector<1x4x64xf32> to vector<4x64xf32>
    %cst_8 = arith.constant dense<0.000000e+00> : vector<64x64xf32>
    %11 = tpu.matmul %8, %10, %cst_8 {dimension_numbers = #tpu.dot_dimension_numbers<[1], [0], [0], [1], [0, 0, 1, 1], [], []>} : vector<64x4xf32>, vector<4x64xf32>, vector<64x64xf32> -> vector<64x64xf32>
    %12 = arith.addf %7, %11 : vector<64x64xf32>
    %13 = vector.extract_strided_slice %1 {offsets = [16, 0], sizes = [64, 4], strides = [1, 1]} : vector<80x4xf32> to vector<64x4xf32>
    %c2 = arith.constant 2 : index
    %c0_9 = arith.constant 0 : index
    %c0_10 = arith.constant 0 : index
    %14 = vector.load %arg2[%c2, %c0_9, %c0_10] : memref<3x4x64xf32, #tpu.memory_space<vmem>>, vector<1x4x64xf32>
    %15 = vector.shape_cast %14 : vector<1x4x64xf32> to vector<4x64xf32>
    %cst_11 = arith.constant dense<0.000000e+00> : vector<64x64xf32>
    %16 = tpu.matmul %13, %15, %cst_11 {dimension_numbers = #tpu.dot_dimension_numbers<[1], [0], [0], [1], [0, 0, 1, 1], [], []>} : vector<64x4xf32>, vector<4x64xf32>, vector<64x64xf32> -> vector<64x64xf32>
    %17 = arith.addf %12, %16 : vector<64x64xf32>
    %c0_12 = arith.constant 0 : index
    %c0_13 = arith.constant 0 : index
    %18 = vector.load %arg3[%c0_12, %c0_13] : memref<1x64xf32, #tpu.memory_space<vmem>>, vector<1x64xf32>
    %19 = vector.broadcast %18 : vector<1x64xf32> to vector<64x64xf32>
    %20 = arith.addf %17, %19 : vector<64x64xf32>
    %cst_14 = arith.constant 0.000000e+00 : f32
    %21 = vector.broadcast %cst_14 : f32 to vector<64x64xf32>
    %22 = arith.maximumf %20, %21 : vector<64x64xf32>
    %cst_15 = arith.constant 0.000000e+00 : f32
    %23 = vector.broadcast %cst_15 : f32 to vector<8x64xf32>
    %c0_16 = arith.constant 0 : index
    %c0_17 = arith.constant 0 : index
    %24 = vector.load %arg22[%c0_16, %c0_17] : memref<80x64xf32, #tpu.memory_space<vmem>>, vector<8x64xf32>
    tpu.vector_store %arg22[%c0_16, %c0_17], %23 {strides = array<i32>} : memref<80x64xf32, #tpu.memory_space<vmem>>, vector<8x64xf32>,
    %c8 = arith.constant 8 : index
    %c0_18 = arith.constant 0 : index
    %25 = vector.load %arg22[%c8, %c0_18] : memref<80x64xf32, #tpu.memory_space<vmem>>, vector<64x64xf32>
    tpu.vector_store %arg22[%c8, %c0_18], %22 {strides = array<i32>} : memref<80x64xf32, #tpu.memory_space<vmem>>, vector<64x64xf32>,
    %c72 = arith.constant 72 : index
    %c0_19 = arith.constant 0 : index
    %26 = vector.load %arg22[%c72, %c0_19] : memref<80x64xf32, #tpu.memory_space<vmem>>, vector<8x64xf32>
    tpu.vector_store %arg22[%c72, %c0_19], %23 {strides = array<i32>} : memref<80x64xf32, #tpu.memory_space<vmem>>, vector<8x64xf32>,
    %cst_20 = arith.constant 0.000000e+00 : f32
    %27 = vector.broadcast %cst_20 : f32 to vector<64x128xf32>
    %c0_21 = arith.constant 0 : index
    %c0_22 = arith.constant 0 : index
    %28 = vector.load %arg22[%c0_21, %c0_22] : memref<80x64xf32, #tpu.memory_space<vmem>>, vector<64x64xf32>
    %c0_23 = arith.constant 0 : index
    %c0_24 = arith.constant 0 : index
    %c0_25 = arith.constant 0 : index
    %29 = vector.load %arg4[%c0_23, %c0_24, %c0_25] : memref<3x64x128xf32, #tpu.memory_space<vmem>>, vector<1x64x128xf32>
    %30 = vector.shape_cast %29 : vector<1x64x128xf32> to vector<64x128xf32>
    %cst_26 = arith.constant dense<0.000000e+00> : vector<64x128xf32>
    %31 = tpu.matmul %28, %30, %cst_26 {dimension_numbers = #tpu.dot_dimension_numbers<[1], [0], [0], [1], [0, 0, 1, 1], [], []>} : vector<64x64xf32>, vector<64x128xf32>, vector<64x128xf32> -> vector<64x128xf32>
    %32 = arith.addf %27, %31 : vector<64x128xf32>
    %c8_27 = arith.constant 8 : index
    %c0_28 = arith.constant 0 : index
    %33 = vector.load %arg22[%c8_27, %c0_28] : memref<80x64xf32, #tpu.memory_space<vmem>>, vector<64x64xf32>
    %c1_29 = arith.constant 1 : index
    %c0_30 = arith.constant 0 : index
    %c0_31 = arith.constant 0 : index
    %34 = vector.load %arg4[%c1_29, %c0_30, %c0_31] : memref<3x64x128xf32, #tpu.memory_space<vmem>>, vector<1x64x128xf32>
    %35 = vector.shape_cast %34 : vector<1x64x128xf32> to vector<64x128xf32>
    %cst_32 = arith.constant dense<0.000000e+00> : vector<64x128xf32>
    %36 = tpu.matmul %33, %35, %cst_32 {dimension_numbers = #tpu.dot_dimension_numbers<[1], [0], [0], [1], [0, 0, 1, 1], [], []>} : vector<64x64xf32>, vector<64x128xf32>, vector<64x128xf32> -> vector<64x128xf32>
    %37 = arith.addf %32, %36 : vector<64x128xf32>
    %c16 = arith.constant 16 : index
    %c0_33 = arith.constant 0 : index
    %38 = vector.load %arg22[%c16, %c0_33] : memref<80x64xf32, #tpu.memory_space<vmem>>, vector<64x64xf32>
    %c2_34 = arith.constant 2 : index
    %c0_35 = arith.constant 0 : index
    %c0_36 = arith.constant 0 : index
    %39 = vector.load %arg4[%c2_34, %c0_35, %c0_36] : memref<3x64x128xf32, #tpu.memory_space<vmem>>, vector<1x64x128xf32>
    %40 = vector.shape_cast %39 : vector<1x64x128xf32> to vector<64x128xf32>
    %cst_37 = arith.constant dense<0.000000e+00> : vector<64x128xf32>
    %41 = tpu.matmul %38, %40, %cst_37 {dimension_numbers = #tpu.dot_dimension_numbers<[1], [0], [0], [1], [0, 0, 1, 1], [], []>} : vector<64x64xf32>, vector<64x128xf32>, vector<64x128xf32> -> vector<64x128xf32>
    %42 = arith.addf %37, %41 : vector<64x128xf32>
    %c0_38 = arith.constant 0 : index
    %c0_39 = arith.constant 0 : index
    %43 = vector.load %arg5[%c0_38, %c0_39] : memref<1x128xf32, #tpu.memory_space<vmem>>, vector<1x128xf32>
    %44 = vector.broadcast %43 : vector<1x128xf32> to vector<64x128xf32>
    %45 = arith.addf %42, %44 : vector<64x128xf32>
    %cst_40 = arith.constant 0.000000e+00 : f32
    %46 = vector.broadcast %cst_40 : f32 to vector<64x128xf32>
    %47 = arith.maximumf %45, %46 : vector<64x128xf32>
    %c0_41 = arith.constant 0 : index
    %c0_42 = arith.constant 0 : index
    %48 = vector.load %arg6[%c0_41, %c0_42] : memref<128x1024xf32, #tpu.memory_space<vmem>>, vector<128x1024xf32>
    %c0_43 = arith.constant 0 : index
    %c0_44 = arith.constant 0 : index
    %49 = vector.load %arg7[%c0_43, %c0_44] : memref<256x1024xf32, #tpu.memory_space<vmem>>, vector<256x1024xf32>
    %c0_45 = arith.constant 0 : index
    %c0_46 = arith.constant 0 : index
    %50 = vector.load %arg8[%c0_45, %c0_46] : memref<1x1024xf32, #tpu.memory_space<vmem>>, vector<1x1024xf32>
    %cst_47 = arith.constant dense<0.000000e+00> : vector<64x1024xf32>
    %51 = tpu.matmul %47, %48, %cst_47 {dimension_numbers = #tpu.dot_dimension_numbers<[1], [0], [0], [1], [0, 0, 1, 1], [], []>} : vector<64x128xf32>, vector<128x1024xf32>, vector<64x1024xf32> -> vector<64x1024xf32>
    %52 = vector.broadcast %50 : vector<1x1024xf32> to vector<64x1024xf32>
    %53 = arith.addf %51, %52 : vector<64x1024xf32>
    %c0_48 = arith.constant 0 : index
    %c0_49 = arith.constant 0 : index
    %54 = vector.load %arg23[%c0_48, %c0_49] : memref<64x1024xf32, #tpu.memory_space<vmem>>, vector<64x1024xf32>
    tpu.vector_store %arg23[%c0_48, %c0_49], %53 {strides = array<i32>} : memref<64x1024xf32, #tpu.memory_space<vmem>>, vector<64x1024xf32>,
    %cst_50 = arith.constant 0.000000e+00 : f32
    %55 = vector.broadcast %cst_50 : f32 to vector<8x256xf32>
    %c0_i32 = arith.constant 0 : i32
    %c8_i32 = arith.constant 8 : i32
    %56 = arith.addi %c0_i32, %c8_i32 : i32
    %c1_i32 = arith.constant 1 : i32
    %57:2 = scf.for %arg25 = %c0_i32 to %56 step %c1_i32 iter_args(%arg26 = %55, %arg27 = %55) -> (vector<8x256xf32>, vector<8x256xf32>)  : i32 {
      %c8_i32_108 = arith.constant 8 : i32
      %122 = arith.muli %arg25, %c8_i32_108 : i32
      %123 = tpu.assume_multiple %122, 8 : i32
      %124 = arith.index_cast %123 : i32 to index
      %c0_109 = arith.constant 0 : index
      %125 = vector.load %arg23[%124, %c0_109] : memref<64x1024xf32, #tpu.memory_space<vmem>>, vector<8x1024xf32>
      %cst_110 = arith.constant dense<0.000000e+00> : vector<8x1024xf32>
      %126 = tpu.matmul %arg26, %49, %cst_110 {dimension_numbers = #tpu.dot_dimension_numbers<[1], [0], [0], [1], [0, 0, 1, 1], [], []>} : vector<8x256xf32>, vector<256x1024xf32>, vector<8x1024xf32> -> vector<8x1024xf32>
      %127 = arith.addf %125, %126 : vector<8x1024xf32>
      %128 = vector.extract_strided_slice %127 {offsets = [0, 0], sizes = [8, 256], strides = [1, 1]} : vector<8x1024xf32> to vector<8x256xf32>
      %129 = arith.negf %128 : vector<8x256xf32>
      %130 = math.exp %129 : vector<8x256xf32>
      %cst_111 = arith.constant 1.000000e+00 : f32
      %131 = vector.broadcast %cst_111 : f32 to vector<8x256xf32>
      %132 = arith.addf %131, %130 : vector<8x256xf32>
      %133 = arith.divf %131, %132 : vector<8x256xf32>
      %134 = vector.extract_strided_slice %127 {offsets = [0, 256], sizes = [8, 256], strides = [1, 1]} : vector<8x1024xf32> to vector<8x256xf32>
      %135 = arith.negf %134 : vector<8x256xf32>
      %136 = math.exp %135 : vector<8x256xf32>
      %cst_112 = arith.constant 1.000000e+00 : f32
      %137 = vector.broadcast %cst_112 : f32 to vector<8x256xf32>
      %138 = arith.addf %137, %136 : vector<8x256xf32>
      %139 = arith.divf %137, %138 : vector<8x256xf32>
      %140 = vector.extract_strided_slice %127 {offsets = [0, 512], sizes = [8, 256], strides = [1, 1]} : vector<8x1024xf32> to vector<8x256xf32>
      %141 = math.tanh %140 : vector<8x256xf32>
      %142 = vector.extract_strided_slice %127 {offsets = [0, 768], sizes = [8, 256], strides = [1, 1]} : vector<8x1024xf32> to vector<8x256xf32>
      %143 = arith.negf %142 : vector<8x256xf32>
      %144 = math.exp %143 : vector<8x256xf32>
      %cst_113 = arith.constant 1.000000e+00 : f32
      %145 = vector.broadcast %cst_113 : f32 to vector<8x256xf32>
      %146 = arith.addf %145, %144 : vector<8x256xf32>
      %147 = arith.divf %145, %146 : vector<8x256xf32>
      %148 = arith.mulf %139, %arg27 : vector<8x256xf32>
      %149 = arith.mulf %133, %141 : vector<8x256xf32>
      %150 = arith.addf %148, %149 : vector<8x256xf32>
      %151 = math.tanh %150 : vector<8x256xf32>
      %152 = arith.mulf %147, %151 : vector<8x256xf32>
      %153 = arith.index_cast %123 : i32 to index
      %c0_114 = arith.constant 0 : index
      %154 = vector.load %arg24[%153, %c0_114] : memref<64x256xf32, #tpu.memory_space<vmem>>, vector<8x256xf32>
      tpu.vector_store %arg24[%153, %c0_114], %152 {strides = array<i32>} : memref<64x256xf32, #tpu.memory_space<vmem>>, vector<8x256xf32>,
      scf.yield %152, %150 : vector<8x256xf32>, vector<8x256xf32>
    }
    %c8_i32_51 = arith.constant 8 : i32
    %c0_52 = arith.constant 0 : index
    %c0_53 = arith.constant 0 : index
    %58 = vector.load %arg24[%c0_52, %c0_53] : memref<64x256xf32, #tpu.memory_space<vmem>>, vector<64x256xf32>
    %c0_54 = arith.constant 0 : index
    %c0_55 = arith.constant 0 : index
    %59 = vector.load %arg9[%c0_54, %c0_55] : memref<256x1024xf32, #tpu.memory_space<vmem>>, vector<256x1024xf32>
    %c0_56 = arith.constant 0 : index
    %c0_57 = arith.constant 0 : index
    %60 = vector.load %arg10[%c0_56, %c0_57] : memref<256x1024xf32, #tpu.memory_space<vmem>>, vector<256x1024xf32>
    %c0_58 = arith.constant 0 : index
    %c0_59 = arith.constant 0 : index
    %61 = vector.load %arg11[%c0_58, %c0_59] : memref<1x1024xf32, #tpu.memory_space<vmem>>, vector<1x1024xf32>
    %cst_60 = arith.constant dense<0.000000e+00> : vector<64x1024xf32>
    %62 = tpu.matmul %58, %59, %cst_60 {dimension_numbers = #tpu.dot_dimension_numbers<[1], [0], [0], [1], [0, 0, 1, 1], [], []>} : vector<64x256xf32>, vector<256x1024xf32>, vector<64x1024xf32> -> vector<64x1024xf32>
    %63 = vector.broadcast %61 : vector<1x1024xf32> to vector<64x1024xf32>
    %64 = arith.addf %62, %63 : vector<64x1024xf32>
    %c0_61 = arith.constant 0 : index
    %c0_62 = arith.constant 0 : index
    %65 = vector.load %arg23[%c0_61, %c0_62] : memref<64x1024xf32, #tpu.memory_space<vmem>>, vector<64x1024xf32>
    tpu.vector_store %arg23[%c0_61, %c0_62], %64 {strides = array<i32>} : memref<64x1024xf32, #tpu.memory_space<vmem>>, vector<64x1024xf32>,
    %cst_63 = arith.constant 0.000000e+00 : f32
    %66 = vector.broadcast %cst_63 : f32 to vector<8x256xf32>
    %c0_i32_64 = arith.constant 0 : i32
    %c8_i32_65 = arith.constant 8 : i32
    %67 = arith.addi %c0_i32_64, %c8_i32_65 : i32
    %c1_i32_66 = arith.constant 1 : i32
    %68:2 = scf.for %arg25 = %c0_i32_64 to %67 step %c1_i32_66 iter_args(%arg26 = %66, %arg27 = %66) -> (vector<8x256xf32>, vector<8x256xf32>)  : i32 {
      %c8_i32_108 = arith.constant 8 : i32
      %122 = arith.muli %arg25, %c8_i32_108 : i32
      %123 = tpu.assume_multiple %122, 8 : i32
      %124 = arith.index_cast %123 : i32 to index
      %c0_109 = arith.constant 0 : index
      %125 = vector.load %arg23[%124, %c0_109] : memref<64x1024xf32, #tpu.memory_space<vmem>>, vector<8x1024xf32>
      %cst_110 = arith.constant dense<0.000000e+00> : vector<8x1024xf32>
      %126 = tpu.matmul %arg26, %60, %cst_110 {dimension_numbers = #tpu.dot_dimension_numbers<[1], [0], [0], [1], [0, 0, 1, 1], [], []>} : vector<8x256xf32>, vector<256x1024xf32>, vector<8x1024xf32> -> vector<8x1024xf32>
      %127 = arith.addf %125, %126 : vector<8x1024xf32>
      %128 = vector.extract_strided_slice %127 {offsets = [0, 0], sizes = [8, 256], strides = [1, 1]} : vector<8x1024xf32> to vector<8x256xf32>
      %129 = arith.negf %128 : vector<8x256xf32>
      %130 = math.exp %129 : vector<8x256xf32>
      %cst_111 = arith.constant 1.000000e+00 : f32
      %131 = vector.broadcast %cst_111 : f32 to vector<8x256xf32>
      %132 = arith.addf %131, %130 : vector<8x256xf32>
      %133 = arith.divf %131, %132 : vector<8x256xf32>
      %134 = vector.extract_strided_slice %127 {offsets = [0, 256], sizes = [8, 256], strides = [1, 1]} : vector<8x1024xf32> to vector<8x256xf32>
      %135 = arith.negf %134 : vector<8x256xf32>
      %136 = math.exp %135 : vector<8x256xf32>
      %cst_112 = arith.constant 1.000000e+00 : f32
      %137 = vector.broadcast %cst_112 : f32 to vector<8x256xf32>
      %138 = arith.addf %137, %136 : vector<8x256xf32>
      %139 = arith.divf %137, %138 : vector<8x256xf32>
      %140 = vector.extract_strided_slice %127 {offsets = [0, 512], sizes = [8, 256], strides = [1, 1]} : vector<8x1024xf32> to vector<8x256xf32>
      %141 = math.tanh %140 : vector<8x256xf32>
      %142 = vector.extract_strided_slice %127 {offsets = [0, 768], sizes = [8, 256], strides = [1, 1]} : vector<8x1024xf32> to vector<8x256xf32>
      %143 = arith.negf %142 : vector<8x256xf32>
      %144 = math.exp %143 : vector<8x256xf32>
      %cst_113 = arith.constant 1.000000e+00 : f32
      %145 = vector.broadcast %cst_113 : f32 to vector<8x256xf32>
      %146 = arith.addf %145, %144 : vector<8x256xf32>
      %147 = arith.divf %145, %146 : vector<8x256xf32>
      %148 = arith.mulf %139, %arg27 : vector<8x256xf32>
      %149 = arith.mulf %133, %141 : vector<8x256xf32>
      %150 = arith.addf %148, %149 : vector<8x256xf32>
      %151 = math.tanh %150 : vector<8x256xf32>
      %152 = arith.mulf %147, %151 : vector<8x256xf32>
      %153 = arith.index_cast %123 : i32 to index
      %c0_114 = arith.constant 0 : index
      %154 = vector.load %arg24[%153, %c0_114] : memref<64x256xf32, #tpu.memory_space<vmem>>, vector<8x256xf32>
      tpu.vector_store %arg24[%153, %c0_114], %152 {strides = array<i32>} : memref<64x256xf32, #tpu.memory_space<vmem>>, vector<8x256xf32>,
      scf.yield %152, %150 : vector<8x256xf32>, vector<8x256xf32>
    }
    %c8_i32_67 = arith.constant 8 : i32
    %c0_68 = arith.constant 0 : index
    %c0_69 = arith.constant 0 : index
    %69 = vector.load %arg24[%c0_68, %c0_69] : memref<64x256xf32, #tpu.memory_space<vmem>>, vector<64x256xf32>
    %c0_70 = arith.constant 0 : index
    %c0_71 = arith.constant 0 : index
    %70 = vector.load %arg12[%c0_70, %c0_71] : memref<256x1024xf32, #tpu.memory_space<vmem>>, vector<256x1024xf32>
    %c0_72 = arith.constant 0 : index
    %c0_73 = arith.constant 0 : index
    %71 = vector.load %arg13[%c0_72, %c0_73] : memref<256x1024xf32, #tpu.memory_space<vmem>>, vector<256x1024xf32>
    %c0_74 = arith.constant 0 : index
    %c0_75 = arith.constant 0 : index
    %72 = vector.load %arg14[%c0_74, %c0_75] : memref<1x1024xf32, #tpu.memory_space<vmem>>, vector<1x1024xf32>
    %cst_76 = arith.constant dense<0.000000e+00> : vector<64x1024xf32>
    %73 = tpu.matmul %69, %70, %cst_76 {dimension_numbers = #tpu.dot_dimension_numbers<[1], [0], [0], [1], [0, 0, 1, 1], [], []>} : vector<64x256xf32>, vector<256x1024xf32>, vector<64x1024xf32> -> vector<64x1024xf32>
    %74 = vector.broadcast %72 : vector<1x1024xf32> to vector<64x1024xf32>
    %75 = arith.addf %73, %74 : vector<64x1024xf32>
    %c0_77 = arith.constant 0 : index
    %c0_78 = arith.constant 0 : index
    %76 = vector.load %arg23[%c0_77, %c0_78] : memref<64x1024xf32, #tpu.memory_space<vmem>>, vector<64x1024xf32>
    tpu.vector_store %arg23[%c0_77, %c0_78], %75 {strides = array<i32>} : memref<64x1024xf32, #tpu.memory_space<vmem>>, vector<64x1024xf32>,
    %cst_79 = arith.constant 0.000000e+00 : f32
    %77 = vector.broadcast %cst_79 : f32 to vector<8x256xf32>
    %c0_i32_80 = arith.constant 0 : i32
    %c8_i32_81 = arith.constant 8 : i32
    %78 = arith.addi %c0_i32_80, %c8_i32_81 : i32
    %c1_i32_82 = arith.constant 1 : i32
    %79:2 = scf.for %arg25 = %c0_i32_80 to %78 step %c1_i32_82 iter_args(%arg26 = %77, %arg27 = %77) -> (vector<8x256xf32>, vector<8x256xf32>)  : i32 {
      %c8_i32_108 = arith.constant 8 : i32
      %122 = arith.muli %arg25, %c8_i32_108 : i32
      %123 = tpu.assume_multiple %122, 8 : i32
      %124 = arith.index_cast %123 : i32 to index
      %c0_109 = arith.constant 0 : index
      %125 = vector.load %arg23[%124, %c0_109] : memref<64x1024xf32, #tpu.memory_space<vmem>>, vector<8x1024xf32>
      %cst_110 = arith.constant dense<0.000000e+00> : vector<8x1024xf32>
      %126 = tpu.matmul %arg26, %71, %cst_110 {dimension_numbers = #tpu.dot_dimension_numbers<[1], [0], [0], [1], [0, 0, 1, 1], [], []>} : vector<8x256xf32>, vector<256x1024xf32>, vector<8x1024xf32> -> vector<8x1024xf32>
      %127 = arith.addf %125, %126 : vector<8x1024xf32>
      %128 = vector.extract_strided_slice %127 {offsets = [0, 0], sizes = [8, 256], strides = [1, 1]} : vector<8x1024xf32> to vector<8x256xf32>
      %129 = arith.negf %128 : vector<8x256xf32>
      %130 = math.exp %129 : vector<8x256xf32>
      %cst_111 = arith.constant 1.000000e+00 : f32
      %131 = vector.broadcast %cst_111 : f32 to vector<8x256xf32>
      %132 = arith.addf %131, %130 : vector<8x256xf32>
      %133 = arith.divf %131, %132 : vector<8x256xf32>
      %134 = vector.extract_strided_slice %127 {offsets = [0, 256], sizes = [8, 256], strides = [1, 1]} : vector<8x1024xf32> to vector<8x256xf32>
      %135 = arith.negf %134 : vector<8x256xf32>
      %136 = math.exp %135 : vector<8x256xf32>
      %cst_112 = arith.constant 1.000000e+00 : f32
      %137 = vector.broadcast %cst_112 : f32 to vector<8x256xf32>
      %138 = arith.addf %137, %136 : vector<8x256xf32>
      %139 = arith.divf %137, %138 : vector<8x256xf32>
      %140 = vector.extract_strided_slice %127 {offsets = [0, 512], sizes = [8, 256], strides = [1, 1]} : vector<8x1024xf32> to vector<8x256xf32>
      %141 = math.tanh %140 : vector<8x256xf32>
      %142 = vector.extract_strided_slice %127 {offsets = [0, 768], sizes = [8, 256], strides = [1, 1]} : vector<8x1024xf32> to vector<8x256xf32>
      %143 = arith.negf %142 : vector<8x256xf32>
      %144 = math.exp %143 : vector<8x256xf32>
      %cst_113 = arith.constant 1.000000e+00 : f32
      %145 = vector.broadcast %cst_113 : f32 to vector<8x256xf32>
      %146 = arith.addf %145, %144 : vector<8x256xf32>
      %147 = arith.divf %145, %146 : vector<8x256xf32>
      %148 = arith.mulf %139, %arg27 : vector<8x256xf32>
      %149 = arith.mulf %133, %141 : vector<8x256xf32>
      %150 = arith.addf %148, %149 : vector<8x256xf32>
      %151 = math.tanh %150 : vector<8x256xf32>
      %152 = arith.mulf %147, %151 : vector<8x256xf32>
      %153 = arith.index_cast %123 : i32 to index
      %c0_114 = arith.constant 0 : index
      %154 = vector.load %arg24[%153, %c0_114] : memref<64x256xf32, #tpu.memory_space<vmem>>, vector<8x256xf32>
      tpu.vector_store %arg24[%153, %c0_114], %152 {strides = array<i32>} : memref<64x256xf32, #tpu.memory_space<vmem>>, vector<8x256xf32>,
      scf.yield %152, %150 : vector<8x256xf32>, vector<8x256xf32>
    }
    %c8_i32_83 = arith.constant 8 : i32
    %c0_84 = arith.constant 0 : index
    %c0_85 = arith.constant 0 : index
    %80 = vector.load %arg24[%c0_84, %c0_85] : memref<64x256xf32, #tpu.memory_space<vmem>>, vector<64x256xf32>
    %c0_86 = arith.constant 0 : index
    %c0_87 = arith.constant 0 : index
    %81 = vector.load %arg15[%c0_86, %c0_87] : memref<1x256xf32, #tpu.memory_space<vmem>>, vector<1x256xf32>
    %82 = vector.broadcast %81 : vector<1x256xf32> to vector<64x256xf32>
    %83 = arith.mulf %80, %82 : vector<64x256xf32>
    %cst_88 = arith.constant dense<0.000000e+00> : vector<64xf32>
    %84 = vector.multi_reduction <add>, %83, %cst_88 [1] : vector<64x256xf32> to vector<64xf32>
    %85 = vector.shape_cast %84 : vector<64xf32> to vector<64x1xf32>
    %c0_89 = arith.constant 0 : index
    %c0_90 = arith.constant 0 : index
    %86 = vector.load %arg16[%c0_89, %c0_90] : memref<1x1xf32, #tpu.memory_space<vmem>>, vector<1x1xf32>
    %87 = vector.broadcast %86 : vector<1x1xf32> to vector<64x1xf32>
    %88 = arith.addf %85, %87 : vector<64x1xf32>
    %cst_91 = arith.constant dense<0xFF800000> : vector<1xf32>
    %89 = vector.multi_reduction <maximumf>, %88, %cst_91 [0] : vector<64x1xf32> to vector<1xf32>
    %90 = vector.shape_cast %89 : vector<1xf32> to vector<1x1xf32>
    %91 = vector.broadcast %90 : vector<1x1xf32> to vector<64x1xf32>
    %92 = arith.subf %88, %91 : vector<64x1xf32>
    %93 = math.exp %92 : vector<64x1xf32>
    %94 = tpu.iota {dimensions = array<i32: 1>} : vector<8x64xi32>
    %95 = tpu.iota {dimensions = array<i32: 0>} : vector<8x64xi32>
    %c7_i32 = arith.constant 7 : i32
    %96 = vector.broadcast %c7_i32 : i32 to vector<8x64xi32>
    %97 = arith.andi %94, %96 : vector<8x64xi32>
    %98 = arith.cmpi eq, %97, %95 : vector<8x64xi32>
    %99 = arith.extui %98 : vector<8x64xi1> to vector<8x64xi32>
    %100 = arith.sitofp %99 : vector<8x64xi32> to vector<8x64xf32>
    %101 = vector.broadcast %93 : vector<64x1xf32> to vector<64x256xf32>
    %102 = arith.mulf %101, %80 : vector<64x256xf32>
    %cst_92 = arith.constant dense<0.000000e+00> : vector<8x256xf32>
    %103 = tpu.matmul %100, %102, %cst_92 {dimension_numbers = #tpu.dot_dimension_numbers<[1], [0], [0], [1], [0, 0, 1, 1], [], []>} : vector<8x64xf32>, vector<64x256xf32>, vector<8x256xf32> -> vector<8x256xf32>
    %cst_93 = arith.constant dense<0.000000e+00> : vector<8x1xf32>
    %104 = tpu.matmul %100, %93, %cst_93 {dimension_numbers = #tpu.dot_dimension_numbers<[1], [0], [0], [1], [0, 0, 1, 1], [], []>} : vector<8x64xf32>, vector<64x1xf32>, vector<8x1xf32> -> vector<8x1xf32>
    %105 = vector.broadcast %104 : vector<8x1xf32> to vector<8x256xf32>
    %106 = arith.divf %103, %105 : vector<8x256xf32>
    %c0_94 = arith.constant 0 : index
    %c0_95 = arith.constant 0 : index
    %107 = vector.load %arg17[%c0_94, %c0_95] : memref<256x128xf32, #tpu.memory_space<vmem>>, vector<256x128xf32>
    %cst_96 = arith.constant dense<0.000000e+00> : vector<8x128xf32>
    %108 = tpu.matmul %106, %107, %cst_96 {dimension_numbers = #tpu.dot_dimension_numbers<[1], [0], [0], [1], [0, 0, 1, 1], [], []>} : vector<8x256xf32>, vector<256x128xf32>, vector<8x128xf32> -> vector<8x128xf32>
    %c0_97 = arith.constant 0 : index
    %c0_98 = arith.constant 0 : index
    %109 = vector.load %arg18[%c0_97, %c0_98] : memref<1x128xf32, #tpu.memory_space<vmem>>, vector<1x128xf32>
    %110 = vector.broadcast %109 : vector<1x128xf32> to vector<8x128xf32>
    %111 = arith.addf %108, %110 : vector<8x128xf32>
    %cst_99 = arith.constant 0.000000e+00 : f32
    %112 = vector.broadcast %cst_99 : f32 to vector<8x128xf32>
    %113 = arith.maximumf %111, %112 : vector<8x128xf32>
    %c0_100 = arith.constant 0 : index
    %c0_101 = arith.constant 0 : index
    %114 = vector.load %arg19[%c0_100, %c0_101] : memref<128x2xf32, #tpu.memory_space<vmem>>, vector<128x2xf32>
    %cst_102 = arith.constant dense<0.000000e+00> : vector<8x2xf32>
    %115 = tpu.matmul %113, %114, %cst_102 {dimension_numbers = #tpu.dot_dimension_numbers<[1], [0], [0], [1], [0, 0, 1, 1], [], []>} : vector<8x128xf32>, vector<128x2xf32>, vector<8x2xf32> -> vector<8x2xf32>
    %c0_103 = arith.constant 0 : index
    %c0_104 = arith.constant 0 : index
    %116 = vector.load %arg20[%c0_103, %c0_104] : memref<1x2xf32, #tpu.memory_space<vmem>>, vector<1x2xf32>
    %117 = vector.broadcast %116 : vector<1x2xf32> to vector<8x2xf32>
    %118 = arith.addf %115, %117 : vector<8x2xf32>
    %c0_105 = arith.constant 0 : index
    %c0_106 = arith.constant 0 : index
    %c0_107 = arith.constant 0 : index
    %119 = vector.load %arg21[%c0_105, %c0_106, %c0_107] : memref<1x8x2xf32, #tpu.memory_space<vmem>>, vector<1x8x2xf32>
    %120 = vector.shape_cast %119 : vector<1x8x2xf32> to vector<8x2xf32>
    %121 = vector.shape_cast %118 : vector<8x2xf32> to vector<1x8x2xf32>
    tpu.vector_store %arg21[%c0_105, %c0_106, %c0_107], %121 {strides = array<i32>} : memref<1x8x2xf32, #tpu.memory_space<vmem>>, vector<1x8x2xf32>,
    return
  }
  func.func @transform_0(%arg0: i32) -> (i32, i32, i32) {
    %c0_i32 = arith.constant 0 : i32
    %c0_i32_0 = arith.constant 0 : i32
    %c0_i32_1 = arith.constant 0 : i32
    return %arg0, %c0_i32, %c0_i32_0 : i32, i32, i32
  }
  func.func @transform_1(%arg0: i32) -> (i32, i32, i32) {
    %c0_i32 = arith.constant 0 : i32
    %c0_i32_0 = arith.constant 0 : i32
    %c0_i32_1 = arith.constant 0 : i32
    %c0_i32_2 = arith.constant 0 : i32
    return %c0_i32, %c0_i32_0, %c0_i32_1 : i32, i32, i32
  }
  func.func @transform_2(%arg0: i32) -> (i32, i32) {
    %c0_i32 = arith.constant 0 : i32
    %c0_i32_0 = arith.constant 0 : i32
    %c0_i32_1 = arith.constant 0 : i32
    return %c0_i32, %c0_i32_0 : i32, i32
  }
  func.func @transform_3(%arg0: i32) -> (i32, i32, i32) {
    %c0_i32 = arith.constant 0 : i32
    %c0_i32_0 = arith.constant 0 : i32
    %c0_i32_1 = arith.constant 0 : i32
    %c0_i32_2 = arith.constant 0 : i32
    return %c0_i32, %c0_i32_0, %c0_i32_1 : i32, i32, i32
  }
  func.func @transform_4(%arg0: i32) -> (i32, i32) {
    %c0_i32 = arith.constant 0 : i32
    %c0_i32_0 = arith.constant 0 : i32
    %c0_i32_1 = arith.constant 0 : i32
    return %c0_i32, %c0_i32_0 : i32, i32
  }
  func.func @transform_5(%arg0: i32) -> (i32, i32) {
    %c0_i32 = arith.constant 0 : i32
    %c0_i32_0 = arith.constant 0 : i32
    %c0_i32_1 = arith.constant 0 : i32
    return %c0_i32, %c0_i32_0 : i32, i32
  }
  func.func @transform_6(%arg0: i32) -> (i32, i32) {
    %c0_i32 = arith.constant 0 : i32
    %c0_i32_0 = arith.constant 0 : i32
    %c0_i32_1 = arith.constant 0 : i32
    return %c0_i32, %c0_i32_0 : i32, i32
  }
  func.func @transform_7(%arg0: i32) -> (i32, i32) {
    %c0_i32 = arith.constant 0 : i32
    %c0_i32_0 = arith.constant 0 : i32
    %c0_i32_1 = arith.constant 0 : i32
    return %c0_i32, %c0_i32_0 : i32, i32
  }
  func.func @transform_8(%arg0: i32) -> (i32, i32) {
    %c0_i32 = arith.constant 0 : i32
    %c0_i32_0 = arith.constant 0 : i32
    %c0_i32_1 = arith.constant 0 : i32
    return %c0_i32, %c0_i32_0 : i32, i32
  }
  func.func @transform_9(%arg0: i32) -> (i32, i32) {
    %c0_i32 = arith.constant 0 : i32
    %c0_i32_0 = arith.constant 0 : i32
    %c0_i32_1 = arith.constant 0 : i32
    return %c0_i32, %c0_i32_0 : i32, i32
  }
  func.func @transform_10(%arg0: i32) -> (i32, i32) {
    %c0_i32 = arith.constant 0 : i32
    %c0_i32_0 = arith.constant 0 : i32
    %c0_i32_1 = arith.constant 0 : i32
    return %c0_i32, %c0_i32_0 : i32, i32
  }
  func.func @transform_11(%arg0: i32) -> (i32, i32) {
    %c0_i32 = arith.constant 0 : i32
    %c0_i32_0 = arith.constant 0 : i32
    %c0_i32_1 = arith.constant 0 : i32
    return %c0_i32, %c0_i32_0 : i32, i32
  }
  func.func @transform_12(%arg0: i32) -> (i32, i32) {
    %c0_i32 = arith.constant 0 : i32
    %c0_i32_0 = arith.constant 0 : i32
    %c0_i32_1 = arith.constant 0 : i32
    return %c0_i32, %c0_i32_0 : i32, i32
  }
  func.func @transform_13(%arg0: i32) -> (i32, i32) {
    %c0_i32 = arith.constant 0 : i32
    %c0_i32_0 = arith.constant 0 : i32
    %c0_i32_1 = arith.constant 0 : i32
    return %c0_i32, %c0_i32_0 : i32, i32
  }
  func.func @transform_14(%arg0: i32) -> (i32, i32) {
    %c0_i32 = arith.constant 0 : i32
    %c0_i32_0 = arith.constant 0 : i32
    %c0_i32_1 = arith.constant 0 : i32
    return %c0_i32, %c0_i32_0 : i32, i32
  }
  func.func @transform_15(%arg0: i32) -> (i32, i32) {
    %c0_i32 = arith.constant 0 : i32
    %c0_i32_0 = arith.constant 0 : i32
    %c0_i32_1 = arith.constant 0 : i32
    return %c0_i32, %c0_i32_0 : i32, i32
  }
  func.func @transform_16(%arg0: i32) -> (i32, i32) {
    %c0_i32 = arith.constant 0 : i32
    %c0_i32_0 = arith.constant 0 : i32
    %c0_i32_1 = arith.constant 0 : i32
    return %c0_i32, %c0_i32_0 : i32, i32
  }
  func.func @transform_17(%arg0: i32) -> (i32, i32) {
    %c0_i32 = arith.constant 0 : i32
    %c0_i32_0 = arith.constant 0 : i32
    %c0_i32_1 = arith.constant 0 : i32
    return %c0_i32, %c0_i32_0 : i32, i32
  }
  func.func @transform_18(%arg0: i32) -> (i32, i32) {
    %c0_i32 = arith.constant 0 : i32
    %c0_i32_0 = arith.constant 0 : i32
    %c0_i32_1 = arith.constant 0 : i32
    return %c0_i32, %c0_i32_0 : i32, i32
  }
  func.func @transform_19(%arg0: i32) -> (i32, i32) {
    %c0_i32 = arith.constant 0 : i32
    %c0_i32_0 = arith.constant 0 : i32
    %c0_i32_1 = arith.constant 0 : i32
    return %c0_i32, %c0_i32_0 : i32, i32
  }
  func.func @transform_20(%arg0: i32) -> (i32, i32, i32) {
    %c0_i32 = arith.constant 0 : i32
    %c0_i32_0 = arith.constant 0 : i32
    %c0_i32_1 = arith.constant 0 : i32
    return %arg0, %c0_i32, %c0_i32_0 : i32, i32, i32
  }
}

</mosaic_0001>

<llo_original>
// kernel: cnn_lstm_forward.1
$region0: #{cnn_lstm_forward.1}
  #allocation0 [shape = 'u32[]', space=smem, size = 0x4, offset = 0x4, fixed_abs, tag = 'smem constant byte address 0x4 - core index']
  #allocation1 [shape = 'u32[144,128]{1,0:T(1,128)}', space=vmem, size = 0x12000, scoped, tag = 'internal scratch']
  #allocation2 [shape = 'f32[80,64]{1,0:T(8,128)}', space=vmem, size = 0xa000, scoped, tag = 'scratch operand']
  #allocation3 [shape = 'f32[64,1024]{1,0:T(8,128)}', space=vmem, size = 0x40000, scoped, tag = 'scratch operand']
  #allocation4 [shape = 'f32[64,256]{1,0:T(8,128)}', space=vmem, size = 0x10000, scoped, tag = 'scratch operand']
  #allocation5 [shape = 'f32[1,1]{1,0:T(1,128)S(1)}', space=vmem, size = 0x200, scoped, tag = 'scoped memory for cnn_lstm_forward.1']
  %s0 = inlined_call_operand.vmem [shape: f32[1,80,4], index: 0, kind: input, shape index: {}]
  %s1 = inlined_call_operand.vmem [shape: f32[3,4,64], index: 1, kind: input, shape index: {}]
  %s2 = inlined_call_operand.vmem [shape: f32[1,64], index: 2, kind: input, shape index: {}]
  %s3 = inlined_call_operand.hbm [shape: f32[3,64,128], index: 3, kind: input, shape index: {}]
  %s4 = inlined_call_operand.vmem [shape: f32[1,128], index: 4, kind: input, shape index: {}]
  %s5 = inlined_call_operand.hbm [shape: f32[128,1024], index: 5, kind: input, shape index: {}]
  %s6 = inlined_call_operand.hbm [shape: f32[256,1024], index: 6, kind: input, shape index: {}]
  %s7 = inlined_call_operand.vmem [shape: f32[1,1024], index: 7, kind: input, shape index: {}]
  %s8 = inlined_call_operand.hbm [shape: f32[256,1024], index: 8, kind: input, shape index: {}]
  %s9 = inlined_call_operand.hbm [shape: f32[256,1024], index: 9, kind: input, shape index: {}]
  %s10 = inlined_call_operand.vmem [shape: f32[1,1024], index: 10, kind: input, shape index: {}]
  %s11 = inlined_call_operand.hbm [shape: f32[256,1024], index: 11, kind: input, shape index: {}]
  %s12 = inlined_call_operand.hbm [shape: f32[256,1024], index: 12, kind: input, shape index: {}]
  %s13 = inlined_call_operand.vmem [shape: f32[1,1024], index: 13, kind: input, shape index: {}]
  %s14 = inlined_call_operand.vmem [shape: f32[1,256], index: 14, kind: input, shape index: {}]
  %s15 = inlined_call_operand.<no memory space> [shape: f32[1,1], index: 15, kind: input, shape index: {}]
  %s16 = inlined_call_operand.hbm [shape: f32[256,128], index: 16, kind: input, shape index: {}]
  %s17 = inlined_call_operand.vmem [shape: f32[1,128], index: 17, kind: input, shape index: {}]
  %s18 = inlined_call_operand.vmem [shape: f32[128,2], index: 18, kind: input, shape index: {}]
  %s19 = inlined_call_operand.vmem [shape: f32[1,2], index: 19, kind: input, shape index: {}]
  %s20 = inlined_call_operand.vmem [shape: f32[1,8,2], index: 20, kind: output, shape index: {}]
  %s21 = sld [smem:[#allocation0]]
  $region143: #{cnn_lstm_forward.1} parent=0
    _
  %s23 = ssub.s32 1, %s21
  %s24 = scalar_select 0, %s23, %s21
  %v25 = vstv %s15
  %26 = vst [vmem:[#allocation5] sm:$0x1] %v25
  $region1: #{cnn_lstm_forward.1} parent=0
    #allocation6 [shape = 'u8[98304]{0}', space=vmem, size = 0x18000, scoped, tag = 'input window, operand 3, single buffered']
    #allocation7 [shape = 's32[1]{0}', space=sflag, size = 0x4, scoped, tag = 'scoped memory for cnn_lstm_forward.1']
    #allocation8 [shape = 'u8[524288]{0}', space=vmem, size = 0x80000, scoped, tag = 'input window, operand 5, single buffered']
    #allocation9 [shape = 's32[1]{0}', space=sflag, size = 0x4, scoped, tag = 'scoped memory for cnn_lstm_forward.1']
    #allocation10 [shape = 'u8[1048576]{0}', space=vmem, size = 0x100000, scoped, tag = 'input window, operand 6, single buffered']
    #allocation11 [shape = 'u8[1048576]{0}', space=vmem, size = 0x100000, scoped, tag = 'input window, operand 8, single buffered']
    #allocation12 [shape = 's32[1]{0}', space=sflag, size = 0x4, scoped, tag = 'scoped memory for cnn_lstm_forward.1']
    #allocation13 [shape = 'u8[1048576]{0}', space=vmem, size = 0x100000, scoped, tag = 'input window, operand 9, single buffered']
    #allocation14 [shape = 'u8[1048576]{0}', space=vmem, size = 0x100000, scoped, tag = 'input window, operand 11, single buffered']
    #allocation15 [shape = 's32[1]{0}', space=sflag, size = 0x4, scoped, tag = 'scoped memory for cnn_lstm_forward.1']
    #allocation16 [shape = 'u8[1048576]{0}', space=vmem, size = 0x100000, scoped, tag = 'input window, operand 12, single buffered']
    #allocation17 [shape = 'u8[131072]{0}', space=vmem, size = 0x20000, scoped, tag = 'input window, operand 16, single buffered']
    #allocation18 [shape = 's32[1]{0}', space=sflag, size = 0x4, scoped, tag = 'scoped memory for cnn_lstm_forward.1']
    %27 = vsyncpa [#allocation7], 0
    %28 = vsyncpa [#allocation9], 0
    %29 = vsyncpa [#allocation12], 0
    %30 = vsyncpa [#allocation15], 0
    %31 = vsyncpa [#allocation18], 0
    // Predicated region
    $region2: #{cnn_lstm_forward.1} parent=1 // pred_check
      _
    $region3: #{cnn_lstm_forward.1} parent=1 // pred_check_branch
      %33 = sbr.rel (0) target = $region5
    $region4: #{cnn_lstm_forward.1} parent=1 // pred_region
      _
    $region5: #{cnn_lstm_forward.1} parent=1 // pred_fallthru
      _
    // Predicated region
    $region6: #{cnn_lstm_forward.1} parent=1 // pred_check
      _
    $region7: #{cnn_lstm_forward.1} parent=1 // pred_check_branch
      %35 = sbr.rel (0) target = $region9
    $region8: #{cnn_lstm_forward.1} parent=1 // pred_region
      _
    $region9: #{cnn_lstm_forward.1} parent=1 // pred_fallthru
      _
    // Predicated region
    $region10: #{cnn_lstm_forward.1} parent=1 // pred_check
      _
    $region11: #{cnn_lstm_forward.1} parent=1 // pred_check_branch
      %37 = sbr.rel (0) target = $region13
    $region12: #{cnn_lstm_forward.1} parent=1 // pred_region
      _
    $region13: #{cnn_lstm_forward.1} parent=1 // pred_fallthru
      _
    // Predicated region
    $region14: #{cnn_lstm_forward.1} parent=1 // pred_check
      _
    $region15: #{cnn_lstm_forward.1} parent=1 // pred_check_branch
      %39 = sbr.rel (0) target = $region17
    $region16: #{cnn_lstm_forward.1} parent=1 // pred_region
      %s41 = ssub.s32 3072, 3072
      %42 = vsyncadd [#allocation7], %s41
      %s43 = sshll.u32 [#allocation6], 4
      %s44 = int_to_ptr.vmem [resolvable:$true] %s43
      %49 = dma.hbm_to_vmem [thread:$0]  %s3, 3072, %s44, [#allocation7], 128, 128, 8
    $region17: #{cnn_lstm_forward.1} parent=1 // pred_fallthru
      _
    // Predicated region
    $region18: #{cnn_lstm_forward.1} parent=1 // pred_check
      _
    $region19: #{cnn_lstm_forward.1} parent=1 // pred_check_branch
      %51 = sbr.rel (0) target = $region21
    $region20: #{cnn_lstm_forward.1} parent=1 // pred_region
      _
    $region21: #{cnn_lstm_forward.1} parent=1 // pred_fallthru
      _
    // Predicated region
    $region22: #{cnn_lstm_forward.1} parent=1 // pred_check
      _
    $region23: #{cnn_lstm_forward.1} parent=1 // pred_check_branch
      %53 = sbr.rel (0) target = $region25
    $region24: #{cnn_lstm_forward.1} parent=1 // pred_region
      %s55 = ssub.s32 16384, 16384
      %56 = vsyncadd [#allocation9], %s55
      %s57 = sshll.u32 [#allocation8], 4
      %s58 = int_to_ptr.vmem [resolvable:$true] %s57
      %63 = dma.hbm_to_vmem [thread:$0]  %s5, 16384, %s58, [#allocation9], 1024, 1024, 64
    $region25: #{cnn_lstm_forward.1} parent=1 // pred_fallthru
      _
    // Predicated region
    $region26: #{cnn_lstm_forward.1} parent=1 // pred_check
      _
    $region27: #{cnn_lstm_forward.1} parent=1 // pred_check_branch
      %65 = sbr.rel (0) target = $region29
    $region28: #{cnn_lstm_forward.1} parent=1 // pred_region
      %s67 = ssub.s32 32768, 32768
      %68 = vsyncadd [#allocation9], %s67
      %s69 = sshll.u32 [#allocation10], 4
      %s70 = int_to_ptr.vmem [resolvable:$true] %s69
      %75 = dma.hbm_to_vmem [thread:$0]  %s6, 32768, %s70, [#allocation9], 1024, 1024, 64
    $region29: #{cnn_lstm_forward.1} parent=1 // pred_fallthru
      _
    // Predicated region
    $region30: #{cnn_lstm_forward.1} parent=1 // pred_check
      _
    $region31: #{cnn_lstm_forward.1} parent=1 // pred_check_branch
      %77 = sbr.rel (0) target = $region33
    $region32: #{cnn_lstm_forward.1} parent=1 // pred_region
      _
    $region33: #{cnn_lstm_forward.1} parent=1 // pred_fallthru
      _
    // Predicated region
    $region34: #{cnn_lstm_forward.1} parent=1 // pred_check
      _
    $region35: #{cnn_lstm_forward.1} parent=1 // pred_check_branch
      %79 = sbr.rel (0) target = $region37
    $region36: #{cnn_lstm_forward.1} parent=1 // pred_region
      %s81 = ssub.s32 32768, 32768
      %82 = vsyncadd [#allocation12], %s81
      %s83 = sshll.u32 [#allocation11], 4
      %s84 = int_to_ptr.vmem [resolvable:$true] %s83
      %89 = dma.hbm_to_vmem [thread:$0]  %s8, 32768, %s84, [#allocation12], 1024, 1024, 64
    $region37: #{cnn_lstm_forward.1} parent=1 // pred_fallthru
      _
    // Predicated region
    $region38: #{cnn_lstm_forward.1} parent=1 // pred_check
      _
    $region39: #{cnn_lstm_forward.1} parent=1 // pred_check_branch
      %91 = sbr.rel (0) target = $region41
    $region40: #{cnn_lstm_forward.1} parent=1 // pred_region
      %s93 = ssub.s32 32768, 32768
      %94 = vsyncadd [#allocation12], %s93
      %s95 = sshll.u32 [#allocation13], 4
      %s96 = int_to_ptr.vmem [resolvable:$true] %s95
      %101 = dma.hbm_to_vmem [thread:$0]  %s9, 32768, %s96, [#allocation12], 1024, 1024, 64
    $region41: #{cnn_lstm_forward.1} parent=1 // pred_fallthru
      _
    // Predicated region
    $region42: #{cnn_lstm_forward.1} parent=1 // pred_check
      _
    $region43: #{cnn_lstm_forward.1} parent=1 // pred_check_branch
      %103 = sbr.rel (0) target = $region45
    $region44: #{cnn_lstm_forward.1} parent=1 // pred_region
      _
    $region45: #{cnn_lstm_forward.1} parent=1 // pred_fallthru
      _
    // Predicated region
    $region46: #{cnn_lstm_forward.1} parent=1 // pred_check
      _
    $region47: #{cnn_lstm_forward.1} parent=1 // pred_check_branch
      %105 = sbr.rel (0) target = $region49
    $region48: #{cnn_lstm_forward.1} parent=1 // pred_region
      %s107 = ssub.s32 32768, 32768
      %108 = vsyncadd [#allocation15], %s107
      %s109 = sshll.u32 [#allocation14], 4
      %s110 = int_to_ptr.vmem [resolvable:$true] %s109
      %115 = dma.hbm_to_vmem [thread:$0]  %s11, 32768, %s110, [#allocation15], 1024, 1024, 64
    $region49: #{cnn_lstm_forward.1} parent=1 // pred_fallthru
      _
    // Predicated region
    $region50: #{cnn_lstm_forward.1} parent=1 // pred_check
      _
    $region51: #{cnn_lstm_forward.1} parent=1 // pred_check_branch
      %117 = sbr.rel (0) target = $region53
    $region52: #{cnn_lstm_forward.1} parent=1 // pred_region
      %s119 = ssub.s32 32768, 32768
      %120 = vsyncadd [#allocation15], %s119
      %s121 = sshll.u32 [#allocation16], 4
      %s122 = int_to_ptr.vmem [resolvable:$true] %s121
      %127 = dma.hbm_to_vmem [thread:$0]  %s12, 32768, %s122, [#allocation15], 1024, 1024, 64
    $region53: #{cnn_lstm_forward.1} parent=1 // pred_fallthru
      _
    // Predicated region
    $region54: #{cnn_lstm_forward.1} parent=1 // pred_check
      _
    $region55: #{cnn_lstm_forward.1} parent=1 // pred_check_branch
      %129 = sbr.rel (0) target = $region57
    $region56: #{cnn_lstm_forward.1} parent=1 // pred_region
      _
    $region57: #{cnn_lstm_forward.1} parent=1 // pred_fallthru
      _
    // Predicated region
    $region58: #{cnn_lstm_forward.1} parent=1 // pred_check
      _
    $region59: #{cnn_lstm_forward.1} parent=1 // pred_check_branch
      %131 = sbr.rel (0) target = $region61
    $region60: #{cnn_lstm_forward.1} parent=1 // pred_region
      _
    $region61: #{cnn_lstm_forward.1} parent=1 // pred_fallthru
      _
    // Predicated region
    $region62: #{cnn_lstm_forward.1} parent=1 // pred_check
      _
    $region63: #{cnn_lstm_forward.1} parent=1 // pred_check_branch
      %133 = sbr.rel (0) target = $region65
    $region64: #{cnn_lstm_forward.1} parent=1 // pred_region
      _
    $region65: #{cnn_lstm_forward.1} parent=1 // pred_fallthru
      _
    // Predicated region
    $region66: #{cnn_lstm_forward.1} parent=1 // pred_check
      _
    $region67: #{cnn_lstm_forward.1} parent=1 // pred_check_branch
      %135 = sbr.rel (0) target = $region69
    $region68: #{cnn_lstm_forward.1} parent=1 // pred_region
      %s137 = ssub.s32 4096, 4096
      %138 = vsyncadd [#allocation18], %s137
      %s139 = sshll.u32 [#allocation17], 4
      %s140 = int_to_ptr.vmem [resolvable:$true] %s139
      %145 = dma.hbm_to_vmem [thread:$0]  %s16, 4096, %s140, [#allocation18], 128, 128, 8
    $region69: #{cnn_lstm_forward.1} parent=1 // pred_fallthru
      _
    // Predicated region
    $region70: #{cnn_lstm_forward.1} parent=1 // pred_check
      _
    $region71: #{cnn_lstm_forward.1} parent=1 // pred_check_branch
      %147 = sbr.rel (0) target = $region73
    $region72: #{cnn_lstm_forward.1} parent=1 // pred_region
      _
    $region73: #{cnn_lstm_forward.1} parent=1 // pred_fallthru
      _
    // Predicated region
    $region74: #{cnn_lstm_forward.1} parent=1 // pred_check
      _
    $region75: #{cnn_lstm_forward.1} parent=1 // pred_check_branch
      %149 = sbr.rel (0) target = $region77
    $region76: #{cnn_lstm_forward.1} parent=1 // pred_region
      _
    $region77: #{cnn_lstm_forward.1} parent=1 // pred_fallthru
      _
    // Predicated region
    $region78: #{cnn_lstm_forward.1} parent=1 // pred_check
      _
    $region79: #{cnn_lstm_forward.1} parent=1 // pred_check_branch
      %151 = sbr.rel (0) target = $region81
    $region80: #{cnn_lstm_forward.1} parent=1 // pred_region
      _
    $region81: #{cnn_lstm_forward.1} parent=1 // pred_fallthru
      _
    // Predicated region
    $region82: #{cnn_lstm_forward.1} parent=1 // pred_check
      _
    $region83: #{cnn_lstm_forward.1} parent=1 // pred_check_branch
      %153 = sbr.rel (0) target = $region85
    $region84: #{cnn_lstm_forward.1} parent=1 // pred_region
      %154 = dma.done [#allocation7], 3072
    $region85: #{cnn_lstm_forward.1} parent=1 // pred_fallthru
      _
    // Predicated region
    $region86: #{cnn_lstm_forward.1} parent=1 // pred_check
      _
    $region87: #{cnn_lstm_forward.1} parent=1 // pred_check_branch
      %156 = sbr.rel (0) target = $region89
    $region88: #{cnn_lstm_forward.1} parent=1 // pred_region
      %157 = dma.done [#allocation9], 16384
    $region89: #{cnn_lstm_forward.1} parent=1 // pred_fallthru
      _
    // Predicated region
    $region90: #{cnn_lstm_forward.1} parent=1 // pred_check
      _
    $region91: #{cnn_lstm_forward.1} parent=1 // pred_check_branch
      %159 = sbr.rel (0) target = $region93
    $region92: #{cnn_lstm_forward.1} parent=1 // pred_region
      %160 = dma.done [#allocation9], 32768
    $region93: #{cnn_lstm_forward.1} parent=1 // pred_fallthru
      _
    // Predicated region
    $region94: #{cnn_lstm_forward.1} parent=1 // pred_check
      _
    $region95: #{cnn_lstm_forward.1} parent=1 // pred_check_branch
      %162 = sbr.rel (0) target = $region97
    $region96: #{cnn_lstm_forward.1} parent=1 // pred_region
      %163 = dma.done [#allocation12], 32768
    $region97: #{cnn_lstm_forward.1} parent=1 // pred_fallthru
      _
    // Predicated region
    $region98: #{cnn_lstm_forward.1} parent=1 // pred_check
      _
    $region99: #{cnn_lstm_forward.1} parent=1 // pred_check_branch
      %165 = sbr.rel (0) target = $region101
    $region100: #{cnn_lstm_forward.1} parent=1 // pred_region
      %166 = dma.done [#allocation12], 32768
    $region101: #{cnn_lstm_forward.1} parent=1 // pred_fallthru
      _
    // Predicated region
    $region102: #{cnn_lstm_forward.1} parent=1 // pred_check
      _
    $region103: #{cnn_lstm_forward.1} parent=1 // pred_check_branch
      %168 = sbr.rel (0) target = $region105
    $region104: #{cnn_lstm_forward.1} parent=1 // pred_region
      %169 = dma.done [#allocation15], 32768
    $region105: #{cnn_lstm_forward.1} parent=1 // pred_fallthru
      _
    // Predicated region
    $region106: #{cnn_lstm_forward.1} parent=1 // pred_check
      _
    $region107: #{cnn_lstm_forward.1} parent=1 // pred_check_branch
      %171 = sbr.rel (0) target = $region109
    $region108: #{cnn_lstm_forward.1} parent=1 // pred_region
      %172 = dma.done [#allocation15], 32768
    $region109: #{cnn_lstm_forward.1} parent=1 // pred_fallthru
      _
    // Predicated region
    $region110: #{cnn_lstm_forward.1} parent=1 // pred_check
      _
    $region111: #{cnn_lstm_forward.1} parent=1 // pred_check_branch
      %174 = sbr.rel (0) target = $region113
    $region112: #{cnn_lstm_forward.1} parent=1 // pred_region
      %175 = dma.done [#allocation18], 4096
    $region113: #{cnn_lstm_forward.1} parent=1 // pred_fallthru
      _
    %v176 = vld [vmem:[%s0] sm:$0xff]
    %v177 = vld [vmem:[%s0 + $0x8] sm:$0xff]
    %v178 = vld [vmem:[%s0 + $0x10] sm:$0xff]
    %v179 = vld [vmem:[%s0 + $0x18] sm:$0xff]
    %v180 = vld [vmem:[%s0 + $0x20] sm:$0xff]
    %v181 = vld [vmem:[%s0 + $0x28] sm:$0xff]
    %v182 = vld [vmem:[%s0 + $0x30] sm:$0xff]
    %v183 = vld [vmem:[%s0 + $0x38] sm:$0xff]
    %v184 = vld [vmem:[%s0 + $0x40] sm:$0xff]
    %v185 = vld [vmem:[%s0 + $0x48] sm:$0xff]
    %v186 = vld [vmem:[%s1] sm:$0xf]
    %s187 = scalar_lea.vmem %s1, 4
    %v188 = vld [vmem:[%s187] sm:$0xf]
    %vm189 = vcmask 31744
    %v191 = vsel %vm189, %v177, 0
    %v194 = vsel %vm189, %v178, 0
    %v197 = vsel %vm189, %v179, 0
    %v200 = vsel %vm189, %v180, 0
    %v203 = vsel %vm189, %v181, 0
    %v206 = vsel %vm189, %v182, 0
    %v209 = vsel %vm189, %v183, 0
    %v212 = vsel %vm189, %v184, 0
    %vm214 = vcmask 1043456
    %v216 = vsel %vm214, %v188, 0
    %218 = vmatprep.subr.mxu0 0.0
    %219 = vmatpush1.msra.mxu0 %v216
    %220 = vmatprep.subr.mxu0 0.0
    %221 = vmatpush1.msra.mxu0 0.0
    %222 = vmatprep.subr.mxu0 0.0
    %223 = vmatpush1.msra.mxu0 0.0
    %224 = vmatprep.subr.mxu0 0.0
    %225 = vmatpush1.msra.mxu0 0.0
    %226 = vmatprep.subr.mxu0 0.0
    %227 = vmatpush1.msra.mxu0 0.0
    %228 = vmatprep.subr.mxu0 0.0
    %229 = vmatpush1.msra.mxu0 0.0
    %230 = vmatprep.subr.mxu0 0.0
    %231 = vmatpush1.msra.mxu0 0.0
    %232 = vmatprep.subr.mxu0 0.0
    %233 = vmatpush1.msra.mxu0 0.0
    %234 = vmatprep.subr.mxu0 0.0
    %235 = vmatpush1.msra.mxu0 0.0
    %236 = vmatprep.subr.mxu0 0.0
    %237 = vmatpush1.msra.mxu0 0.0
    %238 = vmatprep.subr.mxu0 0.0
    %239 = vmatpush1.msra.mxu0 0.0
    %240 = vmatprep.subr.mxu0 0.0
    %241 = vmatpush1.msra.mxu0 0.0
    %242 = vmatprep.subr.mxu0 0.0
    %243 = vmatpush1.msra.mxu0 0.0
    %244 = vmatprep.subr.mxu0 0.0
    %245 = vmatpush1.msra.mxu0 0.0
    %246 = vmatprep.subr.mxu0 0.0
    %247 = vmatpush1.msra.mxu0 0.0
    %248 = vmatprep.subr.mxu0 0.0
    %249 = vmatpush1.msra.mxu0 0.0
    %250 = vmatprep.subr.mxu0 0.0
    %251 = vmatpush1.msra.mxu0 0.0
    %252 = vmatprep.subr.mxu0 0.0
    %253 = vmatpush1.msra.mxu0 0.0
    %254 = vmatprep.subr.mxu0 0.0
    %255 = vmatpush1.msra.mxu0 0.0
    %256 = vmatprep.subr.mxu0 0.0
    %257 = vmatpush1.msra.mxu0 0.0
    %258 = vmatprep.subr.mxu0 0.0
    %259 = vmatpush1.msra.mxu0 0.0
    %260 = vmatprep.subr.mxu0 0.0
    %261 = vmatpush1.msra.mxu0 0.0
    %262 = vmatprep.subr.mxu0 0.0
    %263 = vmatpush1.msra.mxu0 0.0
    %264 = vmatprep.subr.mxu0 0.0
    %265 = vmatpush1.msra.mxu0 0.0
    %266 = vmatprep.subr.mxu0 0.0
    %267 = vmatpush1.msra.mxu0 0.0
    %268 = vmatprep.subr.mxu0 0.0
    %269 = vmatpush1.msra.mxu0 0.0
    %270 = vmatprep.subr.mxu0 0.0
    %271 = vmatpush1.msra.mxu0 0.0
    %272 = vmatprep.subr.mxu0 0.0
    %273 = vmatpush1.msra.mxu0 0.0
    %274 = vmatprep.subr.mxu0 0.0
    %275 = vmatpush1.msra.mxu0 0.0
    %276 = vmatprep.subr.mxu0 0.0
    %277 = vmatpush1.msra.mxu0 0.0
    %278 = vmatprep.subr.mxu0 0.0
    %279 = vmatpush1.msra.mxu0 0.0
    %280 = vmatprep.subr.mxu0 0.0
    %281 = vmatpush1.msra.mxu0 0.0
    %282 = vmatprep.mubr.f32.mxu0 0.0
    %283 = vmatmul.mubr.f32.gmra.mrb[0].mxu0 %v191
    %v284 = vpop.f32.mrb[0].mxu0
    %v285 = vadd.f32 0.0, %v284
    %v286 = vpop.f32.mrb[0].mxu0
    %287 = vmatprep.mubr.f32.mxu0 0.0
    %288 = vmatmul.mubr.f32.gmra.mrb[0].mxu0 %v194
    %v289 = vpop.f32.mrb[0].mxu0
    %v290 = vadd.f32 0.0, %v289
    %v291 = vpop.f32.mrb[0].mxu0
    %292 = vmatprep.mubr.f32.mxu0 0.0
    %293 = vmatmul.mubr.f32.gmra.mrb[0].mxu0 %v197
    %v294 = vpop.f32.mrb[0].mxu0
    %v295 = vadd.f32 0.0, %v294
    %v296 = vpop.f32.mrb[0].mxu0
    %297 = vmatprep.mubr.f32.mxu0 0.0
    %298 = vmatmul.mubr.f32.gmra.mrb[0].mxu0 %v200
    %v299 = vpop.f32.mrb[0].mxu0
    %v300 = vadd.f32 0.0, %v299
    %v301 = vpop.f32.mrb[0].mxu0
    %302 = vmatprep.mubr.f32.mxu0 0.0
    %303 = vmatmul.mubr.f32.gmra.mrb[0].mxu0 %v203
    %v304 = vpop.f32.mrb[0].mxu0
    %v305 = vadd.f32 0.0, %v304
    %v306 = vpop.f32.mrb[0].mxu0
    %307 = vmatprep.mubr.f32.mxu0 0.0
    %308 = vmatmul.mubr.f32.gmra.mrb[0].mxu0 %v206
    %v309 = vpop.f32.mrb[0].mxu0
    %v310 = vadd.f32 0.0, %v309
    %v311 = vpop.f32.mrb[0].mxu0
    %312 = vmatprep.mubr.f32.mxu0 0.0
    %313 = vmatmul.mubr.f32.gmra.mrb[0].mxu0 %v209
    %v314 = vpop.f32.mrb[0].mxu0
    %v315 = vadd.f32 0.0, %v314
    %v316 = vpop.f32.mrb[0].mxu0
    %317 = vmatprep.mubr.f32.mxu0 0.0
    %318 = vmatmul.mubr.f32.gmra.mrb[0].mxu0 %v212
    %v319 = vpop.f32.mrb[0].mxu0
    %v320 = vadd.f32 0.0, %v319
    %v321 = vpop.f32.mrb[0].mxu0
    %322 = vdwg.mxu0
    %v324 = vsel %vm189, %v176, 0
    %v327 = vsel %vm214, %v186, 0
    %329 = vmatprep.subr.mxu0 0.0
    %330 = vmatpush1.msra.mxu0 %v327
    %331 = vmatprep.subr.mxu0 0.0
    %332 = vmatpush1.msra.mxu0 0.0
    %333 = vmatprep.subr.mxu0 0.0
    %334 = vmatpush1.msra.mxu0 0.0
    %335 = vmatprep.subr.mxu0 0.0
    %336 = vmatpush1.msra.mxu0 0.0
    %337 = vmatprep.subr.mxu0 0.0
    %338 = vmatpush1.msra.mxu0 0.0
    %339 = vmatprep.subr.mxu0 0.0
    %340 = vmatpush1.msra.mxu0 0.0
    %341 = vmatprep.subr.mxu0 0.0
    %342 = vmatpush1.msra.mxu0 0.0
    %343 = vmatprep.subr.mxu0 0.0
    %344 = vmatpush1.msra.mxu0 0.0
    %345 = vmatprep.subr.mxu0 0.0
    %346 = vmatpush1.msra.mxu0 0.0
    %347 = vmatprep.subr.mxu0 0.0
    %348 = vmatpush1.msra.mxu0 0.0
    %349 = vmatprep.subr.mxu0 0.0
    %350 = vmatpush1.msra.mxu0 0.0
    %351 = vmatprep.subr.mxu0 0.0
    %352 = vmatpush1.msra.mxu0 0.0
    %353 = vmatprep.subr.mxu0 0.0
    %354 = vmatpush1.msra.mxu0 0.0
    %355 = vmatprep.subr.mxu0 0.0
    %356 = vmatpush1.msra.mxu0 0.0
    %357 = vmatprep.subr.mxu0 0.0
    %358 = vmatpush1.msra.mxu0 0.0
    %359 = vmatprep.subr.mxu0 0.0
    %360 = vmatpush1.msra.mxu0 0.0
    %361 = vmatprep.subr.mxu0 0.0
    %362 = vmatpush1.msra.mxu0 0.0
    %363 = vmatprep.subr.mxu0 0.0
    %364 = vmatpush1.msra.mxu0 0.0
    %365 = vmatprep.subr.mxu0 0.0
    %366 = vmatpush1.msra.mxu0 0.0
    %367 = vmatprep.subr.mxu0 0.0
    %368 = vmatpush1.msra.mxu0 0.0
    %369 = vmatprep.subr.mxu0 0.0
    %370 = vmatpush1.msra.mxu0 0.0
    %371 = vmatprep.subr.mxu0 0.0
    %372 = vmatpush1.msra.mxu0 0.0
    %373 = vmatprep.subr.mxu0 0.0
    %374 = vmatpush1.msra.mxu0 0.0
    %375 = vmatprep.subr.mxu0 0.0
    %376 = vmatpush1.msra.mxu0 0.0
    %377 = vmatprep.subr.mxu0 0.0
    %378 = vmatpush1.msra.mxu0 0.0
    %379 = vmatprep.subr.mxu0 0.0
    %380 = vmatpush1.msra.mxu0 0.0
    %381 = vmatprep.subr.mxu0 0.0
    %382 = vmatpush1.msra.mxu0 0.0
    %383 = vmatprep.subr.mxu0 0.0
    %384 = vmatpush1.msra.mxu0 0.0
    %385 = vmatprep.subr.mxu0 0.0
    %386 = vmatpush1.msra.mxu0 0.0
    %387 = vmatprep.subr.mxu0 0.0
    %388 = vmatpush1.msra.mxu0 0.0
    %389 = vmatprep.subr.mxu0 0.0
    %390 = vmatpush1.msra.mxu0 0.0
    %391 = vmatprep.subr.mxu0 0.0
    %392 = vmatpush1.msra.mxu0 0.0
    %393 = vmatprep.mubr.f32.mxu0 0.0
    %394 = vmatmul.mubr.f32.gmra.mrb[0].mxu0 %v324
    %v395 = vpop.f32.mrb[0].mxu0
    %v396 = vadd.f32 %v285, %v395
    %v397 = vpop.f32.mrb[0].mxu0
    %398 = vmatprep.mubr.f32.mxu0 0.0
    %399 = vmatmul.mubr.f32.gmra.mrb[0].mxu0 %v191
    %v400 = vpop.f32.mrb[0].mxu0
    %v401 = vadd.f32 %v290, %v400
    %v402 = vpop.f32.mrb[0].mxu0
    %403 = vmatprep.mubr.f32.mxu0 0.0
    %404 = vmatmul.mubr.f32.gmra.mrb[0].mxu0 %v194
    %v405 = vpop.f32.mrb[0].mxu0
    %v406 = vadd.f32 %v295, %v405
    %v407 = vpop.f32.mrb[0].mxu0
    %408 = vmatprep.mubr.f32.mxu0 0.0
    %409 = vmatmul.mubr.f32.gmra.mrb[0].mxu0 %v197
    %v410 = vpop.f32.mrb[0].mxu0
    %v411 = vadd.f32 %v300, %v410
    %v412 = vpop.f32.mrb[0].mxu0
    %413 = vmatprep.mubr.f32.mxu0 0.0
    %414 = vmatmul.mubr.f32.gmra.mrb[0].mxu0 %v200
    %v415 = vpop.f32.mrb[0].mxu0
    %v416 = vadd.f32 %v305, %v415
    %v417 = vpop.f32.mrb[0].mxu0
    %418 = vmatprep.mubr.f32.mxu0 0.0
    %419 = vmatmul.mubr.f32.gmra.mrb[0].mxu0 %v203
    %v420 = vpop.f32.mrb[0].mxu0
    %v421 = vadd.f32 %v310, %v420
    %v422 = vpop.f32.mrb[0].mxu0
    %423 = vmatprep.mubr.f32.mxu0 0.0
    %424 = vmatmul.mubr.f32.gmra.mrb[0].mxu0 %v206
    %v425 = vpop.f32.mrb[0].mxu0
    %v426 = vadd.f32 %v315, %v425
    %v427 = vpop.f32.mrb[0].mxu0
    %428 = vmatprep.mubr.f32.mxu0 0.0
    %429 = vmatmul.mubr.f32.gmra.mrb[0].mxu0 %v209
    %v430 = vpop.f32.mrb[0].mxu0
    %v431 = vadd.f32 %v320, %v430
    %v432 = vpop.f32.mrb[0].mxu0
    %433 = vdwg.mxu0
    %s434 = scalar_lea.vmem %s1, 8
    %v435 = vld [vmem:[%s434] sm:$0xf]
    %v437 = vsel %vm189, %v185, 0
    %v440 = vsel %vm214, %v435, 0
    %442 = vmatprep.subr.mxu0 0.0
    %443 = vmatpush1.msra.mxu0 %v440
    %444 = vmatprep.subr.mxu0 0.0
    %445 = vmatpush1.msra.mxu0 0.0
    %446 = vmatprep.subr.mxu0 0.0
    %447 = vmatpush1.msra.mxu0 0.0
    %448 = vmatprep.subr.mxu0 0.0
    %449 = vmatpush1.msra.mxu0 0.0
    %450 = vmatprep.subr.mxu0 0.0
    %451 = vmatpush1.msra.mxu0 0.0
    %452 = vmatprep.subr.mxu0 0.0
    %453 = vmatpush1.msra.mxu0 0.0
    %454 = vmatprep.subr.mxu0 0.0
    %455 = vmatpush1.msra.mxu0 0.0
    %456 = vmatprep.subr.mxu0 0.0
    %457 = vmatpush1.msra.mxu0 0.0
    %458 = vmatprep.subr.mxu0 0.0
    %459 = vmatpush1.msra.mxu0 0.0
    %460 = vmatprep.subr.mxu0 0.0
    %461 = vmatpush1.msra.mxu0 0.0
    %462 = vmatprep.subr.mxu0 0.0
    %463 = vmatpush1.msra.mxu0 0.0
    %464 = vmatprep.subr.mxu0 0.0
    %465 = vmatpush1.msra.mxu0 0.0
    %466 = vmatprep.subr.mxu0 0.0
    %467 = vmatpush1.msra.mxu0 0.0
    %468 = vmatprep.subr.mxu0 0.0
    %469 = vmatpush1.msra.mxu0 0.0
    %470 = vmatprep.subr.mxu0 0.0
    %471 = vmatpush1.msra.mxu0 0.0
    %472 = vmatprep.subr.mxu0 0.0
    %473 = vmatpush1.msra.mxu0 0.0
    %474 = vmatprep.subr.mxu0 0.0
    %475 = vmatpush1.msra.mxu0 0.0
    %476 = vmatprep.subr.mxu0 0.0
    %477 = vmatpush1.msra.mxu0 0.0
    %478 = vmatprep.subr.mxu0 0.0
    %479 = vmatpush1.msra.mxu0 0.0
    %480 = vmatprep.subr.mxu0 0.0
    %481 = vmatpush1.msra.mxu0 0.0
    %482 = vmatprep.subr.mxu0 0.0
    %483 = vmatpush1.msra.mxu0 0.0
    %484 = vmatprep.subr.mxu0 0.0
    %485 = vmatpush1.msra.mxu0 0.0
    %486 = vmatprep.subr.mxu0 0.0
    %487 = vmatpush1.msra.mxu0 0.0
    %488 = vmatprep.subr.mxu0 0.0
    %489 = vmatpush1.msra.mxu0 0.0
    %490 = vmatprep.subr.mxu0 0.0
    %491 = vmatpush1.msra.mxu0 0.0
    %492 = vmatprep.subr.mxu0 0.0
    %493 = vmatpush1.msra.mxu0 0.0
    %494 = vmatprep.subr.mxu0 0.0
    %495 = vmatpush1.msra.mxu0 0.0
    %496 = vmatprep.subr.mxu0 0.0
    %497 = vmatpush1.msra.mxu0 0.0
    %498 = vmatprep.subr.mxu0 0.0
    %499 = vmatpush1.msra.mxu0 0.0
    %500 = vmatprep.subr.mxu0 0.0
    %501 = vmatpush1.msra.mxu0 0.0
    %502 = vmatprep.subr.mxu0 0.0
    %503 = vmatpush1.msra.mxu0 0.0
    %504 = vmatprep.subr.mxu0 0.0
    %505 = vmatpush1.msra.mxu0 0.0
    %506 = vmatprep.mubr.f32.mxu0 0.0
    %507 = vmatmul.mubr.f32.gmra.mrb[0].mxu0 %v194
    %v508 = vpop.f32.mrb[0].mxu0
    %v509 = vadd.f32 0.0, %v508
    %v510 = vpop.f32.mrb[0].mxu0
    %511 = vmatprep.mubr.f32.mxu0 0.0
    %512 = vmatmul.mubr.f32.gmra.mrb[0].mxu0 %v197
    %v513 = vpop.f32.mrb[0].mxu0
    %v514 = vadd.f32 0.0, %v513
    %v515 = vpop.f32.mrb[0].mxu0
    %516 = vmatprep.mubr.f32.mxu0 0.0
    %517 = vmatmul.mubr.f32.gmra.mrb[0].mxu0 %v200
    %v518 = vpop.f32.mrb[0].mxu0
    %v519 = vadd.f32 0.0, %v518
    %v520 = vpop.f32.mrb[0].mxu0
    %521 = vmatprep.mubr.f32.mxu0 0.0
    %522 = vmatmul.mubr.f32.gmra.mrb[0].mxu0 %v203
    %v523 = vpop.f32.mrb[0].mxu0
    %v524 = vadd.f32 0.0, %v523
    %v525 = vpop.f32.mrb[0].mxu0
    %526 = vmatprep.mubr.f32.mxu0 0.0
    %527 = vmatmul.mubr.f32.gmra.mrb[0].mxu0 %v206
    %v528 = vpop.f32.mrb[0].mxu0
    %v529 = vadd.f32 0.0, %v528
    %v530 = vpop.f32.mrb[0].mxu0
    %531 = vmatprep.mubr.f32.mxu0 0.0
    %532 = vmatmul.mubr.f32.gmra.mrb[0].mxu0 %v209
    %v533 = vpop.f32.mrb[0].mxu0
    %v534 = vadd.f32 0.0, %v533
    %v535 = vpop.f32.mrb[0].mxu0
    %536 = vmatprep.mubr.f32.mxu0 0.0
    %537 = vmatmul.mubr.f32.gmra.mrb[0].mxu0 %v212
    %v538 = vpop.f32.mrb[0].mxu0
    %v539 = vadd.f32 0.0, %v538
    %v540 = vpop.f32.mrb[0].mxu0
    %541 = vmatprep.mubr.f32.mxu0 0.0
    %542 = vmatmul.mubr.f32.gmra.mrb[0].mxu0 %v437
    %v543 = vpop.f32.mrb[0].mxu0
    %v544 = vadd.f32 0.0, %v543
    %v545 = vpop.f32.mrb[0].mxu0
    %546 = vdwg.mxu0
    %v547 = vadd.f32 %v396, %v509
    %v548 = vadd.f32 %v401, %v514
    %v549 = vadd.f32 %v406, %v519
    %v550 = vadd.f32 %v411, %v524
    %v551 = vadd.f32 %v416, %v529
    %v552 = vadd.f32 %v421, %v534
    %v553 = vadd.f32 %v426, %v539
    %v554 = vadd.f32 %v431, %v544
    %v555 = vld [vmem:[%s2] sm:$0x1]
    %v557 = vlaneseq
    %v558 = vshrl.u32 %v557, 7
    %v559 = vsub.s32 0, %v558
    %v560 = vrot.slane %v555, %v559
    %v562 = vadd.f32 %v547, %v560
    %v563 = vadd.f32 %v548, %v560
    %v564 = vadd.f32 %v549, %v560
    %v565 = vadd.f32 %v550, %v560
    %v566 = vadd.f32 %v551, %v560
    %v567 = vadd.f32 %v552, %v560
    %v568 = vadd.f32 %v553, %v560
    %v569 = vadd.f32 %v554, %v560
    %v570 = vmax.f32 %v562, 0.0
    %v571 = vmax.f32 %v563, 0.0
    %v572 = vmax.f32 %v564, 0.0
    %v573 = vmax.f32 %v565, 0.0
    %v574 = vmax.f32 %v566, 0.0
    %v575 = vmax.f32 %v567, 0.0
    %v576 = vmax.f32 %v568, 0.0
    %v577 = vmax.f32 %v569, 0.0
    %vm578 = vcmask 523264
    %579 = vst.msk [vmem:[#allocation2] sm:$0xff] %vm578, 0.0
    %580 = vst.msk [vmem:[#allocation2 + $0x8] sm:$0xff] %vm578, %v570
    %581 = vst.msk [vmem:[#allocation2 + $0x10] sm:$0xff] %vm578, %v571
    %582 = vst.msk [vmem:[#allocation2 + $0x18] sm:$0xff] %vm578, %v572
    %583 = vst.msk [vmem:[#allocation2 + $0x20] sm:$0xff] %vm578, %v573
    %584 = vst.msk [vmem:[#allocation2 + $0x28] sm:$0xff] %vm578, %v574
    %585 = vst.msk [vmem:[#allocation2 + $0x30] sm:$0xff] %vm578, %v575
    %586 = vst.msk [vmem:[#allocation2 + $0x38] sm:$0xff] %vm578, %v576
    %587 = vst.msk [vmem:[#allocation2 + $0x40] sm:$0xff] %vm578, %v577
    %588 = vst.msk [vmem:[#allocation2 + $0x48] sm:$0xff] %vm578, 0.0
    %v589 = vld [vmem:[#allocation2] sm:$0xff]
    %v590 = vld [vmem:[#allocation2 + $0x8] sm:$0xff]
    %v591 = vld [vmem:[#allocation2 + $0x10] sm:$0xff]
    %v592 = vld [vmem:[#allocation2 + $0x18] sm:$0xff]
    %v593 = vld [vmem:[#allocation2 + $0x20] sm:$0xff]
    %v594 = vld [vmem:[#allocation2 + $0x28] sm:$0xff]
    %v595 = vld [vmem:[#allocation2 + $0x30] sm:$0xff]
    %v596 = vld [vmem:[#allocation2 + $0x38] sm:$0xff]
    %v597 = vld [vmem:[#allocation6] sm:$0xff]
    %v598 = vld [vmem:[#allocation6 + $0x8] sm:$0xff]
    %v599 = vld [vmem:[#allocation6 + $0x10] sm:$0xff]
    %v600 = vld [vmem:[#allocation6 + $0x18] sm:$0xff]
    %v601 = vld [vmem:[#allocation6 + $0x20] sm:$0xff]
    %v602 = vld [vmem:[#allocation6 + $0x28] sm:$0xff]
    %v603 = vld [vmem:[#allocation6 + $0x30] sm:$0xff]
    %v604 = vld [vmem:[#allocation6 + $0x38] sm:$0xff]
    %v605 = vld [vmem:[#allocation2 + $0x40] sm:$0xff]
    %s606 = scalar_lea.vmem [#allocation6], 64
    %v607 = vld [vmem:[%s606] sm:$0xff]
    %v608 = vld [vmem:[%s606 + $0x8] sm:$0xff]
    %v609 = vld [vmem:[%s606 + $0x10] sm:$0xff]
    %v610 = vld [vmem:[%s606 + $0x18] sm:$0xff]
    %v611 = vld [vmem:[%s606 + $0x20] sm:$0xff]
    %v612 = vld [vmem:[%s606 + $0x28] sm:$0xff]
    %v613 = vld [vmem:[%s606 + $0x30] sm:$0xff]
    %v614 = vld [vmem:[%s606 + $0x38] sm:$0xff]
    %v616 = vsel %vm578, %v590, 0
    %v619 = vsel %vm578, %v591, 0
    %v622 = vsel %vm578, %v592, 0
    %v625 = vsel %vm578, %v593, 0
    %v628 = vsel %vm578, %v594, 0
    %v631 = vsel %vm578, %v595, 0
    %v634 = vsel %vm578, %v596, 0
    %v637 = vsel %vm578, %v605, 0
    %639 = vmatprep.subr.mxu0 0.0
    %640 = vmatpush1.msra.mxu0 %v607
    %641 = vmatprep.subr.mxu0 0.0
    %642 = vmatpush1.msra.mxu0 %v608
    %643 = vmatprep.subr.mxu0 0.0
    %644 = vmatpush1.msra.mxu0 %v609
    %645 = vmatprep.subr.mxu0 0.0
    %646 = vmatpush1.msra.mxu0 %v610
    %647 = vmatprep.subr.mxu0 0.0
    %648 = vmatpush1.msra.mxu0 %v611
    %649 = vmatprep.subr.mxu0 0.0
    %650 = vmatpush1.msra.mxu0 %v612
    %651 = vmatprep.subr.mxu0 0.0
    %652 = vmatpush1.msra.mxu0 %v613
    %653 = vmatprep.subr.mxu0 0.0
    %654 = vmatpush1.msra.mxu0 %v614
    %655 = vmatprep.subr.mxu0 0.0
    %656 = vmatpush1.msra.mxu0 0.0
    %657 = vmatprep.subr.mxu0 0.0
    %658 = vmatpush1.msra.mxu0 0.0
    %659 = vmatprep.subr.mxu0 0.0
    %660 = vmatpush1.msra.mxu0 0.0
    %661 = vmatprep.subr.mxu0 0.0
    %662 = vmatpush1.msra.mxu0 0.0
    %663 = vmatprep.subr.mxu0 0.0
    %664 = vmatpush1.msra.mxu0 0.0
    %665 = vmatprep.subr.mxu0 0.0
    %666 = vmatpush1.msra.mxu0 0.0
    %667 = vmatprep.subr.mxu0 0.0
    %668 = vmatpush1.msra.mxu0 0.0
    %669 = vmatprep.subr.mxu0 0.0
    %670 = vmatpush1.msra.mxu0 0.0
    %671 = vmatprep.subr.mxu0 0.0
    %672 = vmatpush1.msra.mxu0 0.0
    %673 = vmatprep.subr.mxu0 0.0
    %674 = vmatpush1.msra.mxu0 0.0
    %675 = vmatprep.subr.mxu0 0.0
    %676 = vmatpush1.msra.mxu0 0.0
    %677 = vmatprep.subr.mxu0 0.0
    %678 = vmatpush1.msra.mxu0 0.0
    %679 = vmatprep.subr.mxu0 0.0
    %680 = vmatpush1.msra.mxu0 0.0
    %681 = vmatprep.subr.mxu0 0.0
    %682 = vmatpush1.msra.mxu0 0.0
    %683 = vmatprep.subr.mxu0 0.0
    %684 = vmatpush1.msra.mxu0 0.0
    %685 = vmatprep.subr.mxu0 0.0
    %686 = vmatpush1.msra.mxu0 0.0
    %687 = vmatprep.subr.mxu0 0.0
    %688 = vmatpush1.msra.mxu0 0.0
    %689 = vmatprep.subr.mxu0 0.0
    %690 = vmatpush1.msra.mxu0 0.0
    %691 = vmatprep.subr.mxu0 0.0
    %692 = vmatpush1.msra.mxu0 0.0
    %693 = vmatprep.subr.mxu0 0.0
    %694 = vmatpush1.msra.mxu0 0.0
    %695 = vmatprep.subr.mxu0 0.0
    %696 = vmatpush1.msra.mxu0 0.0
    %697 = vmatprep.subr.mxu0 0.0
    %698 = vmatpush1.msra.mxu0 0.0
    %699 = vmatprep.subr.mxu0 0.0
    %700 = vmatpush1.msra.mxu0 0.0
    %701 = vmatprep.subr.mxu0 0.0
    %702 = vmatpush1.msra.mxu0 0.0
    %703 = vmatprep.mubr.f32.mxu0 0.0
    %704 = vmatmul.mubr.f32.gmra.mrb[0].mxu0 %v616
    %v705 = vpop.f32.mrb[0].mxu0
    %v706 = vadd.f32 0.0, %v705
    %v707 = vpop.f32.mrb[0].mxu0
    %708 = vmatprep.mubr.f32.mxu0 0.0
    %709 = vmatmul.mubr.f32.gmra.mrb[0].mxu0 %v619
    %v710 = vpop.f32.mrb[0].mxu0
    %v711 = vadd.f32 0.0, %v710
    %v712 = vpop.f32.mrb[0].mxu0
    %713 = vmatprep.mubr.f32.mxu0 0.0
    %714 = vmatmul.mubr.f32.gmra.mrb[0].mxu0 %v622
    %v715 = vpop.f32.mrb[0].mxu0
    %v716 = vadd.f32 0.0, %v715
    %v717 = vpop.f32.mrb[0].mxu0
    %718 = vmatprep.mubr.f32.mxu0 0.0
    %719 = vmatmul.mubr.f32.gmra.mrb[0].mxu0 %v625
    %v720 = vpop.f32.mrb[0].mxu0
    %v721 = vadd.f32 0.0, %v720
    %v722 = vpop.f32.mrb[0].mxu0
    %723 = vmatprep.mubr.f32.mxu0 0.0
    %724 = vmatmul.mubr.f32.gmra.mrb[0].mxu0 %v628
    %v725 = vpop.f32.mrb[0].mxu0
    %v726 = vadd.f32 0.0, %v725
    %v727 = vpop.f32.mrb[0].mxu0
    %728 = vmatprep.mubr.f32.mxu0 0.0
    %729 = vmatmul.mubr.f32.gmra.mrb[0].mxu0 %v631
    %v730 = vpop.f32.mrb[0].mxu0
    %v731 = vadd.f32 0.0, %v730
    %v732 = vpop.f32.mrb[0].mxu0
    %733 = vmatprep.mubr.f32.mxu0 0.0
    %734 = vmatmul.mubr.f32.gmra.mrb[0].mxu0 %v634
    %v735 = vpop.f32.mrb[0].mxu0
    %v736 = vadd.f32 0.0, %v735
    %v737 = vpop.f32.mrb[0].mxu0
    %738 = vmatprep.mubr.f32.mxu0 0.0
    %739 = vmatmul.mubr.f32.gmra.mrb[0].mxu0 %v637
    %v740 = vpop.f32.mrb[0].mxu0
    %v741 = vadd.f32 0.0, %v740
    %v742 = vpop.f32.mrb[0].mxu0
    %743 = vdwg.mxu0
    %v745 = vsel %vm578, %v589, 0
    %747 = vmatprep.subr.mxu0 0.0
    %748 = vmatpush1.msra.mxu0 %v597
    %749 = vmatprep.subr.mxu0 0.0
    %750 = vmatpush1.msra.mxu0 %v598
    %751 = vmatprep.subr.mxu0 0.0
    %752 = vmatpush1.msra.mxu0 %v599
    %753 = vmatprep.subr.mxu0 0.0
    %754 = vmatpush1.msra.mxu0 %v600
    %755 = vmatprep.subr.mxu0 0.0
    %756 = vmatpush1.msra.mxu0 %v601
    %757 = vmatprep.subr.mxu0 0.0
    %758 = vmatpush1.msra.mxu0 %v602
    %759 = vmatprep.subr.mxu0 0.0
    %760 = vmatpush1.msra.mxu0 %v603
    %761 = vmatprep.subr.mxu0 0.0
    %762 = vmatpush1.msra.mxu0 %v604
    %763 = vmatprep.subr.mxu0 0.0
    %764 = vmatpush1.msra.mxu0 0.0
    %765 = vmatprep.subr.mxu0 0.0
    %766 = vmatpush1.msra.mxu0 0.0
    %767 = vmatprep.subr.mxu0 0.0
    %768 = vmatpush1.msra.mxu0 0.0
    %769 = vmatprep.subr.mxu0 0.0
    %770 = vmatpush1.msra.mxu0 0.0
    %771 = vmatprep.subr.mxu0 0.0
    %772 = vmatpush1.msra.mxu0 0.0
    %773 = vmatprep.subr.mxu0 0.0
    %774 = vmatpush1.msra.mxu0 0.0
    %775 = vmatprep.subr.mxu0 0.0
    %776 = vmatpush1.msra.mxu0 0.0
    %777 = vmatprep.subr.mxu0 0.0
    %778 = vmatpush1.msra.mxu0 0.0
    %779 = vmatprep.subr.mxu0 0.0
    %780 = vmatpush1.msra.mxu0 0.0
    %781 = vmatprep.subr.mxu0 0.0
    %782 = vmatpush1.msra.mxu0 0.0
    %783 = vmatprep.subr.mxu0 0.0
    %784 = vmatpush1.msra.mxu0 0.0
    %785 = vmatprep.subr.mxu0 0.0
    %786 = vmatpush1.msra.mxu0 0.0
    %787 = vmatprep.subr.mxu0 0.0
    %788 = vmatpush1.msra.mxu0 0.0
    %789 = vmatprep.subr.mxu0 0.0
    %790 = vmatpush1.msra.mxu0 0.0
    %791 = vmatprep.subr.mxu0 0.0
    %792 = vmatpush1.msra.mxu0 0.0
    %793 = vmatprep.subr.mxu0 0.0
    %794 = vmatpush1.msra.mxu0 0.0
    %795 = vmatprep.subr.mxu0 0.0
    %796 = vmatpush1.msra.mxu0 0.0
    %797 = vmatprep.subr.mxu0 0.0
    %798 = vmatpush1.msra.mxu0 0.0
    %799 = vmatprep.subr.mxu0 0.0
    %800 = vmatpush1.msra.mxu0 0.0
    %801 = vmatprep.subr.mxu0 0.0
    %802 = vmatpush1.msra.mxu0 0.0
    %803 = vmatprep.subr.mxu0 0.0
    %804 = vmatpush1.msra.mxu0 0.0
    %805 = vmatprep.subr.mxu0 0.0
    %806 = vmatpush1.msra.mxu0 0.0
    %807 = vmatprep.subr.mxu0 0.0
    %808 = vmatpush1.msra.mxu0 0.0
    %809 = vmatprep.subr.mxu0 0.0
    %810 = vmatpush1.msra.mxu0 0.0
    %811 = vmatprep.mubr.f32.mxu0 0.0
    %812 = vmatmul.mubr.f32.gmra.mrb[0].mxu0 %v745
    %v813 = vpop.f32.mrb[0].mxu0
    %v814 = vadd.f32 %v706, %v813
    %v815 = vpop.f32.mrb[0].mxu0
    %816 = vmatprep.mubr.f32.mxu0 0.0
    %817 = vmatmul.mubr.f32.gmra.mrb[0].mxu0 %v616
    %v818 = vpop.f32.mrb[0].mxu0
    %v819 = vadd.f32 %v711, %v818
    %v820 = vpop.f32.mrb[0].mxu0
    %821 = vmatprep.mubr.f32.mxu0 0.0
    %822 = vmatmul.mubr.f32.gmra.mrb[0].mxu0 %v619
    %v823 = vpop.f32.mrb[0].mxu0
    %v824 = vadd.f32 %v716, %v823
    %v825 = vpop.f32.mrb[0].mxu0
    %826 = vmatprep.mubr.f32.mxu0 0.0
    %827 = vmatmul.mubr.f32.gmra.mrb[0].mxu0 %v622
    %v828 = vpop.f32.mrb[0].mxu0
    %v829 = vadd.f32 %v721, %v828
    %v830 = vpop.f32.mrb[0].mxu0
    %831 = vmatprep.mubr.f32.mxu0 0.0
    %832 = vmatmul.mubr.f32.gmra.mrb[0].mxu0 %v625
    %v833 = vpop.f32.mrb[0].mxu0
    %v834 = vadd.f32 %v726, %v833
    %v835 = vpop.f32.mrb[0].mxu0
    %836 = vmatprep.mubr.f32.mxu0 0.0
    %837 = vmatmul.mubr.f32.gmra.mrb[0].mxu0 %v628
    %v838 = vpop.f32.mrb[0].mxu0
    %v839 = vadd.f32 %v731, %v838
    %v840 = vpop.f32.mrb[0].mxu0
    %841 = vmatprep.mubr.f32.mxu0 0.0
    %842 = vmatmul.mubr.f32.gmra.mrb[0].mxu0 %v631
    %v843 = vpop.f32.mrb[0].mxu0
    %v844 = vadd.f32 %v736, %v843
    %v845 = vpop.f32.mrb[0].mxu0
    %846 = vmatprep.mubr.f32.mxu0 0.0
    %847 = vmatmul.mubr.f32.gmra.mrb[0].mxu0 %v634
    %v848 = vpop.f32.mrb[0].mxu0
    %v849 = vadd.f32 %v741, %v848
    %v850 = vpop.f32.mrb[0].mxu0
    %851 = vdwg.mxu0
    %v852 = vld [vmem:[#allocation2 + $0x10] sm:$0xff]
    %v853 = vld [vmem:[#allocation2 + $0x18] sm:$0xff]
    %v854 = vld [vmem:[#allocation2 + $0x20] sm:$0xff]
    %v855 = vld [vmem:[#allocation2 + $0x28] sm:$0xff]
    %v856 = vld [vmem:[#allocation2 + $0x30] sm:$0xff]
    %v857 = vld [vmem:[#allocation2 + $0x38] sm:$0xff]
    %v858 = vld [vmem:[#allocation2 + $0x40] sm:$0xff]
    %v859 = vld [vmem:[#allocation2 + $0x48] sm:$0xff]
    %s860 = scalar_lea.vmem [#allocation6], 128
    %v861 = vld [vmem:[%s860] sm:$0xff]
    %v862 = vld [vmem:[%s860 + $0x8] sm:$0xff]
    %v863 = vld [vmem:[%s860 + $0x10] sm:$0xff]
    %v864 = vld [vmem:[%s860 + $0x18] sm:$0xff]
    %v865 = vld [vmem:[%s860 + $0x20] sm:$0xff]
    %v866 = vld [vmem:[%s860 + $0x28] sm:$0xff]
    %v867 = vld [vmem:[%s860 + $0x30] sm:$0xff]
    %v868 = vld [vmem:[%s860 + $0x38] sm:$0xff]
    %v870 = vsel %vm578, %v852, 0
    %v873 = vsel %vm578, %v853, 0
    %v876 = vsel %vm578, %v854, 0
    %v879 = vsel %vm578, %v855, 0
    %v882 = vsel %vm578, %v856, 0
    %v885 = vsel %vm578, %v857, 0
    %v888 = vsel %vm578, %v858, 0
    %v891 = vsel %vm578, %v859, 0
    %893 = vmatprep.subr.mxu0 0.0
    %894 = vmatpush1.msra.mxu0 %v861
    %895 = vmatprep.subr.mxu0 0.0
    %896 = vmatpush1.msra.mxu0 %v862
    %897 = vmatprep.subr.mxu0 0.0
    %898 = vmatpush1.msra.mxu0 %v863
    %899 = vmatprep.subr.mxu0 0.0
    %900 = vmatpush1.msra.mxu0 %v864
    %901 = vmatprep.subr.mxu0 0.0
    %902 = vmatpush1.msra.mxu0 %v865
    %903 = vmatprep.subr.mxu0 0.0
    %904 = vmatpush1.msra.mxu0 %v866
    %905 = vmatprep.subr.mxu0 0.0
    %906 = vmatpush1.msra.mxu0 %v867
    %907 = vmatprep.subr.mxu0 0.0
    %908 = vmatpush1.msra.mxu0 %v868
    %909 = vmatprep.subr.mxu0 0.0
    %910 = vmatpush1.msra.mxu0 0.0
    %911 = vmatprep.subr.mxu0 0.0
    %912 = vmatpush1.msra.mxu0 0.0
    %913 = vmatprep.subr.mxu0 0.0
    %914 = vmatpush1.msra.mxu0 0.0
    %915 = vmatprep.subr.mxu0 0.0
    %916 = vmatpush1.msra.mxu0 0.0
    %917 = vmatprep.subr.mxu0 0.0
    %918 = vmatpush1.msra.mxu0 0.0
    %919 = vmatprep.subr.mxu0 0.0
    %920 = vmatpush1.msra.mxu0 0.0
    %921 = vmatprep.subr.mxu0 0.0
    %922 = vmatpush1.msra.mxu0 0.0
    %923 = vmatprep.subr.mxu0 0.0
    %924 = vmatpush1.msra.mxu0 0.0
    %925 = vmatprep.subr.mxu0 0.0
    %926 = vmatpush1.msra.mxu0 0.0
    %927 = vmatprep.subr.mxu0 0.0
    %928 = vmatpush1.msra.mxu0 0.0
    %929 = vmatprep.subr.mxu0 0.0
    %930 = vmatpush1.msra.mxu0 0.0
    %931 = vmatprep.subr.mxu0 0.0
    %932 = vmatpush1.msra.mxu0 0.0
    %933 = vmatprep.subr.mxu0 0.0
    %934 = vmatpush1.msra.mxu0 0.0
    %935 = vmatprep.subr.mxu0 0.0
    %936 = vmatpush1.msra.mxu0 0.0
    %937 = vmatprep.subr.mxu0 0.0
    %938 = vmatpush1.msra.mxu0 0.0
    %939 = vmatprep.subr.mxu0 0.0
    %940 = vmatpush1.msra.mxu0 0.0
    %941 = vmatprep.subr.mxu0 0.0
    %942 = vmatpush1.msra.mxu0 0.0
    %943 = vmatprep.subr.mxu0 0.0
    %944 = vmatpush1.msra.mxu0 0.0
    %945 = vmatprep.subr.mxu0 0.0
    %946 = vmatpush1.msra.mxu0 0.0
    %947 = vmatprep.subr.mxu0 0.0
    %948 = vmatpush1.msra.mxu0 0.0
    %949 = vmatprep.subr.mxu0 0.0
    %950 = vmatpush1.msra.mxu0 0.0
    %951 = vmatprep.subr.mxu0 0.0
    %952 = vmatpush1.msra.mxu0 0.0
    %953 = vmatprep.subr.mxu0 0.0
    %954 = vmatpush1.msra.mxu0 0.0
    %955 = vmatprep.subr.mxu0 0.0
    %956 = vmatpush1.msra.mxu0 0.0
    %957 = vmatprep.mubr.f32.mxu0 0.0
    %958 = vmatmul.mubr.f32.gmra.mrb[0].mxu0 %v870
    %v959 = vpop.f32.mrb[0].mxu0
    %v960 = vadd.f32 0.0, %v959
    %v961 = vpop.f32.mrb[0].mxu0
    %962 = vmatprep.mubr.f32.mxu0 0.0
    %963 = vmatmul.mubr.f32.gmra.mrb[0].mxu0 %v873
    %v964 = vpop.f32.mrb[0].mxu0
    %v965 = vadd.f32 0.0, %v964
    %v966 = vpop.f32.mrb[0].mxu0
    %967 = vmatprep.mubr.f32.mxu0 0.0
    %968 = vmatmul.mubr.f32.gmra.mrb[0].mxu0 %v876
    %v969 = vpop.f32.mrb[0].mxu0
    %v970 = vadd.f32 0.0, %v969
    %v971 = vpop.f32.mrb[0].mxu0
    %972 = vmatprep.mubr.f32.mxu0 0.0
    %973 = vmatmul.mubr.f32.gmra.mrb[0].mxu0 %v879
    %v974 = vpop.f32.mrb[0].mxu0
    %v975 = vadd.f32 0.0, %v974
    %v976 = vpop.f32.mrb[0].mxu0
    %977 = vmatprep.mubr.f32.mxu0 0.0
    %978 = vmatmul.mubr.f32.gmra.mrb[0].mxu0 %v882
    %v979 = vpop.f32.mrb[0].mxu0
    %v980 = vadd.f32 0.0, %v979
    %v981 = vpop.f32.mrb[0].mxu0
    %982 = vmatprep.mubr.f32.mxu0 0.0
    %983 = vmatmul.mubr.f32.gmra.mrb[0].mxu0 %v885
    %v984 = vpop.f32.mrb[0].mxu0
    %v985 = vadd.f32 0.0, %v984
    %v986 = vpop.f32.mrb[0].mxu0
    %987 = vmatprep.mubr.f32.mxu0 0.0
    %988 = vmatmul.mubr.f32.gmra.mrb[0].mxu0 %v888
    %v989 = vpop.f32.mrb[0].mxu0
    %v990 = vadd.f32 0.0, %v989
    %v991 = vpop.f32.mrb[0].mxu0
    %992 = vmatprep.mubr.f32.mxu0 0.0
    %993 = vmatmul.mubr.f32.gmra.mrb[0].mxu0 %v891
    %v994 = vpop.f32.mrb[0].mxu0
    %v995 = vadd.f32 0.0, %v994
    %v996 = vpop.f32.mrb[0].mxu0
    %997 = vdwg.mxu0
    %v998 = vadd.f32 %v814, %v960
    %v999 = vadd.f32 %v819, %v965
    %v1000 = vadd.f32 %v824, %v970
    %v1001 = vadd.f32 %v829, %v975
    %v1002 = vadd.f32 %v834, %v980
    %v1003 = vadd.f32 %v839, %v985
    %v1004 = vadd.f32 %v844, %v990
    %v1005 = vadd.f32 %v849, %v995
    %v1006 = vld [vmem:[%s4] sm:$0x1]
    %v1008 = vlaneseq
    %v1009 = vshrl.u32 %v1008, 7
    %v1010 = vsub.s32 0, %v1009
    %v1011 = vrot.slane %v1006, %v1010
    %v1013 = vadd.f32 %v998, %v1011
    %v1014 = vadd.f32 %v999, %v1011
    %v1015 = vadd.f32 %v1000, %v1011
    %v1016 = vadd.f32 %v1001, %v1011
    %v1017 = vadd.f32 %v1002, %v1011
    %v1018 = vadd.f32 %v1003, %v1011
    %v1019 = vadd.f32 %v1004, %v1011
    %v1020 = vadd.f32 %v1005, %v1011
    %v1021 = vmax.f32 %v1013, 0.0
    %v1022 = vmax.f32 %v1014, 0.0
    %v1023 = vmax.f32 %v1015, 0.0
    %v1024 = vmax.f32 %v1016, 0.0
    %v1025 = vmax.f32 %v1017, 0.0
    %v1026 = vmax.f32 %v1018, 0.0
    %v1027 = vmax.f32 %v1019, 0.0
    %v1028 = vmax.f32 %v1020, 0.0
    %v1029 = vld [vmem:[#allocation8] sm:$0xff]
    %v1030 = vld [vmem:[#allocation8 + $0x8] sm:$0xff]
    %v1031 = vld [vmem:[#allocation8 + $0x10] sm:$0xff]
    %v1032 = vld [vmem:[#allocation8 + $0x18] sm:$0xff]
    %v1033 = vld [vmem:[#allocation8 + $0x20] sm:$0xff]
    %v1034 = vld [vmem:[#allocation8 + $0x28] sm:$0xff]
    %v1035 = vld [vmem:[#allocation8 + $0x30] sm:$0xff]
    %v1036 = vld [vmem:[#allocation8 + $0x38] sm:$0xff]
    %v1037 = vld [vmem:[#allocation8 + $0x40] sm:$0xff]
    %v1038 = vld [vmem:[#allocation8 + $0x48] sm:$0xff]
    %v1039 = vld [vmem:[#allocation8 + $0x50] sm:$0xff]
    %v1040 = vld [vmem:[#allocation8 + $0x58] sm:$0xff]
    %v1041 = vld [vmem:[#allocation8 + $0x60] sm:$0xff]
    %v1042 = vld [vmem:[#allocation8 + $0x68] sm:$0xff]
    %v1043 = vld [vmem:[#allocation8 + $0x70] sm:$0xff]
    %v1044 = vld [vmem:[#allocation8 + $0x78] sm:$0xff]
    %v1045 = vld [vmem:[#allocation8 + $0x80] sm:$0xff]
    %v1046 = vld [vmem:[#allocation8 + $0x88] sm:$0xff]
    %v1047 = vld [vmem:[#allocation8 + $0x90] sm:$0xff]
    %v1048 = vld [vmem:[#allocation8 + $0x98] sm:$0xff]
    %v1049 = vld [vmem:[#allocation8 + $0xa0] sm:$0xff]
    %v1050 = vld [vmem:[#allocation8 + $0xa8] sm:$0xff]
    %v1051 = vld [vmem:[#allocation8 + $0xb0] sm:$0xff]
    %v1052 = vld [vmem:[#allocation8 + $0xb8] sm:$0xff]
    %v1053 = vld [vmem:[#allocation8 + $0xc0] sm:$0xff]
    %v1054 = vld [vmem:[#allocation8 + $0xc8] sm:$0xff]
    %v1055 = vld [vmem:[#allocation8 + $0xd0] sm:$0xff]
    %v1056 = vld [vmem:[#allocation8 + $0xd8] sm:$0xff]
    %v1057 = vld [vmem:[#allocation8 + $0xe0] sm:$0xff]
    %v1058 = vld [vmem:[#allocation8 + $0xe8] sm:$0xff]
    %v1059 = vld [vmem:[#allocation8 + $0xf0] sm:$0xff]
    %v1060 = vld [vmem:[#allocation8 + $0xf8] sm:$0xff]
    %v1061 = vld [vmem:[#allocation8 + $0x100] sm:$0xff]
    %v1062 = vld [vmem:[#allocation8 + $0x108] sm:$0xff]
    %v1063 = vld [vmem:[#allocation8 + $0x110] sm:$0xff]
    %v1064 = vld [vmem:[#allocation8 + $0x118] sm:$0xff]
    %v1065 = vld [vmem:[#allocation8 + $0x120] sm:$0xff]
    %v1066 = vld [vmem:[#allocation8 + $0x128] sm:$0xff]
    %v1067 = vld [vmem:[#allocation8 + $0x130] sm:$0xff]
    %v1068 = vld [vmem:[#allocation8 + $0x138] sm:$0xff]
    %v1069 = vld [vmem:[#allocation8 + $0x140] sm:$0xff]
    %v1070 = vld [vmem:[#allocation8 + $0x148] sm:$0xff]
    %v1071 = vld [vmem:[#allocation8 + $0x150] sm:$0xff]
    %v1072 = vld [vmem:[#allocation8 + $0x158] sm:$0xff]
    %v1073 = vld [vmem:[#allocation8 + $0x160] sm:$0xff]
    %v1074 = vld [vmem:[#allocation8 + $0x168] sm:$0xff]
    %v1075 = vld [vmem:[#allocation8 + $0x170] sm:$0xff]
    %v1076 = vld [vmem:[#allocation8 + $0x178] sm:$0xff]
    %v1077 = vld [vmem:[#allocation8 + $0x180] sm:$0xff]
    %v1078 = vld [vmem:[#allocation8 + $0x188] sm:$0xff]
    %v1079 = vld [vmem:[#allocation8 + $0x190] sm:$0xff]
    %v1080 = vld [vmem:[#allocation8 + $0x198] sm:$0xff]
    %v1081 = vld [vmem:[#allocation8 + $0x1a0] sm:$0xff]
    %v1082 = vld [vmem:[#allocation8 + $0x1a8] sm:$0xff]
    %v1083 = vld [vmem:[#allocation8 + $0x1b0] sm:$0xff]
    %v1084 = vld [vmem:[#allocation8 + $0x1b8] sm:$0xff]
    %v1085 = vld [vmem:[#allocation8 + $0x1c0] sm:$0xff]
    %v1086 = vld [vmem:[#allocation8 + $0x1c8] sm:$0xff]
    %v1087 = vld [vmem:[#allocation8 + $0x1d0] sm:$0xff]
    %v1088 = vld [vmem:[#allocation8 + $0x1d8] sm:$0xff]
    %v1089 = vld [vmem:[#allocation8 + $0x1e0] sm:$0xff]
    %v1090 = vld [vmem:[#allocation8 + $0x1e8] sm:$0xff]
    %v1091 = vld [vmem:[#allocation8 + $0x1f0] sm:$0xff]
    %v1092 = vld [vmem:[#allocation8 + $0x1f8] sm:$0xff]
    %v1093 = vld [vmem:[#allocation8 + $0x200] sm:$0xff]
    %v1094 = vld [vmem:[#allocation8 + $0x208] sm:$0xff]
    %v1095 = vld [vmem:[#allocation8 + $0x210] sm:$0xff]
    %v1096 = vld [vmem:[#allocation8 + $0x218] sm:$0xff]
    %v1097 = vld [vmem:[#allocation8 + $0x220] sm:$0xff]
    %v1098 = vld [vmem:[#allocation8 + $0x228] sm:$0xff]
    %v1099 = vld [vmem:[#allocation8 + $0x230] sm:$0xff]
    %v1100 = vld [vmem:[#allocation8 + $0x238] sm:$0xff]
    %v1101 = vld [vmem:[#allocation8 + $0x240] sm:$0xff]
    %v1102 = vld [vmem:[#allocation8 + $0x248] sm:$0xff]
    %v1103 = vld [vmem:[#allocation8 + $0x250] sm:$0xff]
    %v1104 = vld [vmem:[#allocation8 + $0x258] sm:$0xff]
    %v1105 = vld [vmem:[#allocation8 + $0x260] sm:$0xff]
    %v1106 = vld [vmem:[#allocation8 + $0x268] sm:$0xff]
    %v1107 = vld [vmem:[#allocation8 + $0x270] sm:$0xff]
    %v1108 = vld [vmem:[#allocation8 + $0x278] sm:$0xff]
    %v1109 = vld [vmem:[#allocation8 + $0x280] sm:$0xff]
    %v1110 = vld [vmem:[#allocation8 + $0x288] sm:$0xff]
    %v1111 = vld [vmem:[#allocation8 + $0x290] sm:$0xff]
    %v1112 = vld [vmem:[#allocation8 + $0x298] sm:$0xff]
    %v1113 = vld [vmem:[#allocation8 + $0x2a0] sm:$0xff]
    %v1114 = vld [vmem:[#allocation8 + $0x2a8] sm:$0xff]
    %v1115 = vld [vmem:[#allocation8 + $0x2b0] sm:$0xff]
    %v1116 = vld [vmem:[#allocation8 + $0x2b8] sm:$0xff]
    %v1117 = vld [vmem:[#allocation8 + $0x2c0] sm:$0xff]
    %v1118 = vld [vmem:[#allocation8 + $0x2c8] sm:$0xff]
    %v1119 = vld [vmem:[#allocation8 + $0x2d0] sm:$0xff]
    %v1120 = vld [vmem:[#allocation8 + $0x2d8] sm:$0xff]
    %v1121 = vld [vmem:[#allocation8 + $0x2e0] sm:$0xff]
    %v1122 = vld [vmem:[#allocation8 + $0x2e8] sm:$0xff]
    %v1123 = vld [vmem:[#allocation8 + $0x2f0] sm:$0xff]
    %v1124 = vld [vmem:[#allocation8 + $0x2f8] sm:$0xff]
    %v1125 = vld [vmem:[#allocation8 + $0x300] sm:$0xff]
    %v1126 = vld [vmem:[#allocation8 + $0x308] sm:$0xff]
    %v1127 = vld [vmem:[#allocation8 + $0x310] sm:$0xff]
    %v1128 = vld [vmem:[#allocation8 + $0x318] sm:$0xff]
    %v1129 = vld [vmem:[#allocation8 + $0x320] sm:$0xff]
    %v1130 = vld [vmem:[#allocation8 + $0x328] sm:$0xff]
    %v1131 = vld [vmem:[#allocation8 + $0x330] sm:$0xff]
    %v1132 = vld [vmem:[#allocation8 + $0x338] sm:$0xff]
    %v1133 = vld [vmem:[#allocation8 + $0x340] sm:$0xff]
    %v1134 = vld [vmem:[#allocation8 + $0x348] sm:$0xff]
    %v1135 = vld [vmem:[#allocation8 + $0x350] sm:$0xff]
    %v1136 = vld [vmem:[#allocation8 + $0x358] sm:$0xff]
    %v1137 = vld [vmem:[#allocation8 + $0x360] sm:$0xff]
    %v1138 = vld [vmem:[#allocation8 + $0x368] sm:$0xff]
    %v1139 = vld [vmem:[#allocation8 + $0x370] sm:$0xff]
    %v1140 = vld [vmem:[#allocation8 + $0x378] sm:$0xff]
    %v1141 = vld [vmem:[#allocation8 + $0x380] sm:$0xff]
    %v1142 = vld [vmem:[#allocation8 + $0x388] sm:$0xff]
    %v1143 = vld [vmem:[#allocation8 + $0x390] sm:$0xff]
    %v1144 = vld [vmem:[#allocation8 + $0x398] sm:$0xff]
    %v1145 = vld [vmem:[#allocation8 + $0x3a0] sm:$0xff]
    %v1146 = vld [vmem:[#allocation8 + $0x3a8] sm:$0xff]
    %v1147 = vld [vmem:[#allocation8 + $0x3b0] sm:$0xff]
    %v1148 = vld [vmem:[#allocation8 + $0x3b8] sm:$0xff]
    %v1149 = vld [vmem:[#allocation8 + $0x3c0] sm:$0xff]
    %v1150 = vld [vmem:[#allocation8 + $0x3c8] sm:$0xff]
    %v1151 = vld [vmem:[#allocation8 + $0x3d0] sm:$0xff]
    %v1152 = vld [vmem:[#allocation8 + $0x3d8] sm:$0xff]
    %v1153 = vld [vmem:[#allocation8 + $0x3e0] sm:$0xff]
    %v1154 = vld [vmem:[#allocation8 + $0x3e8] sm:$0xff]
    %v1155 = vld [vmem:[#allocation8 + $0x3f0] sm:$0xff]
    %v1156 = vld [vmem:[#allocation8 + $0x3f8] sm:$0xff]
    %v1157 = vld [vmem:[#allocation10] sm:$0xff]
    %v1158 = vld [vmem:[#allocation10 + $0x8] sm:$0xff]
    %v1159 = vld [vmem:[#allocation10 + $0x10] sm:$0xff]
    %v1160 = vld [vmem:[#allocation10 + $0x18] sm:$0xff]
    %v1161 = vld [vmem:[#allocation10 + $0x20] sm:$0xff]
    %v1162 = vld [vmem:[#allocation10 + $0x28] sm:$0xff]
    %v1163 = vld [vmem:[#allocation10 + $0x30] sm:$0xff]
    %v1164 = vld [vmem:[#allocation10 + $0x38] sm:$0xff]
    %v1165 = vld [vmem:[#allocation10 + $0x40] sm:$0xff]
    %v1166 = vld [vmem:[#allocation10 + $0x48] sm:$0xff]
    %v1167 = vld [vmem:[#allocation10 + $0x50] sm:$0xff]
    %v1168 = vld [vmem:[#allocation10 + $0x58] sm:$0xff]
    %v1169 = vld [vmem:[#allocation10 + $0x60] sm:$0xff]
    %v1170 = vld [vmem:[#allocation10 + $0x68] sm:$0xff]
    %v1171 = vld [vmem:[#allocation10 + $0x70] sm:$0xff]
    %v1172 = vld [vmem:[#allocation10 + $0x78] sm:$0xff]
    %v1173 = vld [vmem:[#allocation10 + $0x80] sm:$0xff]
    %v1174 = vld [vmem:[#allocation10 + $0x88] sm:$0xff]
    %v1175 = vld [vmem:[#allocation10 + $0x90] sm:$0xff]
    %v1176 = vld [vmem:[#allocation10 + $0x98] sm:$0xff]
    %v1177 = vld [vmem:[#allocation10 + $0xa0] sm:$0xff]
    %v1178 = vld [vmem:[#allocation10 + $0xa8] sm:$0xff]
    %v1179 = vld [vmem:[#allocation10 + $0xb0] sm:$0xff]
    %v1180 = vld [vmem:[#allocation10 + $0xb8] sm:$0xff]
    %v1181 = vld [vmem:[#allocation10 + $0xc0] sm:$0xff]
    %v1182 = vld [vmem:[#allocation10 + $0xc8] sm:$0xff]
    %v1183 = vld [vmem:[#allocation10 + $0xd0] sm:$0xff]
    %v1184 = vld [vmem:[#allocation10 + $0xd8] sm:$0xff]
    %v1185 = vld [vmem:[#allocation10 + $0xe0] sm:$0xff]
    %v1186 = vld [vmem:[#allocation10 + $0xe8] sm:$0xff]
    %v1187 = vld [vmem:[#allocation10 + $0xf0] sm:$0xff]
    %v1188 = vld [vmem:[#allocation10 + $0xf8] sm:$0xff]
    %v1189 = vld [vmem:[#allocation10 + $0x100] sm:$0xff]
    %v1190 = vld [vmem:[#allocation10 + $0x108] sm:$0xff]
    %v1191 = vld [vmem:[#allocation10 + $0x110] sm:$0xff]
    %v1192 = vld [vmem:[#allocation10 + $0x118] sm:$0xff]
    %v1193 = vld [vmem:[#allocation10 + $0x120] sm:$0xff]
    %v1194 = vld [vmem:[#allocation10 + $0x128] sm:$0xff]
    %v1195 = vld [vmem:[#allocation10 + $0x130] sm:$0xff]
    %v1196 = vld [vmem:[#allocation10 + $0x138] sm:$0xff]
    %v1197 = vld [vmem:[#allocation10 + $0x140] sm:$0xff]
    %v1198 = vld [vmem:[#allocation10 + $0x148] sm:$0xff]
    %v1199 = vld [vmem:[#allocation10 + $0x150] sm:$0xff]
    %v1200 = vld [vmem:[#allocation10 + $0x158] sm:$0xff]
    %v1201 = vld [vmem:[#allocation10 + $0x160] sm:$0xff]
    %v1202 = vld [vmem:[#allocation10 + $0x168] sm:$0xff]
    %v1203 = vld [vmem:[#allocation10 + $0x170] sm:$0xff]
    %v1204 = vld [vmem:[#allocation10 + $0x178] sm:$0xff]
    %v1205 = vld [vmem:[#allocation10 + $0x180] sm:$0xff]
    %v1206 = vld [vmem:[#allocation10 + $0x188] sm:$0xff]
    %v1207 = vld [vmem:[#allocation10 + $0x190] sm:$0xff]
    %v1208 = vld [vmem:[#allocation10 + $0x198] sm:$0xff]
    %v1209 = vld [vmem:[#allocation10 + $0x1a0] sm:$0xff]
    %v1210 = vld [vmem:[#allocation10 + $0x1a8] sm:$0xff]
    %v1211 = vld [vmem:[#allocation10 + $0x1b0] sm:$0xff]
    %v1212 = vld [vmem:[#allocation10 + $0x1b8] sm:$0xff]
    %v1213 = vld [vmem:[#allocation10 + $0x1c0] sm:$0xff]
    %v1214 = vld [vmem:[#allocation10 + $0x1c8] sm:$0xff]
    %v1215 = vld [vmem:[#allocation10 + $0x1d0] sm:$0xff]
    %v1216 = vld [vmem:[#allocation10 + $0x1d8] sm:$0xff]
    %v1217 = vld [vmem:[#allocation10 + $0x1e0] sm:$0xff]
    %v1218 = vld [vmem:[#allocation10 + $0x1e8] sm:$0xff]
    %v1219 = vld [vmem:[#allocation10 + $0x1f0] sm:$0xff]
    %v1220 = vld [vmem:[#allocation10 + $0x1f8] sm:$0xff]
    %v1221 = vld [vmem:[#allocation10 + $0x200] sm:$0xff]
    %v1222 = vld [vmem:[#allocation10 + $0x208] sm:$0xff]
    %v1223 = vld [vmem:[#allocation10 + $0x210] sm:$0xff]
    %v1224 = vld [vmem:[#allocation10 + $0x218] sm:$0xff]
    %v1225 = vld [vmem:[#allocation10 + $0x220] sm:$0xff]
    %v1226 = vld [vmem:[#allocation10 + $0x228] sm:$0xff]
    %v1227 = vld [vmem:[#allocation10 + $0x230] sm:$0xff]
    %v1228 = vld [vmem:[#allocation10 + $0x238] sm:$0xff]
    %v1229 = vld [vmem:[#allocation10 + $0x240] sm:$0xff]
    %v1230 = vld [vmem:[#allocation10 + $0x248] sm:$0xff]
    %v1231 = vld [vmem:[#allocation10 + $0x250] sm:$0xff]
    %v1232 = vld [vmem:[#allocation10 + $0x258] sm:$0xff]
    %v1233 = vld [vmem:[#allocation10 + $0x260] sm:$0xff]
    %v1234 = vld [vmem:[#allocation10 + $0x268] sm:$0xff]
    %v1235 = vld [vmem:[#allocation10 + $0x270] sm:$0xff]
    %v1236 = vld [vmem:[#allocation10 + $0x278] sm:$0xff]
    %v1237 = vld [vmem:[#allocation10 + $0x280] sm:$0xff]
    %v1238 = vld [vmem:[#allocation10 + $0x288] sm:$0xff]
    %v1239 = vld [vmem:[#allocation10 + $0x290] sm:$0xff]
    %v1240 = vld [vmem:[#allocation10 + $0x298] sm:$0xff]
    %v1241 = vld [vmem:[#allocation10 + $0x2a0] sm:$0xff]
    %v1242 = vld [vmem:[#allocation10 + $0x2a8] sm:$0xff]
    %v1243 = vld [vmem:[#allocation10 + $0x2b0] sm:$0xff]
    %v1244 = vld [vmem:[#allocation10 + $0x2b8] sm:$0xff]
    %v1245 = vld [vmem:[#allocation10 + $0x2c0] sm:$0xff]
    %v1246 = vld [vmem:[#allocation10 + $0x2c8] sm:$0xff]
    %v1247 = vld [vmem:[#allocation10 + $0x2d0] sm:$0xff]
    %v1248 = vld [vmem:[#allocation10 + $0x2d8] sm:$0xff]
    %v1249 = vld [vmem:[#allocation10 + $0x2e0] sm:$0xff]
    %v1250 = vld [vmem:[#allocation10 + $0x2e8] sm:$0xff]
    %v1251 = vld [vmem:[#allocation10 + $0x2f0] sm:$0xff]
    %v1252 = vld [vmem:[#allocation10 + $0x2f8] sm:$0xff]
    %v1253 = vld [vmem:[#allocation10 + $0x300] sm:$0xff]
    %v1254 = vld [vmem:[#allocation10 + $0x308] sm:$0xff]
    %v1255 = vld [vmem:[#allocation10 + $0x310] sm:$0xff]
    %v1256 = vld [vmem:[#allocation10 + $0x318] sm:$0xff]
    %v1257 = vld [vmem:[#allocation10 + $0x320] sm:$0xff]
    %v1258 = vld [vmem:[#allocation10 + $0x328] sm:$0xff]
    %v1259 = vld [vmem:[#allocation10 + $0x330] sm:$0xff]
    %v1260 = vld [vmem:[#allocation10 + $0x338] sm:$0xff]
    %v1261 = vld [vmem:[#allocation10 + $0x340] sm:$0xff]
    %v1262 = vld [vmem:[#allocation10 + $0x348] sm:$0xff]
    %v1263 = vld [vmem:[#allocation10 + $0x350] sm:$0xff]
    %v1264 = vld [vmem:[#allocation10 + $0x358] sm:$0xff]
    %v1265 = vld [vmem:[#allocation10 + $0x360] sm:$0xff]
    %v1266 = vld [vmem:[#allocation10 + $0x368] sm:$0xff]
    %v1267 = vld [vmem:[#allocation10 + $0x370] sm:$0xff]
    %v1268 = vld [vmem:[#allocation10 + $0x378] sm:$0xff]
    %v1269 = vld [vmem:[#allocation10 + $0x380] sm:$0xff]
    %v1270 = vld [vmem:[#allocation10 + $0x388] sm:$0xff]
    %v1271 = vld [vmem:[#allocation10 + $0x390] sm:$0xff]
    %v1272 = vld [vmem:[#allocation10 + $0x398] sm:$0xff]
    %v1273 = vld [vmem:[#allocation10 + $0x3a0] sm:$0xff]
    %v1274 = vld [vmem:[#allocation10 + $0x3a8] sm:$0xff]
    %v1275 = vld [vmem:[#allocation10 + $0x3b0] sm:$0xff]
    %v1276 = vld [vmem:[#allocation10 + $0x3b8] sm:$0xff]
    %v1277 = vld [vmem:[#allocation10 + $0x3c0] sm:$0xff]
    %v1278 = vld [vmem:[#allocation10 + $0x3c8] sm:$0xff]
    %v1279 = vld [vmem:[#allocation10 + $0x3d0] sm:$0xff]
    %v1280 = vld [vmem:[#allocation10 + $0x3d8] sm:$0xff]
    %v1281 = vld [vmem:[#allocation10 + $0x3e0] sm:$0xff]
    %v1282 = vld [vmem:[#allocation10 + $0x3e8] sm:$0xff]
    %v1283 = vld [vmem:[#allocation10 + $0x3f0] sm:$0xff]
    %v1284 = vld [vmem:[#allocation10 + $0x3f8] sm:$0xff]
    %v1285 = vld [vmem:[#allocation10 + $0x400] sm:$0xff]
    %v1286 = vld [vmem:[#allocation10 + $0x408] sm:$0xff]
    %v1287 = vld [vmem:[#allocation10 + $0x410] sm:$0xff]
    %v1288 = vld [vmem:[#allocation10 + $0x418] sm:$0xff]
    %v1289 = vld [vmem:[#allocation10 + $0x420] sm:$0xff]
    %v1290 = vld [vmem:[#allocation10 + $0x428] sm:$0xff]
    %v1291 = vld [vmem:[#allocation10 + $0x430] sm:$0xff]
    %v1292 = vld [vmem:[#allocation10 + $0x438] sm:$0xff]
    %v1293 = vld [vmem:[#allocation10 + $0x440] sm:$0xff]
    %v1294 = vld [vmem:[#allocation10 + $0x448] sm:$0xff]
    %v1295 = vld [vmem:[#allocation10 + $0x450] sm:$0xff]
    %v1296 = vld [vmem:[#allocation10 + $0x458] sm:$0xff]
    %v1297 = vld [vmem:[#allocation10 + $0x460] sm:$0xff]
    %v1298 = vld [vmem:[#allocation10 + $0x468] sm:$0xff]
    %v1299 = vld [vmem:[#allocation10 + $0x470] sm:$0xff]
    %v1300 = vld [vmem:[#allocation10 + $0x478] sm:$0xff]
    %v1301 = vld [vmem:[#allocation10 + $0x480] sm:$0xff]
    %v1302 = vld [vmem:[#allocation10 + $0x488] sm:$0xff]
    %v1303 = vld [vmem:[#allocation10 + $0x490] sm:$0xff]
    %v1304 = vld [vmem:[#allocation10 + $0x498] sm:$0xff]
    %v1305 = vld [vmem:[#allocation10 + $0x4a0] sm:$0xff]
    %v1306 = vld [vmem:[#allocation10 + $0x4a8] sm:$0xff]
    %v1307 = vld [vmem:[#allocation10 + $0x4b0] sm:$0xff]
    %v1308 = vld [vmem:[#allocation10 + $0x4b8] sm:$0xff]
    %v1309 = vld [vmem:[#allocation10 + $0x4c0] sm:$0xff]
    %v1310 = vld [vmem:[#allocation10 + $0x4c8] sm:$0xff]
    %v1311 = vld [vmem:[#allocation10 + $0x4d0] sm:$0xff]
    %v1312 = vld [vmem:[#allocation10 + $0x4d8] sm:$0xff]
    %v1313 = vld [vmem:[#allocation10 + $0x4e0] sm:$0xff]
    %v1314 = vld [vmem:[#allocation10 + $0x4e8] sm:$0xff]
    %v1315 = vld [vmem:[#allocation10 + $0x4f0] sm:$0xff]
    %v1316 = vld [vmem:[#allocation10 + $0x4f8] sm:$0xff]
    %v1317 = vld [vmem:[#allocation10 + $0x500] sm:$0xff]
    %v1318 = vld [vmem:[#allocation10 + $0x508] sm:$0xff]
    %v1319 = vld [vmem:[#allocation10 + $0x510] sm:$0xff]
    %v1320 = vld [vmem:[#allocation10 + $0x518] sm:$0xff]
    %v1321 = vld [vmem:[#allocation10 + $0x520] sm:$0xff]
    %v1322 = vld [vmem:[#allocation10 + $0x528] sm:$0xff]
    %v1323 = vld [vmem:[#allocation10 + $0x530] sm:$0xff]
    %v1324 = vld [vmem:[#allocation10 + $0x538] sm:$0xff]
    %v1325 = vld [vmem:[#allocation10 + $0x540] sm:$0xff]
    %v1326 = vld [vmem:[#allocation10 + $0x548] sm:$0xff]
    %v1327 = vld [vmem:[#allocation10 + $0x550] sm:$0xff]
    %v1328 = vld [vmem:[#allocation10 + $0x558] sm:$0xff]
    %v1329 = vld [vmem:[#allocation10 + $0x560] sm:$0xff]
    %v1330 = vld [vmem:[#allocation10 + $0x568] sm:$0xff]
    %v1331 = vld [vmem:[#allocation10 + $0x570] sm:$0xff]
    %v1332 = vld [vmem:[#allocation10 + $0x578] sm:$0xff]
    %v1333 = vld [vmem:[#allocation10 + $0x580] sm:$0xff]
    %v1334 = vld [vmem:[#allocation10 + $0x588] sm:$0xff]
    %v1335 = vld [vmem:[#allocation10 + $0x590] sm:$0xff]
    %v1336 = vld [vmem:[#allocation10 + $0x598] sm:$0xff]
    %v1337 = vld [vmem:[#allocation10 + $0x5a0] sm:$0xff]
    %v1338 = vld [vmem:[#allocation10 + $0x5a8] sm:$0xff]
    %v1339 = vld [vmem:[#allocation10 + $0x5b0] sm:$0xff]
    %v1340 = vld [vmem:[#allocation10 + $0x5b8] sm:$0xff]
    %v1341 = vld [vmem:[#allocation10 + $0x5c0] sm:$0xff]
    %v1342 = vld [vmem:[#allocation10 + $0x5c8] sm:$0xff]
    %v1343 = vld [vmem:[#allocation10 + $0x5d0] sm:$0xff]
    %v1344 = vld [vmem:[#allocation10 + $0x5d8] sm:$0xff]
    %v1345 = vld [vmem:[#allocation10 + $0x5e0] sm:$0xff]
    %v1346 = vld [vmem:[#allocation10 + $0x5e8] sm:$0xff]
    %v1347 = vld [vmem:[#allocation10 + $0x5f0] sm:$0xff]
    %v1348 = vld [vmem:[#allocation10 + $0x5f8] sm:$0xff]
    %v1349 = vld [vmem:[#allocation10 + $0x600] sm:$0xff]
    %v1350 = vld [vmem:[#allocation10 + $0x608] sm:$0xff]
    %v1351 = vld [vmem:[#allocation10 + $0x610] sm:$0xff]
    %v1352 = vld [vmem:[#allocation10 + $0x618] sm:$0xff]
    %v1353 = vld [vmem:[#allocation10 + $0x620] sm:$0xff]
    %v1354 = vld [vmem:[#allocation10 + $0x628] sm:$0xff]
    %v1355 = vld [vmem:[#allocation10 + $0x630] sm:$0xff]
    %v1356 = vld [vmem:[#allocation10 + $0x638] sm:$0xff]
    %v1357 = vld [vmem:[#allocation10 + $0x640] sm:$0xff]
    %v1358 = vld [vmem:[#allocation10 + $0x648] sm:$0xff]
    %v1359 = vld [vmem:[#allocation10 + $0x650] sm:$0xff]
    %v1360 = vld [vmem:[#allocation10 + $0x658] sm:$0xff]
    %v1361 = vld [vmem:[#allocation10 + $0x660] sm:$0xff]
    %v1362 = vld [vmem:[#allocation10 + $0x668] sm:$0xff]
    %v1363 = vld [vmem:[#allocation10 + $0x670] sm:$0xff]
    %v1364 = vld [vmem:[#allocation10 + $0x678] sm:$0xff]
    %v1365 = vld [vmem:[#allocation10 + $0x680] sm:$0xff]
    %v1366 = vld [vmem:[#allocation10 + $0x688] sm:$0xff]
    %v1367 = vld [vmem:[#allocation10 + $0x690] sm:$0xff]
    %v1368 = vld [vmem:[#allocation10 + $0x698] sm:$0xff]
    %v1369 = vld [vmem:[#allocation10 + $0x6a0] sm:$0xff]
    %v1370 = vld [vmem:[#allocation10 + $0x6a8] sm:$0xff]
    %v1371 = vld [vmem:[#allocation10 + $0x6b0] sm:$0xff]
    %v1372 = vld [vmem:[#allocation10 + $0x6b8] sm:$0xff]
    %v1373 = vld [vmem:[#allocation10 + $0x6c0] sm:$0xff]
    %v1374 = vld [vmem:[#allocation10 + $0x6c8] sm:$0xff]
    %v1375 = vld [vmem:[#allocation10 + $0x6d0] sm:$0xff]
    %v1376 = vld [vmem:[#allocation10 + $0x6d8] sm:$0xff]
    %v1377 = vld [vmem:[#allocation10 + $0x6e0] sm:$0xff]
    %v1378 = vld [vmem:[#allocation10 + $0x6e8] sm:$0xff]
    %v1379 = vld [vmem:[#allocation10 + $0x6f0] sm:$0xff]
    %v1380 = vld [vmem:[#allocation10 + $0x6f8] sm:$0xff]
    %v1381 = vld [vmem:[#allocation10 + $0x700] sm:$0xff]
    %v1382 = vld [vmem:[#allocation10 + $0x708] sm:$0xff]
    %v1383 = vld [vmem:[#allocation10 + $0x710] sm:$0xff]
    %v1384 = vld [vmem:[#allocation10 + $0x718] sm:$0xff]
    %v1385 = vld [vmem:[#allocation10 + $0x720] sm:$0xff]
    %v1386 = vld [vmem:[#allocation10 + $0x728] sm:$0xff]
    %v1387 = vld [vmem:[#allocation10 + $0x730] sm:$0xff]
    %v1388 = vld [vmem:[#allocation10 + $0x738] sm:$0xff]
    %v1389 = vld [vmem:[#allocation10 + $0x740] sm:$0xff]
    %v1390 = vld [vmem:[#allocation10 + $0x748] sm:$0xff]
    %v1391 = vld [vmem:[#allocation10 + $0x750] sm:$0xff]
    %v1392 = vld [vmem:[#allocation10 + $0x758] sm:$0xff]
    %v1393 = vld [vmem:[#allocation10 + $0x760] sm:$0xff]
    %v1394 = vld [vmem:[#allocation10 + $0x768] sm:$0xff]
    %v1395 = vld [vmem:[#allocation10 + $0x770] sm:$0xff]
    %v1396 = vld [vmem:[#allocation10 + $0x778] sm:$0xff]
    %v1397 = vld [vmem:[#allocation10 + $0x780] sm:$0xff]
    %v1398 = vld [vmem:[#allocation10 + $0x788] sm:$0xff]
    %v1399 = vld [vmem:[#allocation10 + $0x790] sm:$0xff]
    %v1400 = vld [vmem:[#allocation10 + $0x798] sm:$0xff]
    %v1401 = vld [vmem:[#allocation10 + $0x7a0] sm:$0xff]
    %v1402 = vld [vmem:[#allocation10 + $0x7a8] sm:$0xff]
    %v1403 = vld [vmem:[#allocation10 + $0x7b0] sm:$0xff]
    %v1404 = vld [vmem:[#allocation10 + $0x7b8] sm:$0xff]
    %v1405 = vld [vmem:[#allocation10 + $0x7c0] sm:$0xff]
    %v1406 = vld [vmem:[#allocation10 + $0x7c8] sm:$0xff]
    %v1407 = vld [vmem:[#allocation10 + $0x7d0] sm:$0xff]
    %v1408 = vld [vmem:[#allocation10 + $0x7d8] sm:$0xff]
    %v1409 = vld [vmem:[#allocation10 + $0x7e0] sm:$0xff]
    %v1410 = vld [vmem:[#allocation10 + $0x7e8] sm:$0xff]
    %v1411 = vld [vmem:[#allocation10 + $0x7f0] sm:$0xff]
    %v1412 = vld [vmem:[#allocation10 + $0x7f8] sm:$0xff]
    %v1413 = vld [vmem:[%s7] sm:$0xff]
    %v1415 = vlaneseq
    %v1416 = vshrl.u32 %v1415, 7
    %v1417 = vsub.s32 0, %v1416
    %v1418 = vrot.slane %v1413, %v1417
    %v1419 = vlaneseq
    %v1420 = vshrl.u32 %v1419, 7
    %v1421 = vsub.s32 1, %v1420
    %v1422 = vrot.slane %v1413, %v1421
    %v1423 = vlaneseq
    %v1424 = vshrl.u32 %v1423, 7
    %v1425 = vsub.s32 2, %v1424
    %v1426 = vrot.slane %v1413, %v1425
    %v1427 = vlaneseq
    %v1428 = vshrl.u32 %v1427, 7
    %v1429 = vsub.s32 3, %v1428
    %v1430 = vrot.slane %v1413, %v1429
    %v1431 = vlaneseq
    %v1432 = vshrl.u32 %v1431, 7
    %v1433 = vsub.s32 4, %v1432
    %v1434 = vrot.slane %v1413, %v1433
    %v1435 = vlaneseq
    %v1436 = vshrl.u32 %v1435, 7
    %v1437 = vsub.s32 5, %v1436
    %v1438 = vrot.slane %v1413, %v1437
    %v1439 = vlaneseq
    %v1440 = vshrl.u32 %v1439, 7
    %v1441 = vsub.s32 6, %v1440
    %v1442 = vrot.slane %v1413, %v1441
    %v1443 = vlaneseq
    %v1444 = vshrl.u32 %v1443, 7
    %v1445 = vsub.s32 7, %v1444
    %v1446 = vrot.slane %v1413, %v1445
    %1455 = vmatprep.subr.mxu0 %v1030
    %1456 = vmatpush1.msra.mxu0 %v1029
    %1457 = vmatprep.subr.mxu0 %v1038
    %1458 = vmatpush1.msra.mxu0 %v1037
    %1459 = vmatprep.subr.mxu0 %v1046
    %1460 = vmatpush1.msra.mxu0 %v1045
    %1461 = vmatprep.subr.mxu0 %v1054
    %1462 = vmatpush1.msra.mxu0 %v1053
    %1463 = vmatprep.subr.mxu0 %v1062
    %1464 = vmatpush1.msra.mxu0 %v1061
    %1465 = vmatprep.subr.mxu0 %v1070
    %1466 = vmatpush1.msra.mxu0 %v1069
    %1467 = vmatprep.subr.mxu0 %v1078
    %1468 = vmatpush1.msra.mxu0 %v1077
    %1469 = vmatprep.subr.mxu0 %v1086
    %1470 = vmatpush1.msra.mxu0 %v1085
    %1471 = vmatprep.subr.mxu0 %v1094
    %1472 = vmatpush1.msra.mxu0 %v1093
    %1473 = vmatprep.subr.mxu0 %v1102
    %1474 = vmatpush1.msra.mxu0 %v1101
    %1475 = vmatprep.subr.mxu0 %v1110
    %1476 = vmatpush1.msra.mxu0 %v1109
    %1477 = vmatprep.subr.mxu0 %v1118
    %1478 = vmatpush1.msra.mxu0 %v1117
    %1479 = vmatprep.subr.mxu0 %v1126
    %1480 = vmatpush1.msra.mxu0 %v1125
    %1481 = vmatprep.subr.mxu0 %v1134
    %1482 = vmatpush1.msra.mxu0 %v1133
    %1483 = vmatprep.subr.mxu0 %v1142
    %1484 = vmatpush1.msra.mxu0 %v1141
    %1485 = vmatprep.subr.mxu0 %v1150
    %1486 = vmatpush1.msra.mxu0 %v1149
    %1487 = vmatprep.subr.mxu0 0.0
    %1488 = vmatpush1.msra.mxu0 0.0
    %1489 = vmatprep.subr.mxu0 0.0
    %1490 = vmatpush1.msra.mxu0 0.0
    %1491 = vmatprep.subr.mxu0 0.0
    %1492 = vmatpush1.msra.mxu0 0.0
    %1493 = vmatprep.subr.mxu0 0.0
    %1494 = vmatpush1.msra.mxu0 0.0
    %1495 = vmatprep.subr.mxu0 0.0
    %1496 = vmatpush1.msra.mxu0 0.0
    %1497 = vmatprep.subr.mxu0 0.0
    %1498 = vmatpush1.msra.mxu0 0.0
    %1499 = vmatprep.subr.mxu0 0.0
    %1500 = vmatpush1.msra.mxu0 0.0
    %1501 = vmatprep.subr.mxu0 0.0
    %1502 = vmatpush1.msra.mxu0 0.0
    %1503 = vmatprep.subr.mxu0 0.0
    %1504 = vmatpush1.msra.mxu0 0.0
    %1505 = vmatprep.subr.mxu0 0.0
    %1506 = vmatpush1.msra.mxu0 0.0
    %1507 = vmatprep.subr.mxu0 0.0
    %1508 = vmatpush1.msra.mxu0 0.0
    %1509 = vmatprep.subr.mxu0 0.0
    %1510 = vmatpush1.msra.mxu0 0.0
    %1511 = vmatprep.subr.mxu0 0.0
    %1512 = vmatpush1.msra.mxu0 0.0
    %1513 = vmatprep.subr.mxu0 0.0
    %1514 = vmatpush1.msra.mxu0 0.0
    %1515 = vmatprep.subr.mxu0 0.0
    %1516 = vmatpush1.msra.mxu0 0.0
    %1517 = vmatprep.subr.mxu0 0.0
    %1518 = vmatpush1.msra.mxu0 0.0
    %1519 = vmatprep.mubr.f32.mxu0 0.0
    %1520 = vmatmul.mubr.f32.gmra.mrb[0].mxu0 %v1021
    %v1521 = vpop.f32.mrb[0].mxu0
    %v1522 = vadd.f32 %v1418, %v1521
    %v1523 = vpop.f32.mrb[0].mxu0
    %v1524 = vadd.f32 %v1422, %v1523
    %1525 = vmatprep.mubr.f32.mxu0 0.0
    %1526 = vmatmul.mubr.f32.gmra.mrb[0].mxu0 %v1022
    %v1527 = vpop.f32.mrb[0].mxu0
    %v1528 = vadd.f32 %v1418, %v1527
    %v1529 = vpop.f32.mrb[0].mxu0
    %v1530 = vadd.f32 %v1422, %v1529
    %1531 = vmatprep.mubr.f32.mxu0 0.0
    %1532 = vmatmul.mubr.f32.gmra.mrb[0].mxu0 %v1023
    %v1533 = vpop.f32.mrb[0].mxu0
    %v1534 = vadd.f32 %v1418, %v1533
    %v1535 = vpop.f32.mrb[0].mxu0
    %v1536 = vadd.f32 %v1422, %v1535
    %1537 = vmatprep.mubr.f32.mxu0 0.0
    %1538 = vmatmul.mubr.f32.gmra.mrb[0].mxu0 %v1024
    %v1539 = vpop.f32.mrb[0].mxu0
    %v1540 = vadd.f32 %v1418, %v1539
    %v1541 = vpop.f32.mrb[0].mxu0
    %v1542 = vadd.f32 %v1422, %v1541
    %1543 = vmatprep.mubr.f32.mxu0 0.0
    %1544 = vmatmul.mubr.f32.gmra.mrb[0].mxu0 %v1025
    %v1545 = vpop.f32.mrb[0].mxu0
    %v1546 = vadd.f32 %v1418, %v1545
    %v1547 = vpop.f32.mrb[0].mxu0
    %v1548 = vadd.f32 %v1422, %v1547
    %1549 = vmatprep.mubr.f32.mxu0 0.0
    %1550 = vmatmul.mubr.f32.gmra.mrb[0].mxu0 %v1026
    %v1551 = vpop.f32.mrb[0].mxu0
    %v1552 = vadd.f32 %v1418, %v1551
    %v1553 = vpop.f32.mrb[0].mxu0
    %v1554 = vadd.f32 %v1422, %v1553
    %1555 = vmatprep.mubr.f32.mxu0 0.0
    %1556 = vmatmul.mubr.f32.gmra.mrb[0].mxu0 %v1027
    %v1557 = vpop.f32.mrb[0].mxu0
    %v1558 = vadd.f32 %v1418, %v1557
    %v1559 = vpop.f32.mrb[0].mxu0
    %v1560 = vadd.f32 %v1422, %v1559
    %1561 = vmatprep.mubr.f32.mxu0 0.0
    %1562 = vmatmul.mubr.f32.gmra.mrb[0].mxu0 %v1028
    %v1563 = vpop.f32.mrb[0].mxu0
    %v1564 = vadd.f32 %v1418, %v1563
    %v1565 = vpop.f32.mrb[0].mxu0
    %v1566 = vadd.f32 %v1422, %v1565
    %1567 = vdwg.mxu0
    %1568 = vmatprep.subr.mxu0 %v1032
    %1569 = vmatpush1.msra.mxu0 %v1031
    %1570 = vmatprep.subr.mxu0 %v1040
    %1571 = vmatpush1.msra.mxu0 %v1039
    %1572 = vmatprep.subr.mxu0 %v1048
    %1573 = vmatpush1.msra.mxu0 %v1047
    %1574 = vmatprep.subr.mxu0 %v1056
    %1575 = vmatpush1.msra.mxu0 %v1055
    %1576 = vmatprep.subr.mxu0 %v1064
    %1577 = vmatpush1.msra.mxu0 %v1063
    %1578 = vmatprep.subr.mxu0 %v1072
    %1579 = vmatpush1.msra.mxu0 %v1071
    %1580 = vmatprep.subr.mxu0 %v1080
    %1581 = vmatpush1.msra.mxu0 %v1079
    %1582 = vmatprep.subr.mxu0 %v1088
    %1583 = vmatpush1.msra.mxu0 %v1087
    %1584 = vmatprep.subr.mxu0 %v1096
    %1585 = vmatpush1.msra.mxu0 %v1095
    %1586 = vmatprep.subr.mxu0 %v1104
    %1587 = vmatpush1.msra.mxu0 %v1103
    %1588 = vmatprep.subr.mxu0 %v1112
    %1589 = vmatpush1.msra.mxu0 %v1111
    %1590 = vmatprep.subr.mxu0 %v1120
    %1591 = vmatpush1.msra.mxu0 %v1119
    %1592 = vmatprep.subr.mxu0 %v1128
    %1593 = vmatpush1.msra.mxu0 %v1127
    %1594 = vmatprep.subr.mxu0 %v1136
    %1595 = vmatpush1.msra.mxu0 %v1135
    %1596 = vmatprep.subr.mxu0 %v1144
    %1597 = vmatpush1.msra.mxu0 %v1143
    %1598 = vmatprep.subr.mxu0 %v1152
    %1599 = vmatpush1.msra.mxu0 %v1151
    %1600 = vmatprep.subr.mxu0 0.0
    %1601 = vmatpush1.msra.mxu0 0.0
    %1602 = vmatprep.subr.mxu0 0.0
    %1603 = vmatpush1.msra.mxu0 0.0
    %1604 = vmatprep.subr.mxu0 0.0
    %1605 = vmatpush1.msra.mxu0 0.0
    %1606 = vmatprep.subr.mxu0 0.0
    %1607 = vmatpush1.msra.mxu0 0.0
    %1608 = vmatprep.subr.mxu0 0.0
    %1609 = vmatpush1.msra.mxu0 0.0
    %1610 = vmatprep.subr.mxu0 0.0
    %1611 = vmatpush1.msra.mxu0 0.0
    %1612 = vmatprep.subr.mxu0 0.0
    %1613 = vmatpush1.msra.mxu0 0.0
    %1614 = vmatprep.subr.mxu0 0.0
    %1615 = vmatpush1.msra.mxu0 0.0
    %1616 = vmatprep.subr.mxu0 0.0
    %1617 = vmatpush1.msra.mxu0 0.0
    %1618 = vmatprep.subr.mxu0 0.0
    %1619 = vmatpush1.msra.mxu0 0.0
    %1620 = vmatprep.subr.mxu0 0.0
    %1621 = vmatpush1.msra.mxu0 0.0
    %1622 = vmatprep.subr.mxu0 0.0
    %1623 = vmatpush1.msra.mxu0 0.0
    %1624 = vmatprep.subr.mxu0 0.0
    %1625 = vmatpush1.msra.mxu0 0.0
    %1626 = vmatprep.subr.mxu0 0.0
    %1627 = vmatpush1.msra.mxu0 0.0
    %1628 = vmatprep.subr.mxu0 0.0
    %1629 = vmatpush1.msra.mxu0 0.0
    %1630 = vmatprep.subr.mxu0 0.0
    %1631 = vmatpush1.msra.mxu0 0.0
    %1632 = vmatprep.mubr.f32.mxu0 0.0
    %1633 = vmatmul.mubr.f32.gmra.mrb[0].mxu0 %v1021
    %v1634 = vpop.f32.mrb[0].mxu0
    %v1635 = vadd.f32 %v1426, %v1634
    %v1636 = vpop.f32.mrb[0].mxu0
    %v1637 = vadd.f32 %v1430, %v1636
    %1638 = vmatprep.mubr.f32.mxu0 0.0
    %1639 = vmatmul.mubr.f32.gmra.mrb[0].mxu0 %v1022
    %v1640 = vpop.f32.mrb[0].mxu0
    %v1641 = vadd.f32 %v1426, %v1640
    %v1642 = vpop.f32.mrb[0].mxu0
    %v1643 = vadd.f32 %v1430, %v1642
    %1644 = vmatprep.mubr.f32.mxu0 0.0
    %1645 = vmatmul.mubr.f32.gmra.mrb[0].mxu0 %v1023
    %v1646 = vpop.f32.mrb[0].mxu0
    %v1647 = vadd.f32 %v1426, %v1646
    %v1648 = vpop.f32.mrb[0].mxu0
    %v1649 = vadd.f32 %v1430, %v1648
    %1650 = vmatprep.mubr.f32.mxu0 0.0
    %1651 = vmatmul.mubr.f32.gmra.mrb[0].mxu0 %v1024
    %v1652 = vpop.f32.mrb[0].mxu0
    %v1653 = vadd.f32 %v1426, %v1652
    %v1654 = vpop.f32.mrb[0].mxu0
    %v1655 = vadd.f32 %v1430, %v1654
    %1656 = vmatprep.mubr.f32.mxu0 0.0
    %1657 = vmatmul.mubr.f32.gmra.mrb[0].mxu0 %v1025
    %v1658 = vpop.f32.mrb[0].mxu0
    %v1659 = vadd.f32 %v1426, %v1658
    %v1660 = vpop.f32.mrb[0].mxu0
    %v1661 = vadd.f32 %v1430, %v1660
    %1662 = vmatprep.mubr.f32.mxu0 0.0
    %1663 = vmatmul.mubr.f32.gmra.mrb[0].mxu0 %v1026
    %v1664 = vpop.f32.mrb[0].mxu0
    %v1665 = vadd.f32 %v1426, %v1664
    %v1666 = vpop.f32.mrb[0].mxu0
    %v1667 = vadd.f32 %v1430, %v1666
    %1668 = vmatprep.mubr.f32.mxu0 0.0
    %1669 = vmatmul.mubr.f32.gmra.mrb[0].mxu0 %v1027
    %v1670 = vpop.f32.mrb[0].mxu0
    %v1671 = vadd.f32 %v1426, %v1670
    %v1672 = vpop.f32.mrb[0].mxu0
    %v1673 = vadd.f32 %v1430, %v1672
    %1674 = vmatprep.mubr.f32.mxu0 0.0
    %1675 = vmatmul.mubr.f32.gmra.mrb[0].mxu0 %v1028
    %v1676 = vpop.f32.mrb[0].mxu0
    %v1677 = vadd.f32 %v1426, %v1676
    %v1678 = vpop.f32.mrb[0].mxu0
    %v1679 = vadd.f32 %v1430, %v1678
    %1680 = vdwg.mxu0
    %1681 = vmatprep.subr.mxu0 %v1034
    %1682 = vmatpush1.msra.mxu0 %v1033
    %1683 = vmatprep.subr.mxu0 %v1042
    %1684 = vmatpush1.msra.mxu0 %v1041
    %1685 = vmatprep.subr.mxu0 %v1050
    %1686 = vmatpush1.msra.mxu0 %v1049
    %1687 = vmatprep.subr.mxu0 %v1058
    %1688 = vmatpush1.msra.mxu0 %v1057
    %1689 = vmatprep.subr.mxu0 %v1066
    %1690 = vmatpush1.msra.mxu0 %v1065
    %1691 = vmatprep.subr.mxu0 %v1074
    %1692 = vmatpush1.msra.mxu0 %v1073
    %1693 = vmatprep.subr.mxu0 %v1082
    %1694 = vmatpush1.msra.mxu0 %v1081
    %1695 = vmatprep.subr.mxu0 %v1090
    %1696 = vmatpush1.msra.mxu0 %v1089
    %1697 = vmatprep.subr.mxu0 %v1098
    %1698 = vmatpush1.msra.mxu0 %v1097
    %1699 = vmatprep.subr.mxu0 %v1106
    %1700 = vmatpush1.msra.mxu0 %v1105
    %1701 = vmatprep.subr.mxu0 %v1114
    %1702 = vmatpush1.msra.mxu0 %v1113
    %1703 = vmatprep.subr.mxu0 %v1122
    %1704 = vmatpush1.msra.mxu0 %v1121
    %1705 = vmatprep.subr.mxu0 %v1130
    %1706 = vmatpush1.msra.mxu0 %v1129
    %1707 = vmatprep.subr.mxu0 %v1138
    %1708 = vmatpush1.msra.mxu0 %v1137
    %1709 = vmatprep.subr.mxu0 %v1146
    %1710 = vmatpush1.msra.mxu0 %v1145
    %1711 = vmatprep.subr.mxu0 %v1154
    %1712 = vmatpush1.msra.mxu0 %v1153
    %1713 = vmatprep.subr.mxu0 0.0
    %1714 = vmatpush1.msra.mxu0 0.0
    %1715 = vmatprep.subr.mxu0 0.0
    %1716 = vmatpush1.msra.mxu0 0.0
    %1717 = vmatprep.subr.mxu0 0.0
    %1718 = vmatpush1.msra.mxu0 0.0
    %1719 = vmatprep.subr.mxu0 0.0
    %1720 = vmatpush1.msra.mxu0 0.0
    %1721 = vmatprep.subr.mxu0 0.0
    %1722 = vmatpush1.msra.mxu0 0.0
    %1723 = vmatprep.subr.mxu0 0.0
    %1724 = vmatpush1.msra.mxu0 0.0
    %1725 = vmatprep.subr.mxu0 0.0
    %1726 = vmatpush1.msra.mxu0 0.0
    %1727 = vmatprep.subr.mxu0 0.0
    %1728 = vmatpush1.msra.mxu0 0.0
    %1729 = vmatprep.subr.mxu0 0.0
    %1730 = vmatpush1.msra.mxu0 0.0
    %1731 = vmatprep.subr.mxu0 0.0
    %1732 = vmatpush1.msra.mxu0 0.0
    %1733 = vmatprep.subr.mxu0 0.0
    %1734 = vmatpush1.msra.mxu0 0.0
    %1735 = vmatprep.subr.mxu0 0.0
    %1736 = vmatpush1.msra.mxu0 0.0
    %1737 = vmatprep.subr.mxu0 0.0
    %1738 = vmatpush1.msra.mxu0 0.0
    %1739 = vmatprep.subr.mxu0 0.0
    %1740 = vmatpush1.msra.mxu0 0.0
    %1741 = vmatprep.subr.mxu0 0.0
    %1742 = vmatpush1.msra.mxu0 0.0
    %1743 = vmatprep.subr.mxu0 0.0
    %1744 = vmatpush1.msra.mxu0 0.0
    %1745 = vmatprep.mubr.f32.mxu0 0.0
    %1746 = vmatmul.mubr.f32.gmra.mrb[0].mxu0 %v1021
    %v1747 = vpop.f32.mrb[0].mxu0
    %v1748 = vadd.f32 %v1434, %v1747
    %v1749 = vpop.f32.mrb[0].mxu0
    %v1750 = vadd.f32 %v1438, %v1749
    %1751 = vmatprep.mubr.f32.mxu0 0.0
    %1752 = vmatmul.mubr.f32.gmra.mrb[0].mxu0 %v1022
    %v1753 = vpop.f32.mrb[0].mxu0
    %v1754 = vadd.f32 %v1434, %v1753
    %v1755 = vpop.f32.mrb[0].mxu0
    %v1756 = vadd.f32 %v1438, %v1755
    %1757 = vmatprep.mubr.f32.mxu0 0.0
    %1758 = vmatmul.mubr.f32.gmra.mrb[0].mxu0 %v1023
    %v1759 = vpop.f32.mrb[0].mxu0
    %v1760 = vadd.f32 %v1434, %v1759
    %v1761 = vpop.f32.mrb[0].mxu0
    %v1762 = vadd.f32 %v1438, %v1761
    %1763 = vmatprep.mubr.f32.mxu0 0.0
    %1764 = vmatmul.mubr.f32.gmra.mrb[0].mxu0 %v1024
    %v1765 = vpop.f32.mrb[0].mxu0
    %v1766 = vadd.f32 %v1434, %v1765
    %v1767 = vpop.f32.mrb[0].mxu0
    %v1768 = vadd.f32 %v1438, %v1767
    %1769 = vmatprep.mubr.f32.mxu0 0.0
    %1770 = vmatmul.mubr.f32.gmra.mrb[0].mxu0 %v1025
    %v1771 = vpop.f32.mrb[0].mxu0
    %v1772 = vadd.f32 %v1434, %v1771
    %v1773 = vpop.f32.mrb[0].mxu0
    %v1774 = vadd.f32 %v1438, %v1773
    %1775 = vmatprep.mubr.f32.mxu0 0.0
    %1776 = vmatmul.mubr.f32.gmra.mrb[0].mxu0 %v1026
    %v1777 = vpop.f32.mrb[0].mxu0
    %v1778 = vadd.f32 %v1434, %v1777
    %v1779 = vpop.f32.mrb[0].mxu0
    %v1780 = vadd.f32 %v1438, %v1779
    %1781 = vmatprep.mubr.f32.mxu0 0.0
    %1782 = vmatmul.mubr.f32.gmra.mrb[0].mxu0 %v1027
    %v1783 = vpop.f32.mrb[0].mxu0
    %v1784 = vadd.f32 %v1434, %v1783
    %v1785 = vpop.f32.mrb[0].mxu0
    %v1786 = vadd.f32 %v1438, %v1785
    %1787 = vmatprep.mubr.f32.mxu0 0.0
    %1788 = vmatmul.mubr.f32.gmra.mrb[0].mxu0 %v1028
    %v1789 = vpop.f32.mrb[0].mxu0
    %v1790 = vadd.f32 %v1434, %v1789
    %v1791 = vpop.f32.mrb[0].mxu0
    %v1792 = vadd.f32 %v1438, %v1791
    %1793 = vdwg.mxu0
    %1794 = vmatprep.subr.mxu0 %v1036
    %1795 = vmatpush1.msra.mxu0 %v1035
    %1796 = vmatprep.subr.mxu0 %v1044
    %1797 = vmatpush1.msra.mxu0 %v1043
    %1798 = vmatprep.subr.mxu0 %v1052
    %1799 = vmatpush1.msra.mxu0 %v1051
    %1800 = vmatprep.subr.mxu0 %v1060
    %1801 = vmatpush1.msra.mxu0 %v1059
    %1802 = vmatprep.subr.mxu0 %v1068
    %1803 = vmatpush1.msra.mxu0 %v1067
    %1804 = vmatprep.subr.mxu0 %v1076
    %1805 = vmatpush1.msra.mxu0 %v1075
    %1806 = vmatprep.subr.mxu0 %v1084
    %1807 = vmatpush1.msra.mxu0 %v1083
    %1808 = vmatprep.subr.mxu0 %v1092
    %1809 = vmatpush1.msra.mxu0 %v1091
    %1810 = vmatprep.subr.mxu0 %v1100
    %1811 = vmatpush1.msra.mxu0 %v1099
    %1812 = vmatprep.subr.mxu0 %v1108
    %1813 = vmatpush1.msra.mxu0 %v1107
    %1814 = vmatprep.subr.mxu0 %v1116
    %1815 = vmatpush1.msra.mxu0 %v1115
    %1816 = vmatprep.subr.mxu0 %v1124
    %1817 = vmatpush1.msra.mxu0 %v1123
    %1818 = vmatprep.subr.mxu0 %v1132
    %1819 = vmatpush1.msra.mxu0 %v1131
    %1820 = vmatprep.subr.mxu0 %v1140
    %1821 = vmatpush1.msra.mxu0 %v1139
    %1822 = vmatprep.subr.mxu0 %v1148
    %1823 = vmatpush1.msra.mxu0 %v1147
    %1824 = vmatprep.subr.mxu0 %v1156
    %1825 = vmatpush1.msra.mxu0 %v1155
    %1826 = vmatprep.subr.mxu0 0.0
    %1827 = vmatpush1.msra.mxu0 0.0
    %1828 = vmatprep.subr.mxu0 0.0
    %1829 = vmatpush1.msra.mxu0 0.0
    %1830 = vmatprep.subr.mxu0 0.0
    %1831 = vmatpush1.msra.mxu0 0.0
    %1832 = vmatprep.subr.mxu0 0.0
    %1833 = vmatpush1.msra.mxu0 0.0
    %1834 = vmatprep.subr.mxu0 0.0
    %1835 = vmatpush1.msra.mxu0 0.0
    %1836 = vmatprep.subr.mxu0 0.0
    %1837 = vmatpush1.msra.mxu0 0.0
    %1838 = vmatprep.subr.mxu0 0.0
    %1839 = vmatpush1.msra.mxu0 0.0
    %1840 = vmatprep.subr.mxu0 0.0
    %1841 = vmatpush1.msra.mxu0 0.0
    %1842 = vmatprep.subr.mxu0 0.0
    %1843 = vmatpush1.msra.mxu0 0.0
    %1844 = vmatprep.subr.mxu0 0.0
    %1845 = vmatpush1.msra.mxu0 0.0
    %1846 = vmatprep.subr.mxu0 0.0
    %1847 = vmatpush1.msra.mxu0 0.0
    %1848 = vmatprep.subr.mxu0 0.0
    %1849 = vmatpush1.msra.mxu0 0.0
    %1850 = vmatprep.subr.mxu0 0.0
    %1851 = vmatpush1.msra.mxu0 0.0
    %1852 = vmatprep.subr.mxu0 0.0
    %1853 = vmatpush1.msra.mxu0 0.0
    %1854 = vmatprep.subr.mxu0 0.0
    %1855 = vmatpush1.msra.mxu0 0.0
    %1856 = vmatprep.subr.mxu0 0.0
    %1857 = vmatpush1.msra.mxu0 0.0
    %1858 = vmatprep.mubr.f32.mxu0 0.0
    %1859 = vmatmul.mubr.f32.gmra.mrb[0].mxu0 %v1021
    %v1860 = vpop.f32.mrb[0].mxu0
    %v1861 = vadd.f32 %v1442, %v1860
    %v1862 = vpop.f32.mrb[0].mxu0
    %v1863 = vadd.f32 %v1446, %v1862
    %1864 = vmatprep.mubr.f32.mxu0 0.0
    %1865 = vmatmul.mubr.f32.gmra.mrb[0].mxu0 %v1022
    %v1866 = vpop.f32.mrb[0].mxu0
    %v1867 = vadd.f32 %v1442, %v1866
    %v1868 = vpop.f32.mrb[0].mxu0
    %v1869 = vadd.f32 %v1446, %v1868
    %1870 = vmatprep.mubr.f32.mxu0 0.0
    %1871 = vmatmul.mubr.f32.gmra.mrb[0].mxu0 %v1023
    %v1872 = vpop.f32.mrb[0].mxu0
    %v1873 = vadd.f32 %v1442, %v1872
    %v1874 = vpop.f32.mrb[0].mxu0
    %v1875 = vadd.f32 %v1446, %v1874
    %1876 = vmatprep.mubr.f32.mxu0 0.0
    %1877 = vmatmul.mubr.f32.gmra.mrb[0].mxu0 %v1024
    %v1878 = vpop.f32.mrb[0].mxu0
    %v1879 = vadd.f32 %v1442, %v1878
    %v1880 = vpop.f32.mrb[0].mxu0
    %v1881 = vadd.f32 %v1446, %v1880
    %1882 = vmatprep.mubr.f32.mxu0 0.0
    %1883 = vmatmul.mubr.f32.gmra.mrb[0].mxu0 %v1025
    %v1884 = vpop.f32.mrb[0].mxu0
    %v1885 = vadd.f32 %v1442, %v1884
    %v1886 = vpop.f32.mrb[0].mxu0
    %v1887 = vadd.f32 %v1446, %v1886
    %1888 = vmatprep.mubr.f32.mxu0 0.0
    %1889 = vmatmul.mubr.f32.gmra.mrb[0].mxu0 %v1026
    %v1890 = vpop.f32.mrb[0].mxu0
    %v1891 = vadd.f32 %v1442, %v1890
    %v1892 = vpop.f32.mrb[0].mxu0
    %v1893 = vadd.f32 %v1446, %v1892
    %1894 = vmatprep.mubr.f32.mxu0 0.0
    %1895 = vmatmul.mubr.f32.gmra.mrb[0].mxu0 %v1027
    %v1896 = vpop.f32.mrb[0].mxu0
    %v1897 = vadd.f32 %v1442, %v1896
    %v1898 = vpop.f32.mrb[0].mxu0
    %v1899 = vadd.f32 %v1446, %v1898
    %1900 = vmatprep.mubr.f32.mxu0 0.0
    %1901 = vmatmul.mubr.f32.gmra.mrb[0].mxu0 %v1028
    %v1902 = vpop.f32.mrb[0].mxu0
    %v1903 = vadd.f32 %v1442, %v1902
    %v1904 = vpop.f32.mrb[0].mxu0
    %v1905 = vadd.f32 %v1446, %v1904
    %1906 = vdwg.mxu0
    %1907 = vst [vmem:[#allocation3] sm:$0xff] %v1522
    %1908 = vst [vmem:[#allocation3 + $0x8] sm:$0xff] %v1524
    %1909 = vst [vmem:[#allocation3 + $0x10] sm:$0xff] %v1635
    %1910 = vst [vmem:[#allocation3 + $0x18] sm:$0xff] %v1637
    %1911 = vst [vmem:[#allocation3 + $0x20] sm:$0xff] %v1748
    %1912 = vst [vmem:[#allocation3 + $0x28] sm:$0xff] %v1750
    %1913 = vst [vmem:[#allocation3 + $0x30] sm:$0xff] %v1861
    %1914 = vst [vmem:[#allocation3 + $0x38] sm:$0xff] %v1863
    %1915 = vst [vmem:[#allocation3 + $0x40] sm:$0xff] %v1528
    %1916 = vst [vmem:[#allocation3 + $0x48] sm:$0xff] %v1530
    %1917 = vst [vmem:[#allocation3 + $0x50] sm:$0xff] %v1641
    %1918 = vst [vmem:[#allocation3 + $0x58] sm:$0xff] %v1643
    %1919 = vst [vmem:[#allocation3 + $0x60] sm:$0xff] %v1754
    %1920 = vst [vmem:[#allocation3 + $0x68] sm:$0xff] %v1756
    %1921 = vst [vmem:[#allocation3 + $0x70] sm:$0xff] %v1867
    %1922 = vst [vmem:[#allocation3 + $0x78] sm:$0xff] %v1869
    %1923 = vst [vmem:[#allocation3 + $0x80] sm:$0xff] %v1534
    %1924 = vst [vmem:[#allocation3 + $0x88] sm:$0xff] %v1536
    %1925 = vst [vmem:[#allocation3 + $0x90] sm:$0xff] %v1647
    %1926 = vst [vmem:[#allocation3 + $0x98] sm:$0xff] %v1649
    %1927 = vst [vmem:[#allocation3 + $0xa0] sm:$0xff] %v1760
    %1928 = vst [vmem:[#allocation3 + $0xa8] sm:$0xff] %v1762
    %1929 = vst [vmem:[#allocation3 + $0xb0] sm:$0xff] %v1873
    %1930 = vst [vmem:[#allocation3 + $0xb8] sm:$0xff] %v1875
    %1931 = vst [vmem:[#allocation3 + $0xc0] sm:$0xff] %v1540
    %1932 = vst [vmem:[#allocation3 + $0xc8] sm:$0xff] %v1542
    %1933 = vst [vmem:[#allocation3 + $0xd0] sm:$0xff] %v1653
    %1934 = vst [vmem:[#allocation3 + $0xd8] sm:$0xff] %v1655
    %1935 = vst [vmem:[#allocation3 + $0xe0] sm:$0xff] %v1766
    %1936 = vst [vmem:[#allocation3 + $0xe8] sm:$0xff] %v1768
    %1937 = vst [vmem:[#allocation3 + $0xf0] sm:$0xff] %v1879
    %1938 = vst [vmem:[#allocation3 + $0xf8] sm:$0xff] %v1881
    %1939 = vst [vmem:[#allocation3 + $0x100] sm:$0xff] %v1546
    %1940 = vst [vmem:[#allocation3 + $0x108] sm:$0xff] %v1548
    %1941 = vst [vmem:[#allocation3 + $0x110] sm:$0xff] %v1659
    %1942 = vst [vmem:[#allocation3 + $0x118] sm:$0xff] %v1661
    %1943 = vst [vmem:[#allocation3 + $0x120] sm:$0xff] %v1772
    %1944 = vst [vmem:[#allocation3 + $0x128] sm:$0xff] %v1774
    %1945 = vst [vmem:[#allocation3 + $0x130] sm:$0xff] %v1885
    %1946 = vst [vmem:[#allocation3 + $0x138] sm:$0xff] %v1887
    %1947 = vst [vmem:[#allocation3 + $0x140] sm:$0xff] %v1552
    %1948 = vst [vmem:[#allocation3 + $0x148] sm:$0xff] %v1554
    %1949 = vst [vmem:[#allocation3 + $0x150] sm:$0xff] %v1665
    %1950 = vst [vmem:[#allocation3 + $0x158] sm:$0xff] %v1667
    %1951 = vst [vmem:[#allocation3 + $0x160] sm:$0xff] %v1778
    %1952 = vst [vmem:[#allocation3 + $0x168] sm:$0xff] %v1780
    %1953 = vst [vmem:[#allocation3 + $0x170] sm:$0xff] %v1891
    %1954 = vst [vmem:[#allocation3 + $0x178] sm:$0xff] %v1893
    %1955 = vst [vmem:[#allocation3 + $0x180] sm:$0xff] %v1558
    %1956 = vst [vmem:[#allocation3 + $0x188] sm:$0xff] %v1560
    %1957 = vst [vmem:[#allocation3 + $0x190] sm:$0xff] %v1671
    %1958 = vst [vmem:[#allocation3 + $0x198] sm:$0xff] %v1673
    %1959 = vst [vmem:[#allocation3 + $0x1a0] sm:$0xff] %v1784
    %1960 = vst [vmem:[#allocation3 + $0x1a8] sm:$0xff] %v1786
    %1961 = vst [vmem:[#allocation3 + $0x1b0] sm:$0xff] %v1897
    %1962 = vst [vmem:[#allocation3 + $0x1b8] sm:$0xff] %v1899
    %1963 = vst [vmem:[#allocation3 + $0x1c0] sm:$0xff] %v1564
    %1964 = vst [vmem:[#allocation3 + $0x1c8] sm:$0xff] %v1566
    %1965 = vst [vmem:[#allocation3 + $0x1d0] sm:$0xff] %v1677
    %1966 = vst [vmem:[#allocation3 + $0x1d8] sm:$0xff] %v1679
    %1967 = vst [vmem:[#allocation3 + $0x1e0] sm:$0xff] %v1790
    %1968 = vst [vmem:[#allocation3 + $0x1e8] sm:$0xff] %v1792
    %1969 = vst [vmem:[#allocation3 + $0x1f0] sm:$0xff] %v1903
    %1970 = vst [vmem:[#allocation3 + $0x1f8] sm:$0xff] %v1905
    loop: start=0, step=1, limit=8
    $region114: #{cnn_lstm_forward.1} parent=1 // loop_pre_header
      _
    $region115: #{cnn_lstm_forward.1} parent=1 // loop_header
      %s1972 = sphi 0, %s1976
      %p1973 = scmp.ge.s32.totalorder %s1972, 8
      %v1977 = vphi 0.0, %v2333
      %v1978 = vphi 0.0, %v2334
      %v1979 = vphi 0.0, %v2329
      %v1980 = vphi 0.0, %v2330
    $region116: #{cnn_lstm_forward.1} parent=1 // loop_header_branch
      %1975 = sbr.rel (%p1973) target = $region120
    $region117: #{cnn_lstm_forward.1} parent=1 // loop_body
      %s1981 = smul.u32 %s1972, 8
      %s1982 = sshra.s32 %s1981, 3
      %s1983 = sand.u32 %s1981, 7
      %s1984 = smul.u32 %s1982, 8
      %s1985 = smul.addr %s1984, 8
      %s1986 = scalar_lea.vmem [#allocation3], %s1985
      %v1987 = vld [vmem:[%s1986] sm:$0xff]
      %v1988 = vld [vmem:[%s1986 + $0x8] sm:$0xff]
      %v1989 = vld [vmem:[%s1986 + $0x10] sm:$0xff]
      %v1990 = vld [vmem:[%s1986 + $0x18] sm:$0xff]
      %v1991 = vld [vmem:[%s1986 + $0x20] sm:$0xff]
      %v1992 = vld [vmem:[%s1986 + $0x28] sm:$0xff]
      %v1993 = vld [vmem:[%s1986 + $0x30] sm:$0xff]
      %v1994 = vld [vmem:[%s1986 + $0x38] sm:$0xff]
      %1995 = vmatprep.subr.mxu0 %v1158
      %1996 = vmatpush1.msra.mxu0 %v1157
      %1997 = vmatprep.subr.mxu0 %v1166
      %1998 = vmatpush1.msra.mxu0 %v1165
      %1999 = vmatprep.subr.mxu0 %v1174
      %2000 = vmatpush1.msra.mxu0 %v1173
      %2001 = vmatprep.subr.mxu0 %v1182
      %2002 = vmatpush1.msra.mxu0 %v1181
      %2003 = vmatprep.subr.mxu0 %v1190
      %2004 = vmatpush1.msra.mxu0 %v1189
      %2005 = vmatprep.subr.mxu0 %v1198
      %2006 = vmatpush1.msra.mxu0 %v1197
      %2007 = vmatprep.subr.mxu0 %v1206
      %2008 = vmatpush1.msra.mxu0 %v1205
      %2009 = vmatprep.subr.mxu0 %v1214
      %2010 = vmatpush1.msra.mxu0 %v1213
      %2011 = vmatprep.subr.mxu0 %v1222
      %2012 = vmatpush1.msra.mxu0 %v1221
      %2013 = vmatprep.subr.mxu0 %v1230
      %2014 = vmatpush1.msra.mxu0 %v1229
      %2015 = vmatprep.subr.mxu0 %v1238
      %2016 = vmatpush1.msra.mxu0 %v1237
      %2017 = vmatprep.subr.mxu0 %v1246
      %2018 = vmatpush1.msra.mxu0 %v1245
      %2019 = vmatprep.subr.mxu0 %v1254
      %2020 = vmatpush1.msra.mxu0 %v1253
      %2021 = vmatprep.subr.mxu0 %v1262
      %2022 = vmatpush1.msra.mxu0 %v1261
      %2023 = vmatprep.subr.mxu0 %v1270
      %2024 = vmatpush1.msra.mxu0 %v1269
      %2025 = vmatprep.subr.mxu0 %v1278
      %2026 = vmatpush1.msra.mxu0 %v1277
      %2027 = vmatprep.subr.mxu0 %v1286
      %2028 = vmatpush1.msra.mxu0 %v1285
      %2029 = vmatprep.subr.mxu0 %v1294
      %2030 = vmatpush1.msra.mxu0 %v1293
      %2031 = vmatprep.subr.mxu0 %v1302
      %2032 = vmatpush1.msra.mxu0 %v1301
      %2033 = vmatprep.subr.mxu0 %v1310
      %2034 = vmatpush1.msra.mxu0 %v1309
      %2035 = vmatprep.subr.mxu0 %v1318
      %2036 = vmatpush1.msra.mxu0 %v1317
      %2037 = vmatprep.subr.mxu0 %v1326
      %2038 = vmatpush1.msra.mxu0 %v1325
      %2039 = vmatprep.subr.mxu0 %v1334
      %2040 = vmatpush1.msra.mxu0 %v1333
      %2041 = vmatprep.subr.mxu0 %v1342
      %2042 = vmatpush1.msra.mxu0 %v1341
      %2043 = vmatprep.subr.mxu0 %v1350
      %2044 = vmatpush1.msra.mxu0 %v1349
      %2045 = vmatprep.subr.mxu0 %v1358
      %2046 = vmatpush1.msra.mxu0 %v1357
      %2047 = vmatprep.subr.mxu0 %v1366
      %2048 = vmatpush1.msra.mxu0 %v1365
      %2049 = vmatprep.subr.mxu0 %v1374
      %2050 = vmatpush1.msra.mxu0 %v1373
      %2051 = vmatprep.subr.mxu0 %v1382
      %2052 = vmatpush1.msra.mxu0 %v1381
      %2053 = vmatprep.subr.mxu0 %v1390
      %2054 = vmatpush1.msra.mxu0 %v1389
      %2055 = vmatprep.subr.mxu0 %v1398
      %2056 = vmatpush1.msra.mxu0 %v1397
      %2057 = vmatprep.subr.mxu0 %v1406
      %2058 = vmatpush1.msra.mxu0 %v1405
      %2059 = vmatprep.mubr.f32.mxu0 %v1978
      %2060 = vmatmul.mubr.f32.gmra.mrb[0].mxu0 %v1977
      %v2061 = vpop.f32.mrb[0].mxu0
      %v2062 = vadd.f32 0.0, %v2061
      %v2063 = vpop.f32.mrb[0].mxu0
      %v2064 = vadd.f32 0.0, %v2063
      %2065 = vdwg.mxu0
      %2066 = vmatprep.subr.mxu0 %v1160
      %2067 = vmatpush1.msra.mxu0 %v1159
      %2068 = vmatprep.subr.mxu0 %v1168
      %2069 = vmatpush1.msra.mxu0 %v1167
      %2070 = vmatprep.subr.mxu0 %v1176
      %2071 = vmatpush1.msra.mxu0 %v1175
      %2072 = vmatprep.subr.mxu0 %v1184
      %2073 = vmatpush1.msra.mxu0 %v1183
      %2074 = vmatprep.subr.mxu0 %v1192
      %2075 = vmatpush1.msra.mxu0 %v1191
      %2076 = vmatprep.subr.mxu0 %v1200
      %2077 = vmatpush1.msra.mxu0 %v1199
      %2078 = vmatprep.subr.mxu0 %v1208
      %2079 = vmatpush1.msra.mxu0 %v1207
      %2080 = vmatprep.subr.mxu0 %v1216
      %2081 = vmatpush1.msra.mxu0 %v1215
      %2082 = vmatprep.subr.mxu0 %v1224
      %2083 = vmatpush1.msra.mxu0 %v1223
      %2084 = vmatprep.subr.mxu0 %v1232
      %2085 = vmatpush1.msra.mxu0 %v1231
      %2086 = vmatprep.subr.mxu0 %v1240
      %2087 = vmatpush1.msra.mxu0 %v1239
      %2088 = vmatprep.subr.mxu0 %v1248
      %2089 = vmatpush1.msra.mxu0 %v1247
      %2090 = vmatprep.subr.mxu0 %v1256
      %2091 = vmatpush1.msra.mxu0 %v1255
      %2092 = vmatprep.subr.mxu0 %v1264
      %2093 = vmatpush1.msra.mxu0 %v1263
      %2094 = vmatprep.subr.mxu0 %v1272
      %2095 = vmatpush1.msra.mxu0 %v1271
      %2096 = vmatprep.subr.mxu0 %v1280
      %2097 = vmatpush1.msra.mxu0 %v1279
      %2098 = vmatprep.subr.mxu0 %v1288
      %2099 = vmatpush1.msra.mxu0 %v1287
      %2100 = vmatprep.subr.mxu0 %v1296
      %2101 = vmatpush1.msra.mxu0 %v1295
      %2102 = vmatprep.subr.mxu0 %v1304
      %2103 = vmatpush1.msra.mxu0 %v1303
      %2104 = vmatprep.subr.mxu0 %v1312
      %2105 = vmatpush1.msra.mxu0 %v1311
      %2106 = vmatprep.subr.mxu0 %v1320
      %2107 = vmatpush1.msra.mxu0 %v1319
      %2108 = vmatprep.subr.mxu0 %v1328
      %2109 = vmatpush1.msra.mxu0 %v1327
      %2110 = vmatprep.subr.mxu0 %v1336
      %2111 = vmatpush1.msra.mxu0 %v1335
      %2112 = vmatprep.subr.mxu0 %v1344
      %2113 = vmatpush1.msra.mxu0 %v1343
      %2114 = vmatprep.subr.mxu0 %v1352
      %2115 = vmatpush1.msra.mxu0 %v1351
      %2116 = vmatprep.subr.mxu0 %v1360
      %2117 = vmatpush1.msra.mxu0 %v1359
      %2118 = vmatprep.subr.mxu0 %v1368
      %2119 = vmatpush1.msra.mxu0 %v1367
      %2120 = vmatprep.subr.mxu0 %v1376
      %2121 = vmatpush1.msra.mxu0 %v1375
      %2122 = vmatprep.subr.mxu0 %v1384
      %2123 = vmatpush1.msra.mxu0 %v1383
      %2124 = vmatprep.subr.mxu0 %v1392
      %2125 = vmatpush1.msra.mxu0 %v1391
      %2126 = vmatprep.subr.mxu0 %v1400
      %2127 = vmatpush1.msra.mxu0 %v1399
      %2128 = vmatprep.subr.mxu0 %v1408
      %2129 = vmatpush1.msra.mxu0 %v1407
      %2130 = vmatprep.mubr.f32.mxu0 %v1978
      %2131 = vmatmul.mubr.f32.gmra.mrb[0].mxu0 %v1977
      %v2132 = vpop.f32.mrb[0].mxu0
      %v2133 = vadd.f32 0.0, %v2132
      %v2134 = vpop.f32.mrb[0].mxu0
      %v2135 = vadd.f32 0.0, %v2134
      %2136 = vdwg.mxu0
      %2137 = vmatprep.subr.mxu0 %v1162
      %2138 = vmatpush1.msra.mxu0 %v1161
      %2139 = vmatprep.subr.mxu0 %v1170
      %2140 = vmatpush1.msra.mxu0 %v1169
      %2141 = vmatprep.subr.mxu0 %v1178
      %2142 = vmatpush1.msra.mxu0 %v1177
      %2143 = vmatprep.subr.mxu0 %v1186
      %2144 = vmatpush1.msra.mxu0 %v1185
      %2145 = vmatprep.subr.mxu0 %v1194
      %2146 = vmatpush1.msra.mxu0 %v1193
      %2147 = vmatprep.subr.mxu0 %v1202
      %2148 = vmatpush1.msra.mxu0 %v1201
      %2149 = vmatprep.subr.mxu0 %v1210
      %2150 = vmatpush1.msra.mxu0 %v1209
      %2151 = vmatprep.subr.mxu0 %v1218
      %2152 = vmatpush1.msra.mxu0 %v1217
      %2153 = vmatprep.subr.mxu0 %v1226
      %2154 = vmatpush1.msra.mxu0 %v1225
      %2155 = vmatprep.subr.mxu0 %v1234
      %2156 = vmatpush1.msra.mxu0 %v1233
      %2157 = vmatprep.subr.mxu0 %v1242
      %2158 = vmatpush1.msra.mxu0 %v1241
      %2159 = vmatprep.subr.mxu0 %v1250
      %2160 = vmatpush1.msra.mxu0 %v1249
      %2161 = vmatprep.subr.mxu0 %v1258
      %2162 = vmatpush1.msra.mxu0 %v1257
      %2163 = vmatprep.subr.mxu0 %v1266
      %2164 = vmatpush1.msra.mxu0 %v1265
      %2165 = vmatprep.subr.mxu0 %v1274
      %2166 = vmatpush1.msra.mxu0 %v1273
      %2167 = vmatprep.subr.mxu0 %v1282
      %2168 = vmatpush1.msra.mxu0 %v1281
      %2169 = vmatprep.subr.mxu0 %v1290
      %2170 = vmatpush1.msra.mxu0 %v1289
      %2171 = vmatprep.subr.mxu0 %v1298
      %2172 = vmatpush1.msra.mxu0 %v1297
      %2173 = vmatprep.subr.mxu0 %v1306
      %2174 = vmatpush1.msra.mxu0 %v1305
      %2175 = vmatprep.subr.mxu0 %v1314
      %2176 = vmatpush1.msra.mxu0 %v1313
      %2177 = vmatprep.subr.mxu0 %v1322
      %2178 = vmatpush1.msra.mxu0 %v1321
      %2179 = vmatprep.subr.mxu0 %v1330
      %2180 = vmatpush1.msra.mxu0 %v1329
      %2181 = vmatprep.subr.mxu0 %v1338
      %2182 = vmatpush1.msra.mxu0 %v1337
      %2183 = vmatprep.subr.mxu0 %v1346
      %2184 = vmatpush1.msra.mxu0 %v1345
      %2185 = vmatprep.subr.mxu0 %v1354
      %2186 = vmatpush1.msra.mxu0 %v1353
      %2187 = vmatprep.subr.mxu0 %v1362
      %2188 = vmatpush1.msra.mxu0 %v1361
      %2189 = vmatprep.subr.mxu0 %v1370
      %2190 = vmatpush1.msra.mxu0 %v1369
      %2191 = vmatprep.subr.mxu0 %v1378
      %2192 = vmatpush1.msra.mxu0 %v1377
      %2193 = vmatprep.subr.mxu0 %v1386
      %2194 = vmatpush1.msra.mxu0 %v1385
      %2195 = vmatprep.subr.mxu0 %v1394
      %2196 = vmatpush1.msra.mxu0 %v1393
      %2197 = vmatprep.subr.mxu0 %v1402
      %2198 = vmatpush1.msra.mxu0 %v1401
      %2199 = vmatprep.subr.mxu0 %v1410
      %2200 = vmatpush1.msra.mxu0 %v1409
      %2201 = vmatprep.mubr.f32.mxu0 %v1978
      %2202 = vmatmul.mubr.f32.gmra.mrb[0].mxu0 %v1977
      %v2203 = vpop.f32.mrb[0].mxu0
      %v2204 = vadd.f32 0.0, %v2203
      %v2205 = vpop.f32.mrb[0].mxu0
      %v2206 = vadd.f32 0.0, %v2205
      %2207 = vdwg.mxu0
      %2208 = vmatprep.subr.mxu0 %v1164
      %2209 = vmatpush1.msra.mxu0 %v1163
      %2210 = vmatprep.subr.mxu0 %v1172
      %2211 = vmatpush1.msra.mxu0 %v1171
      %2212 = vmatprep.subr.mxu0 %v1180
      %2213 = vmatpush1.msra.mxu0 %v1179
      %2214 = vmatprep.subr.mxu0 %v1188
      %2215 = vmatpush1.msra.mxu0 %v1187
      %2216 = vmatprep.subr.mxu0 %v1196
      %2217 = vmatpush1.msra.mxu0 %v1195
      %2218 = vmatprep.subr.mxu0 %v1204
      %2219 = vmatpush1.msra.mxu0 %v1203
      %2220 = vmatprep.subr.mxu0 %v1212
      %2221 = vmatpush1.msra.mxu0 %v1211
      %2222 = vmatprep.subr.mxu0 %v1220
      %2223 = vmatpush1.msra.mxu0 %v1219
      %2224 = vmatprep.subr.mxu0 %v1228
      %2225 = vmatpush1.msra.mxu0 %v1227
      %2226 = vmatprep.subr.mxu0 %v1236
      %2227 = vmatpush1.msra.mxu0 %v1235
      %2228 = vmatprep.subr.mxu0 %v1244
      %2229 = vmatpush1.msra.mxu0 %v1243
      %2230 = vmatprep.subr.mxu0 %v1252
      %2231 = vmatpush1.msra.mxu0 %v1251
      %2232 = vmatprep.subr.mxu0 %v1260
      %2233 = vmatpush1.msra.mxu0 %v1259
      %2234 = vmatprep.subr.mxu0 %v1268
      %2235 = vmatpush1.msra.mxu0 %v1267
      %2236 = vmatprep.subr.mxu0 %v1276
      %2237 = vmatpush1.msra.mxu0 %v1275
      %2238 = vmatprep.subr.mxu0 %v1284
      %2239 = vmatpush1.msra.mxu0 %v1283
      %2240 = vmatprep.subr.mxu0 %v1292
      %2241 = vmatpush1.msra.mxu0 %v1291
      %2242 = vmatprep.subr.mxu0 %v1300
      %2243 = vmatpush1.msra.mxu0 %v1299
      %2244 = vmatprep.subr.mxu0 %v1308
      %2245 = vmatpush1.msra.mxu0 %v1307
      %2246 = vmatprep.subr.mxu0 %v1316
      %2247 = vmatpush1.msra.mxu0 %v1315
      %2248 = vmatprep.subr.mxu0 %v1324
      %2249 = vmatpush1.msra.mxu0 %v1323
      %2250 = vmatprep.subr.mxu0 %v1332
      %2251 = vmatpush1.msra.mxu0 %v1331
      %2252 = vmatprep.subr.mxu0 %v1340
      %2253 = vmatpush1.msra.mxu0 %v1339
      %2254 = vmatprep.subr.mxu0 %v1348
      %2255 = vmatpush1.msra.mxu0 %v1347
      %2256 = vmatprep.subr.mxu0 %v1356
      %2257 = vmatpush1.msra.mxu0 %v1355
      %2258 = vmatprep.subr.mxu0 %v1364
      %2259 = vmatpush1.msra.mxu0 %v1363
      %2260 = vmatprep.subr.mxu0 %v1372
      %2261 = vmatpush1.msra.mxu0 %v1371
      %2262 = vmatprep.subr.mxu0 %v1380
      %2263 = vmatpush1.msra.mxu0 %v1379
      %2264 = vmatprep.subr.mxu0 %v1388
      %2265 = vmatpush1.msra.mxu0 %v1387
      %2266 = vmatprep.subr.mxu0 %v1396
      %2267 = vmatpush1.msra.mxu0 %v1395
      %2268 = vmatprep.subr.mxu0 %v1404
      %2269 = vmatpush1.msra.mxu0 %v1403
      %2270 = vmatprep.subr.mxu0 %v1412
      %2271 = vmatpush1.msra.mxu0 %v1411
      %2272 = vmatprep.mubr.f32.mxu0 %v1978
      %2273 = vmatmul.mubr.f32.gmra.mrb[0].mxu0 %v1977
      %v2274 = vpop.f32.mrb[0].mxu0
      %v2275 = vadd.f32 0.0, %v2274
      %v2276 = vpop.f32.mrb[0].mxu0
      %v2277 = vadd.f32 0.0, %v2276
      %2278 = vdwg.mxu0
      %v2279 = vadd.f32 %v1987, %v2062
      %v2280 = vadd.f32 %v1988, %v2064
      %v2281 = vadd.f32 %v1989, %v2133
      %v2282 = vadd.f32 %v1990, %v2135
      %v2283 = vadd.f32 %v1991, %v2204
      %v2284 = vadd.f32 %v1992, %v2206
      %v2285 = vadd.f32 %v1993, %v2275
      %v2286 = vadd.f32 %v1994, %v2277
      %v2287 = vxor.u32 %v2279, 2147483648
      %v2288 = vxor.u32 %v2280, 2147483648
      %v2289 = vmul.f32 %v2287, 1.442695
      %v2290 = vpow.pop %v2289
      %v2291 = vmul.f32 %v2288, 1.442695
      %v2292 = vpow.pop %v2291
      %v2293 = vadd.f32 %v2290, 1.0
      %v2294 = vadd.f32 %v2292, 1.0
      %v2295 = vrcp.pop %v2293
      %v2296 = vmul.f32 1.0, %v2295
      %v2297 = vrcp.pop %v2294
      %v2298 = vmul.f32 1.0, %v2297
      %v2299 = vxor.u32 %v2281, 2147483648
      %v2300 = vxor.u32 %v2282, 2147483648
      %v2301 = vmul.f32 %v2299, 1.442695
      %v2302 = vpow.pop %v2301
      %v2303 = vmul.f32 %v2300, 1.442695
      %v2304 = vpow.pop %v2303
      %v2305 = vadd.f32 %v2302, 1.0
      %v2306 = vadd.f32 %v2304, 1.0
      %v2307 = vrcp.pop %v2305
      %v2308 = vmul.f32 1.0, %v2307
      %v2309 = vrcp.pop %v2306
      %v2310 = vmul.f32 1.0, %v2309
      %v2311 = vtanh.pop %v2283
      %v2312 = vtanh.pop %v2284
      %v2313 = vxor.u32 %v2285, 2147483648
      %v2314 = vxor.u32 %v2286, 2147483648
      %v2315 = vmul.f32 %v2313, 1.442695
      %v2316 = vpow.pop %v2315
      %v2317 = vmul.f32 %v2314, 1.442695
      %v2318 = vpow.pop %v2317
      %v2319 = vadd.f32 %v2316, 1.0
      %v2320 = vadd.f32 %v2318, 1.0
      %v2321 = vrcp.pop %v2319
      %v2322 = vmul.f32 1.0, %v2321
      %v2323 = vrcp.pop %v2320
      %v2324 = vmul.f32 1.0, %v2323
      %v2325 = vmul.f32 %v2308, %v1979
      %v2326 = vmul.f32 %v2310, %v1980
      %v2327 = vmul.f32 %v2296, %v2311
      %v2328 = vmul.f32 %v2298, %v2312
      %v2329 = vadd.f32 %v2325, %v2327
      %v2330 = vadd.f32 %v2326, %v2328
      %v2331 = vtanh.pop %v2329
      %v2332 = vtanh.pop %v2330
      %v2333 = vmul.f32 %v2322, %v2331
      %v2334 = vmul.f32 %v2324, %v2332
      %s2335 = smul.u32 %s1982, 2
      %s2336 = smul.addr %s2335, 8
      %s2337 = scalar_lea.vmem [#allocation4], %s2336
      %2338 = vst [vmem:[%s2337] sm:$0xff] %v2333
      %2339 = vst [vmem:[%s2337 + $0x8] sm:$0xff] %v2334
    $region118: #{cnn_lstm_forward.1} parent=1 // loop_footer
      %s1976 = sadd.s32 1, %s1972
    $region119: #{cnn_lstm_forward.1} parent=1 // loop_footer_branch
      %1971 = sbr.rel target = $region115
    $region120: #{cnn_lstm_forward.1} parent=1 // loop_exit
      _
    %v2340 = vld [vmem:[#allocation4] sm:$0xff]
    %v2341 = vld [vmem:[#allocation4 + $0x8] sm:$0xff]
    %v2342 = vld [vmem:[#allocation4 + $0x10] sm:$0xff]
    %v2343 = vld [vmem:[#allocation4 + $0x18] sm:$0xff]
    %v2344 = vld [vmem:[#allocation4 + $0x20] sm:$0xff]
    %v2345 = vld [vmem:[#allocation4 + $0x28] sm:$0xff]
    %v2346 = vld [vmem:[#allocation4 + $0x30] sm:$0xff]
    %v2347 = vld [vmem:[#allocation4 + $0x38] sm:$0xff]
    %v2348 = vld [vmem:[#allocation4 + $0x40] sm:$0xff]
    %v2349 = vld [vmem:[#allocation4 + $0x48] sm:$0xff]
    %v2350 = vld [vmem:[#allocation4 + $0x50] sm:$0xff]
    %v2351 = vld [vmem:[#allocation4 + $0x58] sm:$0xff]
    %v2352 = vld [vmem:[#allocation4 + $0x60] sm:$0xff]
    %v2353 = vld [vmem:[#allocation4 + $0x68] sm:$0xff]
    %v2354 = vld [vmem:[#allocation4 + $0x70] sm:$0xff]
    %v2355 = vld [vmem:[#allocation4 + $0x78] sm:$0xff]
    %v2356 = vld [vmem:[#allocation11] sm:$0xff]
    %v2357 = vld [vmem:[#allocation11 + $0x8] sm:$0xff]
    %v2358 = vld [vmem:[#allocation11 + $0x10] sm:$0xff]
    %v2359 = vld [vmem:[#allocation11 + $0x18] sm:$0xff]
    %v2360 = vld [vmem:[#allocation11 + $0x20] sm:$0xff]
    %v2361 = vld [vmem:[#allocation11 + $0x28] sm:$0xff]
    %v2362 = vld [vmem:[#allocation11 + $0x30] sm:$0xff]
    %v2363 = vld [vmem:[#allocation11 + $0x38] sm:$0xff]
    %v2364 = vld [vmem:[#allocation11 + $0x40] sm:$0xff]
    %v2365 = vld [vmem:[#allocation11 + $0x48] sm:$0xff]
    %v2366 = vld [vmem:[#allocation11 + $0x50] sm:$0xff]
    %v2367 = vld [vmem:[#allocation11 + $0x58] sm:$0xff]
    %v2368 = vld [vmem:[#allocation11 + $0x60] sm:$0xff]
    %v2369 = vld [vmem:[#allocation11 + $0x68] sm:$0xff]
    %v2370 = vld [vmem:[#allocation11 + $0x70] sm:$0xff]
    %v2371 = vld [vmem:[#allocation11 + $0x78] sm:$0xff]
    %v2372 = vld [vmem:[#allocation11 + $0x80] sm:$0xff]
    %v2373 = vld [vmem:[#allocation11 + $0x88] sm:$0xff]
    %v2374 = vld [vmem:[#allocation11 + $0x90] sm:$0xff]
    %v2375 = vld [vmem:[#allocation11 + $0x98] sm:$0xff]
    %v2376 = vld [vmem:[#allocation11 + $0xa0] sm:$0xff]
    %v2377 = vld [vmem:[#allocation11 + $0xa8] sm:$0xff]
    %v2378 = vld [vmem:[#allocation11 + $0xb0] sm:$0xff]
    %v2379 = vld [vmem:[#allocation11 + $0xb8] sm:$0xff]
    %v2380 = vld [vmem:[#allocation11 + $0xc0] sm:$0xff]
    %v2381 = vld [vmem:[#allocation11 + $0xc8] sm:$0xff]
    %v2382 = vld [vmem:[#allocation11 + $0xd0] sm:$0xff]
    %v2383 = vld [vmem:[#allocation11 + $0xd8] sm:$0xff]
    %v2384 = vld [vmem:[#allocation11 + $0xe0] sm:$0xff]
    %v2385 = vld [vmem:[#allocation11 + $0xe8] sm:$0xff]
    %v2386 = vld [vmem:[#allocation11 + $0xf0] sm:$0xff]
    %v2387 = vld [vmem:[#allocation11 + $0xf8] sm:$0xff]
    %v2388 = vld [vmem:[#allocation11 + $0x100] sm:$0xff]
    %v2389 = vld [vmem:[#allocation11 + $0x108] sm:$0xff]
    %v2390 = vld [vmem:[#allocation11 + $0x110] sm:$0xff]
    %v2391 = vld [vmem:[#allocation11 + $0x118] sm:$0xff]
    %v2392 = vld [vmem:[#allocation11 + $0x120] sm:$0xff]
    %v2393 = vld [vmem:[#allocation11 + $0x128] sm:$0xff]
    %v2394 = vld [vmem:[#allocation11 + $0x130] sm:$0xff]
    %v2395 = vld [vmem:[#allocation11 + $0x138] sm:$0xff]
    %v2396 = vld [vmem:[#allocation11 + $0x140] sm:$0xff]
    %v2397 = vld [vmem:[#allocation11 + $0x148] sm:$0xff]
    %v2398 = vld [vmem:[#allocation11 + $0x150] sm:$0xff]
    %v2399 = vld [vmem:[#allocation11 + $0x158] sm:$0xff]
    %v2400 = vld [vmem:[#allocation11 + $0x160] sm:$0xff]
    %v2401 = vld [vmem:[#allocation11 + $0x168] sm:$0xff]
    %v2402 = vld [vmem:[#allocation11 + $0x170] sm:$0xff]
    %v2403 = vld [vmem:[#allocation11 + $0x178] sm:$0xff]
    %v2404 = vld [vmem:[#allocation11 + $0x180] sm:$0xff]
    %v2405 = vld [vmem:[#allocation11 + $0x188] sm:$0xff]
    %v2406 = vld [vmem:[#allocation11 + $0x190] sm:$0xff]
    %v2407 = vld [vmem:[#allocation11 + $0x198] sm:$0xff]
    %v2408 = vld [vmem:[#allocation11 + $0x1a0] sm:$0xff]
    %v2409 = vld [vmem:[#allocation11 + $0x1a8] sm:$0xff]
    %v2410 = vld [vmem:[#allocation11 + $0x1b0] sm:$0xff]
    %v2411 = vld [vmem:[#allocation11 + $0x1b8] sm:$0xff]
    %v2412 = vld [vmem:[#allocation11 + $0x1c0] sm:$0xff]
    %v2413 = vld [vmem:[#allocation11 + $0x1c8] sm:$0xff]
    %v2414 = vld [vmem:[#allocation11 + $0x1d0] sm:$0xff]
    %v2415 = vld [vmem:[#allocation11 + $0x1d8] sm:$0xff]
    %v2416 = vld [vmem:[#allocation11 + $0x1e0] sm:$0xff]
    %v2417 = vld [vmem:[#allocation11 + $0x1e8] sm:$0xff]
    %v2418 = vld [vmem:[#allocation11 + $0x1f0] sm:$0xff]
    %v2419 = vld [vmem:[#allocation11 + $0x1f8] sm:$0xff]
    %v2420 = vld [vmem:[#allocation11 + $0x200] sm:$0xff]
    %v2421 = vld [vmem:[#allocation11 + $0x208] sm:$0xff]
    %v2422 = vld [vmem:[#allocation11 + $0x210] sm:$0xff]
    %v2423 = vld [vmem:[#allocation11 + $0x218] sm:$0xff]
    %v2424 = vld [vmem:[#allocation11 + $0x220] sm:$0xff]
    %v2425 = vld [vmem:[#allocation11 + $0x228] sm:$0xff]
    %v2426 = vld [vmem:[#allocation11 + $0x230] sm:$0xff]
    %v2427 = vld [vmem:[#allocation11 + $0x238] sm:$0xff]
    %v2428 = vld [vmem:[#allocation11 + $0x240] sm:$0xff]
    %v2429 = vld [vmem:[#allocation11 + $0x248] sm:$0xff]
    %v2430 = vld [vmem:[#allocation11 + $0x250] sm:$0xff]
    %v2431 = vld [vmem:[#allocation11 + $0x258] sm:$0xff]
    %v2432 = vld [vmem:[#allocation11 + $0x260] sm:$0xff]
    %v2433 = vld [vmem:[#allocation11 + $0x268] sm:$0xff]
    %v2434 = vld [vmem:[#allocation11 + $0x270] sm:$0xff]
    %v2435 = vld [vmem:[#allocation11 + $0x278] sm:$0xff]
    %v2436 = vld [vmem:[#allocation11 + $0x280] sm:$0xff]
    %v2437 = vld [vmem:[#allocation11 + $0x288] sm:$0xff]
    %v2438 = vld [vmem:[#allocation11 + $0x290] sm:$0xff]
    %v2439 = vld [vmem:[#allocation11 + $0x298] sm:$0xff]
    %v2440 = vld [vmem:[#allocation11 + $0x2a0] sm:$0xff]
    %v2441 = vld [vmem:[#allocation11 + $0x2a8] sm:$0xff]
    %v2442 = vld [vmem:[#allocation11 + $0x2b0] sm:$0xff]
    %v2443 = vld [vmem:[#allocation11 + $0x2b8] sm:$0xff]
    %v2444 = vld [vmem:[#allocation11 + $0x2c0] sm:$0xff]
    %v2445 = vld [vmem:[#allocation11 + $0x2c8] sm:$0xff]
    %v2446 = vld [vmem:[#allocation11 + $0x2d0] sm:$0xff]
    %v2447 = vld [vmem:[#allocation11 + $0x2d8] sm:$0xff]
    %v2448 = vld [vmem:[#allocation11 + $0x2e0] sm:$0xff]
    %v2449 = vld [vmem:[#allocation11 + $0x2e8] sm:$0xff]
    %v2450 = vld [vmem:[#allocation11 + $0x2f0] sm:$0xff]
    %v2451 = vld [vmem:[#allocation11 + $0x2f8] sm:$0xff]
    %v2452 = vld [vmem:[#allocation11 + $0x300] sm:$0xff]
    %v2453 = vld [vmem:[#allocation11 + $0x308] sm:$0xff]
    %v2454 = vld [vmem:[#allocation11 + $0x310] sm:$0xff]
    %v2455 = vld [vmem:[#allocation11 + $0x318] sm:$0xff]
    %v2456 = vld [vmem:[#allocation11 + $0x320] sm:$0xff]
    %v2457 = vld [vmem:[#allocation11 + $0x328] sm:$0xff]
    %v2458 = vld [vmem:[#allocation11 + $0x330] sm:$0xff]
    %v2459 = vld [vmem:[#allocation11 + $0x338] sm:$0xff]
    %v2460 = vld [vmem:[#allocation11 + $0x340] sm:$0xff]
    %v2461 = vld [vmem:[#allocation11 + $0x348] sm:$0xff]
    %v2462 = vld [vmem:[#allocation11 + $0x350] sm:$0xff]
    %v2463 = vld [vmem:[#allocation11 + $0x358] sm:$0xff]
    %v2464 = vld [vmem:[#allocation11 + $0x360] sm:$0xff]
    %v2465 = vld [vmem:[#allocation11 + $0x368] sm:$0xff]
    %v2466 = vld [vmem:[#allocation11 + $0x370] sm:$0xff]
    %v2467 = vld [vmem:[#allocation11 + $0x378] sm:$0xff]
    %v2468 = vld [vmem:[#allocation11 + $0x380] sm:$0xff]
    %v2469 = vld [vmem:[#allocation11 + $0x388] sm:$0xff]
    %v2470 = vld [vmem:[#allocation11 + $0x390] sm:$0xff]
    %v2471 = vld [vmem:[#allocation11 + $0x398] sm:$0xff]
    %v2472 = vld [vmem:[#allocation11 + $0x3a0] sm:$0xff]
    %v2473 = vld [vmem:[#allocation11 + $0x3a8] sm:$0xff]
    %v2474 = vld [vmem:[#allocation11 + $0x3b0] sm:$0xff]
    %v2475 = vld [vmem:[#allocation11 + $0x3b8] sm:$0xff]
    %v2476 = vld [vmem:[#allocation11 + $0x3c0] sm:$0xff]
    %v2477 = vld [vmem:[#allocation11 + $0x3c8] sm:$0xff]
    %v2478 = vld [vmem:[#allocation11 + $0x3d0] sm:$0xff]
    %v2479 = vld [vmem:[#allocation11 + $0x3d8] sm:$0xff]
    %v2480 = vld [vmem:[#allocation11 + $0x3e0] sm:$0xff]
    %v2481 = vld [vmem:[#allocation11 + $0x3e8] sm:$0xff]
    %v2482 = vld [vmem:[#allocation11 + $0x3f0] sm:$0xff]
    %v2483 = vld [vmem:[#allocation11 + $0x3f8] sm:$0xff]
    %v2484 = vld [vmem:[#allocation11 + $0x400] sm:$0xff]
    %v2485 = vld [vmem:[#allocation11 + $0x408] sm:$0xff]
    %v2486 = vld [vmem:[#allocation11 + $0x410] sm:$0xff]
    %v2487 = vld [vmem:[#allocation11 + $0x418] sm:$0xff]
    %v2488 = vld [vmem:[#allocation11 + $0x420] sm:$0xff]
    %v2489 = vld [vmem:[#allocation11 + $0x428] sm:$0xff]
    %v2490 = vld [vmem:[#allocation11 + $0x430] sm:$0xff]
    %v2491 = vld [vmem:[#allocation11 + $0x438] sm:$0xff]
    %v2492 = vld [vmem:[#allocation11 + $0x440] sm:$0xff]
    %v2493 = vld [vmem:[#allocation11 + $0x448] sm:$0xff]
    %v2494 = vld [vmem:[#allocation11 + $0x450] sm:$0xff]
    %v2495 = vld [vmem:[#allocation11 + $0x458] sm:$0xff]
    %v2496 = vld [vmem:[#allocation11 + $0x460] sm:$0xff]
    %v2497 = vld [vmem:[#allocation11 + $0x468] sm:$0xff]
    %v2498 = vld [vmem:[#allocation11 + $0x470] sm:$0xff]
    %v2499 = vld [vmem:[#allocation11 + $0x478] sm:$0xff]
    %v2500 = vld [vmem:[#allocation11 + $0x480] sm:$0xff]
    %v2501 = vld [vmem:[#allocation11 + $0x488] sm:$0xff]
    %v2502 = vld [vmem:[#allocation11 + $0x490] sm:$0xff]
    %v2503 = vld [vmem:[#allocation11 + $0x498] sm:$0xff]
    %v2504 = vld [vmem:[#allocation11 + $0x4a0] sm:$0xff]
    %v2505 = vld [vmem:[#allocation11 + $0x4a8] sm:$0xff]
    %v2506 = vld [vmem:[#allocation11 + $0x4b0] sm:$0xff]
    %v2507 = vld [vmem:[#allocation11 + $0x4b8] sm:$0xff]
    %v2508 = vld [vmem:[#allocation11 + $0x4c0] sm:$0xff]
    %v2509 = vld [vmem:[#allocation11 + $0x4c8] sm:$0xff]
    %v2510 = vld [vmem:[#allocation11 + $0x4d0] sm:$0xff]
    %v2511 = vld [vmem:[#allocation11 + $0x4d8] sm:$0xff]
    %v2512 = vld [vmem:[#allocation11 + $0x4e0] sm:$0xff]
    %v2513 = vld [vmem:[#allocation11 + $0x4e8] sm:$0xff]
    %v2514 = vld [vmem:[#allocation11 + $0x4f0] sm:$0xff]
    %v2515 = vld [vmem:[#allocation11 + $0x4f8] sm:$0xff]
    %v2516 = vld [vmem:[#allocation11 + $0x500] sm:$0xff]
    %v2517 = vld [vmem:[#allocation11 + $0x508] sm:$0xff]
    %v2518 = vld [vmem:[#allocation11 + $0x510] sm:$0xff]
    %v2519 = vld [vmem:[#allocation11 + $0x518] sm:$0xff]
    %v2520 = vld [vmem:[#allocation11 + $0x520] sm:$0xff]
    %v2521 = vld [vmem:[#allocation11 + $0x528] sm:$0xff]
    %v2522 = vld [vmem:[#allocation11 + $0x530] sm:$0xff]
    %v2523 = vld [vmem:[#allocation11 + $0x538] sm:$0xff]
    %v2524 = vld [vmem:[#allocation11 + $0x540] sm:$0xff]
    %v2525 = vld [vmem:[#allocation11 + $0x548] sm:$0xff]
    %v2526 = vld [vmem:[#allocation11 + $0x550] sm:$0xff]
    %v2527 = vld [vmem:[#allocation11 + $0x558] sm:$0xff]
    %v2528 = vld [vmem:[#allocation11 + $0x560] sm:$0xff]
    %v2529 = vld [vmem:[#allocation11 + $0x568] sm:$0xff]
    %v2530 = vld [vmem:[#allocation11 + $0x570] sm:$0xff]
    %v2531 = vld [vmem:[#allocation11 + $0x578] sm:$0xff]
    %v2532 = vld [vmem:[#allocation11 + $0x580] sm:$0xff]
    %v2533 = vld [vmem:[#allocation11 + $0x588] sm:$0xff]
    %v2534 = vld [vmem:[#allocation11 + $0x590] sm:$0xff]
    %v2535 = vld [vmem:[#allocation11 + $0x598] sm:$0xff]
    %v2536 = vld [vmem:[#allocation11 + $0x5a0] sm:$0xff]
    %v2537 = vld [vmem:[#allocation11 + $0x5a8] sm:$0xff]
    %v2538 = vld [vmem:[#allocation11 + $0x5b0] sm:$0xff]
    %v2539 = vld [vmem:[#allocation11 + $0x5b8] sm:$0xff]
    %v2540 = vld [vmem:[#allocation11 + $0x5c0] sm:$0xff]
    %v2541 = vld [vmem:[#allocation11 + $0x5c8] sm:$0xff]
    %v2542 = vld [vmem:[#allocation11 + $0x5d0] sm:$0xff]
    %v2543 = vld [vmem:[#allocation11 + $0x5d8] sm:$0xff]
    %v2544 = vld [vmem:[#allocation11 + $0x5e0] sm:$0xff]
    %v2545 = vld [vmem:[#allocation11 + $0x5e8] sm:$0xff]
    %v2546 = vld [vmem:[#allocation11 + $0x5f0] sm:$0xff]
    %v2547 = vld [vmem:[#allocation11 + $0x5f8] sm:$0xff]
    %v2548 = vld [vmem:[#allocation11 + $0x600] sm:$0xff]
    %v2549 = vld [vmem:[#allocation11 + $0x608] sm:$0xff]
    %v2550 = vld [vmem:[#allocation11 + $0x610] sm:$0xff]
    %v2551 = vld [vmem:[#allocation11 + $0x618] sm:$0xff]
    %v2552 = vld [vmem:[#allocation11 + $0x620] sm:$0xff]
    %v2553 = vld [vmem:[#allocation11 + $0x628] sm:$0xff]
    %v2554 = vld [vmem:[#allocation11 + $0x630] sm:$0xff]
    %v2555 = vld [vmem:[#allocation11 + $0x638] sm:$0xff]
    %v2556 = vld [vmem:[#allocation11 + $0x640] sm:$0xff]
    %v2557 = vld [vmem:[#allocation11 + $0x648] sm:$0xff]
    %v2558 = vld [vmem:[#allocation11 + $0x650] sm:$0xff]
    %v2559 = vld [vmem:[#allocation11 + $0x658] sm:$0xff]
    %v2560 = vld [vmem:[#allocation11 + $0x660] sm:$0xff]
    %v2561 = vld [vmem:[#allocation11 + $0x668] sm:$0xff]
    %v2562 = vld [vmem:[#allocation11 + $0x670] sm:$0xff]
    %v2563 = vld [vmem:[#allocation11 + $0x678] sm:$0xff]
    %v2564 = vld [vmem:[#allocation11 + $0x680] sm:$0xff]
    %v2565 = vld [vmem:[#allocation11 + $0x688] sm:$0xff]
    %v2566 = vld [vmem:[#allocation11 + $0x690] sm:$0xff]
    %v2567 = vld [vmem:[#allocation11 + $0x698] sm:$0xff]
    %v2568 = vld [vmem:[#allocation11 + $0x6a0] sm:$0xff]
    %v2569 = vld [vmem:[#allocation11 + $0x6a8] sm:$0xff]
    %v2570 = vld [vmem:[#allocation11 + $0x6b0] sm:$0xff]
    %v2571 = vld [vmem:[#allocation11 + $0x6b8] sm:$0xff]
    %v2572 = vld [vmem:[#allocation11 + $0x6c0] sm:$0xff]
    %v2573 = vld [vmem:[#allocation11 + $0x6c8] sm:$0xff]
    %v2574 = vld [vmem:[#allocation11 + $0x6d0] sm:$0xff]
    %v2575 = vld [vmem:[#allocation11 + $0x6d8] sm:$0xff]
    %v2576 = vld [vmem:[#allocation11 + $0x6e0] sm:$0xff]
    %v2577 = vld [vmem:[#allocation11 + $0x6e8] sm:$0xff]
    %v2578 = vld [vmem:[#allocation11 + $0x6f0] sm:$0xff]
    %v2579 = vld [vmem:[#allocation11 + $0x6f8] sm:$0xff]
    %v2580 = vld [vmem:[#allocation11 + $0x700] sm:$0xff]
    %v2581 = vld [vmem:[#allocation11 + $0x708] sm:$0xff]
    %v2582 = vld [vmem:[#allocation11 + $0x710] sm:$0xff]
    %v2583 = vld [vmem:[#allocation11 + $0x718] sm:$0xff]
    %v2584 = vld [vmem:[#allocation11 + $0x720] sm:$0xff]
    %v2585 = vld [vmem:[#allocation11 + $0x728] sm:$0xff]
    %v2586 = vld [vmem:[#allocation11 + $0x730] sm:$0xff]
    %v2587 = vld [vmem:[#allocation11 + $0x738] sm:$0xff]
    %v2588 = vld [vmem:[#allocation11 + $0x740] sm:$0xff]
    %v2589 = vld [vmem:[#allocation11 + $0x748] sm:$0xff]
    %v2590 = vld [vmem:[#allocation11 + $0x750] sm:$0xff]
    %v2591 = vld [vmem:[#allocation11 + $0x758] sm:$0xff]
    %v2592 = vld [vmem:[#allocation11 + $0x760] sm:$0xff]
    %v2593 = vld [vmem:[#allocation11 + $0x768] sm:$0xff]
    %v2594 = vld [vmem:[#allocation11 + $0x770] sm:$0xff]
    %v2595 = vld [vmem:[#allocation11 + $0x778] sm:$0xff]
    %v2596 = vld [vmem:[#allocation11 + $0x780] sm:$0xff]
    %v2597 = vld [vmem:[#allocation11 + $0x788] sm:$0xff]
    %v2598 = vld [vmem:[#allocation11 + $0x790] sm:$0xff]
    %v2599 = vld [vmem:[#allocation11 + $0x798] sm:$0xff]
    %v2600 = vld [vmem:[#allocation11 + $0x7a0] sm:$0xff]
    %v2601 = vld [vmem:[#allocation11 + $0x7a8] sm:$0xff]
    %v2602 = vld [vmem:[#allocation11 + $0x7b0] sm:$0xff]
    %v2603 = vld [vmem:[#allocation11 + $0x7b8] sm:$0xff]
    %v2604 = vld [vmem:[#allocation11 + $0x7c0] sm:$0xff]
    %v2605 = vld [vmem:[#allocation11 + $0x7c8] sm:$0xff]
    %v2606 = vld [vmem:[#allocation11 + $0x7d0] sm:$0xff]
    %v2607 = vld [vmem:[#allocation11 + $0x7d8] sm:$0xff]
    %v2608 = vld [vmem:[#allocation11 + $0x7e0] sm:$0xff]
    %v2609 = vld [vmem:[#allocation11 + $0x7e8] sm:$0xff]
    %v2610 = vld [vmem:[#allocation11 + $0x7f0] sm:$0xff]
    %v2611 = vld [vmem:[#allocation11 + $0x7f8] sm:$0xff]
    %v2612 = vld [vmem:[#allocation13] sm:$0xff]
    %v2613 = vld [vmem:[#allocation13 + $0x8] sm:$0xff]
    %v2614 = vld [vmem:[#allocation13 + $0x10] sm:$0xff]
    %v2615 = vld [vmem:[#allocation13 + $0x18] sm:$0xff]
    %v2616 = vld [vmem:[#allocation13 + $0x20] sm:$0xff]
    %v2617 = vld [vmem:[#allocation13 + $0x28] sm:$0xff]
    %v2618 = vld [vmem:[#allocation13 + $0x30] sm:$0xff]
    %v2619 = vld [vmem:[#allocation13 + $0x38] sm:$0xff]
    %v2620 = vld [vmem:[#allocation13 + $0x40] sm:$0xff]
    %v2621 = vld [vmem:[#allocation13 + $0x48] sm:$0xff]
    %v2622 = vld [vmem:[#allocation13 + $0x50] sm:$0xff]
    %v2623 = vld [vmem:[#allocation13 + $0x58] sm:$0xff]
    %v2624 = vld [vmem:[#allocation13 + $0x60] sm:$0xff]
    %v2625 = vld [vmem:[#allocation13 + $0x68] sm:$0xff]
    %v2626 = vld [vmem:[#allocation13 + $0x70] sm:$0xff]
    %v2627 = vld [vmem:[#allocation13 + $0x78] sm:$0xff]
    %v2628 = vld [vmem:[#allocation13 + $0x80] sm:$0xff]
    %v2629 = vld [vmem:[#allocation13 + $0x88] sm:$0xff]
    %v2630 = vld [vmem:[#allocation13 + $0x90] sm:$0xff]
    %v2631 = vld [vmem:[#allocation13 + $0x98] sm:$0xff]
    %v2632 = vld [vmem:[#allocation13 + $0xa0] sm:$0xff]
    %v2633 = vld [vmem:[#allocation13 + $0xa8] sm:$0xff]
    %v2634 = vld [vmem:[#allocation13 + $0xb0] sm:$0xff]
    %v2635 = vld [vmem:[#allocation13 + $0xb8] sm:$0xff]
    %v2636 = vld [vmem:[#allocation13 + $0xc0] sm:$0xff]
    %v2637 = vld [vmem:[#allocation13 + $0xc8] sm:$0xff]
    %v2638 = vld [vmem:[#allocation13 + $0xd0] sm:$0xff]
    %v2639 = vld [vmem:[#allocation13 + $0xd8] sm:$0xff]
    %v2640 = vld [vmem:[#allocation13 + $0xe0] sm:$0xff]
    %v2641 = vld [vmem:[#allocation13 + $0xe8] sm:$0xff]
    %v2642 = vld [vmem:[#allocation13 + $0xf0] sm:$0xff]
    %v2643 = vld [vmem:[#allocation13 + $0xf8] sm:$0xff]
    %v2644 = vld [vmem:[#allocation13 + $0x100] sm:$0xff]
    %v2645 = vld [vmem:[#allocation13 + $0x108] sm:$0xff]
    %v2646 = vld [vmem:[#allocation13 + $0x110] sm:$0xff]
    %v2647 = vld [vmem:[#allocation13 + $0x118] sm:$0xff]
    %v2648 = vld [vmem:[#allocation13 + $0x120] sm:$0xff]
    %v2649 = vld [vmem:[#allocation13 + $0x128] sm:$0xff]
    %v2650 = vld [vmem:[#allocation13 + $0x130] sm:$0xff]
    %v2651 = vld [vmem:[#allocation13 + $0x138] sm:$0xff]
    %v2652 = vld [vmem:[#allocation13 + $0x140] sm:$0xff]
    %v2653 = vld [vmem:[#allocation13 + $0x148] sm:$0xff]
    %v2654 = vld [vmem:[#allocation13 + $0x150] sm:$0xff]
    %v2655 = vld [vmem:[#allocation13 + $0x158] sm:$0xff]
    %v2656 = vld [vmem:[#allocation13 + $0x160] sm:$0xff]
    %v2657 = vld [vmem:[#allocation13 + $0x168] sm:$0xff]
    %v2658 = vld [vmem:[#allocation13 + $0x170] sm:$0xff]
    %v2659 = vld [vmem:[#allocation13 + $0x178] sm:$0xff]
    %v2660 = vld [vmem:[#allocation13 + $0x180] sm:$0xff]
    %v2661 = vld [vmem:[#allocation13 + $0x188] sm:$0xff]
    %v2662 = vld [vmem:[#allocation13 + $0x190] sm:$0xff]
    %v2663 = vld [vmem:[#allocation13 + $0x198] sm:$0xff]
    %v2664 = vld [vmem:[#allocation13 + $0x1a0] sm:$0xff]
    %v2665 = vld [vmem:[#allocation13 + $0x1a8] sm:$0xff]
    %v2666 = vld [vmem:[#allocation13 + $0x1b0] sm:$0xff]
    %v2667 = vld [vmem:[#allocation13 + $0x1b8] sm:$0xff]
    %v2668 = vld [vmem:[#allocation13 + $0x1c0] sm:$0xff]
    %v2669 = vld [vmem:[#allocation13 + $0x1c8] sm:$0xff]
    %v2670 = vld [vmem:[#allocation13 + $0x1d0] sm:$0xff]
    %v2671 = vld [vmem:[#allocation13 + $0x1d8] sm:$0xff]
    %v2672 = vld [vmem:[#allocation13 + $0x1e0] sm:$0xff]
    %v2673 = vld [vmem:[#allocation13 + $0x1e8] sm:$0xff]
    %v2674 = vld [vmem:[#allocation13 + $0x1f0] sm:$0xff]
    %v2675 = vld [vmem:[#allocation13 + $0x1f8] sm:$0xff]
    %v2676 = vld [vmem:[#allocation13 + $0x200] sm:$0xff]
    %v2677 = vld [vmem:[#allocation13 + $0x208] sm:$0xff]
    %v2678 = vld [vmem:[#allocation13 + $0x210] sm:$0xff]
    %v2679 = vld [vmem:[#allocation13 + $0x218] sm:$0xff]
    %v2680 = vld [vmem:[#allocation13 + $0x220] sm:$0xff]
    %v2681 = vld [vmem:[#allocation13 + $0x228] sm:$0xff]
    %v2682 = vld [vmem:[#allocation13 + $0x230] sm:$0xff]
    %v2683 = vld [vmem:[#allocation13 + $0x238] sm:$0xff]
    %v2684 = vld [vmem:[#allocation13 + $0x240] sm:$0xff]
    %v2685 = vld [vmem:[#allocation13 + $0x248] sm:$0xff]
    %v2686 = vld [vmem:[#allocation13 + $0x250] sm:$0xff]
    %v2687 = vld [vmem:[#allocation13 + $0x258] sm:$0xff]
    %v2688 = vld [vmem:[#allocation13 + $0x260] sm:$0xff]
    %v2689 = vld [vmem:[#allocation13 + $0x268] sm:$0xff]
    %v2690 = vld [vmem:[#allocation13 + $0x270] sm:$0xff]
    %v2691 = vld [vmem:[#allocation13 + $0x278] sm:$0xff]
    %v2692 = vld [vmem:[#allocation13 + $0x280] sm:$0xff]
    %v2693 = vld [vmem:[#allocation13 + $0x288] sm:$0xff]
    %v2694 = vld [vmem:[#allocation13 + $0x290] sm:$0xff]
    %v2695 = vld [vmem:[#allocation13 + $0x298] sm:$0xff]
    %v2696 = vld [vmem:[#allocation13 + $0x2a0] sm:$0xff]
    %v2697 = vld [vmem:[#allocation13 + $0x2a8] sm:$0xff]
    %v2698 = vld [vmem:[#allocation13 + $0x2b0] sm:$0xff]
    %v2699 = vld [vmem:[#allocation13 + $0x2b8] sm:$0xff]
    %v2700 = vld [vmem:[#allocation13 + $0x2c0] sm:$0xff]
    %v2701 = vld [vmem:[#allocation13 + $0x2c8] sm:$0xff]
    %v2702 = vld [vmem:[#allocation13 + $0x2d0] sm:$0xff]
    %v2703 = vld [vmem:[#allocation13 + $0x2d8] sm:$0xff]
    %v2704 = vld [vmem:[#allocation13 + $0x2e0] sm:$0xff]
    %v2705 = vld [vmem:[#allocation13 + $0x2e8] sm:$0xff]
    %v2706 = vld [vmem:[#allocation13 + $0x2f0] sm:$0xff]
    %v2707 = vld [vmem:[#allocation13 + $0x2f8] sm:$0xff]
    %v2708 = vld [vmem:[#allocation13 + $0x300] sm:$0xff]
    %v2709 = vld [vmem:[#allocation13 + $0x308] sm:$0xff]
    %v2710 = vld [vmem:[#allocation13 + $0x310] sm:$0xff]
    %v2711 = vld [vmem:[#allocation13 + $0x318] sm:$0xff]
    %v2712 = vld [vmem:[#allocation13 + $0x320] sm:$0xff]
    %v2713 = vld [vmem:[#allocation13 + $0x328] sm:$0xff]
    %v2714 = vld [vmem:[#allocation13 + $0x330] sm:$0xff]
    %v2715 = vld [vmem:[#allocation13 + $0x338] sm:$0xff]
    %v2716 = vld [vmem:[#allocation13 + $0x340] sm:$0xff]
    %v2717 = vld [vmem:[#allocation13 + $0x348] sm:$0xff]
    %v2718 = vld [vmem:[#allocation13 + $0x350] sm:$0xff]
    %v2719 = vld [vmem:[#allocation13 + $0x358] sm:$0xff]
    %v2720 = vld [vmem:[#allocation13 + $0x360] sm:$0xff]
    %v2721 = vld [vmem:[#allocation13 + $0x368] sm:$0xff]
    %v2722 = vld [vmem:[#allocation13 + $0x370] sm:$0xff]
    %v2723 = vld [vmem:[#allocation13 + $0x378] sm:$0xff]
    %v2724 = vld [vmem:[#allocation13 + $0x380] sm:$0xff]
    %v2725 = vld [vmem:[#allocation13 + $0x388] sm:$0xff]
    %v2726 = vld [vmem:[#allocation13 + $0x390] sm:$0xff]
    %v2727 = vld [vmem:[#allocation13 + $0x398] sm:$0xff]
    %v2728 = vld [vmem:[#allocation13 + $0x3a0] sm:$0xff]
    %v2729 = vld [vmem:[#allocation13 + $0x3a8] sm:$0xff]
    %v2730 = vld [vmem:[#allocation13 + $0x3b0] sm:$0xff]
    %v2731 = vld [vmem:[#allocation13 + $0x3b8] sm:$0xff]
    %v2732 = vld [vmem:[#allocation13 + $0x3c0] sm:$0xff]
    %v2733 = vld [vmem:[#allocation13 + $0x3c8] sm:$0xff]
    %v2734 = vld [vmem:[#allocation13 + $0x3d0] sm:$0xff]
    %v2735 = vld [vmem:[#allocation13 + $0x3d8] sm:$0xff]
    %v2736 = vld [vmem:[#allocation13 + $0x3e0] sm:$0xff]
    %v2737 = vld [vmem:[#allocation13 + $0x3e8] sm:$0xff]
    %v2738 = vld [vmem:[#allocation13 + $0x3f0] sm:$0xff]
    %v2739 = vld [vmem:[#allocation13 + $0x3f8] sm:$0xff]
    %v2740 = vld [vmem:[#allocation13 + $0x400] sm:$0xff]
    %v2741 = vld [vmem:[#allocation13 + $0x408] sm:$0xff]
    %v2742 = vld [vmem:[#allocation13 + $0x410] sm:$0xff]
    %v2743 = vld [vmem:[#allocation13 + $0x418] sm:$0xff]
    %v2744 = vld [vmem:[#allocation13 + $0x420] sm:$0xff]
    %v2745 = vld [vmem:[#allocation13 + $0x428] sm:$0xff]
    %v2746 = vld [vmem:[#allocation13 + $0x430] sm:$0xff]
    %v2747 = vld [vmem:[#allocation13 + $0x438] sm:$0xff]
    %v2748 = vld [vmem:[#allocation13 + $0x440] sm:$0xff]
    %v2749 = vld [vmem:[#allocation13 + $0x448] sm:$0xff]
    %v2750 = vld [vmem:[#allocation13 + $0x450] sm:$0xff]
    %v2751 = vld [vmem:[#allocation13 + $0x458] sm:$0xff]
    %v2752 = vld [vmem:[#allocation13 + $0x460] sm:$0xff]
    %v2753 = vld [vmem:[#allocation13 + $0x468] sm:$0xff]
    %v2754 = vld [vmem:[#allocation13 + $0x470] sm:$0xff]
    %v2755 = vld [vmem:[#allocation13 + $0x478] sm:$0xff]
    %v2756 = vld [vmem:[#allocation13 + $0x480] sm:$0xff]
    %v2757 = vld [vmem:[#allocation13 + $0x488] sm:$0xff]
    %v2758 = vld [vmem:[#allocation13 + $0x490] sm:$0xff]
    %v2759 = vld [vmem:[#allocation13 + $0x498] sm:$0xff]
    %v2760 = vld [vmem:[#allocation13 + $0x4a0] sm:$0xff]
    %v2761 = vld [vmem:[#allocation13 + $0x4a8] sm:$0xff]
    %v2762 = vld [vmem:[#allocation13 + $0x4b0] sm:$0xff]
    %v2763 = vld [vmem:[#allocation13 + $0x4b8] sm:$0xff]
    %v2764 = vld [vmem:[#allocation13 + $0x4c0] sm:$0xff]
    %v2765 = vld [vmem:[#allocation13 + $0x4c8] sm:$0xff]
    %v2766 = vld [vmem:[#allocation13 + $0x4d0] sm:$0xff]
    %v2767 = vld [vmem:[#allocation13 + $0x4d8] sm:$0xff]
    %v2768 = vld [vmem:[#allocation13 + $0x4e0] sm:$0xff]
    %v2769 = vld [vmem:[#allocation13 + $0x4e8] sm:$0xff]
    %v2770 = vld [vmem:[#allocation13 + $0x4f0] sm:$0xff]
    %v2771 = vld [vmem:[#allocation13 + $0x4f8] sm:$0xff]
    %v2772 = vld [vmem:[#allocation13 + $0x500] sm:$0xff]
    %v2773 = vld [vmem:[#allocation13 + $0x508] sm:$0xff]
    %v2774 = vld [vmem:[#allocation13 + $0x510] sm:$0xff]
    %v2775 = vld [vmem:[#allocation13 + $0x518] sm:$0xff]
    %v2776 = vld [vmem:[#allocation13 + $0x520] sm:$0xff]
    %v2777 = vld [vmem:[#allocation13 + $0x528] sm:$0xff]
    %v2778 = vld [vmem:[#allocation13 + $0x530] sm:$0xff]
    %v2779 = vld [vmem:[#allocation13 + $0x538] sm:$0xff]
    %v2780 = vld [vmem:[#allocation13 + $0x540] sm:$0xff]
    %v2781 = vld [vmem:[#allocation13 + $0x548] sm:$0xff]
    %v2782 = vld [vmem:[#allocation13 + $0x550] sm:$0xff]
    %v2783 = vld [vmem:[#allocation13 + $0x558] sm:$0xff]
    %v2784 = vld [vmem:[#allocation13 + $0x560] sm:$0xff]
    %v2785 = vld [vmem:[#allocation13 + $0x568] sm:$0xff]
    %v2786 = vld [vmem:[#allocation13 + $0x570] sm:$0xff]
    %v2787 = vld [vmem:[#allocation13 + $0x578] sm:$0xff]
    %v2788 = vld [vmem:[#allocation13 + $0x580] sm:$0xff]
    %v2789 = vld [vmem:[#allocation13 + $0x588] sm:$0xff]
    %v2790 = vld [vmem:[#allocation13 + $0x590] sm:$0xff]
    %v2791 = vld [vmem:[#allocation13 + $0x598] sm:$0xff]
    %v2792 = vld [vmem:[#allocation13 + $0x5a0] sm:$0xff]
    %v2793 = vld [vmem:[#allocation13 + $0x5a8] sm:$0xff]
    %v2794 = vld [vmem:[#allocation13 + $0x5b0] sm:$0xff]
    %v2795 = vld [vmem:[#allocation13 + $0x5b8] sm:$0xff]
    %v2796 = vld [vmem:[#allocation13 + $0x5c0] sm:$0xff]
    %v2797 = vld [vmem:[#allocation13 + $0x5c8] sm:$0xff]
    %v2798 = vld [vmem:[#allocation13 + $0x5d0] sm:$0xff]
    %v2799 = vld [vmem:[#allocation13 + $0x5d8] sm:$0xff]
    %v2800 = vld [vmem:[#allocation13 + $0x5e0] sm:$0xff]
    %v2801 = vld [vmem:[#allocation13 + $0x5e8] sm:$0xff]
    %v2802 = vld [vmem:[#allocation13 + $0x5f0] sm:$0xff]
    %v2803 = vld [vmem:[#allocation13 + $0x5f8] sm:$0xff]
    %v2804 = vld [vmem:[#allocation13 + $0x600] sm:$0xff]
    %v2805 = vld [vmem:[#allocation13 + $0x608] sm:$0xff]
    %v2806 = vld [vmem:[#allocation13 + $0x610] sm:$0xff]
    %v2807 = vld [vmem:[#allocation13 + $0x618] sm:$0xff]
    %v2808 = vld [vmem:[#allocation13 + $0x620] sm:$0xff]
    %v2809 = vld [vmem:[#allocation13 + $0x628] sm:$0xff]
    %v2810 = vld [vmem:[#allocation13 + $0x630] sm:$0xff]
    %v2811 = vld [vmem:[#allocation13 + $0x638] sm:$0xff]
    %v2812 = vld [vmem:[#allocation13 + $0x640] sm:$0xff]
    %v2813 = vld [vmem:[#allocation13 + $0x648] sm:$0xff]
    %v2814 = vld [vmem:[#allocation13 + $0x650] sm:$0xff]
    %v2815 = vld [vmem:[#allocation13 + $0x658] sm:$0xff]
    %v2816 = vld [vmem:[#allocation13 + $0x660] sm:$0xff]
    %v2817 = vld [vmem:[#allocation13 + $0x668] sm:$0xff]
    %v2818 = vld [vmem:[#allocation13 + $0x670] sm:$0xff]
    %v2819 = vld [vmem:[#allocation13 + $0x678] sm:$0xff]
    %v2820 = vld [vmem:[#allocation13 + $0x680] sm:$0xff]
    %v2821 = vld [vmem:[#allocation13 + $0x688] sm:$0xff]
    %v2822 = vld [vmem:[#allocation13 + $0x690] sm:$0xff]
    %v2823 = vld [vmem:[#allocation13 + $0x698] sm:$0xff]
    %v2824 = vld [vmem:[#allocation13 + $0x6a0] sm:$0xff]
    %v2825 = vld [vmem:[#allocation13 + $0x6a8] sm:$0xff]
    %v2826 = vld [vmem:[#allocation13 + $0x6b0] sm:$0xff]
    %v2827 = vld [vmem:[#allocation13 + $0x6b8] sm:$0xff]
    %v2828 = vld [vmem:[#allocation13 + $0x6c0] sm:$0xff]
    %v2829 = vld [vmem:[#allocation13 + $0x6c8] sm:$0xff]
    %v2830 = vld [vmem:[#allocation13 + $0x6d0] sm:$0xff]
    %v2831 = vld [vmem:[#allocation13 + $0x6d8] sm:$0xff]
    %v2832 = vld [vmem:[#allocation13 + $0x6e0] sm:$0xff]
    %v2833 = vld [vmem:[#allocation13 + $0x6e8] sm:$0xff]
    %v2834 = vld [vmem:[#allocation13 + $0x6f0] sm:$0xff]
    %v2835 = vld [vmem:[#allocation13 + $0x6f8] sm:$0xff]
    %v2836 = vld [vmem:[#allocation13 + $0x700] sm:$0xff]
    %v2837 = vld [vmem:[#allocation13 + $0x708] sm:$0xff]
    %v2838 = vld [vmem:[#allocation13 + $0x710] sm:$0xff]
    %v2839 = vld [vmem:[#allocation13 + $0x718] sm:$0xff]
    %v2840 = vld [vmem:[#allocation13 + $0x720] sm:$0xff]
    %v2841 = vld [vmem:[#allocation13 + $0x728] sm:$0xff]
    %v2842 = vld [vmem:[#allocation13 + $0x730] sm:$0xff]
    %v2843 = vld [vmem:[#allocation13 + $0x738] sm:$0xff]
    %v2844 = vld [vmem:[#allocation13 + $0x740] sm:$0xff]
    %v2845 = vld [vmem:[#allocation13 + $0x748] sm:$0xff]
    %v2846 = vld [vmem:[#allocation13 + $0x750] sm:$0xff]
    %v2847 = vld [vmem:[#allocation13 + $0x758] sm:$0xff]
    %v2848 = vld [vmem:[#allocation13 + $0x760] sm:$0xff]
    %v2849 = vld [vmem:[#allocation13 + $0x768] sm:$0xff]
    %v2850 = vld [vmem:[#allocation13 + $0x770] sm:$0xff]
    %v2851 = vld [vmem:[#allocation13 + $0x778] sm:$0xff]
    %v2852 = vld [vmem:[#allocation13 + $0x780] sm:$0xff]
    %v2853 = vld [vmem:[#allocation13 + $0x788] sm:$0xff]
    %v2854 = vld [vmem:[#allocation13 + $0x790] sm:$0xff]
    %v2855 = vld [vmem:[#allocation13 + $0x798] sm:$0xff]
    %v2856 = vld [vmem:[#allocation13 + $0x7a0] sm:$0xff]
    %v2857 = vld [vmem:[#allocation13 + $0x7a8] sm:$0xff]
    %v2858 = vld [vmem:[#allocation13 + $0x7b0] sm:$0xff]
    %v2859 = vld [vmem:[#allocation13 + $0x7b8] sm:$0xff]
    %v2860 = vld [vmem:[#allocation13 + $0x7c0] sm:$0xff]
    %v2861 = vld [vmem:[#allocation13 + $0x7c8] sm:$0xff]
    %v2862 = vld [vmem:[#allocation13 + $0x7d0] sm:$0xff]
    %v2863 = vld [vmem:[#allocation13 + $0x7d8] sm:$0xff]
    %v2864 = vld [vmem:[#allocation13 + $0x7e0] sm:$0xff]
    %v2865 = vld [vmem:[#allocation13 + $0x7e8] sm:$0xff]
    %v2866 = vld [vmem:[#allocation13 + $0x7f0] sm:$0xff]
    %v2867 = vld [vmem:[#allocation13 + $0x7f8] sm:$0xff]
    %v2868 = vld [vmem:[%s10] sm:$0xff]
    %v2870 = vlaneseq
    %v2871 = vshrl.u32 %v2870, 7
    %v2872 = vsub.s32 0, %v2871
    %v2873 = vrot.slane %v2868, %v2872
    %v2874 = vlaneseq
    %v2875 = vshrl.u32 %v2874, 7
    %v2876 = vsub.s32 1, %v2875
    %v2877 = vrot.slane %v2868, %v2876
    %v2878 = vlaneseq
    %v2879 = vshrl.u32 %v2878, 7
    %v2880 = vsub.s32 2, %v2879
    %v2881 = vrot.slane %v2868, %v2880
    %v2882 = vlaneseq
    %v2883 = vshrl.u32 %v2882, 7
    %v2884 = vsub.s32 3, %v2883
    %v2885 = vrot.slane %v2868, %v2884
    %v2886 = vlaneseq
    %v2887 = vshrl.u32 %v2886, 7
    %v2888 = vsub.s32 4, %v2887
    %v2889 = vrot.slane %v2868, %v2888
    %v2890 = vlaneseq
    %v2891 = vshrl.u32 %v2890, 7
    %v2892 = vsub.s32 5, %v2891
    %v2893 = vrot.slane %v2868, %v2892
    %v2894 = vlaneseq
    %v2895 = vshrl.u32 %v2894, 7
    %v2896 = vsub.s32 6, %v2895
    %v2897 = vrot.slane %v2868, %v2896
    %v2898 = vlaneseq
    %v2899 = vshrl.u32 %v2898, 7
    %v2900 = vsub.s32 7, %v2899
    %v2901 = vrot.slane %v2868, %v2900
    %2910 = vmatprep.subr.mxu0 %v2357
    %2911 = vmatpush1.msra.mxu0 %v2356
    %2912 = vmatprep.subr.mxu0 %v2365
    %2913 = vmatpush1.msra.mxu0 %v2364
    %2914 = vmatprep.subr.mxu0 %v2373
    %2915 = vmatpush1.msra.mxu0 %v2372
    %2916 = vmatprep.subr.mxu0 %v2381
    %2917 = vmatpush1.msra.mxu0 %v2380
    %2918 = vmatprep.subr.mxu0 %v2389
    %2919 = vmatpush1.msra.mxu0 %v2388
    %2920 = vmatprep.subr.mxu0 %v2397
    %2921 = vmatpush1.msra.mxu0 %v2396
    %2922 = vmatprep.subr.mxu0 %v2405
    %2923 = vmatpush1.msra.mxu0 %v2404
    %2924 = vmatprep.subr.mxu0 %v2413
    %2925 = vmatpush1.msra.mxu0 %v2412
    %2926 = vmatprep.subr.mxu0 %v2421
    %2927 = vmatpush1.msra.mxu0 %v2420
    %2928 = vmatprep.subr.mxu0 %v2429
    %2929 = vmatpush1.msra.mxu0 %v2428
    %2930 = vmatprep.subr.mxu0 %v2437
    %2931 = vmatpush1.msra.mxu0 %v2436
    %2932 = vmatprep.subr.mxu0 %v2445
    %2933 = vmatpush1.msra.mxu0 %v2444
    %2934 = vmatprep.subr.mxu0 %v2453
    %2935 = vmatpush1.msra.mxu0 %v2452
    %2936 = vmatprep.subr.mxu0 %v2461
    %2937 = vmatpush1.msra.mxu0 %v2460
    %2938 = vmatprep.subr.mxu0 %v2469
    %2939 = vmatpush1.msra.mxu0 %v2468
    %2940 = vmatprep.subr.mxu0 %v2477
    %2941 = vmatpush1.msra.mxu0 %v2476
    %2942 = vmatprep.subr.mxu0 %v2485
    %2943 = vmatpush1.msra.mxu0 %v2484
    %2944 = vmatprep.subr.mxu0 %v2493
    %2945 = vmatpush1.msra.mxu0 %v2492
    %2946 = vmatprep.subr.mxu0 %v2501
    %2947 = vmatpush1.msra.mxu0 %v2500
    %2948 = vmatprep.subr.mxu0 %v2509
    %2949 = vmatpush1.msra.mxu0 %v2508
    %2950 = vmatprep.subr.mxu0 %v2517
    %2951 = vmatpush1.msra.mxu0 %v2516
    %2952 = vmatprep.subr.mxu0 %v2525
    %2953 = vmatpush1.msra.mxu0 %v2524
    %2954 = vmatprep.subr.mxu0 %v2533
    %2955 = vmatpush1.msra.mxu0 %v2532
    %2956 = vmatprep.subr.mxu0 %v2541
    %2957 = vmatpush1.msra.mxu0 %v2540
    %2958 = vmatprep.subr.mxu0 %v2549
    %2959 = vmatpush1.msra.mxu0 %v2548
    %2960 = vmatprep.subr.mxu0 %v2557
    %2961 = vmatpush1.msra.mxu0 %v2556
    %2962 = vmatprep.subr.mxu0 %v2565
    %2963 = vmatpush1.msra.mxu0 %v2564
    %2964 = vmatprep.subr.mxu0 %v2573
    %2965 = vmatpush1.msra.mxu0 %v2572
    %2966 = vmatprep.subr.mxu0 %v2581
    %2967 = vmatpush1.msra.mxu0 %v2580
    %2968 = vmatprep.subr.mxu0 %v2589
    %2969 = vmatpush1.msra.mxu0 %v2588
    %2970 = vmatprep.subr.mxu0 %v2597
    %2971 = vmatpush1.msra.mxu0 %v2596
    %2972 = vmatprep.subr.mxu0 %v2605
    %2973 = vmatpush1.msra.mxu0 %v2604
    %2974 = vmatprep.mubr.f32.mxu0 %v2341
    %2975 = vmatmul.mubr.f32.gmra.mrb[0].mxu0 %v2340
    %v2976 = vpop.f32.mrb[0].mxu0
    %v2977 = vadd.f32 %v2873, %v2976
    %v2978 = vpop.f32.mrb[0].mxu0
    %v2979 = vadd.f32 %v2877, %v2978
    %2980 = vmatprep.mubr.f32.mxu0 %v2343
    %2981 = vmatmul.mubr.f32.gmra.mrb[0].mxu0 %v2342
    %v2982 = vpop.f32.mrb[0].mxu0
    %v2983 = vadd.f32 %v2873, %v2982
    %v2984 = vpop.f32.mrb[0].mxu0
    %v2985 = vadd.f32 %v2877, %v2984
    %2986 = vmatprep.mubr.f32.mxu0 %v2345
    %2987 = vmatmul.mubr.f32.gmra.mrb[0].mxu0 %v2344
    %v2988 = vpop.f32.mrb[0].mxu0
    %v2989 = vadd.f32 %v2873, %v2988
    %v2990 = vpop.f32.mrb[0].mxu0
    %v2991 = vadd.f32 %v2877, %v2990
    %2992 = vmatprep.mubr.f32.mxu0 %v2347
    %2993 = vmatmul.mubr.f32.gmra.mrb[0].mxu0 %v2346
    %v2994 = vpop.f32.mrb[0].mxu0
    %v2995 = vadd.f32 %v2873, %v2994
    %v2996 = vpop.f32.mrb[0].mxu0
    %v2997 = vadd.f32 %v2877, %v2996
    %2998 = vmatprep.mubr.f32.mxu0 %v2349
    %2999 = vmatmul.mubr.f32.gmra.mrb[0].mxu0 %v2348
    %v3000 = vpop.f32.mrb[0].mxu0
    %v3001 = vadd.f32 %v2873, %v3000
    %v3002 = vpop.f32.mrb[0].mxu0
    %v3003 = vadd.f32 %v2877, %v3002
    %3004 = vmatprep.mubr.f32.mxu0 %v2351
    %3005 = vmatmul.mubr.f32.gmra.mrb[0].mxu0 %v2350
    %v3006 = vpop.f32.mrb[0].mxu0
    %v3007 = vadd.f32 %v2873, %v3006
    %v3008 = vpop.f32.mrb[0].mxu0
    %v3009 = vadd.f32 %v2877, %v3008
    %3010 = vmatprep.mubr.f32.mxu0 %v2353
    %3011 = vmatmul.mubr.f32.gmra.mrb[0].mxu0 %v2352
    %v3012 = vpop.f32.mrb[0].mxu0
    %v3013 = vadd.f32 %v2873, %v3012
    %v3014 = vpop.f32.mrb[0].mxu0
    %v3015 = vadd.f32 %v2877, %v3014
    %3016 = vmatprep.mubr.f32.mxu0 %v2355
    %3017 = vmatmul.mubr.f32.gmra.mrb[0].mxu0 %v2354
    %v3018 = vpop.f32.mrb[0].mxu0
    %v3019 = vadd.f32 %v2873, %v3018
    %v3020 = vpop.f32.mrb[0].mxu0
    %v3021 = vadd.f32 %v2877, %v3020
    %3022 = vdwg.mxu0
    %3023 = vmatprep.subr.mxu0 %v2359
    %3024 = vmatpush1.msra.mxu0 %v2358
    %3025 = vmatprep.subr.mxu0 %v2367
    %3026 = vmatpush1.msra.mxu0 %v2366
    %3027 = vmatprep.subr.mxu0 %v2375
    %3028 = vmatpush1.msra.mxu0 %v2374
    %3029 = vmatprep.subr.mxu0 %v2383
    %3030 = vmatpush1.msra.mxu0 %v2382
    %3031 = vmatprep.subr.mxu0 %v2391
    %3032 = vmatpush1.msra.mxu0 %v2390
    %3033 = vmatprep.subr.mxu0 %v2399
    %3034 = vmatpush1.msra.mxu0 %v2398
    %3035 = vmatprep.subr.mxu0 %v2407
    %3036 = vmatpush1.msra.mxu0 %v2406
    %3037 = vmatprep.subr.mxu0 %v2415
    %3038 = vmatpush1.msra.mxu0 %v2414
    %3039 = vmatprep.subr.mxu0 %v2423
    %3040 = vmatpush1.msra.mxu0 %v2422
    %3041 = vmatprep.subr.mxu0 %v2431
    %3042 = vmatpush1.msra.mxu0 %v2430
    %3043 = vmatprep.subr.mxu0 %v2439
    %3044 = vmatpush1.msra.mxu0 %v2438
    %3045 = vmatprep.subr.mxu0 %v2447
    %3046 = vmatpush1.msra.mxu0 %v2446
    %3047 = vmatprep.subr.mxu0 %v2455
    %3048 = vmatpush1.msra.mxu0 %v2454
    %3049 = vmatprep.subr.mxu0 %v2463
    %3050 = vmatpush1.msra.mxu0 %v2462
    %3051 = vmatprep.subr.mxu0 %v2471
    %3052 = vmatpush1.msra.mxu0 %v2470
    %3053 = vmatprep.subr.mxu0 %v2479
    %3054 = vmatpush1.msra.mxu0 %v2478
    %3055 = vmatprep.subr.mxu0 %v2487
    %3056 = vmatpush1.msra.mxu0 %v2486
    %3057 = vmatprep.subr.mxu0 %v2495
    %3058 = vmatpush1.msra.mxu0 %v2494
    %3059 = vmatprep.subr.mxu0 %v2503
    %3060 = vmatpush1.msra.mxu0 %v2502
    %3061 = vmatprep.subr.mxu0 %v2511
    %3062 = vmatpush1.msra.mxu0 %v2510
    %3063 = vmatprep.subr.mxu0 %v2519
    %3064 = vmatpush1.msra.mxu0 %v2518
    %3065 = vmatprep.subr.mxu0 %v2527
    %3066 = vmatpush1.msra.mxu0 %v2526
    %3067 = vmatprep.subr.mxu0 %v2535
    %3068 = vmatpush1.msra.mxu0 %v2534
    %3069 = vmatprep.subr.mxu0 %v2543
    %3070 = vmatpush1.msra.mxu0 %v2542
    %3071 = vmatprep.subr.mxu0 %v2551
    %3072 = vmatpush1.msra.mxu0 %v2550
    %3073 = vmatprep.subr.mxu0 %v2559
    %3074 = vmatpush1.msra.mxu0 %v2558
    %3075 = vmatprep.subr.mxu0 %v2567
    %3076 = vmatpush1.msra.mxu0 %v2566
    %3077 = vmatprep.subr.mxu0 %v2575
    %3078 = vmatpush1.msra.mxu0 %v2574
    %3079 = vmatprep.subr.mxu0 %v2583
    %3080 = vmatpush1.msra.mxu0 %v2582
    %3081 = vmatprep.subr.mxu0 %v2591
    %3082 = vmatpush1.msra.mxu0 %v2590
    %3083 = vmatprep.subr.mxu0 %v2599
    %3084 = vmatpush1.msra.mxu0 %v2598
    %3085 = vmatprep.subr.mxu0 %v2607
    %3086 = vmatpush1.msra.mxu0 %v2606
    %3087 = vmatprep.mubr.f32.mxu0 %v2341
    %3088 = vmatmul.mubr.f32.gmra.mrb[0].mxu0 %v2340
    %v3089 = vpop.f32.mrb[0].mxu0
    %v3090 = vadd.f32 %v2881, %v3089
    %v3091 = vpop.f32.mrb[0].mxu0
    %v3092 = vadd.f32 %v2885, %v3091
    %3093 = vmatprep.mubr.f32.mxu0 %v2343
    %3094 = vmatmul.mubr.f32.gmra.mrb[0].mxu0 %v2342
    %v3095 = vpop.f32.mrb[0].mxu0
    %v3096 = vadd.f32 %v2881, %v3095
    %v3097 = vpop.f32.mrb[0].mxu0
    %v3098 = vadd.f32 %v2885, %v3097
    %3099 = vmatprep.mubr.f32.mxu0 %v2345
    %3100 = vmatmul.mubr.f32.gmra.mrb[0].mxu0 %v2344
    %v3101 = vpop.f32.mrb[0].mxu0
    %v3102 = vadd.f32 %v2881, %v3101
    %v3103 = vpop.f32.mrb[0].mxu0
    %v3104 = vadd.f32 %v2885, %v3103
    %3105 = vmatprep.mubr.f32.mxu0 %v2347
    %3106 = vmatmul.mubr.f32.gmra.mrb[0].mxu0 %v2346
    %v3107 = vpop.f32.mrb[0].mxu0
    %v3108 = vadd.f32 %v2881, %v3107
    %v3109 = vpop.f32.mrb[0].mxu0
    %v3110 = vadd.f32 %v2885, %v3109
    %3111 = vmatprep.mubr.f32.mxu0 %v2349
    %3112 = vmatmul.mubr.f32.gmra.mrb[0].mxu0 %v2348
    %v3113 = vpop.f32.mrb[0].mxu0
    %v3114 = vadd.f32 %v2881, %v3113
    %v3115 = vpop.f32.mrb[0].mxu0
    %v3116 = vadd.f32 %v2885, %v3115
    %3117 = vmatprep.mubr.f32.mxu0 %v2351
    %3118 = vmatmul.mubr.f32.gmra.mrb[0].mxu0 %v2350
    %v3119 = vpop.f32.mrb[0].mxu0
    %v3120 = vadd.f32 %v2881, %v3119
    %v3121 = vpop.f32.mrb[0].mxu0
    %v3122 = vadd.f32 %v2885, %v3121
    %3123 = vmatprep.mubr.f32.mxu0 %v2353
    %3124 = vmatmul.mubr.f32.gmra.mrb[0].mxu0 %v2352
    %v3125 = vpop.f32.mrb[0].mxu0
    %v3126 = vadd.f32 %v2881, %v3125
    %v3127 = vpop.f32.mrb[0].mxu0
    %v3128 = vadd.f32 %v2885, %v3127
    %3129 = vmatprep.mubr.f32.mxu0 %v2355
    %3130 = vmatmul.mubr.f32.gmra.mrb[0].mxu0 %v2354
    %v3131 = vpop.f32.mrb[0].mxu0
    %v3132 = vadd.f32 %v2881, %v3131
    %v3133 = vpop.f32.mrb[0].mxu0
    %v3134 = vadd.f32 %v2885, %v3133
    %3135 = vdwg.mxu0
    %3136 = vmatprep.subr.mxu0 %v2361
    %3137 = vmatpush1.msra.mxu0 %v2360
    %3138 = vmatprep.subr.mxu0 %v2369
    %3139 = vmatpush1.msra.mxu0 %v2368
    %3140 = vmatprep.subr.mxu0 %v2377
    %3141 = vmatpush1.msra.mxu0 %v2376
    %3142 = vmatprep.subr.mxu0 %v2385
    %3143 = vmatpush1.msra.mxu0 %v2384
    %3144 = vmatprep.subr.mxu0 %v2393
    %3145 = vmatpush1.msra.mxu0 %v2392
    %3146 = vmatprep.subr.mxu0 %v2401
    %3147 = vmatpush1.msra.mxu0 %v2400
    %3148 = vmatprep.subr.mxu0 %v2409
    %3149 = vmatpush1.msra.mxu0 %v2408
    %3150 = vmatprep.subr.mxu0 %v2417
    %3151 = vmatpush1.msra.mxu0 %v2416
    %3152 = vmatprep.subr.mxu0 %v2425
    %3153 = vmatpush1.msra.mxu0 %v2424
    %3154 = vmatprep.subr.mxu0 %v2433
    %3155 = vmatpush1.msra.mxu0 %v2432
    %3156 = vmatprep.subr.mxu0 %v2441
    %3157 = vmatpush1.msra.mxu0 %v2440
    %3158 = vmatprep.subr.mxu0 %v2449
    %3159 = vmatpush1.msra.mxu0 %v2448
    %3160 = vmatprep.subr.mxu0 %v2457
    %3161 = vmatpush1.msra.mxu0 %v2456
    %3162 = vmatprep.subr.mxu0 %v2465
    %3163 = vmatpush1.msra.mxu0 %v2464
    %3164 = vmatprep.subr.mxu0 %v2473
    %3165 = vmatpush1.msra.mxu0 %v2472
    %3166 = vmatprep.subr.mxu0 %v2481
    %3167 = vmatpush1.msra.mxu0 %v2480
    %3168 = vmatprep.subr.mxu0 %v2489
    %3169 = vmatpush1.msra.mxu0 %v2488
    %3170 = vmatprep.subr.mxu0 %v2497
    %3171 = vmatpush1.msra.mxu0 %v2496
    %3172 = vmatprep.subr.mxu0 %v2505
    %3173 = vmatpush1.msra.mxu0 %v2504
    %3174 = vmatprep.subr.mxu0 %v2513
    %3175 = vmatpush1.msra.mxu0 %v2512
    %3176 = vmatprep.subr.mxu0 %v2521
    %3177 = vmatpush1.msra.mxu0 %v2520
    %3178 = vmatprep.subr.mxu0 %v2529
    %3179 = vmatpush1.msra.mxu0 %v2528
    %3180 = vmatprep.subr.mxu0 %v2537
    %3181 = vmatpush1.msra.mxu0 %v2536
    %3182 = vmatprep.subr.mxu0 %v2545
    %3183 = vmatpush1.msra.mxu0 %v2544
    %3184 = vmatprep.subr.mxu0 %v2553
    %3185 = vmatpush1.msra.mxu0 %v2552
    %3186 = vmatprep.subr.mxu0 %v2561
    %3187 = vmatpush1.msra.mxu0 %v2560
    %3188 = vmatprep.subr.mxu0 %v2569
    %3189 = vmatpush1.msra.mxu0 %v2568
    %3190 = vmatprep.subr.mxu0 %v2577
    %3191 = vmatpush1.msra.mxu0 %v2576
    %3192 = vmatprep.subr.mxu0 %v2585
    %3193 = vmatpush1.msra.mxu0 %v2584
    %3194 = vmatprep.subr.mxu0 %v2593
    %3195 = vmatpush1.msra.mxu0 %v2592
    %3196 = vmatprep.subr.mxu0 %v2601
    %3197 = vmatpush1.msra.mxu0 %v2600
    %3198 = vmatprep.subr.mxu0 %v2609
    %3199 = vmatpush1.msra.mxu0 %v2608
    %3200 = vmatprep.mubr.f32.mxu0 %v2341
    %3201 = vmatmul.mubr.f32.gmra.mrb[0].mxu0 %v2340
    %v3202 = vpop.f32.mrb[0].mxu0
    %v3203 = vadd.f32 %v2889, %v3202
    %v3204 = vpop.f32.mrb[0].mxu0
    %v3205 = vadd.f32 %v2893, %v3204
    %3206 = vmatprep.mubr.f32.mxu0 %v2343
    %3207 = vmatmul.mubr.f32.gmra.mrb[0].mxu0 %v2342
    %v3208 = vpop.f32.mrb[0].mxu0
    %v3209 = vadd.f32 %v2889, %v3208
    %v3210 = vpop.f32.mrb[0].mxu0
    %v3211 = vadd.f32 %v2893, %v3210
    %3212 = vmatprep.mubr.f32.mxu0 %v2345
    %3213 = vmatmul.mubr.f32.gmra.mrb[0].mxu0 %v2344
    %v3214 = vpop.f32.mrb[0].mxu0
    %v3215 = vadd.f32 %v2889, %v3214
    %v3216 = vpop.f32.mrb[0].mxu0
    %v3217 = vadd.f32 %v2893, %v3216
    %3218 = vmatprep.mubr.f32.mxu0 %v2347
    %3219 = vmatmul.mubr.f32.gmra.mrb[0].mxu0 %v2346
    %v3220 = vpop.f32.mrb[0].mxu0
    %v3221 = vadd.f32 %v2889, %v3220
    %v3222 = vpop.f32.mrb[0].mxu0
    %v3223 = vadd.f32 %v2893, %v3222
    %3224 = vmatprep.mubr.f32.mxu0 %v2349
    %3225 = vmatmul.mubr.f32.gmra.mrb[0].mxu0 %v2348
    %v3226 = vpop.f32.mrb[0].mxu0
    %v3227 = vadd.f32 %v2889, %v3226
    %v3228 = vpop.f32.mrb[0].mxu0
    %v3229 = vadd.f32 %v2893, %v3228
    %3230 = vmatprep.mubr.f32.mxu0 %v2351
    %3231 = vmatmul.mubr.f32.gmra.mrb[0].mxu0 %v2350
    %v3232 = vpop.f32.mrb[0].mxu0
    %v3233 = vadd.f32 %v2889, %v3232
    %v3234 = vpop.f32.mrb[0].mxu0
    %v3235 = vadd.f32 %v2893, %v3234
    %3236 = vmatprep.mubr.f32.mxu0 %v2353
    %3237 = vmatmul.mubr.f32.gmra.mrb[0].mxu0 %v2352
    %v3238 = vpop.f32.mrb[0].mxu0
    %v3239 = vadd.f32 %v2889, %v3238
    %v3240 = vpop.f32.mrb[0].mxu0
    %v3241 = vadd.f32 %v2893, %v3240
    %3242 = vmatprep.mubr.f32.mxu0 %v2355
    %3243 = vmatmul.mubr.f32.gmra.mrb[0].mxu0 %v2354
    %v3244 = vpop.f32.mrb[0].mxu0
    %v3245 = vadd.f32 %v2889, %v3244
    %v3246 = vpop.f32.mrb[0].mxu0
    %v3247 = vadd.f32 %v2893, %v3246
    %3248 = vdwg.mxu0
    %3249 = vmatprep.subr.mxu0 %v2363
    %3250 = vmatpush1.msra.mxu0 %v2362
    %3251 = vmatprep.subr.mxu0 %v2371
    %3252 = vmatpush1.msra.mxu0 %v2370
    %3253 = vmatprep.subr.mxu0 %v2379
    %3254 = vmatpush1.msra.mxu0 %v2378
    %3255 = vmatprep.subr.mxu0 %v2387
    %3256 = vmatpush1.msra.mxu0 %v2386
    %3257 = vmatprep.subr.mxu0 %v2395
    %3258 = vmatpush1.msra.mxu0 %v2394
    %3259 = vmatprep.subr.mxu0 %v2403
    %3260 = vmatpush1.msra.mxu0 %v2402
    %3261 = vmatprep.subr.mxu0 %v2411
    %3262 = vmatpush1.msra.mxu0 %v2410
    %3263 = vmatprep.subr.mxu0 %v2419
    %3264 = vmatpush1.msra.mxu0 %v2418
    %3265 = vmatprep.subr.mxu0 %v2427
    %3266 = vmatpush1.msra.mxu0 %v2426
    %3267 = vmatprep.subr.mxu0 %v2435
    %3268 = vmatpush1.msra.mxu0 %v2434
    %3269 = vmatprep.subr.mxu0 %v2443
    %3270 = vmatpush1.msra.mxu0 %v2442
    %3271 = vmatprep.subr.mxu0 %v2451
    %3272 = vmatpush1.msra.mxu0 %v2450
    %3273 = vmatprep.subr.mxu0 %v2459
    %3274 = vmatpush1.msra.mxu0 %v2458
    %3275 = vmatprep.subr.mxu0 %v2467
    %3276 = vmatpush1.msra.mxu0 %v2466
    %3277 = vmatprep.subr.mxu0 %v2475
    %3278 = vmatpush1.msra.mxu0 %v2474
    %3279 = vmatprep.subr.mxu0 %v2483
    %3280 = vmatpush1.msra.mxu0 %v2482
    %3281 = vmatprep.subr.mxu0 %v2491
    %3282 = vmatpush1.msra.mxu0 %v2490
    %3283 = vmatprep.subr.mxu0 %v2499
    %3284 = vmatpush1.msra.mxu0 %v2498
    %3285 = vmatprep.subr.mxu0 %v2507
    %3286 = vmatpush1.msra.mxu0 %v2506
    %3287 = vmatprep.subr.mxu0 %v2515
    %3288 = vmatpush1.msra.mxu0 %v2514
    %3289 = vmatprep.subr.mxu0 %v2523
    %3290 = vmatpush1.msra.mxu0 %v2522
    %3291 = vmatprep.subr.mxu0 %v2531
    %3292 = vmatpush1.msra.mxu0 %v2530
    %3293 = vmatprep.subr.mxu0 %v2539
    %3294 = vmatpush1.msra.mxu0 %v2538
    %3295 = vmatprep.subr.mxu0 %v2547
    %3296 = vmatpush1.msra.mxu0 %v2546
    %3297 = vmatprep.subr.mxu0 %v2555
    %3298 = vmatpush1.msra.mxu0 %v2554
    %3299 = vmatprep.subr.mxu0 %v2563
    %3300 = vmatpush1.msra.mxu0 %v2562
    %3301 = vmatprep.subr.mxu0 %v2571
    %3302 = vmatpush1.msra.mxu0 %v2570
    %3303 = vmatprep.subr.mxu0 %v2579
    %3304 = vmatpush1.msra.mxu0 %v2578
    %3305 = vmatprep.subr.mxu0 %v2587
    %3306 = vmatpush1.msra.mxu0 %v2586
    %3307 = vmatprep.subr.mxu0 %v2595
    %3308 = vmatpush1.msra.mxu0 %v2594
    %3309 = vmatprep.subr.mxu0 %v2603
    %3310 = vmatpush1.msra.mxu0 %v2602
    %3311 = vmatprep.subr.mxu0 %v2611
    %3312 = vmatpush1.msra.mxu0 %v2610
    %3313 = vmatprep.mubr.f32.mxu0 %v2341
    %3314 = vmatmul.mubr.f32.gmra.mrb[0].mxu0 %v2340
    %v3315 = vpop.f32.mrb[0].mxu0
    %v3316 = vadd.f32 %v2897, %v3315
    %v3317 = vpop.f32.mrb[0].mxu0
    %v3318 = vadd.f32 %v2901, %v3317
    %3319 = vmatprep.mubr.f32.mxu0 %v2343
    %3320 = vmatmul.mubr.f32.gmra.mrb[0].mxu0 %v2342
    %v3321 = vpop.f32.mrb[0].mxu0
    %v3322 = vadd.f32 %v2897, %v3321
    %v3323 = vpop.f32.mrb[0].mxu0
    %v3324 = vadd.f32 %v2901, %v3323
    %3325 = vmatprep.mubr.f32.mxu0 %v2345
    %3326 = vmatmul.mubr.f32.gmra.mrb[0].mxu0 %v2344
    %v3327 = vpop.f32.mrb[0].mxu0
    %v3328 = vadd.f32 %v2897, %v3327
    %v3329 = vpop.f32.mrb[0].mxu0
    %v3330 = vadd.f32 %v2901, %v3329
    %3331 = vmatprep.mubr.f32.mxu0 %v2347
    %3332 = vmatmul.mubr.f32.gmra.mrb[0].mxu0 %v2346
    %v3333 = vpop.f32.mrb[0].mxu0
    %v3334 = vadd.f32 %v2897, %v3333
    %v3335 = vpop.f32.mrb[0].mxu0
    %v3336 = vadd.f32 %v2901, %v3335
    %3337 = vmatprep.mubr.f32.mxu0 %v2349
    %3338 = vmatmul.mubr.f32.gmra.mrb[0].mxu0 %v2348
    %v3339 = vpop.f32.mrb[0].mxu0
    %v3340 = vadd.f32 %v2897, %v3339
    %v3341 = vpop.f32.mrb[0].mxu0
    %v3342 = vadd.f32 %v2901, %v3341
    %3343 = vmatprep.mubr.f32.mxu0 %v2351
    %3344 = vmatmul.mubr.f32.gmra.mrb[0].mxu0 %v2350
    %v3345 = vpop.f32.mrb[0].mxu0
    %v3346 = vadd.f32 %v2897, %v3345
    %v3347 = vpop.f32.mrb[0].mxu0
    %v3348 = vadd.f32 %v2901, %v3347
    %3349 = vmatprep.mubr.f32.mxu0 %v2353
    %3350 = vmatmul.mubr.f32.gmra.mrb[0].mxu0 %v2352
    %v3351 = vpop.f32.mrb[0].mxu0
    %v3352 = vadd.f32 %v2897, %v3351
    %v3353 = vpop.f32.mrb[0].mxu0
    %v3354 = vadd.f32 %v2901, %v3353
    %3355 = vmatprep.mubr.f32.mxu0 %v2355
    %3356 = vmatmul.mubr.f32.gmra.mrb[0].mxu0 %v2354
    %v3357 = vpop.f32.mrb[0].mxu0
    %v3358 = vadd.f32 %v2897, %v3357
    %v3359 = vpop.f32.mrb[0].mxu0
    %v3360 = vadd.f32 %v2901, %v3359
    %3361 = vdwg.mxu0
    %3362 = vst [vmem:[#allocation3] sm:$0xff] %v2977
    %3363 = vst [vmem:[#allocation3 + $0x8] sm:$0xff] %v2979
    %3364 = vst [vmem:[#allocation3 + $0x10] sm:$0xff] %v3090
    %3365 = vst [vmem:[#allocation3 + $0x18] sm:$0xff] %v3092
    %3366 = vst [vmem:[#allocation3 + $0x20] sm:$0xff] %v3203
    %3367 = vst [vmem:[#allocation3 + $0x28] sm:$0xff] %v3205
    %3368 = vst [vmem:[#allocation3 + $0x30] sm:$0xff] %v3316
    %3369 = vst [vmem:[#allocation3 + $0x38] sm:$0xff] %v3318
    %3370 = vst [vmem:[#allocation3 + $0x40] sm:$0xff] %v2983
    %3371 = vst [vmem:[#allocation3 + $0x48] sm:$0xff] %v2985
    %3372 = vst [vmem:[#allocation3 + $0x50] sm:$0xff] %v3096
    %3373 = vst [vmem:[#allocation3 + $0x58] sm:$0xff] %v3098
    %3374 = vst [vmem:[#allocation3 + $0x60] sm:$0xff] %v3209
    %3375 = vst [vmem:[#allocation3 + $0x68] sm:$0xff] %v3211
    %3376 = vst [vmem:[#allocation3 + $0x70] sm:$0xff] %v3322
    %3377 = vst [vmem:[#allocation3 + $0x78] sm:$0xff] %v3324
    %3378 = vst [vmem:[#allocation3 + $0x80] sm:$0xff] %v2989
    %3379 = vst [vmem:[#allocation3 + $0x88] sm:$0xff] %v2991
    %3380 = vst [vmem:[#allocation3 + $0x90] sm:$0xff] %v3102
    %3381 = vst [vmem:[#allocation3 + $0x98] sm:$0xff] %v3104
    %3382 = vst [vmem:[#allocation3 + $0xa0] sm:$0xff] %v3215
    %3383 = vst [vmem:[#allocation3 + $0xa8] sm:$0xff] %v3217
    %3384 = vst [vmem:[#allocation3 + $0xb0] sm:$0xff] %v3328
    %3385 = vst [vmem:[#allocation3 + $0xb8] sm:$0xff] %v3330
    %3386 = vst [vmem:[#allocation3 + $0xc0] sm:$0xff] %v2995
    %3387 = vst [vmem:[#allocation3 + $0xc8] sm:$0xff] %v2997
    %3388 = vst [vmem:[#allocation3 + $0xd0] sm:$0xff] %v3108
    %3389 = vst [vmem:[#allocation3 + $0xd8] sm:$0xff] %v3110
    %3390 = vst [vmem:[#allocation3 + $0xe0] sm:$0xff] %v3221
    %3391 = vst [vmem:[#allocation3 + $0xe8] sm:$0xff] %v3223
    %3392 = vst [vmem:[#allocation3 + $0xf0] sm:$0xff] %v3334
    %3393 = vst [vmem:[#allocation3 + $0xf8] sm:$0xff] %v3336
    %3394 = vst [vmem:[#allocation3 + $0x100] sm:$0xff] %v3001
    %3395 = vst [vmem:[#allocation3 + $0x108] sm:$0xff] %v3003
    %3396 = vst [vmem:[#allocation3 + $0x110] sm:$0xff] %v3114
    %3397 = vst [vmem:[#allocation3 + $0x118] sm:$0xff] %v3116
    %3398 = vst [vmem:[#allocation3 + $0x120] sm:$0xff] %v3227
    %3399 = vst [vmem:[#allocation3 + $0x128] sm:$0xff] %v3229
    %3400 = vst [vmem:[#allocation3 + $0x130] sm:$0xff] %v3340
    %3401 = vst [vmem:[#allocation3 + $0x138] sm:$0xff] %v3342
    %3402 = vst [vmem:[#allocation3 + $0x140] sm:$0xff] %v3007
    %3403 = vst [vmem:[#allocation3 + $0x148] sm:$0xff] %v3009
    %3404 = vst [vmem:[#allocation3 + $0x150] sm:$0xff] %v3120
    %3405 = vst [vmem:[#allocation3 + $0x158] sm:$0xff] %v3122
    %3406 = vst [vmem:[#allocation3 + $0x160] sm:$0xff] %v3233
    %3407 = vst [vmem:[#allocation3 + $0x168] sm:$0xff] %v3235
    %3408 = vst [vmem:[#allocation3 + $0x170] sm:$0xff] %v3346
    %3409 = vst [vmem:[#allocation3 + $0x178] sm:$0xff] %v3348
    %3410 = vst [vmem:[#allocation3 + $0x180] sm:$0xff] %v3013
    %3411 = vst [vmem:[#allocation3 + $0x188] sm:$0xff] %v3015
    %3412 = vst [vmem:[#allocation3 + $0x190] sm:$0xff] %v3126
    %3413 = vst [vmem:[#allocation3 + $0x198] sm:$0xff] %v3128
    %3414 = vst [vmem:[#allocation3 + $0x1a0] sm:$0xff] %v3239
    %3415 = vst [vmem:[#allocation3 + $0x1a8] sm:$0xff] %v3241
    %3416 = vst [vmem:[#allocation3 + $0x1b0] sm:$0xff] %v3352
    %3417 = vst [vmem:[#allocation3 + $0x1b8] sm:$0xff] %v3354
    %3418 = vst [vmem:[#allocation3 + $0x1c0] sm:$0xff] %v3019
    %3419 = vst [vmem:[#allocation3 + $0x1c8] sm:$0xff] %v3021
    %3420 = vst [vmem:[#allocation3 + $0x1d0] sm:$0xff] %v3132
    %3421 = vst [vmem:[#allocation3 + $0x1d8] sm:$0xff] %v3134
    %3422 = vst [vmem:[#allocation3 + $0x1e0] sm:$0xff] %v3245
    %3423 = vst [vmem:[#allocation3 + $0x1e8] sm:$0xff] %v3247
    %3424 = vst [vmem:[#allocation3 + $0x1f0] sm:$0xff] %v3358
    %3425 = vst [vmem:[#allocation3 + $0x1f8] sm:$0xff] %v3360
    loop: start=0, step=1, limit=8
    $region121: #{cnn_lstm_forward.1} parent=1 // loop_pre_header
      _
    $region122: #{cnn_lstm_forward.1} parent=1 // loop_header
      %s3427 = sphi 0, %s3431
      %p3428 = scmp.ge.s32.totalorder %s3427, 8
      %v3432 = vphi 0.0, %v3788
      %v3433 = vphi 0.0, %v3789
      %v3434 = vphi 0.0, %v3784
      %v3435 = vphi 0.0, %v3785
    $region123: #{cnn_lstm_forward.1} parent=1 // loop_header_branch
      %3430 = sbr.rel (%p3428) target = $region127
    $region124: #{cnn_lstm_forward.1} parent=1 // loop_body
      %s3436 = smul.u32 %s3427, 8
      %s3437 = sshra.s32 %s3436, 3
      %s3438 = sand.u32 %s3436, 7
      %s3439 = smul.u32 %s3437, 8
      %s3440 = smul.addr %s3439, 8
      %s3441 = scalar_lea.vmem [#allocation3], %s3440
      %v3442 = vld [vmem:[%s3441] sm:$0xff]
      %v3443 = vld [vmem:[%s3441 + $0x8] sm:$0xff]
      %v3444 = vld [vmem:[%s3441 + $0x10] sm:$0xff]
      %v3445 = vld [vmem:[%s3441 + $0x18] sm:$0xff]
      %v3446 = vld [vmem:[%s3441 + $0x20] sm:$0xff]
      %v3447 = vld [vmem:[%s3441 + $0x28] sm:$0xff]
      %v3448 = vld [vmem:[%s3441 + $0x30] sm:$0xff]
      %v3449 = vld [vmem:[%s3441 + $0x38] sm:$0xff]
      %3450 = vmatprep.subr.mxu0 %v2613
      %3451 = vmatpush1.msra.mxu0 %v2612
      %3452 = vmatprep.subr.mxu0 %v2621
      %3453 = vmatpush1.msra.mxu0 %v2620
      %3454 = vmatprep.subr.mxu0 %v2629
      %3455 = vmatpush1.msra.mxu0 %v2628
      %3456 = vmatprep.subr.mxu0 %v2637
      %3457 = vmatpush1.msra.mxu0 %v2636
      %3458 = vmatprep.subr.mxu0 %v2645
      %3459 = vmatpush1.msra.mxu0 %v2644
      %3460 = vmatprep.subr.mxu0 %v2653
      %3461 = vmatpush1.msra.mxu0 %v2652
      %3462 = vmatprep.subr.mxu0 %v2661
      %3463 = vmatpush1.msra.mxu0 %v2660
      %3464 = vmatprep.subr.mxu0 %v2669
      %3465 = vmatpush1.msra.mxu0 %v2668
      %3466 = vmatprep.subr.mxu0 %v2677
      %3467 = vmatpush1.msra.mxu0 %v2676
      %3468 = vmatprep.subr.mxu0 %v2685
      %3469 = vmatpush1.msra.mxu0 %v2684
      %3470 = vmatprep.subr.mxu0 %v2693
      %3471 = vmatpush1.msra.mxu0 %v2692
      %3472 = vmatprep.subr.mxu0 %v2701
      %3473 = vmatpush1.msra.mxu0 %v2700
      %3474 = vmatprep.subr.mxu0 %v2709
      %3475 = vmatpush1.msra.mxu0 %v2708
      %3476 = vmatprep.subr.mxu0 %v2717
      %3477 = vmatpush1.msra.mxu0 %v2716
      %3478 = vmatprep.subr.mxu0 %v2725
      %3479 = vmatpush1.msra.mxu0 %v2724
      %3480 = vmatprep.subr.mxu0 %v2733
      %3481 = vmatpush1.msra.mxu0 %v2732
      %3482 = vmatprep.subr.mxu0 %v2741
      %3483 = vmatpush1.msra.mxu0 %v2740
      %3484 = vmatprep.subr.mxu0 %v2749
      %3485 = vmatpush1.msra.mxu0 %v2748
      %3486 = vmatprep.subr.mxu0 %v2757
      %3487 = vmatpush1.msra.mxu0 %v2756
      %3488 = vmatprep.subr.mxu0 %v2765
      %3489 = vmatpush1.msra.mxu0 %v2764
      %3490 = vmatprep.subr.mxu0 %v2773
      %3491 = vmatpush1.msra.mxu0 %v2772
      %3492 = vmatprep.subr.mxu0 %v2781
      %3493 = vmatpush1.msra.mxu0 %v2780
      %3494 = vmatprep.subr.mxu0 %v2789
      %3495 = vmatpush1.msra.mxu0 %v2788
      %3496 = vmatprep.subr.mxu0 %v2797
      %3497 = vmatpush1.msra.mxu0 %v2796
      %3498 = vmatprep.subr.mxu0 %v2805
      %3499 = vmatpush1.msra.mxu0 %v2804
      %3500 = vmatprep.subr.mxu0 %v2813
      %3501 = vmatpush1.msra.mxu0 %v2812
      %3502 = vmatprep.subr.mxu0 %v2821
      %3503 = vmatpush1.msra.mxu0 %v2820
      %3504 = vmatprep.subr.mxu0 %v2829
      %3505 = vmatpush1.msra.mxu0 %v2828
      %3506 = vmatprep.subr.mxu0 %v2837
      %3507 = vmatpush1.msra.mxu0 %v2836
      %3508 = vmatprep.subr.mxu0 %v2845
      %3509 = vmatpush1.msra.mxu0 %v2844
      %3510 = vmatprep.subr.mxu0 %v2853
      %3511 = vmatpush1.msra.mxu0 %v2852
      %3512 = vmatprep.subr.mxu0 %v2861
      %3513 = vmatpush1.msra.mxu0 %v2860
      %3514 = vmatprep.mubr.f32.mxu0 %v3433
      %3515 = vmatmul.mubr.f32.gmra.mrb[0].mxu0 %v3432
      %v3516 = vpop.f32.mrb[0].mxu0
      %v3517 = vadd.f32 0.0, %v3516
      %v3518 = vpop.f32.mrb[0].mxu0
      %v3519 = vadd.f32 0.0, %v3518
      %3520 = vdwg.mxu0
      %3521 = vmatprep.subr.mxu0 %v2615
      %3522 = vmatpush1.msra.mxu0 %v2614
      %3523 = vmatprep.subr.mxu0 %v2623
      %3524 = vmatpush1.msra.mxu0 %v2622
      %3525 = vmatprep.subr.mxu0 %v2631
      %3526 = vmatpush1.msra.mxu0 %v2630
      %3527 = vmatprep.subr.mxu0 %v2639
      %3528 = vmatpush1.msra.mxu0 %v2638
      %3529 = vmatprep.subr.mxu0 %v2647
      %3530 = vmatpush1.msra.mxu0 %v2646
      %3531 = vmatprep.subr.mxu0 %v2655
      %3532 = vmatpush1.msra.mxu0 %v2654
      %3533 = vmatprep.subr.mxu0 %v2663
      %3534 = vmatpush1.msra.mxu0 %v2662
      %3535 = vmatprep.subr.mxu0 %v2671
      %3536 = vmatpush1.msra.mxu0 %v2670
      %3537 = vmatprep.subr.mxu0 %v2679
      %3538 = vmatpush1.msra.mxu0 %v2678
      %3539 = vmatprep.subr.mxu0 %v2687
      %3540 = vmatpush1.msra.mxu0 %v2686
      %3541 = vmatprep.subr.mxu0 %v2695
      %3542 = vmatpush1.msra.mxu0 %v2694
      %3543 = vmatprep.subr.mxu0 %v2703
      %3544 = vmatpush1.msra.mxu0 %v2702
      %3545 = vmatprep.subr.mxu0 %v2711
      %3546 = vmatpush1.msra.mxu0 %v2710
      %3547 = vmatprep.subr.mxu0 %v2719
      %3548 = vmatpush1.msra.mxu0 %v2718
      %3549 = vmatprep.subr.mxu0 %v2727
      %3550 = vmatpush1.msra.mxu0 %v2726
      %3551 = vmatprep.subr.mxu0 %v2735
      %3552 = vmatpush1.msra.mxu0 %v2734
      %3553 = vmatprep.subr.mxu0 %v2743
      %3554 = vmatpush1.msra.mxu0 %v2742
      %3555 = vmatprep.subr.mxu0 %v2751
      %3556 = vmatpush1.msra.mxu0 %v2750
      %3557 = vmatprep.subr.mxu0 %v2759
      %3558 = vmatpush1.msra.mxu0 %v2758
      %3559 = vmatprep.subr.mxu0 %v2767
      %3560 = vmatpush1.msra.mxu0 %v2766
      %3561 = vmatprep.subr.mxu0 %v2775
      %3562 = vmatpush1.msra.mxu0 %v2774
      %3563 = vmatprep.subr.mxu0 %v2783
      %3564 = vmatpush1.msra.mxu0 %v2782
      %3565 = vmatprep.subr.mxu0 %v2791
      %3566 = vmatpush1.msra.mxu0 %v2790
      %3567 = vmatprep.subr.mxu0 %v2799
      %3568 = vmatpush1.msra.mxu0 %v2798
      %3569 = vmatprep.subr.mxu0 %v2807
      %3570 = vmatpush1.msra.mxu0 %v2806
      %3571 = vmatprep.subr.mxu0 %v2815
      %3572 = vmatpush1.msra.mxu0 %v2814
      %3573 = vmatprep.subr.mxu0 %v2823
      %3574 = vmatpush1.msra.mxu0 %v2822
      %3575 = vmatprep.subr.mxu0 %v2831
      %3576 = vmatpush1.msra.mxu0 %v2830
      %3577 = vmatprep.subr.mxu0 %v2839
      %3578 = vmatpush1.msra.mxu0 %v2838
      %3579 = vmatprep.subr.mxu0 %v2847
      %3580 = vmatpush1.msra.mxu0 %v2846
      %3581 = vmatprep.subr.mxu0 %v2855
      %3582 = vmatpush1.msra.mxu0 %v2854
      %3583 = vmatprep.subr.mxu0 %v2863
      %3584 = vmatpush1.msra.mxu0 %v2862
      %3585 = vmatprep.mubr.f32.mxu0 %v3433
      %3586 = vmatmul.mubr.f32.gmra.mrb[0].mxu0 %v3432
      %v3587 = vpop.f32.mrb[0].mxu0
      %v3588 = vadd.f32 0.0, %v3587
      %v3589 = vpop.f32.mrb[0].mxu0
      %v3590 = vadd.f32 0.0, %v3589
      %3591 = vdwg.mxu0
      %3592 = vmatprep.subr.mxu0 %v2617
      %3593 = vmatpush1.msra.mxu0 %v2616
      %3594 = vmatprep.subr.mxu0 %v2625
      %3595 = vmatpush1.msra.mxu0 %v2624
      %3596 = vmatprep.subr.mxu0 %v2633
      %3597 = vmatpush1.msra.mxu0 %v2632
      %3598 = vmatprep.subr.mxu0 %v2641
      %3599 = vmatpush1.msra.mxu0 %v2640
      %3600 = vmatprep.subr.mxu0 %v2649
      %3601 = vmatpush1.msra.mxu0 %v2648
      %3602 = vmatprep.subr.mxu0 %v2657
      %3603 = vmatpush1.msra.mxu0 %v2656
      %3604 = vmatprep.subr.mxu0 %v2665
      %3605 = vmatpush1.msra.mxu0 %v2664
      %3606 = vmatprep.subr.mxu0 %v2673
      %3607 = vmatpush1.msra.mxu0 %v2672
      %3608 = vmatprep.subr.mxu0 %v2681
      %3609 = vmatpush1.msra.mxu0 %v2680
      %3610 = vmatprep.subr.mxu0 %v2689
      %3611 = vmatpush1.msra.mxu0 %v2688
      %3612 = vmatprep.subr.mxu0 %v2697
      %3613 = vmatpush1.msra.mxu0 %v2696
      %3614 = vmatprep.subr.mxu0 %v2705
      %3615 = vmatpush1.msra.mxu0 %v2704
      %3616 = vmatprep.subr.mxu0 %v2713
      %3617 = vmatpush1.msra.mxu0 %v2712
      %3618 = vmatprep.subr.mxu0 %v2721
      %3619 = vmatpush1.msra.mxu0 %v2720
      %3620 = vmatprep.subr.mxu0 %v2729
      %3621 = vmatpush1.msra.mxu0 %v2728
      %3622 = vmatprep.subr.mxu0 %v2737
      %3623 = vmatpush1.msra.mxu0 %v2736
      %3624 = vmatprep.subr.mxu0 %v2745
      %3625 = vmatpush1.msra.mxu0 %v2744
      %3626 = vmatprep.subr.mxu0 %v2753
      %3627 = vmatpush1.msra.mxu0 %v2752
      %3628 = vmatprep.subr.mxu0 %v2761
      %3629 = vmatpush1.msra.mxu0 %v2760
      %3630 = vmatprep.subr.mxu0 %v2769
      %3631 = vmatpush1.msra.mxu0 %v2768
      %3632 = vmatprep.subr.mxu0 %v2777
      %3633 = vmatpush1.msra.mxu0 %v2776
      %3634 = vmatprep.subr.mxu0 %v2785
      %3635 = vmatpush1.msra.mxu0 %v2784
      %3636 = vmatprep.subr.mxu0 %v2793
      %3637 = vmatpush1.msra.mxu0 %v2792
      %3638 = vmatprep.subr.mxu0 %v2801
      %3639 = vmatpush1.msra.mxu0 %v2800
      %3640 = vmatprep.subr.mxu0 %v2809
      %3641 = vmatpush1.msra.mxu0 %v2808
      %3642 = vmatprep.subr.mxu0 %v2817
      %3643 = vmatpush1.msra.mxu0 %v2816
      %3644 = vmatprep.subr.mxu0 %v2825
      %3645 = vmatpush1.msra.mxu0 %v2824
      %3646 = vmatprep.subr.mxu0 %v2833
      %3647 = vmatpush1.msra.mxu0 %v2832
      %3648 = vmatprep.subr.mxu0 %v2841
      %3649 = vmatpush1.msra.mxu0 %v2840
      %3650 = vmatprep.subr.mxu0 %v2849
      %3651 = vmatpush1.msra.mxu0 %v2848
      %3652 = vmatprep.subr.mxu0 %v2857
      %3653 = vmatpush1.msra.mxu0 %v2856
      %3654 = vmatprep.subr.mxu0 %v2865
      %3655 = vmatpush1.msra.mxu0 %v2864
      %3656 = vmatprep.mubr.f32.mxu0 %v3433
      %3657 = vmatmul.mubr.f32.gmra.mrb[0].mxu0 %v3432
      %v3658 = vpop.f32.mrb[0].mxu0
      %v3659 = vadd.f32 0.0, %v3658
      %v3660 = vpop.f32.mrb[0].mxu0
      %v3661 = vadd.f32 0.0, %v3660
      %3662 = vdwg.mxu0
      %3663 = vmatprep.subr.mxu0 %v2619
      %3664 = vmatpush1.msra.mxu0 %v2618
      %3665 = vmatprep.subr.mxu0 %v2627
      %3666 = vmatpush1.msra.mxu0 %v2626
      %3667 = vmatprep.subr.mxu0 %v2635
      %3668 = vmatpush1.msra.mxu0 %v2634
      %3669 = vmatprep.subr.mxu0 %v2643
      %3670 = vmatpush1.msra.mxu0 %v2642
      %3671 = vmatprep.subr.mxu0 %v2651
      %3672 = vmatpush1.msra.mxu0 %v2650
      %3673 = vmatprep.subr.mxu0 %v2659
      %3674 = vmatpush1.msra.mxu0 %v2658
      %3675 = vmatprep.subr.mxu0 %v2667
      %3676 = vmatpush1.msra.mxu0 %v2666
      %3677 = vmatprep.subr.mxu0 %v2675
      %3678 = vmatpush1.msra.mxu0 %v2674
      %3679 = vmatprep.subr.mxu0 %v2683
      %3680 = vmatpush1.msra.mxu0 %v2682
      %3681 = vmatprep.subr.mxu0 %v2691
      %3682 = vmatpush1.msra.mxu0 %v2690
      %3683 = vmatprep.subr.mxu0 %v2699
      %3684 = vmatpush1.msra.mxu0 %v2698
      %3685 = vmatprep.subr.mxu0 %v2707
      %3686 = vmatpush1.msra.mxu0 %v2706
      %3687 = vmatprep.subr.mxu0 %v2715
      %3688 = vmatpush1.msra.mxu0 %v2714
      %3689 = vmatprep.subr.mxu0 %v2723
      %3690 = vmatpush1.msra.mxu0 %v2722
      %3691 = vmatprep.subr.mxu0 %v2731
      %3692 = vmatpush1.msra.mxu0 %v2730
      %3693 = vmatprep.subr.mxu0 %v2739
      %3694 = vmatpush1.msra.mxu0 %v2738
      %3695 = vmatprep.subr.mxu0 %v2747
      %3696 = vmatpush1.msra.mxu0 %v2746
      %3697 = vmatprep.subr.mxu0 %v2755
      %3698 = vmatpush1.msra.mxu0 %v2754
      %3699 = vmatprep.subr.mxu0 %v2763
      %3700 = vmatpush1.msra.mxu0 %v2762
      %3701 = vmatprep.subr.mxu0 %v2771
      %3702 = vmatpush1.msra.mxu0 %v2770
      %3703 = vmatprep.subr.mxu0 %v2779
      %3704 = vmatpush1.msra.mxu0 %v2778
      %3705 = vmatprep.subr.mxu0 %v2787
      %3706 = vmatpush1.msra.mxu0 %v2786
      %3707 = vmatprep.subr.mxu0 %v2795
      %3708 = vmatpush1.msra.mxu0 %v2794
      %3709 = vmatprep.subr.mxu0 %v2803
      %3710 = vmatpush1.msra.mxu0 %v2802
      %3711 = vmatprep.subr.mxu0 %v2811
      %3712 = vmatpush1.msra.mxu0 %v2810
      %3713 = vmatprep.subr.mxu0 %v2819
      %3714 = vmatpush1.msra.mxu0 %v2818
      %3715 = vmatprep.subr.mxu0 %v2827
      %3716 = vmatpush1.msra.mxu0 %v2826
      %3717 = vmatprep.subr.mxu0 %v2835
      %3718 = vmatpush1.msra.mxu0 %v2834
      %3719 = vmatprep.subr.mxu0 %v2843
      %3720 = vmatpush1.msra.mxu0 %v2842
      %3721 = vmatprep.subr.mxu0 %v2851
      %3722 = vmatpush1.msra.mxu0 %v2850
      %3723 = vmatprep.subr.mxu0 %v2859
      %3724 = vmatpush1.msra.mxu0 %v2858
      %3725 = vmatprep.subr.mxu0 %v2867
      %3726 = vmatpush1.msra.mxu0 %v2866
      %3727 = vmatprep.mubr.f32.mxu0 %v3433
      %3728 = vmatmul.mubr.f32.gmra.mrb[0].mxu0 %v3432
      %v3729 = vpop.f32.mrb[0].mxu0
      %v3730 = vadd.f32 0.0, %v3729
      %v3731 = vpop.f32.mrb[0].mxu0
      %v3732 = vadd.f32 0.0, %v3731
      %3733 = vdwg.mxu0
      %v3734 = vadd.f32 %v3442, %v3517
      %v3735 = vadd.f32 %v3443, %v3519
      %v3736 = vadd.f32 %v3444, %v3588
      %v3737 = vadd.f32 %v3445, %v3590
      %v3738 = vadd.f32 %v3446, %v3659
      %v3739 = vadd.f32 %v3447, %v3661
      %v3740 = vadd.f32 %v3448, %v3730
      %v3741 = vadd.f32 %v3449, %v3732
      %v3742 = vxor.u32 %v3734, 2147483648
      %v3743 = vxor.u32 %v3735, 2147483648
      %v3744 = vmul.f32 %v3742, 1.442695
      %v3745 = vpow.pop %v3744
      %v3746 = vmul.f32 %v3743, 1.442695
      %v3747 = vpow.pop %v3746
      %v3748 = vadd.f32 %v3745, 1.0
      %v3749 = vadd.f32 %v3747, 1.0
      %v3750 = vrcp.pop %v3748
      %v3751 = vmul.f32 1.0, %v3750
      %v3752 = vrcp.pop %v3749
      %v3753 = vmul.f32 1.0, %v3752
      %v3754 = vxor.u32 %v3736, 2147483648
      %v3755 = vxor.u32 %v3737, 2147483648
      %v3756 = vmul.f32 %v3754, 1.442695
      %v3757 = vpow.pop %v3756
      %v3758 = vmul.f32 %v3755, 1.442695
      %v3759 = vpow.pop %v3758
      %v3760 = vadd.f32 %v3757, 1.0
      %v3761 = vadd.f32 %v3759, 1.0
      %v3762 = vrcp.pop %v3760
      %v3763 = vmul.f32 1.0, %v3762
      %v3764 = vrcp.pop %v3761
      %v3765 = vmul.f32 1.0, %v3764
      %v3766 = vtanh.pop %v3738
      %v3767 = vtanh.pop %v3739
      %v3768 = vxor.u32 %v3740, 2147483648
      %v3769 = vxor.u32 %v3741, 2147483648
      %v3770 = vmul.f32 %v3768, 1.442695
      %v3771 = vpow.pop %v3770
      %v3772 = vmul.f32 %v3769, 1.442695
      %v3773 = vpow.pop %v3772
      %v3774 = vadd.f32 %v3771, 1.0
      %v3775 = vadd.f32 %v3773, 1.0
      %v3776 = vrcp.pop %v3774
      %v3777 = vmul.f32 1.0, %v3776
      %v3778 = vrcp.pop %v3775
      %v3779 = vmul.f32 1.0, %v3778
      %v3780 = vmul.f32 %v3763, %v3434
      %v3781 = vmul.f32 %v3765, %v3435
      %v3782 = vmul.f32 %v3751, %v3766
      %v3783 = vmul.f32 %v3753, %v3767
      %v3784 = vadd.f32 %v3780, %v3782
      %v3785 = vadd.f32 %v3781, %v3783
      %v3786 = vtanh.pop %v3784
      %v3787 = vtanh.pop %v3785
      %v3788 = vmul.f32 %v3777, %v3786
      %v3789 = vmul.f32 %v3779, %v3787
      %s3790 = smul.u32 %s3437, 2
      %s3791 = smul.addr %s3790, 8
      %s3792 = scalar_lea.vmem [#allocation4], %s3791
      %3793 = vst [vmem:[%s3792] sm:$0xff] %v3788
      %3794 = vst [vmem:[%s3792 + $0x8] sm:$0xff] %v3789
    $region125: #{cnn_lstm_forward.1} parent=1 // loop_footer
      %s3431 = sadd.s32 1, %s3427
    $region126: #{cnn_lstm_forward.1} parent=1 // loop_footer_branch
      %3426 = sbr.rel target = $region122
    $region127: #{cnn_lstm_forward.1} parent=1 // loop_exit
      _
    %v3795 = vld [vmem:[#allocation4] sm:$0xff]
    %v3796 = vld [vmem:[#allocation4 + $0x8] sm:$0xff]
    %v3797 = vld [vmem:[#allocation4 + $0x10] sm:$0xff]
    %v3798 = vld [vmem:[#allocation4 + $0x18] sm:$0xff]
    %v3799 = vld [vmem:[#allocation4 + $0x20] sm:$0xff]
    %v3800 = vld [vmem:[#allocation4 + $0x28] sm:$0xff]
    %v3801 = vld [vmem:[#allocation4 + $0x30] sm:$0xff]
    %v3802 = vld [vmem:[#allocation4 + $0x38] sm:$0xff]
    %v3803 = vld [vmem:[#allocation4 + $0x40] sm:$0xff]
    %v3804 = vld [vmem:[#allocation4 + $0x48] sm:$0xff]
    %v3805 = vld [vmem:[#allocation4 + $0x50] sm:$0xff]
    %v3806 = vld [vmem:[#allocation4 + $0x58] sm:$0xff]
    %v3807 = vld [vmem:[#allocation4 + $0x60] sm:$0xff]
    %v3808 = vld [vmem:[#allocation4 + $0x68] sm:$0xff]
    %v3809 = vld [vmem:[#allocation4 + $0x70] sm:$0xff]
    %v3810 = vld [vmem:[#allocation4 + $0x78] sm:$0xff]
    %v3811 = vld [vmem:[#allocation14] sm:$0xff]
    %v3812 = vld [vmem:[#allocation14 + $0x8] sm:$0xff]
    %v3813 = vld [vmem:[#allocation14 + $0x10] sm:$0xff]
    %v3814 = vld [vmem:[#allocation14 + $0x18] sm:$0xff]
    %v3815 = vld [vmem:[#allocation14 + $0x20] sm:$0xff]
    %v3816 = vld [vmem:[#allocation14 + $0x28] sm:$0xff]
    %v3817 = vld [vmem:[#allocation14 + $0x30] sm:$0xff]
    %v3818 = vld [vmem:[#allocation14 + $0x38] sm:$0xff]
    %v3819 = vld [vmem:[#allocation14 + $0x40] sm:$0xff]
    %v3820 = vld [vmem:[#allocation14 + $0x48] sm:$0xff]
    %v3821 = vld [vmem:[#allocation14 + $0x50] sm:$0xff]
    %v3822 = vld [vmem:[#allocation14 + $0x58] sm:$0xff]
    %v3823 = vld [vmem:[#allocation14 + $0x60] sm:$0xff]
    %v3824 = vld [vmem:[#allocation14 + $0x68] sm:$0xff]
    %v3825 = vld [vmem:[#allocation14 + $0x70] sm:$0xff]
    %v3826 = vld [vmem:[#allocation14 + $0x78] sm:$0xff]
    %v3827 = vld [vmem:[#allocation14 + $0x80] sm:$0xff]
    %v3828 = vld [vmem:[#allocation14 + $0x88] sm:$0xff]
    %v3829 = vld [vmem:[#allocation14 + $0x90] sm:$0xff]
    %v3830 = vld [vmem:[#allocation14 + $0x98] sm:$0xff]
    %v3831 = vld [vmem:[#allocation14 + $0xa0] sm:$0xff]
    %v3832 = vld [vmem:[#allocation14 + $0xa8] sm:$0xff]
    %v3833 = vld [vmem:[#allocation14 + $0xb0] sm:$0xff]
    %v3834 = vld [vmem:[#allocation14 + $0xb8] sm:$0xff]
    %v3835 = vld [vmem:[#allocation14 + $0xc0] sm:$0xff]
    %v3836 = vld [vmem:[#allocation14 + $0xc8] sm:$0xff]
    %v3837 = vld [vmem:[#allocation14 + $0xd0] sm:$0xff]
    %v3838 = vld [vmem:[#allocation14 + $0xd8] sm:$0xff]
    %v3839 = vld [vmem:[#allocation14 + $0xe0] sm:$0xff]
    %v3840 = vld [vmem:[#allocation14 + $0xe8] sm:$0xff]
    %v3841 = vld [vmem:[#allocation14 + $0xf0] sm:$0xff]
    %v3842 = vld [vmem:[#allocation14 + $0xf8] sm:$0xff]
    %v3843 = vld [vmem:[#allocation14 + $0x100] sm:$0xff]
    %v3844 = vld [vmem:[#allocation14 + $0x108] sm:$0xff]
    %v3845 = vld [vmem:[#allocation14 + $0x110] sm:$0xff]
    %v3846 = vld [vmem:[#allocation14 + $0x118] sm:$0xff]
    %v3847 = vld [vmem:[#allocation14 + $0x120] sm:$0xff]
    %v3848 = vld [vmem:[#allocation14 + $0x128] sm:$0xff]
    %v3849 = vld [vmem:[#allocation14 + $0x130] sm:$0xff]
    %v3850 = vld [vmem:[#allocation14 + $0x138] sm:$0xff]
    %v3851 = vld [vmem:[#allocation14 + $0x140] sm:$0xff]
    %v3852 = vld [vmem:[#allocation14 + $0x148] sm:$0xff]
    %v3853 = vld [vmem:[#allocation14 + $0x150] sm:$0xff]
    %v3854 = vld [vmem:[#allocation14 + $0x158] sm:$0xff]
    %v3855 = vld [vmem:[#allocation14 + $0x160] sm:$0xff]
    %v3856 = vld [vmem:[#allocation14 + $0x168] sm:$0xff]
    %v3857 = vld [vmem:[#allocation14 + $0x170] sm:$0xff]
    %v3858 = vld [vmem:[#allocation14 + $0x178] sm:$0xff]
    %v3859 = vld [vmem:[#allocation14 + $0x180] sm:$0xff]
    %v3860 = vld [vmem:[#allocation14 + $0x188] sm:$0xff]
    %v3861 = vld [vmem:[#allocation14 + $0x190] sm:$0xff]
    %v3862 = vld [vmem:[#allocation14 + $0x198] sm:$0xff]
    %v3863 = vld [vmem:[#allocation14 + $0x1a0] sm:$0xff]
    %v3864 = vld [vmem:[#allocation14 + $0x1a8] sm:$0xff]
    %v3865 = vld [vmem:[#allocation14 + $0x1b0] sm:$0xff]
    %v3866 = vld [vmem:[#allocation14 + $0x1b8] sm:$0xff]
    %v3867 = vld [vmem:[#allocation14 + $0x1c0] sm:$0xff]
    %v3868 = vld [vmem:[#allocation14 + $0x1c8] sm:$0xff]
    %v3869 = vld [vmem:[#allocation14 + $0x1d0] sm:$0xff]
    %v3870 = vld [vmem:[#allocation14 + $0x1d8] sm:$0xff]
    %v3871 = vld [vmem:[#allocation14 + $0x1e0] sm:$0xff]
    %v3872 = vld [vmem:[#allocation14 + $0x1e8] sm:$0xff]
    %v3873 = vld [vmem:[#allocation14 + $0x1f0] sm:$0xff]
    %v3874 = vld [vmem:[#allocation14 + $0x1f8] sm:$0xff]
    %v3875 = vld [vmem:[#allocation14 + $0x200] sm:$0xff]
    %v3876 = vld [vmem:[#allocation14 + $0x208] sm:$0xff]
    %v3877 = vld [vmem:[#allocation14 + $0x210] sm:$0xff]
    %v3878 = vld [vmem:[#allocation14 + $0x218] sm:$0xff]
    %v3879 = vld [vmem:[#allocation14 + $0x220] sm:$0xff]
    %v3880 = vld [vmem:[#allocation14 + $0x228] sm:$0xff]
    %v3881 = vld [vmem:[#allocation14 + $0x230] sm:$0xff]
    %v3882 = vld [vmem:[#allocation14 + $0x238] sm:$0xff]
    %v3883 = vld [vmem:[#allocation14 + $0x240] sm:$0xff]
    %v3884 = vld [vmem:[#allocation14 + $0x248] sm:$0xff]
    %v3885 = vld [vmem:[#allocation14 + $0x250] sm:$0xff]
    %v3886 = vld [vmem:[#allocation14 + $0x258] sm:$0xff]
    %v3887 = vld [vmem:[#allocation14 + $0x260] sm:$0xff]
    %v3888 = vld [vmem:[#allocation14 + $0x268] sm:$0xff]
    %v3889 = vld [vmem:[#allocation14 + $0x270] sm:$0xff]
    %v3890 = vld [vmem:[#allocation14 + $0x278] sm:$0xff]
    %v3891 = vld [vmem:[#allocation14 + $0x280] sm:$0xff]
    %v3892 = vld [vmem:[#allocation14 + $0x288] sm:$0xff]
    %v3893 = vld [vmem:[#allocation14 + $0x290] sm:$0xff]
    %v3894 = vld [vmem:[#allocation14 + $0x298] sm:$0xff]
    %v3895 = vld [vmem:[#allocation14 + $0x2a0] sm:$0xff]
    %v3896 = vld [vmem:[#allocation14 + $0x2a8] sm:$0xff]
    %v3897 = vld [vmem:[#allocation14 + $0x2b0] sm:$0xff]
    %v3898 = vld [vmem:[#allocation14 + $0x2b8] sm:$0xff]
    %v3899 = vld [vmem:[#allocation14 + $0x2c0] sm:$0xff]
    %v3900 = vld [vmem:[#allocation14 + $0x2c8] sm:$0xff]
    %v3901 = vld [vmem:[#allocation14 + $0x2d0] sm:$0xff]
    %v3902 = vld [vmem:[#allocation14 + $0x2d8] sm:$0xff]
    %v3903 = vld [vmem:[#allocation14 + $0x2e0] sm:$0xff]
    %v3904 = vld [vmem:[#allocation14 + $0x2e8] sm:$0xff]
    %v3905 = vld [vmem:[#allocation14 + $0x2f0] sm:$0xff]
    %v3906 = vld [vmem:[#allocation14 + $0x2f8] sm:$0xff]
    %v3907 = vld [vmem:[#allocation14 + $0x300] sm:$0xff]
    %v3908 = vld [vmem:[#allocation14 + $0x308] sm:$0xff]
    %v3909 = vld [vmem:[#allocation14 + $0x310] sm:$0xff]
    %v3910 = vld [vmem:[#allocation14 + $0x318] sm:$0xff]
    %v3911 = vld [vmem:[#allocation14 + $0x320] sm:$0xff]
    %v3912 = vld [vmem:[#allocation14 + $0x328] sm:$0xff]
    %v3913 = vld [vmem:[#allocation14 + $0x330] sm:$0xff]
    %v3914 = vld [vmem:[#allocation14 + $0x338] sm:$0xff]
    %v3915 = vld [vmem:[#allocation14 + $0x340] sm:$0xff]
    %v3916 = vld [vmem:[#allocation14 + $0x348] sm:$0xff]
    %v3917 = vld [vmem:[#allocation14 + $0x350] sm:$0xff]
    %v3918 = vld [vmem:[#allocation14 + $0x358] sm:$0xff]
    %v3919 = vld [vmem:[#allocation14 + $0x360] sm:$0xff]
    %v3920 = vld [vmem:[#allocation14 + $0x368] sm:$0xff]
    %v3921 = vld [vmem:[#allocation14 + $0x370] sm:$0xff]
    %v3922 = vld [vmem:[#allocation14 + $0x378] sm:$0xff]
    %v3923 = vld [vmem:[#allocation14 + $0x380] sm:$0xff]
    %v3924 = vld [vmem:[#allocation14 + $0x388] sm:$0xff]
    %v3925 = vld [vmem:[#allocation14 + $0x390] sm:$0xff]
    %v3926 = vld [vmem:[#allocation14 + $0x398] sm:$0xff]
    %v3927 = vld [vmem:[#allocation14 + $0x3a0] sm:$0xff]
    %v3928 = vld [vmem:[#allocation14 + $0x3a8] sm:$0xff]
    %v3929 = vld [vmem:[#allocation14 + $0x3b0] sm:$0xff]
    %v3930 = vld [vmem:[#allocation14 + $0x3b8] sm:$0xff]
    %v3931 = vld [vmem:[#allocation14 + $0x3c0] sm:$0xff]
    %v3932 = vld [vmem:[#allocation14 + $0x3c8] sm:$0xff]
    %v3933 = vld [vmem:[#allocation14 + $0x3d0] sm:$0xff]
    %v3934 = vld [vmem:[#allocation14 + $0x3d8] sm:$0xff]
    %v3935 = vld [vmem:[#allocation14 + $0x3e0] sm:$0xff]
    %v3936 = vld [vmem:[#allocation14 + $0x3e8] sm:$0xff]
    %v3937 = vld [vmem:[#allocation14 + $0x3f0] sm:$0xff]
    %v3938 = vld [vmem:[#allocation14 + $0x3f8] sm:$0xff]
    %v3939 = vld [vmem:[#allocation14 + $0x400] sm:$0xff]
    %v3940 = vld [vmem:[#allocation14 + $0x408] sm:$0xff]
    %v3941 = vld [vmem:[#allocation14 + $0x410] sm:$0xff]
    %v3942 = vld [vmem:[#allocation14 + $0x418] sm:$0xff]
    %v3943 = vld [vmem:[#allocation14 + $0x420] sm:$0xff]
    %v3944 = vld [vmem:[#allocation14 + $0x428] sm:$0xff]
    %v3945 = vld [vmem:[#allocation14 + $0x430] sm:$0xff]
    %v3946 = vld [vmem:[#allocation14 + $0x438] sm:$0xff]
    %v3947 = vld [vmem:[#allocation14 + $0x440] sm:$0xff]
    %v3948 = vld [vmem:[#allocation14 + $0x448] sm:$0xff]
    %v3949 = vld [vmem:[#allocation14 + $0x450] sm:$0xff]
    %v3950 = vld [vmem:[#allocation14 + $0x458] sm:$0xff]
    %v3951 = vld [vmem:[#allocation14 + $0x460] sm:$0xff]
    %v3952 = vld [vmem:[#allocation14 + $0x468] sm:$0xff]
    %v3953 = vld [vmem:[#allocation14 + $0x470] sm:$0xff]
    %v3954 = vld [vmem:[#allocation14 + $0x478] sm:$0xff]
    %v3955 = vld [vmem:[#allocation14 + $0x480] sm:$0xff]
    %v3956 = vld [vmem:[#allocation14 + $0x488] sm:$0xff]
    %v3957 = vld [vmem:[#allocation14 + $0x490] sm:$0xff]
    %v3958 = vld [vmem:[#allocation14 + $0x498] sm:$0xff]
    %v3959 = vld [vmem:[#allocation14 + $0x4a0] sm:$0xff]
    %v3960 = vld [vmem:[#allocation14 + $0x4a8] sm:$0xff]
    %v3961 = vld [vmem:[#allocation14 + $0x4b0] sm:$0xff]
    %v3962 = vld [vmem:[#allocation14 + $0x4b8] sm:$0xff]
    %v3963 = vld [vmem:[#allocation14 + $0x4c0] sm:$0xff]
    %v3964 = vld [vmem:[#allocation14 + $0x4c8] sm:$0xff]
    %v3965 = vld [vmem:[#allocation14 + $0x4d0] sm:$0xff]
    %v3966 = vld [vmem:[#allocation14 + $0x4d8] sm:$0xff]
    %v3967 = vld [vmem:[#allocation14 + $0x4e0] sm:$0xff]
    %v3968 = vld [vmem:[#allocation14 + $0x4e8] sm:$0xff]
    %v3969 = vld [vmem:[#allocation14 + $0x4f0] sm:$0xff]
    %v3970 = vld [vmem:[#allocation14 + $0x4f8] sm:$0xff]
    %v3971 = vld [vmem:[#allocation14 + $0x500] sm:$0xff]
    %v3972 = vld [vmem:[#allocation14 + $0x508] sm:$0xff]
    %v3973 = vld [vmem:[#allocation14 + $0x510] sm:$0xff]
    %v3974 = vld [vmem:[#allocation14 + $0x518] sm:$0xff]
    %v3975 = vld [vmem:[#allocation14 + $0x520] sm:$0xff]
    %v3976 = vld [vmem:[#allocation14 + $0x528] sm:$0xff]
    %v3977 = vld [vmem:[#allocation14 + $0x530] sm:$0xff]
    %v3978 = vld [vmem:[#allocation14 + $0x538] sm:$0xff]
    %v3979 = vld [vmem:[#allocation14 + $0x540] sm:$0xff]
    %v3980 = vld [vmem:[#allocation14 + $0x548] sm:$0xff]
    %v3981 = vld [vmem:[#allocation14 + $0x550] sm:$0xff]
    %v3982 = vld [vmem:[#allocation14 + $0x558] sm:$0xff]
    %v3983 = vld [vmem:[#allocation14 + $0x560] sm:$0xff]
    %v3984 = vld [vmem:[#allocation14 + $0x568] sm:$0xff]
    %v3985 = vld [vmem:[#allocation14 + $0x570] sm:$0xff]
    %v3986 = vld [vmem:[#allocation14 + $0x578] sm:$0xff]
    %v3987 = vld [vmem:[#allocation14 + $0x580] sm:$0xff]
    %v3988 = vld [vmem:[#allocation14 + $0x588] sm:$0xff]
    %v3989 = vld [vmem:[#allocation14 + $0x590] sm:$0xff]
    %v3990 = vld [vmem:[#allocation14 + $0x598] sm:$0xff]
    %v3991 = vld [vmem:[#allocation14 + $0x5a0] sm:$0xff]
    %v3992 = vld [vmem:[#allocation14 + $0x5a8] sm:$0xff]
    %v3993 = vld [vmem:[#allocation14 + $0x5b0] sm:$0xff]
    %v3994 = vld [vmem:[#allocation14 + $0x5b8] sm:$0xff]
    %v3995 = vld [vmem:[#allocation14 + $0x5c0] sm:$0xff]
    %v3996 = vld [vmem:[#allocation14 + $0x5c8] sm:$0xff]
    %v3997 = vld [vmem:[#allocation14 + $0x5d0] sm:$0xff]
    %v3998 = vld [vmem:[#allocation14 + $0x5d8] sm:$0xff]
    %v3999 = vld [vmem:[#allocation14 + $0x5e0] sm:$0xff]
    %v4000 = vld [vmem:[#allocation14 + $0x5e8] sm:$0xff]
    %v4001 = vld [vmem:[#allocation14 + $0x5f0] sm:$0xff]
    %v4002 = vld [vmem:[#allocation14 + $0x5f8] sm:$0xff]
    %v4003 = vld [vmem:[#allocation14 + $0x600] sm:$0xff]
    %v4004 = vld [vmem:[#allocation14 + $0x608] sm:$0xff]
    %v4005 = vld [vmem:[#allocation14 + $0x610] sm:$0xff]
    %v4006 = vld [vmem:[#allocation14 + $0x618] sm:$0xff]
    %v4007 = vld [vmem:[#allocation14 + $0x620] sm:$0xff]
    %v4008 = vld [vmem:[#allocation14 + $0x628] sm:$0xff]
    %v4009 = vld [vmem:[#allocation14 + $0x630] sm:$0xff]
    %v4010 = vld [vmem:[#allocation14 + $0x638] sm:$0xff]
    %v4011 = vld [vmem:[#allocation14 + $0x640] sm:$0xff]
    %v4012 = vld [vmem:[#allocation14 + $0x648] sm:$0xff]
    %v4013 = vld [vmem:[#allocation14 + $0x650] sm:$0xff]
    %v4014 = vld [vmem:[#allocation14 + $0x658] sm:$0xff]
    %v4015 = vld [vmem:[#allocation14 + $0x660] sm:$0xff]
    %v4016 = vld [vmem:[#allocation14 + $0x668] sm:$0xff]
    %v4017 = vld [vmem:[#allocation14 + $0x670] sm:$0xff]
    %v4018 = vld [vmem:[#allocation14 + $0x678] sm:$0xff]
    %v4019 = vld [vmem:[#allocation14 + $0x680] sm:$0xff]
    %v4020 = vld [vmem:[#allocation14 + $0x688] sm:$0xff]
    %v4021 = vld [vmem:[#allocation14 + $0x690] sm:$0xff]
    %v4022 = vld [vmem:[#allocation14 + $0x698] sm:$0xff]
    %v4023 = vld [vmem:[#allocation14 + $0x6a0] sm:$0xff]
    %v4024 = vld [vmem:[#allocation14 + $0x6a8] sm:$0xff]
    %v4025 = vld [vmem:[#allocation14 + $0x6b0] sm:$0xff]
    %v4026 = vld [vmem:[#allocation14 + $0x6b8] sm:$0xff]
    %v4027 = vld [vmem:[#allocation14 + $0x6c0] sm:$0xff]
    %v4028 = vld [vmem:[#allocation14 + $0x6c8] sm:$0xff]
    %v4029 = vld [vmem:[#allocation14 + $0x6d0] sm:$0xff]
    %v4030 = vld [vmem:[#allocation14 + $0x6d8] sm:$0xff]
    %v4031 = vld [vmem:[#allocation14 + $0x6e0] sm:$0xff]
    %v4032 = vld [vmem:[#allocation14 + $0x6e8] sm:$0xff]
    %v4033 = vld [vmem:[#allocation14 + $0x6f0] sm:$0xff]
    %v4034 = vld [vmem:[#allocation14 + $0x6f8] sm:$0xff]
    %v4035 = vld [vmem:[#allocation14 + $0x700] sm:$0xff]
    %v4036 = vld [vmem:[#allocation14 + $0x708] sm:$0xff]
    %v4037 = vld [vmem:[#allocation14 + $0x710] sm:$0xff]
    %v4038 = vld [vmem:[#allocation14 + $0x718] sm:$0xff]
    %v4039 = vld [vmem:[#allocation14 + $0x720] sm:$0xff]
    %v4040 = vld [vmem:[#allocation14 + $0x728] sm:$0xff]
    %v4041 = vld [vmem:[#allocation14 + $0x730] sm:$0xff]
    %v4042 = vld [vmem:[#allocation14 + $0x738] sm:$0xff]
    %v4043 = vld [vmem:[#allocation14 + $0x740] sm:$0xff]
    %v4044 = vld [vmem:[#allocation14 + $0x748] sm:$0xff]
    %v4045 = vld [vmem:[#allocation14 + $0x750] sm:$0xff]
    %v4046 = vld [vmem:[#allocation14 + $0x758] sm:$0xff]
    %v4047 = vld [vmem:[#allocation14 + $0x760] sm:$0xff]
    %v4048 = vld [vmem:[#allocation14 + $0x768] sm:$0xff]
    %v4049 = vld [vmem:[#allocation14 + $0x770] sm:$0xff]
    %v4050 = vld [vmem:[#allocation14 + $0x778] sm:$0xff]
    %v4051 = vld [vmem:[#allocation14 + $0x780] sm:$0xff]
    %v4052 = vld [vmem:[#allocation14 + $0x788] sm:$0xff]
    %v4053 = vld [vmem:[#allocation14 + $0x790] sm:$0xff]
    %v4054 = vld [vmem:[#allocation14 + $0x798] sm:$0xff]
    %v4055 = vld [vmem:[#allocation14 + $0x7a0] sm:$0xff]
    %v4056 = vld [vmem:[#allocation14 + $0x7a8] sm:$0xff]
    %v4057 = vld [vmem:[#allocation14 + $0x7b0] sm:$0xff]
    %v4058 = vld [vmem:[#allocation14 + $0x7b8] sm:$0xff]
    %v4059 = vld [vmem:[#allocation14 + $0x7c0] sm:$0xff]
    %v4060 = vld [vmem:[#allocation14 + $0x7c8] sm:$0xff]
    %v4061 = vld [vmem:[#allocation14 + $0x7d0] sm:$0xff]
    %v4062 = vld [vmem:[#allocation14 + $0x7d8] sm:$0xff]
    %v4063 = vld [vmem:[#allocation14 + $0x7e0] sm:$0xff]
    %v4064 = vld [vmem:[#allocation14 + $0x7e8] sm:$0xff]
    %v4065 = vld [vmem:[#allocation14 + $0x7f0] sm:$0xff]
    %v4066 = vld [vmem:[#allocation14 + $0x7f8] sm:$0xff]
    %v4067 = vld [vmem:[#allocation16] sm:$0xff]
    %v4068 = vld [vmem:[#allocation16 + $0x8] sm:$0xff]
    %v4069 = vld [vmem:[#allocation16 + $0x10] sm:$0xff]
    %v4070 = vld [vmem:[#allocation16 + $0x18] sm:$0xff]
    %v4071 = vld [vmem:[#allocation16 + $0x20] sm:$0xff]
    %v4072 = vld [vmem:[#allocation16 + $0x28] sm:$0xff]
    %v4073 = vld [vmem:[#allocation16 + $0x30] sm:$0xff]
    %v4074 = vld [vmem:[#allocation16 + $0x38] sm:$0xff]
    %v4075 = vld [vmem:[#allocation16 + $0x40] sm:$0xff]
    %v4076 = vld [vmem:[#allocation16 + $0x48] sm:$0xff]
    %v4077 = vld [vmem:[#allocation16 + $0x50] sm:$0xff]
    %v4078 = vld [vmem:[#allocation16 + $0x58] sm:$0xff]
    %v4079 = vld [vmem:[#allocation16 + $0x60] sm:$0xff]
    %v4080 = vld [vmem:[#allocation16 + $0x68] sm:$0xff]
    %v4081 = vld [vmem:[#allocation16 + $0x70] sm:$0xff]
    %v4082 = vld [vmem:[#allocation16 + $0x78] sm:$0xff]
    %v4083 = vld [vmem:[#allocation16 + $0x80] sm:$0xff]
    %v4084 = vld [vmem:[#allocation16 + $0x88] sm:$0xff]
    %v4085 = vld [vmem:[#allocation16 + $0x90] sm:$0xff]
    %v4086 = vld [vmem:[#allocation16 + $0x98] sm:$0xff]
    %v4087 = vld [vmem:[#allocation16 + $0xa0] sm:$0xff]
    %v4088 = vld [vmem:[#allocation16 + $0xa8] sm:$0xff]
    %v4089 = vld [vmem:[#allocation16 + $0xb0] sm:$0xff]
    %v4090 = vld [vmem:[#allocation16 + $0xb8] sm:$0xff]
    %v4091 = vld [vmem:[#allocation16 + $0xc0] sm:$0xff]
    %v4092 = vld [vmem:[#allocation16 + $0xc8] sm:$0xff]
    %v4093 = vld [vmem:[#allocation16 + $0xd0] sm:$0xff]
    %v4094 = vld [vmem:[#allocation16 + $0xd8] sm:$0xff]
    %v4095 = vld [vmem:[#allocation16 + $0xe0] sm:$0xff]
    %v4096 = vld [vmem:[#allocation16 + $0xe8] sm:$0xff]
    %v4097 = vld [vmem:[#allocation16 + $0xf0] sm:$0xff]
    %v4098 = vld [vmem:[#allocation16 + $0xf8] sm:$0xff]
    %v4099 = vld [vmem:[#allocation16 + $0x100] sm:$0xff]
    %v4100 = vld [vmem:[#allocation16 + $0x108] sm:$0xff]
    %v4101 = vld [vmem:[#allocation16 + $0x110] sm:$0xff]
    %v4102 = vld [vmem:[#allocation16 + $0x118] sm:$0xff]
    %v4103 = vld [vmem:[#allocation16 + $0x120] sm:$0xff]
    %v4104 = vld [vmem:[#allocation16 + $0x128] sm:$0xff]
    %v4105 = vld [vmem:[#allocation16 + $0x130] sm:$0xff]
    %v4106 = vld [vmem:[#allocation16 + $0x138] sm:$0xff]
    %v4107 = vld [vmem:[#allocation16 + $0x140] sm:$0xff]
    %v4108 = vld [vmem:[#allocation16 + $0x148] sm:$0xff]
    %v4109 = vld [vmem:[#allocation16 + $0x150] sm:$0xff]
    %v4110 = vld [vmem:[#allocation16 + $0x158] sm:$0xff]
    %v4111 = vld [vmem:[#allocation16 + $0x160] sm:$0xff]
    %v4112 = vld [vmem:[#allocation16 + $0x168] sm:$0xff]
    %v4113 = vld [vmem:[#allocation16 + $0x170] sm:$0xff]
    %v4114 = vld [vmem:[#allocation16 + $0x178] sm:$0xff]
    %v4115 = vld [vmem:[#allocation16 + $0x180] sm:$0xff]
    %v4116 = vld [vmem:[#allocation16 + $0x188] sm:$0xff]
    %v4117 = vld [vmem:[#allocation16 + $0x190] sm:$0xff]
    %v4118 = vld [vmem:[#allocation16 + $0x198] sm:$0xff]
    %v4119 = vld [vmem:[#allocation16 + $0x1a0] sm:$0xff]
    %v4120 = vld [vmem:[#allocation16 + $0x1a8] sm:$0xff]
    %v4121 = vld [vmem:[#allocation16 + $0x1b0] sm:$0xff]
    %v4122 = vld [vmem:[#allocation16 + $0x1b8] sm:$0xff]
    %v4123 = vld [vmem:[#allocation16 + $0x1c0] sm:$0xff]
    %v4124 = vld [vmem:[#allocation16 + $0x1c8] sm:$0xff]
    %v4125 = vld [vmem:[#allocation16 + $0x1d0] sm:$0xff]
    %v4126 = vld [vmem:[#allocation16 + $0x1d8] sm:$0xff]
    %v4127 = vld [vmem:[#allocation16 + $0x1e0] sm:$0xff]
    %v4128 = vld [vmem:[#allocation16 + $0x1e8] sm:$0xff]
    %v4129 = vld [vmem:[#allocation16 + $0x1f0] sm:$0xff]
    %v4130 = vld [vmem:[#allocation16 + $0x1f8] sm:$0xff]
    %v4131 = vld [vmem:[#allocation16 + $0x200] sm:$0xff]
    %v4132 = vld [vmem:[#allocation16 + $0x208] sm:$0xff]
    %v4133 = vld [vmem:[#allocation16 + $0x210] sm:$0xff]
    %v4134 = vld [vmem:[#allocation16 + $0x218] sm:$0xff]
    %v4135 = vld [vmem:[#allocation16 + $0x220] sm:$0xff]
    %v4136 = vld [vmem:[#allocation16 + $0x228] sm:$0xff]
    %v4137 = vld [vmem:[#allocation16 + $0x230] sm:$0xff]
    %v4138 = vld [vmem:[#allocation16 + $0x238] sm:$0xff]
    %v4139 = vld [vmem:[#allocation16 + $0x240] sm:$0xff]
    %v4140 = vld [vmem:[#allocation16 + $0x248] sm:$0xff]
    %v4141 = vld [vmem:[#allocation16 + $0x250] sm:$0xff]
    %v4142 = vld [vmem:[#allocation16 + $0x258] sm:$0xff]
    %v4143 = vld [vmem:[#allocation16 + $0x260] sm:$0xff]
    %v4144 = vld [vmem:[#allocation16 + $0x268] sm:$0xff]
    %v4145 = vld [vmem:[#allocation16 + $0x270] sm:$0xff]
    %v4146 = vld [vmem:[#allocation16 + $0x278] sm:$0xff]
    %v4147 = vld [vmem:[#allocation16 + $0x280] sm:$0xff]
    %v4148 = vld [vmem:[#allocation16 + $0x288] sm:$0xff]
    %v4149 = vld [vmem:[#allocation16 + $0x290] sm:$0xff]
    %v4150 = vld [vmem:[#allocation16 + $0x298] sm:$0xff]
    %v4151 = vld [vmem:[#allocation16 + $0x2a0] sm:$0xff]
    %v4152 = vld [vmem:[#allocation16 + $0x2a8] sm:$0xff]
    %v4153 = vld [vmem:[#allocation16 + $0x2b0] sm:$0xff]
    %v4154 = vld [vmem:[#allocation16 + $0x2b8] sm:$0xff]
    %v4155 = vld [vmem:[#allocation16 + $0x2c0] sm:$0xff]
    %v4156 = vld [vmem:[#allocation16 + $0x2c8] sm:$0xff]
    %v4157 = vld [vmem:[#allocation16 + $0x2d0] sm:$0xff]
    %v4158 = vld [vmem:[#allocation16 + $0x2d8] sm:$0xff]
    %v4159 = vld [vmem:[#allocation16 + $0x2e0] sm:$0xff]
    %v4160 = vld [vmem:[#allocation16 + $0x2e8] sm:$0xff]
    %v4161 = vld [vmem:[#allocation16 + $0x2f0] sm:$0xff]
    %v4162 = vld [vmem:[#allocation16 + $0x2f8] sm:$0xff]
    %v4163 = vld [vmem:[#allocation16 + $0x300] sm:$0xff]
    %v4164 = vld [vmem:[#allocation16 + $0x308] sm:$0xff]
    %v4165 = vld [vmem:[#allocation16 + $0x310] sm:$0xff]
    %v4166 = vld [vmem:[#allocation16 + $0x318] sm:$0xff]
    %v4167 = vld [vmem:[#allocation16 + $0x320] sm:$0xff]
    %v4168 = vld [vmem:[#allocation16 + $0x328] sm:$0xff]
    %v4169 = vld [vmem:[#allocation16 + $0x330] sm:$0xff]
    %v4170 = vld [vmem:[#allocation16 + $0x338] sm:$0xff]
    %v4171 = vld [vmem:[#allocation16 + $0x340] sm:$0xff]
    %v4172 = vld [vmem:[#allocation16 + $0x348] sm:$0xff]
    %v4173 = vld [vmem:[#allocation16 + $0x350] sm:$0xff]
    %v4174 = vld [vmem:[#allocation16 + $0x358] sm:$0xff]
    %v4175 = vld [vmem:[#allocation16 + $0x360] sm:$0xff]
    %v4176 = vld [vmem:[#allocation16 + $0x368] sm:$0xff]
    %v4177 = vld [vmem:[#allocation16 + $0x370] sm:$0xff]
    %v4178 = vld [vmem:[#allocation16 + $0x378] sm:$0xff]
    %v4179 = vld [vmem:[#allocation16 + $0x380] sm:$0xff]
    %v4180 = vld [vmem:[#allocation16 + $0x388] sm:$0xff]
    %v4181 = vld [vmem:[#allocation16 + $0x390] sm:$0xff]
    %v4182 = vld [vmem:[#allocation16 + $0x398] sm:$0xff]
    %v4183 = vld [vmem:[#allocation16 + $0x3a0] sm:$0xff]
    %v4184 = vld [vmem:[#allocation16 + $0x3a8] sm:$0xff]
    %v4185 = vld [vmem:[#allocation16 + $0x3b0] sm:$0xff]
    %v4186 = vld [vmem:[#allocation16 + $0x3b8] sm:$0xff]
    %v4187 = vld [vmem:[#allocation16 + $0x3c0] sm:$0xff]
    %v4188 = vld [vmem:[#allocation16 + $0x3c8] sm:$0xff]
    %v4189 = vld [vmem:[#allocation16 + $0x3d0] sm:$0xff]
    %v4190 = vld [vmem:[#allocation16 + $0x3d8] sm:$0xff]
    %v4191 = vld [vmem:[#allocation16 + $0x3e0] sm:$0xff]
    %v4192 = vld [vmem:[#allocation16 + $0x3e8] sm:$0xff]
    %v4193 = vld [vmem:[#allocation16 + $0x3f0] sm:$0xff]
    %v4194 = vld [vmem:[#allocation16 + $0x3f8] sm:$0xff]
    %v4195 = vld [vmem:[#allocation16 + $0x400] sm:$0xff]
    %v4196 = vld [vmem:[#allocation16 + $0x408] sm:$0xff]
    %v4197 = vld [vmem:[#allocation16 + $0x410] sm:$0xff]
    %v4198 = vld [vmem:[#allocation16 + $0x418] sm:$0xff]
    %v4199 = vld [vmem:[#allocation16 + $0x420] sm:$0xff]
    %v4200 = vld [vmem:[#allocation16 + $0x428] sm:$0xff]
    %v4201 = vld [vmem:[#allocation16 + $0x430] sm:$0xff]
    %v4202 = vld [vmem:[#allocation16 + $0x438] sm:$0xff]
    %v4203 = vld [vmem:[#allocation16 + $0x440] sm:$0xff]
    %v4204 = vld [vmem:[#allocation16 + $0x448] sm:$0xff]
    %v4205 = vld [vmem:[#allocation16 + $0x450] sm:$0xff]
    %v4206 = vld [vmem:[#allocation16 + $0x458] sm:$0xff]
    %v4207 = vld [vmem:[#allocation16 + $0x460] sm:$0xff]
    %v4208 = vld [vmem:[#allocation16 + $0x468] sm:$0xff]
    %v4209 = vld [vmem:[#allocation16 + $0x470] sm:$0xff]
    %v4210 = vld [vmem:[#allocation16 + $0x478] sm:$0xff]
    %v4211 = vld [vmem:[#allocation16 + $0x480] sm:$0xff]
    %v4212 = vld [vmem:[#allocation16 + $0x488] sm:$0xff]
    %v4213 = vld [vmem:[#allocation16 + $0x490] sm:$0xff]
    %v4214 = vld [vmem:[#allocation16 + $0x498] sm:$0xff]
    %v4215 = vld [vmem:[#allocation16 + $0x4a0] sm:$0xff]
    %v4216 = vld [vmem:[#allocation16 + $0x4a8] sm:$0xff]
    %v4217 = vld [vmem:[#allocation16 + $0x4b0] sm:$0xff]
    %v4218 = vld [vmem:[#allocation16 + $0x4b8] sm:$0xff]
    %v4219 = vld [vmem:[#allocation16 + $0x4c0] sm:$0xff]
    %v4220 = vld [vmem:[#allocation16 + $0x4c8] sm:$0xff]
    %v4221 = vld [vmem:[#allocation16 + $0x4d0] sm:$0xff]
    %v4222 = vld [vmem:[#allocation16 + $0x4d8] sm:$0xff]
    %v4223 = vld [vmem:[#allocation16 + $0x4e0] sm:$0xff]
    %v4224 = vld [vmem:[#allocation16 + $0x4e8] sm:$0xff]
    %v4225 = vld [vmem:[#allocation16 + $0x4f0] sm:$0xff]
    %v4226 = vld [vmem:[#allocation16 + $0x4f8] sm:$0xff]
    %v4227 = vld [vmem:[#allocation16 + $0x500] sm:$0xff]
    %v4228 = vld [vmem:[#allocation16 + $0x508] sm:$0xff]
    %v4229 = vld [vmem:[#allocation16 + $0x510] sm:$0xff]
    %v4230 = vld [vmem:[#allocation16 + $0x518] sm:$0xff]
    %v4231 = vld [vmem:[#allocation16 + $0x520] sm:$0xff]
    %v4232 = vld [vmem:[#allocation16 + $0x528] sm:$0xff]
    %v4233 = vld [vmem:[#allocation16 + $0x530] sm:$0xff]
    %v4234 = vld [vmem:[#allocation16 + $0x538] sm:$0xff]
    %v4235 = vld [vmem:[#allocation16 + $0x540] sm:$0xff]
    %v4236 = vld [vmem:[#allocation16 + $0x548] sm:$0xff]
    %v4237 = vld [vmem:[#allocation16 + $0x550] sm:$0xff]
    %v4238 = vld [vmem:[#allocation16 + $0x558] sm:$0xff]
    %v4239 = vld [vmem:[#allocation16 + $0x560] sm:$0xff]
    %v4240 = vld [vmem:[#allocation16 + $0x568] sm:$0xff]
    %v4241 = vld [vmem:[#allocation16 + $0x570] sm:$0xff]
    %v4242 = vld [vmem:[#allocation16 + $0x578] sm:$0xff]
    %v4243 = vld [vmem:[#allocation16 + $0x580] sm:$0xff]
    %v4244 = vld [vmem:[#allocation16 + $0x588] sm:$0xff]
    %v4245 = vld [vmem:[#allocation16 + $0x590] sm:$0xff]
    %v4246 = vld [vmem:[#allocation16 + $0x598] sm:$0xff]
    %v4247 = vld [vmem:[#allocation16 + $0x5a0] sm:$0xff]
    %v4248 = vld [vmem:[#allocation16 + $0x5a8] sm:$0xff]
    %v4249 = vld [vmem:[#allocation16 + $0x5b0] sm:$0xff]
    %v4250 = vld [vmem:[#allocation16 + $0x5b8] sm:$0xff]
    %v4251 = vld [vmem:[#allocation16 + $0x5c0] sm:$0xff]
    %v4252 = vld [vmem:[#allocation16 + $0x5c8] sm:$0xff]
    %v4253 = vld [vmem:[#allocation16 + $0x5d0] sm:$0xff]
    %v4254 = vld [vmem:[#allocation16 + $0x5d8] sm:$0xff]
    %v4255 = vld [vmem:[#allocation16 + $0x5e0] sm:$0xff]
    %v4256 = vld [vmem:[#allocation16 + $0x5e8] sm:$0xff]
    %v4257 = vld [vmem:[#allocation16 + $0x5f0] sm:$0xff]
    %v4258 = vld [vmem:[#allocation16 + $0x5f8] sm:$0xff]
    %v4259 = vld [vmem:[#allocation16 + $0x600] sm:$0xff]
    %v4260 = vld [vmem:[#allocation16 + $0x608] sm:$0xff]
    %v4261 = vld [vmem:[#allocation16 + $0x610] sm:$0xff]
    %v4262 = vld [vmem:[#allocation16 + $0x618] sm:$0xff]
    %v4263 = vld [vmem:[#allocation16 + $0x620] sm:$0xff]
    %v4264 = vld [vmem:[#allocation16 + $0x628] sm:$0xff]
    %v4265 = vld [vmem:[#allocation16 + $0x630] sm:$0xff]
    %v4266 = vld [vmem:[#allocation16 + $0x638] sm:$0xff]
    %v4267 = vld [vmem:[#allocation16 + $0x640] sm:$0xff]
    %v4268 = vld [vmem:[#allocation16 + $0x648] sm:$0xff]
    %v4269 = vld [vmem:[#allocation16 + $0x650] sm:$0xff]
    %v4270 = vld [vmem:[#allocation16 + $0x658] sm:$0xff]
    %v4271 = vld [vmem:[#allocation16 + $0x660] sm:$0xff]
    %v4272 = vld [vmem:[#allocation16 + $0x668] sm:$0xff]
    %v4273 = vld [vmem:[#allocation16 + $0x670] sm:$0xff]
    %v4274 = vld [vmem:[#allocation16 + $0x678] sm:$0xff]
    %v4275 = vld [vmem:[#allocation16 + $0x680] sm:$0xff]
    %v4276 = vld [vmem:[#allocation16 + $0x688] sm:$0xff]
    %v4277 = vld [vmem:[#allocation16 + $0x690] sm:$0xff]
    %v4278 = vld [vmem:[#allocation16 + $0x698] sm:$0xff]
    %v4279 = vld [vmem:[#allocation16 + $0x6a0] sm:$0xff]
    %v4280 = vld [vmem:[#allocation16 + $0x6a8] sm:$0xff]
    %v4281 = vld [vmem:[#allocation16 + $0x6b0] sm:$0xff]
    %v4282 = vld [vmem:[#allocation16 + $0x6b8] sm:$0xff]
    %v4283 = vld [vmem:[#allocation16 + $0x6c0] sm:$0xff]
    %v4284 = vld [vmem:[#allocation16 + $0x6c8] sm:$0xff]
    %v4285 = vld [vmem:[#allocation16 + $0x6d0] sm:$0xff]
    %v4286 = vld [vmem:[#allocation16 + $0x6d8] sm:$0xff]
    %v4287 = vld [vmem:[#allocation16 + $0x6e0] sm:$0xff]
    %v4288 = vld [vmem:[#allocation16 + $0x6e8] sm:$0xff]
    %v4289 = vld [vmem:[#allocation16 + $0x6f0] sm:$0xff]
    %v4290 = vld [vmem:[#allocation16 + $0x6f8] sm:$0xff]
    %v4291 = vld [vmem:[#allocation16 + $0x700] sm:$0xff]
    %v4292 = vld [vmem:[#allocation16 + $0x708] sm:$0xff]
    %v4293 = vld [vmem:[#allocation16 + $0x710] sm:$0xff]
    %v4294 = vld [vmem:[#allocation16 + $0x718] sm:$0xff]
    %v4295 = vld [vmem:[#allocation16 + $0x720] sm:$0xff]
    %v4296 = vld [vmem:[#allocation16 + $0x728] sm:$0xff]
    %v4297 = vld [vmem:[#allocation16 + $0x730] sm:$0xff]
    %v4298 = vld [vmem:[#allocation16 + $0x738] sm:$0xff]
    %v4299 = vld [vmem:[#allocation16 + $0x740] sm:$0xff]
    %v4300 = vld [vmem:[#allocation16 + $0x748] sm:$0xff]
    %v4301 = vld [vmem:[#allocation16 + $0x750] sm:$0xff]
    %v4302 = vld [vmem:[#allocation16 + $0x758] sm:$0xff]
    %v4303 = vld [vmem:[#allocation16 + $0x760] sm:$0xff]
    %v4304 = vld [vmem:[#allocation16 + $0x768] sm:$0xff]
    %v4305 = vld [vmem:[#allocation16 + $0x770] sm:$0xff]
    %v4306 = vld [vmem:[#allocation16 + $0x778] sm:$0xff]
    %v4307 = vld [vmem:[#allocation16 + $0x780] sm:$0xff]
    %v4308 = vld [vmem:[#allocation16 + $0x788] sm:$0xff]
    %v4309 = vld [vmem:[#allocation16 + $0x790] sm:$0xff]
    %v4310 = vld [vmem:[#allocation16 + $0x798] sm:$0xff]
    %v4311 = vld [vmem:[#allocation16 + $0x7a0] sm:$0xff]
    %v4312 = vld [vmem:[#allocation16 + $0x7a8] sm:$0xff]
    %v4313 = vld [vmem:[#allocation16 + $0x7b0] sm:$0xff]
    %v4314 = vld [vmem:[#allocation16 + $0x7b8] sm:$0xff]
    %v4315 = vld [vmem:[#allocation16 + $0x7c0] sm:$0xff]
    %v4316 = vld [vmem:[#allocation16 + $0x7c8] sm:$0xff]
    %v4317 = vld [vmem:[#allocation16 + $0x7d0] sm:$0xff]
    %v4318 = vld [vmem:[#allocation16 + $0x7d8] sm:$0xff]
    %v4319 = vld [vmem:[#allocation16 + $0x7e0] sm:$0xff]
    %v4320 = vld [vmem:[#allocation16 + $0x7e8] sm:$0xff]
    %v4321 = vld [vmem:[#allocation16 + $0x7f0] sm:$0xff]
    %v4322 = vld [vmem:[#allocation16 + $0x7f8] sm:$0xff]
    %v4323 = vld [vmem:[%s13] sm:$0xff]
    %v4325 = vlaneseq
    %v4326 = vshrl.u32 %v4325, 7
    %v4327 = vsub.s32 0, %v4326
    %v4328 = vrot.slane %v4323, %v4327
    %v4329 = vlaneseq
    %v4330 = vshrl.u32 %v4329, 7
    %v4331 = vsub.s32 1, %v4330
    %v4332 = vrot.slane %v4323, %v4331
    %v4333 = vlaneseq
    %v4334 = vshrl.u32 %v4333, 7
    %v4335 = vsub.s32 2, %v4334
    %v4336 = vrot.slane %v4323, %v4335
    %v4337 = vlaneseq
    %v4338 = vshrl.u32 %v4337, 7
    %v4339 = vsub.s32 3, %v4338
    %v4340 = vrot.slane %v4323, %v4339
    %v4341 = vlaneseq
    %v4342 = vshrl.u32 %v4341, 7
    %v4343 = vsub.s32 4, %v4342
    %v4344 = vrot.slane %v4323, %v4343
    %v4345 = vlaneseq
    %v4346 = vshrl.u32 %v4345, 7
    %v4347 = vsub.s32 5, %v4346
    %v4348 = vrot.slane %v4323, %v4347
    %v4349 = vlaneseq
    %v4350 = vshrl.u32 %v4349, 7
    %v4351 = vsub.s32 6, %v4350
    %v4352 = vrot.slane %v4323, %v4351
    %v4353 = vlaneseq
    %v4354 = vshrl.u32 %v4353, 7
    %v4355 = vsub.s32 7, %v4354
    %v4356 = vrot.slane %v4323, %v4355
    %4365 = vmatprep.subr.mxu0 %v3812
    %4366 = vmatpush1.msra.mxu0 %v3811
    %4367 = vmatprep.subr.mxu0 %v3820
    %4368 = vmatpush1.msra.mxu0 %v3819
    %4369 = vmatprep.subr.mxu0 %v3828
    %4370 = vmatpush1.msra.mxu0 %v3827
    %4371 = vmatprep.subr.mxu0 %v3836
    %4372 = vmatpush1.msra.mxu0 %v3835
    %4373 = vmatprep.subr.mxu0 %v3844
    %4374 = vmatpush1.msra.mxu0 %v3843
    %4375 = vmatprep.subr.mxu0 %v3852
    %4376 = vmatpush1.msra.mxu0 %v3851
    %4377 = vmatprep.subr.mxu0 %v3860
    %4378 = vmatpush1.msra.mxu0 %v3859
    %4379 = vmatprep.subr.mxu0 %v3868
    %4380 = vmatpush1.msra.mxu0 %v3867
    %4381 = vmatprep.subr.mxu0 %v3876
    %4382 = vmatpush1.msra.mxu0 %v3875
    %4383 = vmatprep.subr.mxu0 %v3884
    %4384 = vmatpush1.msra.mxu0 %v3883
    %4385 = vmatprep.subr.mxu0 %v3892
    %4386 = vmatpush1.msra.mxu0 %v3891
    %4387 = vmatprep.subr.mxu0 %v3900
    %4388 = vmatpush1.msra.mxu0 %v3899
    %4389 = vmatprep.subr.mxu0 %v3908
    %4390 = vmatpush1.msra.mxu0 %v3907
    %4391 = vmatprep.subr.mxu0 %v3916
    %4392 = vmatpush1.msra.mxu0 %v3915
    %4393 = vmatprep.subr.mxu0 %v3924
    %4394 = vmatpush1.msra.mxu0 %v3923
    %4395 = vmatprep.subr.mxu0 %v3932
    %4396 = vmatpush1.msra.mxu0 %v3931
    %4397 = vmatprep.subr.mxu0 %v3940
    %4398 = vmatpush1.msra.mxu0 %v3939
    %4399 = vmatprep.subr.mxu0 %v3948
    %4400 = vmatpush1.msra.mxu0 %v3947
    %4401 = vmatprep.subr.mxu0 %v3956
    %4402 = vmatpush1.msra.mxu0 %v3955
    %4403 = vmatprep.subr.mxu0 %v3964
    %4404 = vmatpush1.msra.mxu0 %v3963
    %4405 = vmatprep.subr.mxu0 %v3972
    %4406 = vmatpush1.msra.mxu0 %v3971
    %4407 = vmatprep.subr.mxu0 %v3980
    %4408 = vmatpush1.msra.mxu0 %v3979
    %4409 = vmatprep.subr.mxu0 %v3988
    %4410 = vmatpush1.msra.mxu0 %v3987
    %4411 = vmatprep.subr.mxu0 %v3996
    %4412 = vmatpush1.msra.mxu0 %v3995
    %4413 = vmatprep.subr.mxu0 %v4004
    %4414 = vmatpush1.msra.mxu0 %v4003
    %4415 = vmatprep.subr.mxu0 %v4012
    %4416 = vmatpush1.msra.mxu0 %v4011
    %4417 = vmatprep.subr.mxu0 %v4020
    %4418 = vmatpush1.msra.mxu0 %v4019
    %4419 = vmatprep.subr.mxu0 %v4028
    %4420 = vmatpush1.msra.mxu0 %v4027
    %4421 = vmatprep.subr.mxu0 %v4036
    %4422 = vmatpush1.msra.mxu0 %v4035
    %4423 = vmatprep.subr.mxu0 %v4044
    %4424 = vmatpush1.msra.mxu0 %v4043
    %4425 = vmatprep.subr.mxu0 %v4052
    %4426 = vmatpush1.msra.mxu0 %v4051
    %4427 = vmatprep.subr.mxu0 %v4060
    %4428 = vmatpush1.msra.mxu0 %v4059
    %4429 = vmatprep.mubr.f32.mxu0 %v3796
    %4430 = vmatmul.mubr.f32.gmra.mrb[0].mxu0 %v3795
    %v4431 = vpop.f32.mrb[0].mxu0
    %v4432 = vadd.f32 %v4328, %v4431
    %v4433 = vpop.f32.mrb[0].mxu0
    %v4434 = vadd.f32 %v4332, %v4433
    %4435 = vmatprep.mubr.f32.mxu0 %v3798
    %4436 = vmatmul.mubr.f32.gmra.mrb[0].mxu0 %v3797
    %v4437 = vpop.f32.mrb[0].mxu0
    %v4438 = vadd.f32 %v4328, %v4437
    %v4439 = vpop.f32.mrb[0].mxu0
    %v4440 = vadd.f32 %v4332, %v4439
    %4441 = vmatprep.mubr.f32.mxu0 %v3800
    %4442 = vmatmul.mubr.f32.gmra.mrb[0].mxu0 %v3799
    %v4443 = vpop.f32.mrb[0].mxu0
    %v4444 = vadd.f32 %v4328, %v4443
    %v4445 = vpop.f32.mrb[0].mxu0
    %v4446 = vadd.f32 %v4332, %v4445
    %4447 = vmatprep.mubr.f32.mxu0 %v3802
    %4448 = vmatmul.mubr.f32.gmra.mrb[0].mxu0 %v3801
    %v4449 = vpop.f32.mrb[0].mxu0
    %v4450 = vadd.f32 %v4328, %v4449
    %v4451 = vpop.f32.mrb[0].mxu0
    %v4452 = vadd.f32 %v4332, %v4451
    %4453 = vmatprep.mubr.f32.mxu0 %v3804
    %4454 = vmatmul.mubr.f32.gmra.mrb[0].mxu0 %v3803
    %v4455 = vpop.f32.mrb[0].mxu0
    %v4456 = vadd.f32 %v4328, %v4455
    %v4457 = vpop.f32.mrb[0].mxu0
    %v4458 = vadd.f32 %v4332, %v4457
    %4459 = vmatprep.mubr.f32.mxu0 %v3806
    %4460 = vmatmul.mubr.f32.gmra.mrb[0].mxu0 %v3805
    %v4461 = vpop.f32.mrb[0].mxu0
    %v4462 = vadd.f32 %v4328, %v4461
    %v4463 = vpop.f32.mrb[0].mxu0
    %v4464 = vadd.f32 %v4332, %v4463
    %4465 = vmatprep.mubr.f32.mxu0 %v3808
    %4466 = vmatmul.mubr.f32.gmra.mrb[0].mxu0 %v3807
    %v4467 = vpop.f32.mrb[0].mxu0
    %v4468 = vadd.f32 %v4328, %v4467
    %v4469 = vpop.f32.mrb[0].mxu0
    %v4470 = vadd.f32 %v4332, %v4469
    %4471 = vmatprep.mubr.f32.mxu0 %v3810
    %4472 = vmatmul.mubr.f32.gmra.mrb[0].mxu0 %v3809
    %v4473 = vpop.f32.mrb[0].mxu0
    %v4474 = vadd.f32 %v4328, %v4473
    %v4475 = vpop.f32.mrb[0].mxu0
    %v4476 = vadd.f32 %v4332, %v4475
    %4477 = vdwg.mxu0
    %4478 = vmatprep.subr.mxu0 %v3814
    %4479 = vmatpush1.msra.mxu0 %v3813
    %4480 = vmatprep.subr.mxu0 %v3822
    %4481 = vmatpush1.msra.mxu0 %v3821
    %4482 = vmatprep.subr.mxu0 %v3830
    %4483 = vmatpush1.msra.mxu0 %v3829
    %4484 = vmatprep.subr.mxu0 %v3838
    %4485 = vmatpush1.msra.mxu0 %v3837
    %4486 = vmatprep.subr.mxu0 %v3846
    %4487 = vmatpush1.msra.mxu0 %v3845
    %4488 = vmatprep.subr.mxu0 %v3854
    %4489 = vmatpush1.msra.mxu0 %v3853
    %4490 = vmatprep.subr.mxu0 %v3862
    %4491 = vmatpush1.msra.mxu0 %v3861
    %4492 = vmatprep.subr.mxu0 %v3870
    %4493 = vmatpush1.msra.mxu0 %v3869
    %4494 = vmatprep.subr.mxu0 %v3878
    %4495 = vmatpush1.msra.mxu0 %v3877
    %4496 = vmatprep.subr.mxu0 %v3886
    %4497 = vmatpush1.msra.mxu0 %v3885
    %4498 = vmatprep.subr.mxu0 %v3894
    %4499 = vmatpush1.msra.mxu0 %v3893
    %4500 = vmatprep.subr.mxu0 %v3902
    %4501 = vmatpush1.msra.mxu0 %v3901
    %4502 = vmatprep.subr.mxu0 %v3910
    %4503 = vmatpush1.msra.mxu0 %v3909
    %4504 = vmatprep.subr.mxu0 %v3918
    %4505 = vmatpush1.msra.mxu0 %v3917
    %4506 = vmatprep.subr.mxu0 %v3926
    %4507 = vmatpush1.msra.mxu0 %v3925
    %4508 = vmatprep.subr.mxu0 %v3934
    %4509 = vmatpush1.msra.mxu0 %v3933
    %4510 = vmatprep.subr.mxu0 %v3942
    %4511 = vmatpush1.msra.mxu0 %v3941
    %4512 = vmatprep.subr.mxu0 %v3950
    %4513 = vmatpush1.msra.mxu0 %v3949
    %4514 = vmatprep.subr.mxu0 %v3958
    %4515 = vmatpush1.msra.mxu0 %v3957
    %4516 = vmatprep.subr.mxu0 %v3966
    %4517 = vmatpush1.msra.mxu0 %v3965
    %4518 = vmatprep.subr.mxu0 %v3974
    %4519 = vmatpush1.msra.mxu0 %v3973
    %4520 = vmatprep.subr.mxu0 %v3982
    %4521 = vmatpush1.msra.mxu0 %v3981
    %4522 = vmatprep.subr.mxu0 %v3990
    %4523 = vmatpush1.msra.mxu0 %v3989
    %4524 = vmatprep.subr.mxu0 %v3998
    %4525 = vmatpush1.msra.mxu0 %v3997
    %4526 = vmatprep.subr.mxu0 %v4006
    %4527 = vmatpush1.msra.mxu0 %v4005
    %4528 = vmatprep.subr.mxu0 %v4014
    %4529 = vmatpush1.msra.mxu0 %v4013
    %4530 = vmatprep.subr.mxu0 %v4022
    %4531 = vmatpush1.msra.mxu0 %v4021
    %4532 = vmatprep.subr.mxu0 %v4030
    %4533 = vmatpush1.msra.mxu0 %v4029
    %4534 = vmatprep.subr.mxu0 %v4038
    %4535 = vmatpush1.msra.mxu0 %v4037
    %4536 = vmatprep.subr.mxu0 %v4046
    %4537 = vmatpush1.msra.mxu0 %v4045
    %4538 = vmatprep.subr.mxu0 %v4054
    %4539 = vmatpush1.msra.mxu0 %v4053
    %4540 = vmatprep.subr.mxu0 %v4062
    %4541 = vmatpush1.msra.mxu0 %v4061
    %4542 = vmatprep.mubr.f32.mxu0 %v3796
    %4543 = vmatmul.mubr.f32.gmra.mrb[0].mxu0 %v3795
    %v4544 = vpop.f32.mrb[0].mxu0
    %v4545 = vadd.f32 %v4336, %v4544
    %v4546 = vpop.f32.mrb[0].mxu0
    %v4547 = vadd.f32 %v4340, %v4546
    %4548 = vmatprep.mubr.f32.mxu0 %v3798
    %4549 = vmatmul.mubr.f32.gmra.mrb[0].mxu0 %v3797
    %v4550 = vpop.f32.mrb[0].mxu0
    %v4551 = vadd.f32 %v4336, %v4550
    %v4552 = vpop.f32.mrb[0].mxu0
    %v4553 = vadd.f32 %v4340, %v4552
    %4554 = vmatprep.mubr.f32.mxu0 %v3800
    %4555 = vmatmul.mubr.f32.gmra.mrb[0].mxu0 %v3799
    %v4556 = vpop.f32.mrb[0].mxu0
    %v4557 = vadd.f32 %v4336, %v4556
    %v4558 = vpop.f32.mrb[0].mxu0
    %v4559 = vadd.f32 %v4340, %v4558
    %4560 = vmatprep.mubr.f32.mxu0 %v3802
    %4561 = vmatmul.mubr.f32.gmra.mrb[0].mxu0 %v3801
    %v4562 = vpop.f32.mrb[0].mxu0
    %v4563 = vadd.f32 %v4336, %v4562
    %v4564 = vpop.f32.mrb[0].mxu0
    %v4565 = vadd.f32 %v4340, %v4564
    %4566 = vmatprep.mubr.f32.mxu0 %v3804
    %4567 = vmatmul.mubr.f32.gmra.mrb[0].mxu0 %v3803
    %v4568 = vpop.f32.mrb[0].mxu0
    %v4569 = vadd.f32 %v4336, %v4568
    %v4570 = vpop.f32.mrb[0].mxu0
    %v4571 = vadd.f32 %v4340, %v4570
    %4572 = vmatprep.mubr.f32.mxu0 %v3806
    %4573 = vmatmul.mubr.f32.gmra.mrb[0].mxu0 %v3805
    %v4574 = vpop.f32.mrb[0].mxu0
    %v4575 = vadd.f32 %v4336, %v4574
    %v4576 = vpop.f32.mrb[0].mxu0
    %v4577 = vadd.f32 %v4340, %v4576
    %4578 = vmatprep.mubr.f32.mxu0 %v3808
    %4579 = vmatmul.mubr.f32.gmra.mrb[0].mxu0 %v3807
    %v4580 = vpop.f32.mrb[0].mxu0
    %v4581 = vadd.f32 %v4336, %v4580
    %v4582 = vpop.f32.mrb[0].mxu0
    %v4583 = vadd.f32 %v4340, %v4582
    %4584 = vmatprep.mubr.f32.mxu0 %v3810
    %4585 = vmatmul.mubr.f32.gmra.mrb[0].mxu0 %v3809
    %v4586 = vpop.f32.mrb[0].mxu0
    %v4587 = vadd.f32 %v4336, %v4586
    %v4588 = vpop.f32.mrb[0].mxu0
    %v4589 = vadd.f32 %v4340, %v4588
    %4590 = vdwg.mxu0
    %4591 = vmatprep.subr.mxu0 %v3816
    %4592 = vmatpush1.msra.mxu0 %v3815
    %4593 = vmatprep.subr.mxu0 %v3824
    %4594 = vmatpush1.msra.mxu0 %v3823
    %4595 = vmatprep.subr.mxu0 %v3832
    %4596 = vmatpush1.msra.mxu0 %v3831
    %4597 = vmatprep.subr.mxu0 %v3840
    %4598 = vmatpush1.msra.mxu0 %v3839
    %4599 = vmatprep.subr.mxu0 %v3848
    %4600 = vmatpush1.msra.mxu0 %v3847
    %4601 = vmatprep.subr.mxu0 %v3856
    %4602 = vmatpush1.msra.mxu0 %v3855
    %4603 = vmatprep.subr.mxu0 %v3864
    %4604 = vmatpush1.msra.mxu0 %v3863
    %4605 = vmatprep.subr.mxu0 %v3872
    %4606 = vmatpush1.msra.mxu0 %v3871
    %4607 = vmatprep.subr.mxu0 %v3880
    %4608 = vmatpush1.msra.mxu0 %v3879
    %4609 = vmatprep.subr.mxu0 %v3888
    %4610 = vmatpush1.msra.mxu0 %v3887
    %4611 = vmatprep.subr.mxu0 %v3896
    %4612 = vmatpush1.msra.mxu0 %v3895
    %4613 = vmatprep.subr.mxu0 %v3904
    %4614 = vmatpush1.msra.mxu0 %v3903
    %4615 = vmatprep.subr.mxu0 %v3912
    %4616 = vmatpush1.msra.mxu0 %v3911
    %4617 = vmatprep.subr.mxu0 %v3920
    %4618 = vmatpush1.msra.mxu0 %v3919
    %4619 = vmatprep.subr.mxu0 %v3928
    %4620 = vmatpush1.msra.mxu0 %v3927
    %4621 = vmatprep.subr.mxu0 %v3936
    %4622 = vmatpush1.msra.mxu0 %v3935
    %4623 = vmatprep.subr.mxu0 %v3944
    %4624 = vmatpush1.msra.mxu0 %v3943
    %4625 = vmatprep.subr.mxu0 %v3952
    %4626 = vmatpush1.msra.mxu0 %v3951
    %4627 = vmatprep.subr.mxu0 %v3960
    %4628 = vmatpush1.msra.mxu0 %v3959
    %4629 = vmatprep.subr.mxu0 %v3968
    %4630 = vmatpush1.msra.mxu0 %v3967
    %4631 = vmatprep.subr.mxu0 %v3976
    %4632 = vmatpush1.msra.mxu0 %v3975
    %4633 = vmatprep.subr.mxu0 %v3984
    %4634 = vmatpush1.msra.mxu0 %v3983
    %4635 = vmatprep.subr.mxu0 %v3992
    %4636 = vmatpush1.msra.mxu0 %v3991
    %4637 = vmatprep.subr.mxu0 %v4000
    %4638 = vmatpush1.msra.mxu0 %v3999
    %4639 = vmatprep.subr.mxu0 %v4008
    %4640 = vmatpush1.msra.mxu0 %v4007
    %4641 = vmatprep.subr.mxu0 %v4016
    %4642 = vmatpush1.msra.mxu0 %v4015
    %4643 = vmatprep.subr.mxu0 %v4024
    %4644 = vmatpush1.msra.mxu0 %v4023
    %4645 = vmatprep.subr.mxu0 %v4032
    %4646 = vmatpush1.msra.mxu0 %v4031
    %4647 = vmatprep.subr.mxu0 %v4040
    %4648 = vmatpush1.msra.mxu0 %v4039
    %4649 = vmatprep.subr.mxu0 %v4048
    %4650 = vmatpush1.msra.mxu0 %v4047
    %4651 = vmatprep.subr.mxu0 %v4056
    %4652 = vmatpush1.msra.mxu0 %v4055
    %4653 = vmatprep.subr.mxu0 %v4064
    %4654 = vmatpush1.msra.mxu0 %v4063
    %4655 = vmatprep.mubr.f32.mxu0 %v3796
    %4656 = vmatmul.mubr.f32.gmra.mrb[0].mxu0 %v3795
    %v4657 = vpop.f32.mrb[0].mxu0
    %v4658 = vadd.f32 %v4344, %v4657
    %v4659 = vpop.f32.mrb[0].mxu0
    %v4660 = vadd.f32 %v4348, %v4659
    %4661 = vmatprep.mubr.f32.mxu0 %v3798
    %4662 = vmatmul.mubr.f32.gmra.mrb[0].mxu0 %v3797
    %v4663 = vpop.f32.mrb[0].mxu0
    %v4664 = vadd.f32 %v4344, %v4663
    %v4665 = vpop.f32.mrb[0].mxu0
    %v4666 = vadd.f32 %v4348, %v4665
    %4667 = vmatprep.mubr.f32.mxu0 %v3800
    %4668 = vmatmul.mubr.f32.gmra.mrb[0].mxu0 %v3799
    %v4669 = vpop.f32.mrb[0].mxu0
    %v4670 = vadd.f32 %v4344, %v4669
    %v4671 = vpop.f32.mrb[0].mxu0
    %v4672 = vadd.f32 %v4348, %v4671
    %4673 = vmatprep.mubr.f32.mxu0 %v3802
    %4674 = vmatmul.mubr.f32.gmra.mrb[0].mxu0 %v3801
    %v4675 = vpop.f32.mrb[0].mxu0
    %v4676 = vadd.f32 %v4344, %v4675
    %v4677 = vpop.f32.mrb[0].mxu0
    %v4678 = vadd.f32 %v4348, %v4677
    %4679 = vmatprep.mubr.f32.mxu0 %v3804
    %4680 = vmatmul.mubr.f32.gmra.mrb[0].mxu0 %v3803
    %v4681 = vpop.f32.mrb[0].mxu0
    %v4682 = vadd.f32 %v4344, %v4681
    %v4683 = vpop.f32.mrb[0].mxu0
    %v4684 = vadd.f32 %v4348, %v4683
    %4685 = vmatprep.mubr.f32.mxu0 %v3806
    %4686 = vmatmul.mubr.f32.gmra.mrb[0].mxu0 %v3805
    %v4687 = vpop.f32.mrb[0].mxu0
    %v4688 = vadd.f32 %v4344, %v4687
    %v4689 = vpop.f32.mrb[0].mxu0
    %v4690 = vadd.f32 %v4348, %v4689
    %4691 = vmatprep.mubr.f32.mxu0 %v3808
    %4692 = vmatmul.mubr.f32.gmra.mrb[0].mxu0 %v3807
    %v4693 = vpop.f32.mrb[0].mxu0
    %v4694 = vadd.f32 %v4344, %v4693
    %v4695 = vpop.f32.mrb[0].mxu0
    %v4696 = vadd.f32 %v4348, %v4695
    %4697 = vmatprep.mubr.f32.mxu0 %v3810
    %4698 = vmatmul.mubr.f32.gmra.mrb[0].mxu0 %v3809
    %v4699 = vpop.f32.mrb[0].mxu0
    %v4700 = vadd.f32 %v4344, %v4699
    %v4701 = vpop.f32.mrb[0].mxu0
    %v4702 = vadd.f32 %v4348, %v4701
    %4703 = vdwg.mxu0
    %4704 = vmatprep.subr.mxu0 %v3818
    %4705 = vmatpush1.msra.mxu0 %v3817
    %4706 = vmatprep.subr.mxu0 %v3826
    %4707 = vmatpush1.msra.mxu0 %v3825
    %4708 = vmatprep.subr.mxu0 %v3834
    %4709 = vmatpush1.msra.mxu0 %v3833
    %4710 = vmatprep.subr.mxu0 %v3842
    %4711 = vmatpush1.msra.mxu0 %v3841
    %4712 = vmatprep.subr.mxu0 %v3850
    %4713 = vmatpush1.msra.mxu0 %v3849
    %4714 = vmatprep.subr.mxu0 %v3858
    %4715 = vmatpush1.msra.mxu0 %v3857
    %4716 = vmatprep.subr.mxu0 %v3866
    %4717 = vmatpush1.msra.mxu0 %v3865
    %4718 = vmatprep.subr.mxu0 %v3874
    %4719 = vmatpush1.msra.mxu0 %v3873
    %4720 = vmatprep.subr.mxu0 %v3882
    %4721 = vmatpush1.msra.mxu0 %v3881
    %4722 = vmatprep.subr.mxu0 %v3890
    %4723 = vmatpush1.msra.mxu0 %v3889
    %4724 = vmatprep.subr.mxu0 %v3898
    %4725 = vmatpush1.msra.mxu0 %v3897
    %4726 = vmatprep.subr.mxu0 %v3906
    %4727 = vmatpush1.msra.mxu0 %v3905
    %4728 = vmatprep.subr.mxu0 %v3914
    %4729 = vmatpush1.msra.mxu0 %v3913
    %4730 = vmatprep.subr.mxu0 %v3922
    %4731 = vmatpush1.msra.mxu0 %v3921
    %4732 = vmatprep.subr.mxu0 %v3930
    %4733 = vmatpush1.msra.mxu0 %v3929
    %4734 = vmatprep.subr.mxu0 %v3938
    %4735 = vmatpush1.msra.mxu0 %v3937
    %4736 = vmatprep.subr.mxu0 %v3946
    %4737 = vmatpush1.msra.mxu0 %v3945
    %4738 = vmatprep.subr.mxu0 %v3954
    %4739 = vmatpush1.msra.mxu0 %v3953
    %4740 = vmatprep.subr.mxu0 %v3962
    %4741 = vmatpush1.msra.mxu0 %v3961
    %4742 = vmatprep.subr.mxu0 %v3970
    %4743 = vmatpush1.msra.mxu0 %v3969
    %4744 = vmatprep.subr.mxu0 %v3978
    %4745 = vmatpush1.msra.mxu0 %v3977
    %4746 = vmatprep.subr.mxu0 %v3986
    %4747 = vmatpush1.msra.mxu0 %v3985
    %4748 = vmatprep.subr.mxu0 %v3994
    %4749 = vmatpush1.msra.mxu0 %v3993
    %4750 = vmatprep.subr.mxu0 %v4002
    %4751 = vmatpush1.msra.mxu0 %v4001
    %4752 = vmatprep.subr.mxu0 %v4010
    %4753 = vmatpush1.msra.mxu0 %v4009
    %4754 = vmatprep.subr.mxu0 %v4018
    %4755 = vmatpush1.msra.mxu0 %v4017
    %4756 = vmatprep.subr.mxu0 %v4026
    %4757 = vmatpush1.msra.mxu0 %v4025
    %4758 = vmatprep.subr.mxu0 %v4034
    %4759 = vmatpush1.msra.mxu0 %v4033
    %4760 = vmatprep.subr.mxu0 %v4042
    %4761 = vmatpush1.msra.mxu0 %v4041
    %4762 = vmatprep.subr.mxu0 %v4050
    %4763 = vmatpush1.msra.mxu0 %v4049
    %4764 = vmatprep.subr.mxu0 %v4058
    %4765 = vmatpush1.msra.mxu0 %v4057
    %4766 = vmatprep.subr.mxu0 %v4066
    %4767 = vmatpush1.msra.mxu0 %v4065
    %4768 = vmatprep.mubr.f32.mxu0 %v3796
    %4769 = vmatmul.mubr.f32.gmra.mrb[0].mxu0 %v3795
    %v4770 = vpop.f32.mrb[0].mxu0
    %v4771 = vadd.f32 %v4352, %v4770
    %v4772 = vpop.f32.mrb[0].mxu0
    %v4773 = vadd.f32 %v4356, %v4772
    %4774 = vmatprep.mubr.f32.mxu0 %v3798
    %4775 = vmatmul.mubr.f32.gmra.mrb[0].mxu0 %v3797
    %v4776 = vpop.f32.mrb[0].mxu0
    %v4777 = vadd.f32 %v4352, %v4776
    %v4778 = vpop.f32.mrb[0].mxu0
    %v4779 = vadd.f32 %v4356, %v4778
    %4780 = vmatprep.mubr.f32.mxu0 %v3800
    %4781 = vmatmul.mubr.f32.gmra.mrb[0].mxu0 %v3799
    %v4782 = vpop.f32.mrb[0].mxu0
    %v4783 = vadd.f32 %v4352, %v4782
    %v4784 = vpop.f32.mrb[0].mxu0
    %v4785 = vadd.f32 %v4356, %v4784
    %4786 = vmatprep.mubr.f32.mxu0 %v3802
    %4787 = vmatmul.mubr.f32.gmra.mrb[0].mxu0 %v3801
    %v4788 = vpop.f32.mrb[0].mxu0
    %v4789 = vadd.f32 %v4352, %v4788
    %v4790 = vpop.f32.mrb[0].mxu0
    %v4791 = vadd.f32 %v4356, %v4790
    %4792 = vmatprep.mubr.f32.mxu0 %v3804
    %4793 = vmatmul.mubr.f32.gmra.mrb[0].mxu0 %v3803
    %v4794 = vpop.f32.mrb[0].mxu0
    %v4795 = vadd.f32 %v4352, %v4794
    %v4796 = vpop.f32.mrb[0].mxu0
    %v4797 = vadd.f32 %v4356, %v4796
    %4798 = vmatprep.mubr.f32.mxu0 %v3806
    %4799 = vmatmul.mubr.f32.gmra.mrb[0].mxu0 %v3805
    %v4800 = vpop.f32.mrb[0].mxu0
    %v4801 = vadd.f32 %v4352, %v4800
    %v4802 = vpop.f32.mrb[0].mxu0
    %v4803 = vadd.f32 %v4356, %v4802
    %4804 = vmatprep.mubr.f32.mxu0 %v3808
    %4805 = vmatmul.mubr.f32.gmra.mrb[0].mxu0 %v3807
    %v4806 = vpop.f32.mrb[0].mxu0
    %v4807 = vadd.f32 %v4352, %v4806
    %v4808 = vpop.f32.mrb[0].mxu0
    %v4809 = vadd.f32 %v4356, %v4808
    %4810 = vmatprep.mubr.f32.mxu0 %v3810
    %4811 = vmatmul.mubr.f32.gmra.mrb[0].mxu0 %v3809
    %v4812 = vpop.f32.mrb[0].mxu0
    %v4813 = vadd.f32 %v4352, %v4812
    %v4814 = vpop.f32.mrb[0].mxu0
    %v4815 = vadd.f32 %v4356, %v4814
    %4816 = vdwg.mxu0
    %4817 = vst [vmem:[#allocation3] sm:$0xff] %v4432
    %4818 = vst [vmem:[#allocation3 + $0x8] sm:$0xff] %v4434
    %4819 = vst [vmem:[#allocation3 + $0x10] sm:$0xff] %v4545
    %4820 = vst [vmem:[#allocation3 + $0x18] sm:$0xff] %v4547
    %4821 = vst [vmem:[#allocation3 + $0x20] sm:$0xff] %v4658
    %4822 = vst [vmem:[#allocation3 + $0x28] sm:$0xff] %v4660
    %4823 = vst [vmem:[#allocation3 + $0x30] sm:$0xff] %v4771
    %4824 = vst [vmem:[#allocation3 + $0x38] sm:$0xff] %v4773
    %4825 = vst [vmem:[#allocation3 + $0x40] sm:$0xff] %v4438
    %4826 = vst [vmem:[#allocation3 + $0x48] sm:$0xff] %v4440
    %4827 = vst [vmem:[#allocation3 + $0x50] sm:$0xff] %v4551
    %4828 = vst [vmem:[#allocation3 + $0x58] sm:$0xff] %v4553
    %4829 = vst [vmem:[#allocation3 + $0x60] sm:$0xff] %v4664
    %4830 = vst [vmem:[#allocation3 + $0x68] sm:$0xff] %v4666
    %4831 = vst [vmem:[#allocation3 + $0x70] sm:$0xff] %v4777
    %4832 = vst [vmem:[#allocation3 + $0x78] sm:$0xff] %v4779
    %4833 = vst [vmem:[#allocation3 + $0x80] sm:$0xff] %v4444
    %4834 = vst [vmem:[#allocation3 + $0x88] sm:$0xff] %v4446
    %4835 = vst [vmem:[#allocation3 + $0x90] sm:$0xff] %v4557
    %4836 = vst [vmem:[#allocation3 + $0x98] sm:$0xff] %v4559
    %4837 = vst [vmem:[#allocation3 + $0xa0] sm:$0xff] %v4670
    %4838 = vst [vmem:[#allocation3 + $0xa8] sm:$0xff] %v4672
    %4839 = vst [vmem:[#allocation3 + $0xb0] sm:$0xff] %v4783
    %4840 = vst [vmem:[#allocation3 + $0xb8] sm:$0xff] %v4785
    %4841 = vst [vmem:[#allocation3 + $0xc0] sm:$0xff] %v4450
    %4842 = vst [vmem:[#allocation3 + $0xc8] sm:$0xff] %v4452
    %4843 = vst [vmem:[#allocation3 + $0xd0] sm:$0xff] %v4563
    %4844 = vst [vmem:[#allocation3 + $0xd8] sm:$0xff] %v4565
    %4845 = vst [vmem:[#allocation3 + $0xe0] sm:$0xff] %v4676
    %4846 = vst [vmem:[#allocation3 + $0xe8] sm:$0xff] %v4678
    %4847 = vst [vmem:[#allocation3 + $0xf0] sm:$0xff] %v4789
    %4848 = vst [vmem:[#allocation3 + $0xf8] sm:$0xff] %v4791
    %4849 = vst [vmem:[#allocation3 + $0x100] sm:$0xff] %v4456
    %4850 = vst [vmem:[#allocation3 + $0x108] sm:$0xff] %v4458
    %4851 = vst [vmem:[#allocation3 + $0x110] sm:$0xff] %v4569
    %4852 = vst [vmem:[#allocation3 + $0x118] sm:$0xff] %v4571
    %4853 = vst [vmem:[#allocation3 + $0x120] sm:$0xff] %v4682
    %4854 = vst [vmem:[#allocation3 + $0x128] sm:$0xff] %v4684
    %4855 = vst [vmem:[#allocation3 + $0x130] sm:$0xff] %v4795
    %4856 = vst [vmem:[#allocation3 + $0x138] sm:$0xff] %v4797
    %4857 = vst [vmem:[#allocation3 + $0x140] sm:$0xff] %v4462
    %4858 = vst [vmem:[#allocation3 + $0x148] sm:$0xff] %v4464
    %4859 = vst [vmem:[#allocation3 + $0x150] sm:$0xff] %v4575
    %4860 = vst [vmem:[#allocation3 + $0x158] sm:$0xff] %v4577
    %4861 = vst [vmem:[#allocation3 + $0x160] sm:$0xff] %v4688
    %4862 = vst [vmem:[#allocation3 + $0x168] sm:$0xff] %v4690
    %4863 = vst [vmem:[#allocation3 + $0x170] sm:$0xff] %v4801
    %4864 = vst [vmem:[#allocation3 + $0x178] sm:$0xff] %v4803
    %4865 = vst [vmem:[#allocation3 + $0x180] sm:$0xff] %v4468
    %4866 = vst [vmem:[#allocation3 + $0x188] sm:$0xff] %v4470
    %4867 = vst [vmem:[#allocation3 + $0x190] sm:$0xff] %v4581
    %4868 = vst [vmem:[#allocation3 + $0x198] sm:$0xff] %v4583
    %4869 = vst [vmem:[#allocation3 + $0x1a0] sm:$0xff] %v4694
    %4870 = vst [vmem:[#allocation3 + $0x1a8] sm:$0xff] %v4696
    %4871 = vst [vmem:[#allocation3 + $0x1b0] sm:$0xff] %v4807
    %4872 = vst [vmem:[#allocation3 + $0x1b8] sm:$0xff] %v4809
    %4873 = vst [vmem:[#allocation3 + $0x1c0] sm:$0xff] %v4474
    %4874 = vst [vmem:[#allocation3 + $0x1c8] sm:$0xff] %v4476
    %4875 = vst [vmem:[#allocation3 + $0x1d0] sm:$0xff] %v4587
    %4876 = vst [vmem:[#allocation3 + $0x1d8] sm:$0xff] %v4589
    %4877 = vst [vmem:[#allocation3 + $0x1e0] sm:$0xff] %v4700
    %4878 = vst [vmem:[#allocation3 + $0x1e8] sm:$0xff] %v4702
    %4879 = vst [vmem:[#allocation3 + $0x1f0] sm:$0xff] %v4813
    %4880 = vst [vmem:[#allocation3 + $0x1f8] sm:$0xff] %v4815
    loop: start=0, step=1, limit=8
    $region128: #{cnn_lstm_forward.1} parent=1 // loop_pre_header
      _
    $region129: #{cnn_lstm_forward.1} parent=1 // loop_header
      %s4882 = sphi 0, %s4886
      %p4883 = scmp.ge.s32.totalorder %s4882, 8
      %v4887 = vphi 0.0, %v5243
      %v4888 = vphi 0.0, %v5244
      %v4889 = vphi 0.0, %v5239
      %v4890 = vphi 0.0, %v5240
    $region130: #{cnn_lstm_forward.1} parent=1 // loop_header_branch
      %4885 = sbr.rel (%p4883) target = $region134
    $region131: #{cnn_lstm_forward.1} parent=1 // loop_body
      %s4891 = smul.u32 %s4882, 8
      %s4892 = sshra.s32 %s4891, 3
      %s4893 = sand.u32 %s4891, 7
      %s4894 = smul.u32 %s4892, 8
      %s4895 = smul.addr %s4894, 8
      %s4896 = scalar_lea.vmem [#allocation3], %s4895
      %v4897 = vld [vmem:[%s4896] sm:$0xff]
      %v4898 = vld [vmem:[%s4896 + $0x8] sm:$0xff]
      %v4899 = vld [vmem:[%s4896 + $0x10] sm:$0xff]
      %v4900 = vld [vmem:[%s4896 + $0x18] sm:$0xff]
      %v4901 = vld [vmem:[%s4896 + $0x20] sm:$0xff]
      %v4902 = vld [vmem:[%s4896 + $0x28] sm:$0xff]
      %v4903 = vld [vmem:[%s4896 + $0x30] sm:$0xff]
      %v4904 = vld [vmem:[%s4896 + $0x38] sm:$0xff]
      %4905 = vmatprep.subr.mxu0 %v4068
      %4906 = vmatpush1.msra.mxu0 %v4067
      %4907 = vmatprep.subr.mxu0 %v4076
      %4908 = vmatpush1.msra.mxu0 %v4075
      %4909 = vmatprep.subr.mxu0 %v4084
      %4910 = vmatpush1.msra.mxu0 %v4083
      %4911 = vmatprep.subr.mxu0 %v4092
      %4912 = vmatpush1.msra.mxu0 %v4091
      %4913 = vmatprep.subr.mxu0 %v4100
      %4914 = vmatpush1.msra.mxu0 %v4099
      %4915 = vmatprep.subr.mxu0 %v4108
      %4916 = vmatpush1.msra.mxu0 %v4107
      %4917 = vmatprep.subr.mxu0 %v4116
      %4918 = vmatpush1.msra.mxu0 %v4115
      %4919 = vmatprep.subr.mxu0 %v4124
      %4920 = vmatpush1.msra.mxu0 %v4123
      %4921 = vmatprep.subr.mxu0 %v4132
      %4922 = vmatpush1.msra.mxu0 %v4131
      %4923 = vmatprep.subr.mxu0 %v4140
      %4924 = vmatpush1.msra.mxu0 %v4139
      %4925 = vmatprep.subr.mxu0 %v4148
      %4926 = vmatpush1.msra.mxu0 %v4147
      %4927 = vmatprep.subr.mxu0 %v4156
      %4928 = vmatpush1.msra.mxu0 %v4155
      %4929 = vmatprep.subr.mxu0 %v4164
      %4930 = vmatpush1.msra.mxu0 %v4163
      %4931 = vmatprep.subr.mxu0 %v4172
      %4932 = vmatpush1.msra.mxu0 %v4171
      %4933 = vmatprep.subr.mxu0 %v4180
      %4934 = vmatpush1.msra.mxu0 %v4179
      %4935 = vmatprep.subr.mxu0 %v4188
      %4936 = vmatpush1.msra.mxu0 %v4187
      %4937 = vmatprep.subr.mxu0 %v4196
      %4938 = vmatpush1.msra.mxu0 %v4195
      %4939 = vmatprep.subr.mxu0 %v4204
      %4940 = vmatpush1.msra.mxu0 %v4203
      %4941 = vmatprep.subr.mxu0 %v4212
      %4942 = vmatpush1.msra.mxu0 %v4211
      %4943 = vmatprep.subr.mxu0 %v4220
      %4944 = vmatpush1.msra.mxu0 %v4219
      %4945 = vmatprep.subr.mxu0 %v4228
      %4946 = vmatpush1.msra.mxu0 %v4227
      %4947 = vmatprep.subr.mxu0 %v4236
      %4948 = vmatpush1.msra.mxu0 %v4235
      %4949 = vmatprep.subr.mxu0 %v4244
      %4950 = vmatpush1.msra.mxu0 %v4243
      %4951 = vmatprep.subr.mxu0 %v4252
      %4952 = vmatpush1.msra.mxu0 %v4251
      %4953 = vmatprep.subr.mxu0 %v4260
      %4954 = vmatpush1.msra.mxu0 %v4259
      %4955 = vmatprep.subr.mxu0 %v4268
      %4956 = vmatpush1.msra.mxu0 %v4267
      %4957 = vmatprep.subr.mxu0 %v4276
      %4958 = vmatpush1.msra.mxu0 %v4275
      %4959 = vmatprep.subr.mxu0 %v4284
      %4960 = vmatpush1.msra.mxu0 %v4283
      %4961 = vmatprep.subr.mxu0 %v4292
      %4962 = vmatpush1.msra.mxu0 %v4291
      %4963 = vmatprep.subr.mxu0 %v4300
      %4964 = vmatpush1.msra.mxu0 %v4299
      %4965 = vmatprep.subr.mxu0 %v4308
      %4966 = vmatpush1.msra.mxu0 %v4307
      %4967 = vmatprep.subr.mxu0 %v4316
      %4968 = vmatpush1.msra.mxu0 %v4315
      %4969 = vmatprep.mubr.f32.mxu0 %v4888
      %4970 = vmatmul.mubr.f32.gmra.mrb[0].mxu0 %v4887
      %v4971 = vpop.f32.mrb[0].mxu0
      %v4972 = vadd.f32 0.0, %v4971
      %v4973 = vpop.f32.mrb[0].mxu0
      %v4974 = vadd.f32 0.0, %v4973
      %4975 = vdwg.mxu0
      %4976 = vmatprep.subr.mxu0 %v4070
      %4977 = vmatpush1.msra.mxu0 %v4069
      %4978 = vmatprep.subr.mxu0 %v4078
      %4979 = vmatpush1.msra.mxu0 %v4077
      %4980 = vmatprep.subr.mxu0 %v4086
      %4981 = vmatpush1.msra.mxu0 %v4085
      %4982 = vmatprep.subr.mxu0 %v4094
      %4983 = vmatpush1.msra.mxu0 %v4093
      %4984 = vmatprep.subr.mxu0 %v4102
      %4985 = vmatpush1.msra.mxu0 %v4101
      %4986 = vmatprep.subr.mxu0 %v4110
      %4987 = vmatpush1.msra.mxu0 %v4109
      %4988 = vmatprep.subr.mxu0 %v4118
      %4989 = vmatpush1.msra.mxu0 %v4117
      %4990 = vmatprep.subr.mxu0 %v4126
      %4991 = vmatpush1.msra.mxu0 %v4125
      %4992 = vmatprep.subr.mxu0 %v4134
      %4993 = vmatpush1.msra.mxu0 %v4133
      %4994 = vmatprep.subr.mxu0 %v4142
      %4995 = vmatpush1.msra.mxu0 %v4141
      %4996 = vmatprep.subr.mxu0 %v4150
      %4997 = vmatpush1.msra.mxu0 %v4149
      %4998 = vmatprep.subr.mxu0 %v4158
      %4999 = vmatpush1.msra.mxu0 %v4157
      %5000 = vmatprep.subr.mxu0 %v4166
      %5001 = vmatpush1.msra.mxu0 %v4165
      %5002 = vmatprep.subr.mxu0 %v4174
      %5003 = vmatpush1.msra.mxu0 %v4173
      %5004 = vmatprep.subr.mxu0 %v4182
      %5005 = vmatpush1.msra.mxu0 %v4181
      %5006 = vmatprep.subr.mxu0 %v4190
      %5007 = vmatpush1.msra.mxu0 %v4189
      %5008 = vmatprep.subr.mxu0 %v4198
      %5009 = vmatpush1.msra.mxu0 %v4197
      %5010 = vmatprep.subr.mxu0 %v4206
      %5011 = vmatpush1.msra.mxu0 %v4205
      %5012 = vmatprep.subr.mxu0 %v4214
      %5013 = vmatpush1.msra.mxu0 %v4213
      %5014 = vmatprep.subr.mxu0 %v4222
      %5015 = vmatpush1.msra.mxu0 %v4221
      %5016 = vmatprep.subr.mxu0 %v4230
      %5017 = vmatpush1.msra.mxu0 %v4229
      %5018 = vmatprep.subr.mxu0 %v4238
      %5019 = vmatpush1.msra.mxu0 %v4237
      %5020 = vmatprep.subr.mxu0 %v4246
      %5021 = vmatpush1.msra.mxu0 %v4245
      %5022 = vmatprep.subr.mxu0 %v4254
      %5023 = vmatpush1.msra.mxu0 %v4253
      %5024 = vmatprep.subr.mxu0 %v4262
      %5025 = vmatpush1.msra.mxu0 %v4261
      %5026 = vmatprep.subr.mxu0 %v4270
      %5027 = vmatpush1.msra.mxu0 %v4269
      %5028 = vmatprep.subr.mxu0 %v4278
      %5029 = vmatpush1.msra.mxu0 %v4277
      %5030 = vmatprep.subr.mxu0 %v4286
      %5031 = vmatpush1.msra.mxu0 %v4285
      %5032 = vmatprep.subr.mxu0 %v4294
      %5033 = vmatpush1.msra.mxu0 %v4293
      %5034 = vmatprep.subr.mxu0 %v4302
      %5035 = vmatpush1.msra.mxu0 %v4301
      %5036 = vmatprep.subr.mxu0 %v4310
      %5037 = vmatpush1.msra.mxu0 %v4309
      %5038 = vmatprep.subr.mxu0 %v4318
      %5039 = vmatpush1.msra.mxu0 %v4317
      %5040 = vmatprep.mubr.f32.mxu0 %v4888
      %5041 = vmatmul.mubr.f32.gmra.mrb[0].mxu0 %v4887
      %v5042 = vpop.f32.mrb[0].mxu0
      %v5043 = vadd.f32 0.0, %v5042
      %v5044 = vpop.f32.mrb[0].mxu0
      %v5045 = vadd.f32 0.0, %v5044
      %5046 = vdwg.mxu0
      %5047 = vmatprep.subr.mxu0 %v4072
      %5048 = vmatpush1.msra.mxu0 %v4071
      %5049 = vmatprep.subr.mxu0 %v4080
      %5050 = vmatpush1.msra.mxu0 %v4079
      %5051 = vmatprep.subr.mxu0 %v4088
      %5052 = vmatpush1.msra.mxu0 %v4087
      %5053 = vmatprep.subr.mxu0 %v4096
      %5054 = vmatpush1.msra.mxu0 %v4095
      %5055 = vmatprep.subr.mxu0 %v4104
      %5056 = vmatpush1.msra.mxu0 %v4103
      %5057 = vmatprep.subr.mxu0 %v4112
      %5058 = vmatpush1.msra.mxu0 %v4111
      %5059 = vmatprep.subr.mxu0 %v4120
      %5060 = vmatpush1.msra.mxu0 %v4119
      %5061 = vmatprep.subr.mxu0 %v4128
      %5062 = vmatpush1.msra.mxu0 %v4127
      %5063 = vmatprep.subr.mxu0 %v4136
      %5064 = vmatpush1.msra.mxu0 %v4135
      %5065 = vmatprep.subr.mxu0 %v4144
      %5066 = vmatpush1.msra.mxu0 %v4143
      %5067 = vmatprep.subr.mxu0 %v4152
      %5068 = vmatpush1.msra.mxu0 %v4151
      %5069 = vmatprep.subr.mxu0 %v4160
      %5070 = vmatpush1.msra.mxu0 %v4159
      %5071 = vmatprep.subr.mxu0 %v4168
      %5072 = vmatpush1.msra.mxu0 %v4167
      %5073 = vmatprep.subr.mxu0 %v4176
      %5074 = vmatpush1.msra.mxu0 %v4175
      %5075 = vmatprep.subr.mxu0 %v4184
      %5076 = vmatpush1.msra.mxu0 %v4183
      %5077 = vmatprep.subr.mxu0 %v4192
      %5078 = vmatpush1.msra.mxu0 %v4191
      %5079 = vmatprep.subr.mxu0 %v4200
      %5080 = vmatpush1.msra.mxu0 %v4199
      %5081 = vmatprep.subr.mxu0 %v4208
      %5082 = vmatpush1.msra.mxu0 %v4207
      %5083 = vmatprep.subr.mxu0 %v4216
      %5084 = vmatpush1.msra.mxu0 %v4215
      %5085 = vmatprep.subr.mxu0 %v4224
      %5086 = vmatpush1.msra.mxu0 %v4223
      %5087 = vmatprep.subr.mxu0 %v4232
      %5088 = vmatpush1.msra.mxu0 %v4231
      %5089 = vmatprep.subr.mxu0 %v4240
      %5090 = vmatpush1.msra.mxu0 %v4239
      %5091 = vmatprep.subr.mxu0 %v4248
      %5092 = vmatpush1.msra.mxu0 %v4247
      %5093 = vmatprep.subr.mxu0 %v4256
      %5094 = vmatpush1.msra.mxu0 %v4255
      %5095 = vmatprep.subr.mxu0 %v4264
      %5096 = vmatpush1.msra.mxu0 %v4263
      %5097 = vmatprep.subr.mxu0 %v4272
      %5098 = vmatpush1.msra.mxu0 %v4271
      %5099 = vmatprep.subr.mxu0 %v4280
      %5100 = vmatpush1.msra.mxu0 %v4279
      %5101 = vmatprep.subr.mxu0 %v4288
      %5102 = vmatpush1.msra.mxu0 %v4287
      %5103 = vmatprep.subr.mxu0 %v4296
      %5104 = vmatpush1.msra.mxu0 %v4295
      %5105 = vmatprep.subr.mxu0 %v4304
      %5106 = vmatpush1.msra.mxu0 %v4303
      %5107 = vmatprep.subr.mxu0 %v4312
      %5108 = vmatpush1.msra.mxu0 %v4311
      %5109 = vmatprep.subr.mxu0 %v4320
      %5110 = vmatpush1.msra.mxu0 %v4319
      %5111 = vmatprep.mubr.f32.mxu0 %v4888
      %5112 = vmatmul.mubr.f32.gmra.mrb[0].mxu0 %v4887
      %v5113 = vpop.f32.mrb[0].mxu0
      %v5114 = vadd.f32 0.0, %v5113
      %v5115 = vpop.f32.mrb[0].mxu0
      %v5116 = vadd.f32 0.0, %v5115
      %5117 = vdwg.mxu0
      %5118 = vmatprep.subr.mxu0 %v4074
      %5119 = vmatpush1.msra.mxu0 %v4073
      %5120 = vmatprep.subr.mxu0 %v4082
      %5121 = vmatpush1.msra.mxu0 %v4081
      %5122 = vmatprep.subr.mxu0 %v4090
      %5123 = vmatpush1.msra.mxu0 %v4089
      %5124 = vmatprep.subr.mxu0 %v4098
      %5125 = vmatpush1.msra.mxu0 %v4097
      %5126 = vmatprep.subr.mxu0 %v4106
      %5127 = vmatpush1.msra.mxu0 %v4105
      %5128 = vmatprep.subr.mxu0 %v4114
      %5129 = vmatpush1.msra.mxu0 %v4113
      %5130 = vmatprep.subr.mxu0 %v4122
      %5131 = vmatpush1.msra.mxu0 %v4121
      %5132 = vmatprep.subr.mxu0 %v4130
      %5133 = vmatpush1.msra.mxu0 %v4129
      %5134 = vmatprep.subr.mxu0 %v4138
      %5135 = vmatpush1.msra.mxu0 %v4137
      %5136 = vmatprep.subr.mxu0 %v4146
      %5137 = vmatpush1.msra.mxu0 %v4145
      %5138 = vmatprep.subr.mxu0 %v4154
      %5139 = vmatpush1.msra.mxu0 %v4153
      %5140 = vmatprep.subr.mxu0 %v4162
      %5141 = vmatpush1.msra.mxu0 %v4161
      %5142 = vmatprep.subr.mxu0 %v4170
      %5143 = vmatpush1.msra.mxu0 %v4169
      %5144 = vmatprep.subr.mxu0 %v4178
      %5145 = vmatpush1.msra.mxu0 %v4177
      %5146 = vmatprep.subr.mxu0 %v4186
      %5147 = vmatpush1.msra.mxu0 %v4185
      %5148 = vmatprep.subr.mxu0 %v4194
      %5149 = vmatpush1.msra.mxu0 %v4193
      %5150 = vmatprep.subr.mxu0 %v4202
      %5151 = vmatpush1.msra.mxu0 %v4201
      %5152 = vmatprep.subr.mxu0 %v4210
      %5153 = vmatpush1.msra.mxu0 %v4209
      %5154 = vmatprep.subr.mxu0 %v4218
      %5155 = vmatpush1.msra.mxu0 %v4217
      %5156 = vmatprep.subr.mxu0 %v4226
      %5157 = vmatpush1.msra.mxu0 %v4225
      %5158 = vmatprep.subr.mxu0 %v4234
      %5159 = vmatpush1.msra.mxu0 %v4233
      %5160 = vmatprep.subr.mxu0 %v4242
      %5161 = vmatpush1.msra.mxu0 %v4241
      %5162 = vmatprep.subr.mxu0 %v4250
      %5163 = vmatpush1.msra.mxu0 %v4249
      %5164 = vmatprep.subr.mxu0 %v4258
      %5165 = vmatpush1.msra.mxu0 %v4257
      %5166 = vmatprep.subr.mxu0 %v4266
      %5167 = vmatpush1.msra.mxu0 %v4265
      %5168 = vmatprep.subr.mxu0 %v4274
      %5169 = vmatpush1.msra.mxu0 %v4273
      %5170 = vmatprep.subr.mxu0 %v4282
      %5171 = vmatpush1.msra.mxu0 %v4281
      %5172 = vmatprep.subr.mxu0 %v4290
      %5173 = vmatpush1.msra.mxu0 %v4289
      %5174 = vmatprep.subr.mxu0 %v4298
      %5175 = vmatpush1.msra.mxu0 %v4297
      %5176 = vmatprep.subr.mxu0 %v4306
      %5177 = vmatpush1.msra.mxu0 %v4305
      %5178 = vmatprep.subr.mxu0 %v4314
      %5179 = vmatpush1.msra.mxu0 %v4313
      %5180 = vmatprep.subr.mxu0 %v4322
      %5181 = vmatpush1.msra.mxu0 %v4321
      %5182 = vmatprep.mubr.f32.mxu0 %v4888
      %5183 = vmatmul.mubr.f32.gmra.mrb[0].mxu0 %v4887
      %v5184 = vpop.f32.mrb[0].mxu0
      %v5185 = vadd.f32 0.0, %v5184
      %v5186 = vpop.f32.mrb[0].mxu0
      %v5187 = vadd.f32 0.0, %v5186
      %5188 = vdwg.mxu0
      %v5189 = vadd.f32 %v4897, %v4972
      %v5190 = vadd.f32 %v4898, %v4974
      %v5191 = vadd.f32 %v4899, %v5043
      %v5192 = vadd.f32 %v4900, %v5045
      %v5193 = vadd.f32 %v4901, %v5114
      %v5194 = vadd.f32 %v4902, %v5116
      %v5195 = vadd.f32 %v4903, %v5185
      %v5196 = vadd.f32 %v4904, %v5187
      %v5197 = vxor.u32 %v5189, 2147483648
      %v5198 = vxor.u32 %v5190, 2147483648
      %v5199 = vmul.f32 %v5197, 1.442695
      %v5200 = vpow.pop %v5199
      %v5201 = vmul.f32 %v5198, 1.442695
      %v5202 = vpow.pop %v5201
      %v5203 = vadd.f32 %v5200, 1.0
      %v5204 = vadd.f32 %v5202, 1.0
      %v5205 = vrcp.pop %v5203
      %v5206 = vmul.f32 1.0, %v5205
      %v5207 = vrcp.pop %v5204
      %v5208 = vmul.f32 1.0, %v5207
      %v5209 = vxor.u32 %v5191, 2147483648
      %v5210 = vxor.u32 %v5192, 2147483648
      %v5211 = vmul.f32 %v5209, 1.442695
      %v5212 = vpow.pop %v5211
      %v5213 = vmul.f32 %v5210, 1.442695
      %v5214 = vpow.pop %v5213
      %v5215 = vadd.f32 %v5212, 1.0
      %v5216 = vadd.f32 %v5214, 1.0
      %v5217 = vrcp.pop %v5215
      %v5218 = vmul.f32 1.0, %v5217
      %v5219 = vrcp.pop %v5216
      %v5220 = vmul.f32 1.0, %v5219
      %v5221 = vtanh.pop %v5193
      %v5222 = vtanh.pop %v5194
      %v5223 = vxor.u32 %v5195, 2147483648
      %v5224 = vxor.u32 %v5196, 2147483648
      %v5225 = vmul.f32 %v5223, 1.442695
      %v5226 = vpow.pop %v5225
      %v5227 = vmul.f32 %v5224, 1.442695
      %v5228 = vpow.pop %v5227
      %v5229 = vadd.f32 %v5226, 1.0
      %v5230 = vadd.f32 %v5228, 1.0
      %v5231 = vrcp.pop %v5229
      %v5232 = vmul.f32 1.0, %v5231
      %v5233 = vrcp.pop %v5230
      %v5234 = vmul.f32 1.0, %v5233
      %v5235 = vmul.f32 %v5218, %v4889
      %v5236 = vmul.f32 %v5220, %v4890
      %v5237 = vmul.f32 %v5206, %v5221
      %v5238 = vmul.f32 %v5208, %v5222
      %v5239 = vadd.f32 %v5235, %v5237
      %v5240 = vadd.f32 %v5236, %v5238
      %v5241 = vtanh.pop %v5239
      %v5242 = vtanh.pop %v5240
      %v5243 = vmul.f32 %v5232, %v5241
      %v5244 = vmul.f32 %v5234, %v5242
      %s5245 = smul.u32 %s4892, 2
      %s5246 = smul.addr %s5245, 8
      %s5247 = scalar_lea.vmem [#allocation4], %s5246
      %5248 = vst [vmem:[%s5247] sm:$0xff] %v5243
      %5249 = vst [vmem:[%s5247 + $0x8] sm:$0xff] %v5244
    $region132: #{cnn_lstm_forward.1} parent=1 // loop_footer
      %s4886 = sadd.s32 1, %s4882
    $region133: #{cnn_lstm_forward.1} parent=1 // loop_footer_branch
      %4881 = sbr.rel target = $region129
    $region134: #{cnn_lstm_forward.1} parent=1 // loop_exit
      _
    %v5250 = vld [vmem:[#allocation4] sm:$0xff]
    %v5251 = vld [vmem:[#allocation4 + $0x8] sm:$0xff]
    %v5252 = vld [vmem:[#allocation4 + $0x10] sm:$0xff]
    %v5253 = vld [vmem:[#allocation4 + $0x18] sm:$0xff]
    %v5254 = vld [vmem:[#allocation4 + $0x20] sm:$0xff]
    %v5255 = vld [vmem:[#allocation4 + $0x28] sm:$0xff]
    %v5256 = vld [vmem:[#allocation4 + $0x30] sm:$0xff]
    %v5257 = vld [vmem:[#allocation4 + $0x38] sm:$0xff]
    %v5258 = vld [vmem:[#allocation4 + $0x40] sm:$0xff]
    %v5259 = vld [vmem:[#allocation4 + $0x48] sm:$0xff]
    %v5260 = vld [vmem:[#allocation4 + $0x50] sm:$0xff]
    %v5261 = vld [vmem:[#allocation4 + $0x58] sm:$0xff]
    %v5262 = vld [vmem:[#allocation4 + $0x60] sm:$0xff]
    %v5263 = vld [vmem:[#allocation4 + $0x68] sm:$0xff]
    %v5264 = vld [vmem:[#allocation4 + $0x70] sm:$0xff]
    %v5265 = vld [vmem:[#allocation4 + $0x78] sm:$0xff]
    %v5266 = vld [vmem:[%s14] sm:$0x3]
    %v5268 = vlaneseq
    %v5269 = vshrl.u32 %v5268, 7
    %v5270 = vsub.s32 0, %v5269
    %v5271 = vrot.slane %v5266, %v5270
    %v5272 = vlaneseq
    %v5273 = vshrl.u32 %v5272, 7
    %v5274 = vsub.s32 1, %v5273
    %v5275 = vrot.slane %v5266, %v5274
    %v5278 = vmul.f32 %v5250, %v5271
    %v5279 = vmul.f32 %v5251, %v5275
    %v5280 = vmul.f32 %v5252, %v5271
    %v5281 = vmul.f32 %v5253, %v5275
    %v5282 = vmul.f32 %v5254, %v5271
    %v5283 = vmul.f32 %v5255, %v5275
    %v5284 = vmul.f32 %v5256, %v5271
    %v5285 = vmul.f32 %v5257, %v5275
    %v5286 = vmul.f32 %v5258, %v5271
    %v5287 = vmul.f32 %v5259, %v5275
    %v5288 = vmul.f32 %v5260, %v5271
    %v5289 = vmul.f32 %v5261, %v5275
    %v5290 = vmul.f32 %v5262, %v5271
    %v5291 = vmul.f32 %v5263, %v5275
    %v5292 = vmul.f32 %v5264, %v5271
    %v5293 = vmul.f32 %v5265, %v5275
    %v5294 = vadd.f32 %v5278, %v5279
    %5295 = vadd.xlane.f32.xlu0 %v5294
    %v5296 = vpop.xlane.xlu0 %5295
    %v5297 = vadd.f32 %v5280, %v5281
    %5298 = vadd.xlane.f32.xlu0 %v5297
    %v5299 = vpop.xlane.xlu0 %5298
    %v5300 = vadd.f32 %v5282, %v5283
    %5301 = vadd.xlane.f32.xlu0 %v5300
    %v5302 = vpop.xlane.xlu0 %5301
    %v5303 = vadd.f32 %v5284, %v5285
    %5304 = vadd.xlane.f32.xlu0 %v5303
    %v5305 = vpop.xlane.xlu0 %5304
    %v5306 = vadd.f32 %v5286, %v5287
    %5307 = vadd.xlane.f32.xlu0 %v5306
    %v5308 = vpop.xlane.xlu0 %5307
    %v5309 = vadd.f32 %v5288, %v5289
    %5310 = vadd.xlane.f32.xlu0 %v5309
    %v5311 = vpop.xlane.xlu0 %5310
    %v5312 = vadd.f32 %v5290, %v5291
    %5313 = vadd.xlane.f32.xlu0 %v5312
    %v5314 = vpop.xlane.xlu0 %5313
    %v5315 = vadd.f32 %v5292, %v5293
    %5316 = vadd.xlane.f32.xlu0 %v5315
    %v5317 = vpop.xlane.xlu0 %5316
    %v5318 = vld [vmem:[#allocation5] sm:$0x1]
    %v5320 = vlaneseq
    %v5321 = vshrl.u32 %v5320, 7
    %v5322 = vsub.s32 0, %v5321
    %v5323 = vrot.slane %v5318, %v5322
    %v5325 = vadd.f32 %v5296, %v5323
    %v5326 = vadd.f32 %v5299, %v5323
    %v5327 = vadd.f32 %v5302, %v5323
    %v5328 = vadd.f32 %v5305, %v5323
    %v5329 = vadd.f32 %v5308, %v5323
    %v5330 = vadd.f32 %v5311, %v5323
    %v5331 = vadd.f32 %v5314, %v5323
    %v5332 = vadd.f32 %v5317, %v5323
    %vm5333 = vcmask 7168
    %v5334 = vsel %vm5333, %v5325, -inf
    %v5335 = vsel %vm5333, %v5326, -inf
    %v5336 = vsel %vm5333, %v5327, -inf
    %v5337 = vsel %vm5333, %v5328, -inf
    %v5338 = vsel %vm5333, %v5329, -inf
    %v5339 = vmax.f32 %v5334, %v5338
    %v5340 = vsel %vm5333, %v5330, -inf
    %v5341 = vmax.f32 %v5335, %v5340
    %v5342 = vsel %vm5333, %v5331, -inf
    %v5343 = vmax.f32 %v5336, %v5342
    %v5344 = vsel %vm5333, %v5332, -inf
    %v5345 = vmax.f32 %v5337, %v5344
    %v5346 = vmax.f32 %v5339, %v5341
    %v5347 = vmax.f32 %v5343, %v5345
    %v5348 = vmax.f32 %v5346, %v5347
    %v5349 = vrot.slane %v5348, 4
    %v5350 = vmax.f32 %v5348, %v5349
    %v5351 = vrot.slane %v5350, 2
    %v5352 = vmax.f32 %v5350, %v5351
    %v5353 = vrot.slane %v5352, 1
    %v5354 = vmax.f32 %v5352, %v5353
    %v5355 = vsub.f32 %v5325, %v5354
    %v5356 = vsub.f32 %v5326, %v5354
    %v5357 = vsub.f32 %v5327, %v5354
    %v5358 = vsub.f32 %v5328, %v5354
    %v5359 = vsub.f32 %v5329, %v5354
    %v5360 = vsub.f32 %v5330, %v5354
    %v5361 = vsub.f32 %v5331, %v5354
    %v5362 = vsub.f32 %v5332, %v5354
    %v5363 = vmul.f32 %v5355, 1.442695
    %v5364 = vpow.pop %v5363
    %v5365 = vmul.f32 %v5356, 1.442695
    %v5366 = vpow.pop %v5365
    %v5367 = vmul.f32 %v5357, 1.442695
    %v5368 = vpow.pop %v5367
    %v5369 = vmul.f32 %v5358, 1.442695
    %v5370 = vpow.pop %v5369
    %v5371 = vmul.f32 %v5359, 1.442695
    %v5372 = vpow.pop %v5371
    %v5373 = vmul.f32 %v5360, 1.442695
    %v5374 = vpow.pop %v5373
    %v5375 = vmul.f32 %v5361, 1.442695
    %v5376 = vpow.pop %v5375
    %v5377 = vmul.f32 %v5362, 1.442695
    %v5378 = vpow.pop %v5377
    %v5379 = vlaneseq
    %v5380 = vand.u32 %v5379, 127
    %v5381 = vlaneseq
    %v5382 = vshrl.u32 %v5381, 7
    %v5383 = vand.u32 %v5380, 7
    %vm5384 = vcmp.eq.s32.totalorder %v5383, %v5382
    %v5385 = vsel %vm5384, 1, 0
    %v5386 = vcvt.s32.f32 %v5385
    %5388 = vset.pattern.permute.xlu0 0
    %5389 = vperm.xlu0 %5388, %v5364
    %v5390 = vpop.permute.xlu0 %5389
    %5393 = vset.pattern.permute.xlu0 0
    %5394 = vperm.xlu0 %5393, %v5366
    %v5395 = vpop.permute.xlu0 %5394
    %5398 = vset.pattern.permute.xlu0 0
    %5399 = vperm.xlu0 %5398, %v5368
    %v5400 = vpop.permute.xlu0 %5399
    %5403 = vset.pattern.permute.xlu0 0
    %5404 = vperm.xlu0 %5403, %v5370
    %v5405 = vpop.permute.xlu0 %5404
    %5408 = vset.pattern.permute.xlu0 0
    %5409 = vperm.xlu0 %5408, %v5372
    %v5410 = vpop.permute.xlu0 %5409
    %5413 = vset.pattern.permute.xlu0 0
    %5414 = vperm.xlu0 %5413, %v5374
    %v5415 = vpop.permute.xlu0 %5414
    %5418 = vset.pattern.permute.xlu0 0
    %5419 = vperm.xlu0 %5418, %v5376
    %v5420 = vpop.permute.xlu0 %5419
    %5423 = vset.pattern.permute.xlu0 0
    %5424 = vperm.xlu0 %5423, %v5378
    %v5425 = vpop.permute.xlu0 %5424
    %v5427 = vmul.f32 %v5390, %v5250
    %v5428 = vmul.f32 %v5390, %v5251
    %v5429 = vmul.f32 %v5395, %v5252
    %v5430 = vmul.f32 %v5395, %v5253
    %v5431 = vmul.f32 %v5400, %v5254
    %v5432 = vmul.f32 %v5400, %v5255
    %v5433 = vmul.f32 %v5405, %v5256
    %v5434 = vmul.f32 %v5405, %v5257
    %v5435 = vmul.f32 %v5410, %v5258
    %v5436 = vmul.f32 %v5410, %v5259
    %v5437 = vmul.f32 %v5415, %v5260
    %v5438 = vmul.f32 %v5415, %v5261
    %v5439 = vmul.f32 %v5420, %v5262
    %v5440 = vmul.f32 %v5420, %v5263
    %v5441 = vmul.f32 %v5425, %v5264
    %v5442 = vmul.f32 %v5425, %v5265
    %v5444 = vsel %vm578, %v5386, 0
    %5446 = vmatprep.subr.mxu0 %v5428
    %5447 = vmatpush1.msra.mxu0 %v5427
    %5448 = vmatprep.subr.mxu0 %v5430
    %5449 = vmatpush1.msra.mxu0 %v5429
    %5450 = vmatprep.subr.mxu0 %v5432
    %5451 = vmatpush1.msra.mxu0 %v5431
    %5452 = vmatprep.subr.mxu0 %v5434
    %5453 = vmatpush1.msra.mxu0 %v5433
    %5454 = vmatprep.subr.mxu0 %v5436
    %5455 = vmatpush1.msra.mxu0 %v5435
    %5456 = vmatprep.subr.mxu0 %v5438
    %5457 = vmatpush1.msra.mxu0 %v5437
    %5458 = vmatprep.subr.mxu0 %v5440
    %5459 = vmatpush1.msra.mxu0 %v5439
    %5460 = vmatprep.subr.mxu0 %v5442
    %5461 = vmatpush1.msra.mxu0 %v5441
    %5462 = vmatprep.subr.mxu0 0.0
    %5463 = vmatpush1.msra.mxu0 0.0
    %5464 = vmatprep.subr.mxu0 0.0
    %5465 = vmatpush1.msra.mxu0 0.0
    %5466 = vmatprep.subr.mxu0 0.0
    %5467 = vmatpush1.msra.mxu0 0.0
    %5468 = vmatprep.subr.mxu0 0.0
    %5469 = vmatpush1.msra.mxu0 0.0
    %5470 = vmatprep.subr.mxu0 0.0
    %5471 = vmatpush1.msra.mxu0 0.0
    %5472 = vmatprep.subr.mxu0 0.0
    %5473 = vmatpush1.msra.mxu0 0.0
    %5474 = vmatprep.subr.mxu0 0.0
    %5475 = vmatpush1.msra.mxu0 0.0
    %5476 = vmatprep.subr.mxu0 0.0
    %5477 = vmatpush1.msra.mxu0 0.0
    %5478 = vmatprep.subr.mxu0 0.0
    %5479 = vmatpush1.msra.mxu0 0.0
    %5480 = vmatprep.subr.mxu0 0.0
    %5481 = vmatpush1.msra.mxu0 0.0
    %5482 = vmatprep.subr.mxu0 0.0
    %5483 = vmatpush1.msra.mxu0 0.0
    %5484 = vmatprep.subr.mxu0 0.0
    %5485 = vmatpush1.msra.mxu0 0.0
    %5486 = vmatprep.subr.mxu0 0.0
    %5487 = vmatpush1.msra.mxu0 0.0
    %5488 = vmatprep.subr.mxu0 0.0
    %5489 = vmatpush1.msra.mxu0 0.0
    %5490 = vmatprep.subr.mxu0 0.0
    %5491 = vmatpush1.msra.mxu0 0.0
    %5492 = vmatprep.subr.mxu0 0.0
    %5493 = vmatpush1.msra.mxu0 0.0
    %5494 = vmatprep.subr.mxu0 0.0
    %5495 = vmatpush1.msra.mxu0 0.0
    %5496 = vmatprep.subr.mxu0 0.0
    %5497 = vmatpush1.msra.mxu0 0.0
    %5498 = vmatprep.subr.mxu0 0.0
    %5499 = vmatpush1.msra.mxu0 0.0
    %5500 = vmatprep.subr.mxu0 0.0
    %5501 = vmatpush1.msra.mxu0 0.0
    %5502 = vmatprep.subr.mxu0 0.0
    %5503 = vmatpush1.msra.mxu0 0.0
    %5504 = vmatprep.subr.mxu0 0.0
    %5505 = vmatpush1.msra.mxu0 0.0
    %5506 = vmatprep.subr.mxu0 0.0
    %5507 = vmatpush1.msra.mxu0 0.0
    %5508 = vmatprep.subr.mxu0 0.0
    %5509 = vmatpush1.msra.mxu0 0.0
    %5510 = vmatprep.mubr.f32.mxu0 0.0
    %5511 = vmatmul.mubr.f32.gmra.mrb[0].mxu0 %v5444
    %v5512 = vpop.f32.mrb[0].mxu0
    %v5513 = vadd.f32 0.0, %v5512
    %v5514 = vpop.f32.mrb[0].mxu0
    %v5515 = vadd.f32 0.0, %v5514
    %5516 = vdwg.mxu0
    %5517 = vmatprep.subr.mxu0 0.0
    %5518 = vmatpush1.msra.mxu0 %v5364
    %5519 = vmatprep.subr.mxu0 0.0
    %5520 = vmatpush1.msra.mxu0 %v5366
    %5521 = vmatprep.subr.mxu0 0.0
    %5522 = vmatpush1.msra.mxu0 %v5368
    %5523 = vmatprep.subr.mxu0 0.0
    %5524 = vmatpush1.msra.mxu0 %v5370
    %5525 = vmatprep.subr.mxu0 0.0
    %5526 = vmatpush1.msra.mxu0 %v5372
    %5527 = vmatprep.subr.mxu0 0.0
    %5528 = vmatpush1.msra.mxu0 %v5374
    %5529 = vmatprep.subr.mxu0 0.0
    %5530 = vmatpush1.msra.mxu0 %v5376
    %5531 = vmatprep.subr.mxu0 0.0
    %5532 = vmatpush1.msra.mxu0 %v5378
    %5533 = vmatprep.subr.mxu0 0.0
    %5534 = vmatpush1.msra.mxu0 0.0
    %5535 = vmatprep.subr.mxu0 0.0
    %5536 = vmatpush1.msra.mxu0 0.0
    %5537 = vmatprep.subr.mxu0 0.0
    %5538 = vmatpush1.msra.mxu0 0.0
    %5539 = vmatprep.subr.mxu0 0.0
    %5540 = vmatpush1.msra.mxu0 0.0
    %5541 = vmatprep.subr.mxu0 0.0
    %5542 = vmatpush1.msra.mxu0 0.0
    %5543 = vmatprep.subr.mxu0 0.0
    %5544 = vmatpush1.msra.mxu0 0.0
    %5545 = vmatprep.subr.mxu0 0.0
    %5546 = vmatpush1.msra.mxu0 0.0
    %5547 = vmatprep.subr.mxu0 0.0
    %5548 = vmatpush1.msra.mxu0 0.0
    %5549 = vmatprep.subr.mxu0 0.0
    %5550 = vmatpush1.msra.mxu0 0.0
    %5551 = vmatprep.subr.mxu0 0.0
    %5552 = vmatpush1.msra.mxu0 0.0
    %5553 = vmatprep.subr.mxu0 0.0
    %5554 = vmatpush1.msra.mxu0 0.0
    %5555 = vmatprep.subr.mxu0 0.0
    %5556 = vmatpush1.msra.mxu0 0.0
    %5557 = vmatprep.subr.mxu0 0.0
    %5558 = vmatpush1.msra.mxu0 0.0
    %5559 = vmatprep.subr.mxu0 0.0
    %5560 = vmatpush1.msra.mxu0 0.0
    %5561 = vmatprep.subr.mxu0 0.0
    %5562 = vmatpush1.msra.mxu0 0.0
    %5563 = vmatprep.subr.mxu0 0.0
    %5564 = vmatpush1.msra.mxu0 0.0
    %5565 = vmatprep.subr.mxu0 0.0
    %5566 = vmatpush1.msra.mxu0 0.0
    %5567 = vmatprep.subr.mxu0 0.0
    %5568 = vmatpush1.msra.mxu0 0.0
    %5569 = vmatprep.subr.mxu0 0.0
    %5570 = vmatpush1.msra.mxu0 0.0
    %5571 = vmatprep.subr.mxu0 0.0
    %5572 = vmatpush1.msra.mxu0 0.0
    %5573 = vmatprep.subr.mxu0 0.0
    %5574 = vmatpush1.msra.mxu0 0.0
    %5575 = vmatprep.subr.mxu0 0.0
    %5576 = vmatpush1.msra.mxu0 0.0
    %5577 = vmatprep.subr.mxu0 0.0
    %5578 = vmatpush1.msra.mxu0 0.0
    %5579 = vmatprep.subr.mxu0 0.0
    %5580 = vmatpush1.msra.mxu0 0.0
    %5581 = vmatprep.mubr.f32.mxu0 0.0
    %5582 = vmatmul.mubr.f32.gmra.mrb[0].mxu0 %v5444
    %v5583 = vpop.f32.mrb[0].mxu0
    %v5584 = vadd.f32 0.0, %v5583
    %v5585 = vpop.f32.mrb[0].mxu0
    %5586 = vdwg.mxu0
    %5588 = vset.pattern.permute.xlu0 0
    %5589 = vperm.xlu0 %5588, %v5584
    %v5590 = vpop.permute.xlu0 %5589
    %v5592 = vrcp.pop %v5590
    %v5593 = vmul.f32 %v5513, %v5592
    %v5594 = vmul.f32 %v5515, %v5592
    %v5595 = vld [vmem:[#allocation17] sm:$0xff]
    %v5596 = vld [vmem:[#allocation17 + $0x8] sm:$0xff]
    %v5597 = vld [vmem:[#allocation17 + $0x10] sm:$0xff]
    %v5598 = vld [vmem:[#allocation17 + $0x18] sm:$0xff]
    %v5599 = vld [vmem:[#allocation17 + $0x20] sm:$0xff]
    %v5600 = vld [vmem:[#allocation17 + $0x28] sm:$0xff]
    %v5601 = vld [vmem:[#allocation17 + $0x30] sm:$0xff]
    %v5602 = vld [vmem:[#allocation17 + $0x38] sm:$0xff]
    %v5603 = vld [vmem:[#allocation17 + $0x40] sm:$0xff]
    %v5604 = vld [vmem:[#allocation17 + $0x48] sm:$0xff]
    %v5605 = vld [vmem:[#allocation17 + $0x50] sm:$0xff]
    %v5606 = vld [vmem:[#allocation17 + $0x58] sm:$0xff]
    %v5607 = vld [vmem:[#allocation17 + $0x60] sm:$0xff]
    %v5608 = vld [vmem:[#allocation17 + $0x68] sm:$0xff]
    %v5609 = vld [vmem:[#allocation17 + $0x70] sm:$0xff]
    %v5610 = vld [vmem:[#allocation17 + $0x78] sm:$0xff]
    %v5611 = vld [vmem:[#allocation17 + $0x80] sm:$0xff]
    %v5612 = vld [vmem:[#allocation17 + $0x88] sm:$0xff]
    %v5613 = vld [vmem:[#allocation17 + $0x90] sm:$0xff]
    %v5614 = vld [vmem:[#allocation17 + $0x98] sm:$0xff]
    %v5615 = vld [vmem:[#allocation17 + $0xa0] sm:$0xff]
    %v5616 = vld [vmem:[#allocation17 + $0xa8] sm:$0xff]
    %v5617 = vld [vmem:[#allocation17 + $0xb0] sm:$0xff]
    %v5618 = vld [vmem:[#allocation17 + $0xb8] sm:$0xff]
    %v5619 = vld [vmem:[#allocation17 + $0xc0] sm:$0xff]
    %v5620 = vld [vmem:[#allocation17 + $0xc8] sm:$0xff]
    %v5621 = vld [vmem:[#allocation17 + $0xd0] sm:$0xff]
    %v5622 = vld [vmem:[#allocation17 + $0xd8] sm:$0xff]
    %v5623 = vld [vmem:[#allocation17 + $0xe0] sm:$0xff]
    %v5624 = vld [vmem:[#allocation17 + $0xe8] sm:$0xff]
    %v5625 = vld [vmem:[#allocation17 + $0xf0] sm:$0xff]
    %v5626 = vld [vmem:[#allocation17 + $0xf8] sm:$0xff]
    %v5627 = vld [vmem:[%s17] sm:$0x1]
    %v5629 = vlaneseq
    %v5630 = vshrl.u32 %v5629, 7
    %v5631 = vsub.s32 0, %v5630
    %v5632 = vrot.slane %v5627, %v5631
    %5634 = vmatprep.subr.mxu0 0.0
    %5635 = vmatpush1.msra.mxu0 %v5595
    %5636 = vmatprep.subr.mxu0 0.0
    %5637 = vmatpush1.msra.mxu0 %v5596
    %5638 = vmatprep.subr.mxu0 0.0
    %5639 = vmatpush1.msra.mxu0 %v5597
    %5640 = vmatprep.subr.mxu0 0.0
    %5641 = vmatpush1.msra.mxu0 %v5598
    %5642 = vmatprep.subr.mxu0 0.0
    %5643 = vmatpush1.msra.mxu0 %v5599
    %5644 = vmatprep.subr.mxu0 0.0
    %5645 = vmatpush1.msra.mxu0 %v5600
    %5646 = vmatprep.subr.mxu0 0.0
    %5647 = vmatpush1.msra.mxu0 %v5601
    %5648 = vmatprep.subr.mxu0 0.0
    %5649 = vmatpush1.msra.mxu0 %v5602
    %5650 = vmatprep.subr.mxu0 0.0
    %5651 = vmatpush1.msra.mxu0 %v5603
    %5652 = vmatprep.subr.mxu0 0.0
    %5653 = vmatpush1.msra.mxu0 %v5604
    %5654 = vmatprep.subr.mxu0 0.0
    %5655 = vmatpush1.msra.mxu0 %v5605
    %5656 = vmatprep.subr.mxu0 0.0
    %5657 = vmatpush1.msra.mxu0 %v5606
    %5658 = vmatprep.subr.mxu0 0.0
    %5659 = vmatpush1.msra.mxu0 %v5607
    %5660 = vmatprep.subr.mxu0 0.0
    %5661 = vmatpush1.msra.mxu0 %v5608
    %5662 = vmatprep.subr.mxu0 0.0
    %5663 = vmatpush1.msra.mxu0 %v5609
    %5664 = vmatprep.subr.mxu0 0.0
    %5665 = vmatpush1.msra.mxu0 %v5610
    %5666 = vmatprep.subr.mxu0 0.0
    %5667 = vmatpush1.msra.mxu0 %v5611
    %5668 = vmatprep.subr.mxu0 0.0
    %5669 = vmatpush1.msra.mxu0 %v5612
    %5670 = vmatprep.subr.mxu0 0.0
    %5671 = vmatpush1.msra.mxu0 %v5613
    %5672 = vmatprep.subr.mxu0 0.0
    %5673 = vmatpush1.msra.mxu0 %v5614
    %5674 = vmatprep.subr.mxu0 0.0
    %5675 = vmatpush1.msra.mxu0 %v5615
    %5676 = vmatprep.subr.mxu0 0.0
    %5677 = vmatpush1.msra.mxu0 %v5616
    %5678 = vmatprep.subr.mxu0 0.0
    %5679 = vmatpush1.msra.mxu0 %v5617
    %5680 = vmatprep.subr.mxu0 0.0
    %5681 = vmatpush1.msra.mxu0 %v5618
    %5682 = vmatprep.subr.mxu0 0.0
    %5683 = vmatpush1.msra.mxu0 %v5619
    %5684 = vmatprep.subr.mxu0 0.0
    %5685 = vmatpush1.msra.mxu0 %v5620
    %5686 = vmatprep.subr.mxu0 0.0
    %5687 = vmatpush1.msra.mxu0 %v5621
    %5688 = vmatprep.subr.mxu0 0.0
    %5689 = vmatpush1.msra.mxu0 %v5622
    %5690 = vmatprep.subr.mxu0 0.0
    %5691 = vmatpush1.msra.mxu0 %v5623
    %5692 = vmatprep.subr.mxu0 0.0
    %5693 = vmatpush1.msra.mxu0 %v5624
    %5694 = vmatprep.subr.mxu0 0.0
    %5695 = vmatpush1.msra.mxu0 %v5625
    %5696 = vmatprep.subr.mxu0 0.0
    %5697 = vmatpush1.msra.mxu0 %v5626
    %5698 = vmatprep.mubr.f32.mxu0 %v5594
    %5699 = vmatmul.mubr.f32.gmra.mrb[0].mxu0 %v5593
    %v5700 = vpop.f32.mrb[0].mxu0
    %v5701 = vadd.f32 %v5632, %v5700
    %v5702 = vpop.f32.mrb[0].mxu0
    %5703 = vdwg.mxu0
    %v5704 = vmax.f32 %v5701, 0.0
    %v5705 = vld [vmem:[%s18] sm:$0xff]
    %v5706 = vld [vmem:[%s18 + $0x8] sm:$0xff]
    %v5707 = vld [vmem:[%s18 + $0x10] sm:$0xff]
    %v5708 = vld [vmem:[%s18 + $0x18] sm:$0xff]
    %v5709 = vld [vmem:[%s18 + $0x20] sm:$0xff]
    %v5710 = vld [vmem:[%s18 + $0x28] sm:$0xff]
    %v5711 = vld [vmem:[%s18 + $0x30] sm:$0xff]
    %v5712 = vld [vmem:[%s18 + $0x38] sm:$0xff]
    %v5713 = vld [vmem:[%s18 + $0x40] sm:$0xff]
    %v5714 = vld [vmem:[%s18 + $0x48] sm:$0xff]
    %v5715 = vld [vmem:[%s18 + $0x50] sm:$0xff]
    %v5716 = vld [vmem:[%s18 + $0x58] sm:$0xff]
    %v5717 = vld [vmem:[%s18 + $0x60] sm:$0xff]
    %v5718 = vld [vmem:[%s18 + $0x68] sm:$0xff]
    %v5719 = vld [vmem:[%s18 + $0x70] sm:$0xff]
    %v5720 = vld [vmem:[%s18 + $0x78] sm:$0xff]
    %v5721 = vld [vmem:[%s19] sm:$0x1]
    %v5723 = vlaneseq
    %v5724 = vshrl.u32 %v5723, 7
    %v5725 = vsub.s32 0, %v5724
    %v5726 = vrot.slane %v5721, %v5725
    %5728 = vmatprep.subr.mxu0 0.0
    %5729 = vmatpush1.msra.mxu0 %v5705
    %5730 = vmatprep.subr.mxu0 0.0
    %5731 = vmatpush1.msra.mxu0 %v5706
    %5732 = vmatprep.subr.mxu0 0.0
    %5733 = vmatpush1.msra.mxu0 %v5707
    %5734 = vmatprep.subr.mxu0 0.0
    %5735 = vmatpush1.msra.mxu0 %v5708
    %5736 = vmatprep.subr.mxu0 0.0
    %5737 = vmatpush1.msra.mxu0 %v5709
    %5738 = vmatprep.subr.mxu0 0.0
    %5739 = vmatpush1.msra.mxu0 %v5710
    %5740 = vmatprep.subr.mxu0 0.0
    %5741 = vmatpush1.msra.mxu0 %v5711
    %5742 = vmatprep.subr.mxu0 0.0
    %5743 = vmatpush1.msra.mxu0 %v5712
    %5744 = vmatprep.subr.mxu0 0.0
    %5745 = vmatpush1.msra.mxu0 %v5713
    %5746 = vmatprep.subr.mxu0 0.0
    %5747 = vmatpush1.msra.mxu0 %v5714
    %5748 = vmatprep.subr.mxu0 0.0
    %5749 = vmatpush1.msra.mxu0 %v5715
    %5750 = vmatprep.subr.mxu0 0.0
    %5751 = vmatpush1.msra.mxu0 %v5716
    %5752 = vmatprep.subr.mxu0 0.0
    %5753 = vmatpush1.msra.mxu0 %v5717
    %5754 = vmatprep.subr.mxu0 0.0
    %5755 = vmatpush1.msra.mxu0 %v5718
    %5756 = vmatprep.subr.mxu0 0.0
    %5757 = vmatpush1.msra.mxu0 %v5719
    %5758 = vmatprep.subr.mxu0 0.0
    %5759 = vmatpush1.msra.mxu0 %v5720
    %5760 = vmatprep.subr.mxu0 0.0
    %5761 = vmatpush1.msra.mxu0 0.0
    %5762 = vmatprep.subr.mxu0 0.0
    %5763 = vmatpush1.msra.mxu0 0.0
    %5764 = vmatprep.subr.mxu0 0.0
    %5765 = vmatpush1.msra.mxu0 0.0
    %5766 = vmatprep.subr.mxu0 0.0
    %5767 = vmatpush1.msra.mxu0 0.0
    %5768 = vmatprep.subr.mxu0 0.0
    %5769 = vmatpush1.msra.mxu0 0.0
    %5770 = vmatprep.subr.mxu0 0.0
    %5771 = vmatpush1.msra.mxu0 0.0
    %5772 = vmatprep.subr.mxu0 0.0
    %5773 = vmatpush1.msra.mxu0 0.0
    %5774 = vmatprep.subr.mxu0 0.0
    %5775 = vmatpush1.msra.mxu0 0.0
    %5776 = vmatprep.subr.mxu0 0.0
    %5777 = vmatpush1.msra.mxu0 0.0
    %5778 = vmatprep.subr.mxu0 0.0
    %5779 = vmatpush1.msra.mxu0 0.0
    %5780 = vmatprep.subr.mxu0 0.0
    %5781 = vmatpush1.msra.mxu0 0.0
    %5782 = vmatprep.subr.mxu0 0.0
    %5783 = vmatpush1.msra.mxu0 0.0
    %5784 = vmatprep.subr.mxu0 0.0
    %5785 = vmatpush1.msra.mxu0 0.0
    %5786 = vmatprep.subr.mxu0 0.0
    %5787 = vmatpush1.msra.mxu0 0.0
    %5788 = vmatprep.subr.mxu0 0.0
    %5789 = vmatpush1.msra.mxu0 0.0
    %5790 = vmatprep.subr.mxu0 0.0
    %5791 = vmatpush1.msra.mxu0 0.0
    %5792 = vmatprep.mubr.f32.mxu0 0.0
    %5793 = vmatmul.mubr.f32.gmra.mrb[0].mxu0 %v5704
    %v5794 = vpop.f32.mrb[0].mxu0
    %v5795 = vadd.f32 %v5726, %v5794
    %v5796 = vpop.f32.mrb[0].mxu0
    %5797 = vdwg.mxu0
    %vm5798 = vcmask 15360
    %5799 = vst.msk [vmem:[%s20] sm:$0xff] %vm5798, %v5795
    // Predicated region
    $region135: #{cnn_lstm_forward.1} parent=1 // pred_check
      _
    $region136: #{cnn_lstm_forward.1} parent=1 // pred_check_branch
      %5801 = sbr.rel (0) target = $region138
    $region137: #{cnn_lstm_forward.1} parent=1 // pred_region
      _
    $region138: #{cnn_lstm_forward.1} parent=1 // pred_fallthru
      _
    // Predicated region
    $region139: #{cnn_lstm_forward.1} parent=1 // pred_check
      _
    $region140: #{cnn_lstm_forward.1} parent=1 // pred_check_branch
      %5803 = sbr.rel (0) target = $region142
    $region141: #{cnn_lstm_forward.1} parent=1 // pred_region
      _
    $region142: #{cnn_lstm_forward.1} parent=1 // pred_fallthru
      _
    %5804 = vsyncpa [#allocation7], 1
    %5805 = vsyncpa [#allocation9], 1
    %5806 = vsyncpa [#allocation12], 1
    %5807 = vsyncpa [#allocation15], 1
    %5808 = vsyncpa [#allocation18], 1

</llo_original>
